<compile_context>
chip_gen: v7x
topology: tpu7x:2x2x1
jax: 0.10.0
libtpu: 0.0.40
codegen_flags: <defaults>
</compile_context>

<pallas_src>
import jax
import jax.numpy as jnp
from jax.experimental import pallas as pl
from jax.experimental.pallas import tpu as pltpu

# ----------------------------------------------------------------------------
# Config (small synthetic sizes consistent with the module)
# ----------------------------------------------------------------------------
VOCAB_SIZE = 114          # synthetic CROHME vocab size
VOCAB_PAD = 128           # padded to a full 128-lane vreg for the projection
PAD_IDX = 0
D_MODEL = 32
NHEAD = 4
DH = D_MODEL // NHEAD
NUM_LAYERS = 2
DIM_FF = 64
B, L, S = 2, 8, 16
M_TOT = B * L             # merged-query rows
N_MEM = B * S             # merged-memory rows
LN_EPS = 1e-5
NEG_INF = -1e30

# ---- layer-weight slab layout (per layer: rows x 128 lanes) ----
LW_SA_QKV = 0                       # (D, 3D)   lanes [0, 96)
LW_SA_O = LW_SA_QKV + D_MODEL       # (D, D)
LW_CA_Q = LW_SA_O + D_MODEL         # (D, D)
LW_CA_KV = LW_CA_Q + D_MODEL        # (D, 2D)   lanes [0, 64)
LW_CA_O = LW_CA_KV + D_MODEL        # (D, D)
LW_FF1 = LW_CA_O + D_MODEL          # (D, FF)   lanes [0, 64)
LW_FF2 = LW_FF1 + D_MODEL           # (FF, D)
LB_BASE = LW_FF2 + DIM_FF           # bias / LN rows start here
# bias row indices (relative to LB_BASE), one row each, prefix lanes used
BI_SA_QKV, BI_SA_O = 0, 1
BI_LN1_G, BI_LN1_B = 2, 3
BI_CA_Q, BI_CA_KV, BI_CA_O = 4, 5, 6
BI_LN2_G, BI_LN2_B = 7, 8
BI_FF1, BI_FF2 = 9, 10
BI_LN3_G, BI_LN3_B = 11, 12
N_BIAS_ROWS = 13
LAYER_ROWS = ((LB_BASE + N_BIAS_ROWS + 7) // 8) * 8     # 272

# ---- global slab layout (rows x 128 lanes) ----
G_EMBED = 0                          # (VOCAB_PAD, D)
G_PROJW = G_EMBED + VOCAB_PAD        # (D, VOCAB_PAD)
G_PROJB = G_PROJW + D_MODEL          # (1, VOCAB_PAD)
G_ELN_G = G_PROJB + 1                # (1, D)
G_ELN_B = G_ELN_G + 1                # (1, D)
G_PE = ((G_ELN_B + 1 + 7) // 8) * 8  # (B*L, D)   positional enc, batch-tiled
G_SELFM = G_PE + M_TOT               # (B*L, B*L) structural self-attn mask
G_MEMM = G_SELFM + M_TOT             # (B*L, B*S) structural cross-attn mask
G_ROWS = G_MEMM + M_TOT

# ---- per-call data slab layout (rows x DS_COLS lanes) ----
DS_COLS = max(D_MODEL, N_MEM)
DS_SRC = 0                           # (B*S, D)  encoder memory
DS_SRCPAD = N_MEM                    # (1, B*S)  src pad flags as float
DS_ROWS = ((N_MEM + 1 + 7) // 8) * 8


# ----------------------------------------------------------------------------
# In-kernel helpers (traced inside the single fused kernel)
# ----------------------------------------------------------------------------
def _layernorm(x, g, b):
    mu = jnp.mean(x, axis=-1, keepdims=True)
    var = jnp.mean((x - mu) ** 2, axis=-1, keepdims=True)
    return (x - mu) * jax.lax.rsqrt(var + LN_EPS) * g + b


def _mha(q, k, v, bias, w_o, b_o):
    """Multi-head attention on the merged (B*L, D) layout.

    q: (M, D) (1/sqrt(Dh) already folded into the Q weights), k, v: (N, D),
    bias: (M, N) additive mask, w_o: (D, D), b_o: (1, D).

    One K transpose per attention; per-head score tiles are stacked along
    rows so softmax (max/exp/sum/reciprocal/guard) runs once; per-head
    context vectors are concatenated into (M, D) for a single output
    projection matmul.
    """
    m = q.shape[0]
    kt = jnp.transpose(k)                                       # (D, N)
    s = jnp.concatenate(
        [jnp.dot(q[:, h * DH:(h + 1) * DH], kt[h * DH:(h + 1) * DH, :],
                 preferred_element_type=jnp.float32)
         for h in range(NHEAD)], axis=0)                        # (NHEAD*M, N)
    s = s + jnp.tile(bias, (NHEAD, 1))
    mx = jnp.max(s, axis=-1, keepdims=True)
    p = jnp.exp(s - mx)
    p = p * pl.reciprocal(jnp.sum(p, axis=-1, keepdims=True), approx=True)
    # guard: a fully-masked query row yields zeros (not a bogus uniform mix)
    p = jnp.where(mx <= NEG_INF * 0.5, 0.0, p)
    ctx = jnp.concatenate(
        [jnp.dot(p[h * m:(h + 1) * m, :], v[:, h * DH:(h + 1) * DH],
                 preferred_element_type=jnp.float32)
         for h in range(NHEAD)], axis=1)                        # (M, D)
    return jnp.dot(ctx, w_o, preferred_element_type=jnp.float32) + b_o


# ----------------------------------------------------------------------------
# The single fused decoder kernel (one invocation = whole batch)
# ----------------------------------------------------------------------------
def _decoder_kernel(ids_col_ref, ids_row_ref, dslab_ref, lslab_ref, gslab_ref,
                    out_ref):
    ids_col = ids_col_ref[...]                                  # (B*L, 1) i32
    ids_row = ids_row_ref[...]                                  # (1, B*L) i32
    src = dslab_ref[DS_SRC:DS_SRC + N_MEM, 0:D_MODEL]           # (B*S, D)
    src_pad = dslab_ref[DS_SRCPAD:DS_SRCPAD + 1, 0:N_MEM]       # (1, B*S) f32

    # ---- embedding (one-hot matmul) + LayerNorm + positional encoding ----
    one_hot = (jax.lax.broadcasted_iota(jnp.int32, (M_TOT, VOCAB_PAD), 1)
               == ids_col).astype(jnp.float32)                  # (B*L, Vp)
    x = jnp.dot(one_hot, gslab_ref[G_EMBED:G_EMBED + VOCAB_PAD, 0:D_MODEL],
                preferred_element_type=jnp.float32)
    x = _layernorm(x,
                   gslab_ref[G_ELN_G:G_ELN_G + 1, 0:D_MODEL],
                   gslab_ref[G_ELN_B:G_ELN_B + 1, 0:D_MODEL])
    x = x + gslab_ref[G_PE:G_PE + M_TOT, 0:D_MODEL]

    # ---- attention biases: structural part precomputed, pad part on the fly
    self_bias = (gslab_ref[G_SELFM:G_SELFM + M_TOT, 0:M_TOT]
                 + jnp.where(ids_row == PAD_IDX, NEG_INF, 0.0))
    mem_bias = (gslab_ref[G_MEMM:G_MEMM + M_TOT, 0:N_MEM]
                + jnp.where(src_pad != 0.0, NEG_INF, 0.0))

    for layer in range(NUM_LAYERS):
        def wmat(row, rows, cols):
            return lslab_ref[layer, row:row + rows, 0:cols]

        def bvec(row, cols):
            r = LB_BASE + row
            return lslab_ref[layer, r:r + 1, 0:cols]

        # --- self attention (fused QKV; scale folded into Q weights) ---
        qkv = (jnp.dot(x, wmat(LW_SA_QKV, D_MODEL, 3 * D_MODEL),
                       preferred_element_type=jnp.float32)
               + bvec(BI_SA_QKV, 3 * D_MODEL))
        sa = _mha(qkv[:, 0:D_MODEL], qkv[:, D_MODEL:2 * D_MODEL],
                  qkv[:, 2 * D_MODEL:3 * D_MODEL], self_bias,
                  wmat(LW_SA_O, D_MODEL, D_MODEL), bvec(BI_SA_O, D_MODEL))
        x = _layernorm(x + sa, bvec(BI_LN1_G, D_MODEL), bvec(BI_LN1_B, D_MODEL))

        # --- cross attention (fused K/V over encoder memory) ---
        qc = (jnp.dot(x, wmat(LW_CA_Q, D_MODEL, D_MODEL),
                      preferred_element_type=jnp.float32)
              + bvec(BI_CA_Q, D_MODEL))
        kv = (jnp.dot(src, wmat(LW_CA_KV, D_MODEL, 2 * D_MODEL),
                      preferred_element_type=jnp.float32)
              + bvec(BI_CA_KV, 2 * D_MODEL))
        ca = _mha(qc, kv[:, 0:D_MODEL], kv[:, D_MODEL:2 * D_MODEL], mem_bias,
                  wmat(LW_CA_O, D_MODEL, D_MODEL), bvec(BI_CA_O, D_MODEL))
        x = _layernorm(x + ca, bvec(BI_LN2_G, D_MODEL), bvec(BI_LN2_B, D_MODEL))

        # --- feed forward ---
        h = (jnp.dot(x, wmat(LW_FF1, D_MODEL, DIM_FF),
                     preferred_element_type=jnp.float32) + bvec(BI_FF1, DIM_FF))
        h = jnp.maximum(h, 0.0)
        ff = (jnp.dot(h, wmat(LW_FF2, DIM_FF, D_MODEL),
                      preferred_element_type=jnp.float32) + bvec(BI_FF2, D_MODEL))
        x = _layernorm(x + ff, bvec(BI_LN3_G, D_MODEL), bvec(BI_LN3_B, D_MODEL))

    # ---- vocab projection (padded to 128 lanes -> lane-dense stores) ----
    out_ref[...] = (jnp.dot(x, gslab_ref[G_PROJW:G_PROJW + D_MODEL, :],
                            preferred_element_type=jnp.float32)
                    + gslab_ref[G_PROJB:G_PROJB + 1, :])


# ----------------------------------------------------------------------------
# Host-side glue
# ----------------------------------------------------------------------------
def word_pos_enc(seq_len, d_model, temperature=10000.0):
    pos = jnp.arange(seq_len, dtype=jnp.float32)
    dim_t = jnp.arange(0, d_model, 2, dtype=jnp.float32)
    div = 1.0 / (temperature ** (dim_t / d_model))
    ang = pos[:, None] * div[None, :]                         # (L, D/2)
    pe = jnp.zeros((seq_len, d_model), jnp.float32)
    pe = pe.at[:, 0::2].set(jnp.sin(ang))
    pe = pe.at[:, 1::2].set(jnp.cos(ang))
    return pe


def _cost_estimate():
    m, n, d, f = M_TOT, N_MEM, D_MODEL, DIM_FF
    mm = lambda a, b, c: 2 * a * b * c
    per_layer = (mm(m, d, 3 * d) + mm(m, d, m) + mm(m, m, d) + mm(m, d, d)
                 + mm(m, d, d) + mm(n, d, 2 * d) + mm(m, d, n) + mm(m, n, d)
                 + mm(m, d, d) + mm(m, d, f) + mm(m, f, d))
    flops = NUM_LAYERS * per_layer + mm(m, VOCAB_PAD, d) + mm(m, d, VOCAB_PAD)
    transcendentals = NUM_LAYERS * NHEAD * m * (m + n)
    bytes_accessed = 4 * (NUM_LAYERS * LAYER_ROWS * 128 + G_ROWS * 128
                          + DS_ROWS * DS_COLS + 2 * m + m * VOCAB_PAD)
    return pl.CostEstimate(flops=flops, transcendentals=transcendentals,
                           bytes_accessed=bytes_accessed)


def decoder_forward(packed, src, src_mask, tgt):
    """src:(B,S,D) f32, src_mask:(B,S) bool (True=pad), tgt:(B,L) int32."""
    b, l = tgt.shape
    s = src.shape[1]
    m_tot, n_mem = b * l, b * s

    ids = tgt.astype(jnp.int32)
    ids_col = ids.reshape(m_tot, 1)
    ids_row = ids.reshape(1, m_tot)

    # per-call data slab: encoder memory + src pad flags (float)
    dslab = jnp.zeros((DS_ROWS, DS_COLS), jnp.float32)
    dslab = dslab.at[DS_SRC:DS_SRC + n_mem, 0:D_MODEL].set(
        src.reshape(n_mem, D_MODEL))
    dslab = dslab.at[DS_SRCPAD, 0:n_mem].set(
        src_mask.astype(jnp.float32).reshape(n_mem))

    logits_pad = pl.pallas_call(
        _decoder_kernel,
        out_shape=jax.ShapeDtypeStruct((m_tot, VOCAB_PAD), jnp.float32),
        in_specs=[pl.BlockSpec(memory_space=pltpu.MemorySpace.VMEM)] * 5,
        out_specs=pl.BlockSpec(memory_space=pltpu.MemorySpace.VMEM),
        cost_estimate=_cost_estimate(),
    )(ids_col, ids_row, dslab, packed["lslab"], packed["gslab"])

    return logits_pad[:, :VOCAB_SIZE].reshape(b, l, VOCAB_SIZE)


# ----------------------------------------------------------------------------
# Deterministic parameter init + slab packing
# ----------------------------------------------------------------------------
def init_params(key):
    keys = iter(jax.random.split(key, 64))

    def normal(shape, scale=0.02):
        return scale * jax.random.normal(next(keys), shape, dtype=jnp.float32)

    def attn_params():
        return {
            "wq": normal((D_MODEL, D_MODEL)), "bq": jnp.zeros((D_MODEL,), jnp.float32),
            "wk": normal((D_MODEL, D_MODEL)), "bk": jnp.zeros((D_MODEL,), jnp.float32),
            "wv": normal((D_MODEL, D_MODEL)), "bv": jnp.zeros((D_MODEL,), jnp.float32),
            "wo": normal((D_MODEL, D_MODEL)), "bo": jnp.zeros((D_MODEL,), jnp.float32),
        }

    layers = []
    for _ in range(NUM_LAYERS):
        layers.append({
            "self_attn": attn_params(),
            "cross_attn": attn_params(),
            "w1": normal((D_MODEL, DIM_FF)), "b1": jnp.zeros((DIM_FF,), jnp.float32),
            "w2": normal((DIM_FF, D_MODEL)), "b2": jnp.zeros((D_MODEL,), jnp.float32),
            "ln1_g": jnp.ones((D_MODEL,), jnp.float32), "ln1_b": jnp.zeros((D_MODEL,), jnp.float32),
            "ln2_g": jnp.ones((D_MODEL,), jnp.float32), "ln2_b": jnp.zeros((D_MODEL,), jnp.float32),
            "ln3_g": jnp.ones((D_MODEL,), jnp.float32), "ln3_b": jnp.zeros((D_MODEL,), jnp.float32),
        })

    return {
        "embed": normal((VOCAB_SIZE, D_MODEL), scale=1.0),
        "embed_ln_g": jnp.ones((D_MODEL,), jnp.float32),
        "embed_ln_b": jnp.zeros((D_MODEL,), jnp.float32),
        "layers": layers,
        "proj_w": normal((D_MODEL, VOCAB_SIZE)),
        "proj_b": jnp.zeros((VOCAB_SIZE,), jnp.float32),
    }


def pack_params(p):
    """Fuse QKV/KV, fold 1/sqrt(Dh) into Q, and pack everything into 2 slabs."""
    scale = DH ** -0.5

    # ---- per-layer weight/bias slab ----
    lslab = jnp.zeros((NUM_LAYERS, LAYER_ROWS, 128), jnp.float32)
    for i, lyr in enumerate(p["layers"]):
        sa, ca = lyr["self_attn"], lyr["cross_attn"]
        w_qkv = jnp.concatenate([sa["wq"] * scale, sa["wk"], sa["wv"]], axis=1)
        b_qkv = jnp.concatenate([sa["bq"] * scale, sa["bk"], sa["bv"]])
        w_kv = jnp.concatenate([ca["wk"], ca["wv"]], axis=1)
        b_kv = jnp.concatenate([ca["bk"], ca["bv"]])

        lslab = lslab.at[i, LW_SA_QKV:LW_SA_QKV + D_MODEL, :3 * D_MODEL].set(w_qkv)
        lslab = lslab.at[i, LW_SA_O:LW_SA_O + D_MODEL, :D_MODEL].set(sa["wo"])
        lslab = lslab.at[i, LW_CA_Q:LW_CA_Q + D_MODEL, :D_MODEL].set(ca["wq"] * scale)
        lslab = lslab.at[i, LW_CA_KV:LW_CA_KV + D_MODEL, :2 * D_MODEL].set(w_kv)
        lslab = lslab.at[i, LW_CA_O:LW_CA_O + D_MODEL, :D_MODEL].set(ca["wo"])
        lslab = lslab.at[i, LW_FF1:LW_FF1 + D_MODEL, :DIM_FF].set(lyr["w1"])
        lslab = lslab.at[i, LW_FF2:LW_FF2 + DIM_FF, :D_MODEL].set(lyr["w2"])

        bias_rows = {
            BI_SA_QKV: b_qkv, BI_SA_O: sa["bo"],
            BI_LN1_G: lyr["ln1_g"], BI_LN1_B: lyr["ln1_b"],
            BI_CA_Q: ca["bq"] * scale, BI_CA_KV: b_kv, BI_CA_O: ca["bo"],
            BI_LN2_G: lyr["ln2_g"], BI_LN2_B: lyr["ln2_b"],
            BI_FF1: lyr["b1"], BI_FF2: lyr["b2"],
            BI_LN3_G: lyr["ln3_g"], BI_LN3_B: lyr["ln3_b"],
        }
        for r, vec in bias_rows.items():
            lslab = lslab.at[i, LB_BASE + r, :vec.shape[0]].set(vec)

    # ---- global slab: embed / proj / emb-LN / PE / structural masks ----
    gslab = jnp.zeros((G_ROWS, 128), jnp.float32)
    gslab = gslab.at[G_EMBED:G_EMBED + VOCAB_SIZE, :D_MODEL].set(p["embed"])
    gslab = gslab.at[G_PROJW:G_PROJW + D_MODEL, :VOCAB_SIZE].set(p["proj_w"])
    gslab = gslab.at[G_PROJB, :VOCAB_SIZE].set(p["proj_b"])
    gslab = gslab.at[G_ELN_G, :D_MODEL].set(p["embed_ln_g"])
    gslab = gslab.at[G_ELN_B, :D_MODEL].set(p["embed_ln_b"])
    pe = word_pos_enc(L, D_MODEL)
    gslab = gslab.at[G_PE:G_PE + M_TOT, :D_MODEL].set(jnp.tile(pe, (B, 1)))

    # structural masks for the merged (B*L) query layout:
    #   self-attn: causal within a batch element + cross-batch blocked
    #   cross-attn: cross-batch blocked
    qi = jnp.arange(M_TOT)
    self_blocked = ((qi[:, None] // L != qi[None, :] // L)
                    | (qi[None, :] % L > qi[:, None] % L))
    gslab = gslab.at[G_SELFM:G_SELFM + M_TOT, :M_TOT].set(
        jnp.where(self_blocked, NEG_INF, 0.0))
    ki = jnp.arange(N_MEM)
    mem_blocked = qi[:, None] // L != ki[None, :] // S
    gslab = gslab.at[G_MEMM:G_MEMM + M_TOT, :N_MEM].set(
        jnp.where(mem_blocked, NEG_INF, 0.0))

    return {"lslab": lslab, "gslab": gslab}


# ----------------------------------------------------------------------------
# Main
# ----------------------------------------------------------------------------
if __name__ == "__main__":
    key = jax.random.PRNGKey(0)
    k_par, k_src, k_tgt = jax.random.split(key, 3)

    packed = pack_params(init_params(k_par))

    # encoder memory + its padding mask (True = padded)
    src = jax.random.normal(k_src, (B, S, D_MODEL), dtype=jnp.float32)
    src_mask = jnp.zeros((B, S), dtype=bool).at[:, S - 3:].set(True)

    # target token ids, with trailing PAD tokens to exercise tgt_pad_mask
    tgt = jax.random.randint(k_tgt, (B, L), 1, VOCAB_SIZE).astype(jnp.int32)
    tgt = tgt.at[:, L - 2:].set(PAD_IDX)

    # TODO(synk): beam_search (autoregressive loop with topk / hypothesis
    # bookkeeping) and the return_attention_weights path are host-side control
    # flow, not implemented as a kernel.
    forward = jax.jit(decoder_forward)
    logits = forward(packed, src, src_mask, tgt)
    jax.block_until_ready(logits)

    assert logits.shape == (B, L, VOCAB_SIZE)
    assert bool(jnp.all(jnp.isfinite(logits)))
    print("KERNEL_OK")
</pallas_src>

<mosaic_0001>
module attributes {stable_mosaic.version = 11 : i64} {
  func.func @_decoder_kernel(%arg0: memref<16x1xi32, #tpu.memory_space<vmem>>, %arg1: memref<1x16xi32, #tpu.memory_space<vmem>>, %arg2: memref<40x32xf32, #tpu.memory_space<vmem>>, %arg3: memref<2x272x128xf32, #tpu.memory_space<vmem>>, %arg4: memref<216x128xf32, #tpu.memory_space<vmem>>, %arg5: memref<16x128xf32, #tpu.memory_space<vmem>>) attributes {dimension_semantics = [], scalar_prefetch = 0 : i64, scratch_operands = 0 : i64, tpu.core_type = #tpu.core_type<tc>} {
    %c0 = arith.constant 0 : index
    %c0_0 = arith.constant 0 : index
    %0 = vector.load %arg0[%c0, %c0_0] : memref<16x1xi32, #tpu.memory_space<vmem>>, vector<16x1xi32>
    %c0_1 = arith.constant 0 : index
    %c0_2 = arith.constant 0 : index
    %1 = vector.load %arg1[%c0_1, %c0_2] : memref<1x16xi32, #tpu.memory_space<vmem>>, vector<1x16xi32>
    %c0_3 = arith.constant 0 : index
    %c0_4 = arith.constant 0 : index
    %2 = vector.load %arg2[%c0_3, %c0_4] : memref<40x32xf32, #tpu.memory_space<vmem>>, vector<32x32xf32>
    %c32 = arith.constant 32 : index
    %c0_5 = arith.constant 0 : index
    %3 = vector.load %arg2[%c32, %c0_5] : memref<40x32xf32, #tpu.memory_space<vmem>>, vector<1x32xf32>
    %4 = tpu.iota {dimensions = array<i32: 1>} : vector<16x128xi32>
    %5 = vector.broadcast %0 : vector<16x1xi32> to vector<16x128xi32>
    %6 = arith.cmpi eq, %4, %5 : vector<16x128xi32>
    %7 = arith.extui %6 : vector<16x128xi1> to vector<16x128xi32>
    %8 = arith.sitofp %7 : vector<16x128xi32> to vector<16x128xf32>
    %c0_6 = arith.constant 0 : index
    %c0_7 = arith.constant 0 : index
    %9 = vector.load %arg4[%c0_6, %c0_7] : memref<216x128xf32, #tpu.memory_space<vmem>>, vector<128x32xf32>
    %cst = arith.constant dense<0.000000e+00> : vector<16x32xf32>
    %10 = tpu.matmul %8, %9, %cst {dimension_numbers = #tpu.dot_dimension_numbers<[1], [0], [0], [1], [0, 0, 1, 1], [], []>} : vector<16x128xf32>, vector<128x32xf32>, vector<16x32xf32> -> vector<16x32xf32>
    %c161 = arith.constant 161 : index
    %c0_8 = arith.constant 0 : index
    %11 = vector.load %arg4[%c161, %c0_8] : memref<216x128xf32, #tpu.memory_space<vmem>>, vector<1x32xf32>
    %c162 = arith.constant 162 : index
    %c0_9 = arith.constant 0 : index
    %12 = vector.load %arg4[%c162, %c0_9] : memref<216x128xf32, #tpu.memory_space<vmem>>, vector<1x32xf32>
    %cst_10 = arith.constant dense<0.000000e+00> : vector<16xf32>
    %13 = vector.multi_reduction <add>, %10, %cst_10 [1] : vector<16x32xf32> to vector<16xf32>
    %14 = vector.shape_cast %13 : vector<16xf32> to vector<16x1xf32>
    %cst_11 = arith.constant 3.200000e+01 : f32
    %15 = vector.broadcast %cst_11 : f32 to vector<16x1xf32>
    %16 = arith.divf %14, %15 : vector<16x1xf32>
    %17 = vector.broadcast %16 : vector<16x1xf32> to vector<16x32xf32>
    %18 = arith.subf %10, %17 : vector<16x32xf32>
    %19 = arith.mulf %18, %18 : vector<16x32xf32>
    %cst_12 = arith.constant dense<0.000000e+00> : vector<16xf32>
    %20 = vector.multi_reduction <add>, %19, %cst_12 [1] : vector<16x32xf32> to vector<16xf32>
    %21 = vector.shape_cast %20 : vector<16xf32> to vector<16x1xf32>
    %cst_13 = arith.constant 3.200000e+01 : f32
    %22 = vector.broadcast %cst_13 : f32 to vector<16x1xf32>
    %23 = arith.divf %21, %22 : vector<16x1xf32>
    %24 = vector.broadcast %16 : vector<16x1xf32> to vector<16x32xf32>
    %25 = arith.subf %10, %24 : vector<16x32xf32>
    %cst_14 = arith.constant 9.99999974E-6 : f32
    %26 = vector.broadcast %cst_14 : f32 to vector<16x1xf32>
    %27 = arith.addf %23, %26 : vector<16x1xf32>
    %28 = math.rsqrt %27 : vector<16x1xf32>
    %29 = vector.broadcast %28 : vector<16x1xf32> to vector<16x32xf32>
    %30 = arith.mulf %25, %29 : vector<16x32xf32>
    %31 = vector.broadcast %11 : vector<1x32xf32> to vector<16x32xf32>
    %32 = arith.mulf %30, %31 : vector<16x32xf32>
    %33 = vector.broadcast %12 : vector<1x32xf32> to vector<16x32xf32>
    %34 = arith.addf %32, %33 : vector<16x32xf32>
    %c168 = arith.constant 168 : index
    %c0_15 = arith.constant 0 : index
    %35 = vector.load %arg4[%c168, %c0_15] : memref<216x128xf32, #tpu.memory_space<vmem>>, vector<16x32xf32>
    %36 = arith.addf %34, %35 : vector<16x32xf32>
    %c184 = arith.constant 184 : index
    %c0_16 = arith.constant 0 : index
    %37 = vector.load %arg4[%c184, %c0_16] : memref<216x128xf32, #tpu.memory_space<vmem>>, vector<16x16xf32>
    %c0_i32 = arith.constant 0 : i32
    %38 = vector.broadcast %c0_i32 : i32 to vector<1x16xi32>
    %39 = arith.cmpi eq, %1, %38 : vector<1x16xi32>
    %cst_17 = arith.constant -1.000000e+30 : f32
    %cst_18 = arith.constant 0.000000e+00 : f32
    %40 = vector.broadcast %cst_17 : f32 to vector<1x16xf32>
    %41 = vector.broadcast %cst_18 : f32 to vector<1x16xf32>
    %42 = arith.select %39, %40, %41 : vector<1x16xi1>, vector<1x16xf32>
    %43 = vector.broadcast %42 : vector<1x16xf32> to vector<16x16xf32>
    %44 = arith.addf %37, %43 : vector<16x16xf32>
    %c200 = arith.constant 200 : index
    %c0_19 = arith.constant 0 : index
    %45 = vector.load %arg4[%c200, %c0_19] : memref<216x128xf32, #tpu.memory_space<vmem>>, vector<16x32xf32>
    %cst_20 = arith.constant 0.000000e+00 : f32
    %46 = vector.broadcast %cst_20 : f32 to vector<1x32xf32>
    %47 = arith.cmpf one, %3, %46 : vector<1x32xf32>
    %cst_21 = arith.constant -1.000000e+30 : f32
    %cst_22 = arith.constant 0.000000e+00 : f32
    %48 = vector.broadcast %cst_21 : f32 to vector<1x32xf32>
    %49 = vector.broadcast %cst_22 : f32 to vector<1x32xf32>
    %50 = arith.select %47, %48, %49 : vector<1x32xi1>, vector<1x32xf32>
    %51 = vector.broadcast %50 : vector<1x32xf32> to vector<16x32xf32>
    %52 = arith.addf %45, %51 : vector<16x32xf32>
    %c0_23 = arith.constant 0 : index
    %c0_24 = arith.constant 0 : index
    %c0_25 = arith.constant 0 : index
    %53 = vector.load %arg3[%c0_23, %c0_24, %c0_25] : memref<2x272x128xf32, #tpu.memory_space<vmem>>, vector<1x32x96xf32>
    %54 = vector.shape_cast %53 : vector<1x32x96xf32> to vector<32x96xf32>
    %cst_26 = arith.constant dense<0.000000e+00> : vector<16x96xf32>
    %55 = tpu.matmul %36, %54, %cst_26 {dimension_numbers = #tpu.dot_dimension_numbers<[1], [0], [0], [1], [0, 0, 1, 1], [], []>} : vector<16x32xf32>, vector<32x96xf32>, vector<16x96xf32> -> vector<16x96xf32>
    %c0_27 = arith.constant 0 : index
    %c256 = arith.constant 256 : index
    %c0_28 = arith.constant 0 : index
    %56 = vector.load %arg3[%c0_27, %c256, %c0_28] : memref<2x272x128xf32, #tpu.memory_space<vmem>>, vector<1x1x96xf32>
    %57 = vector.shape_cast %56 : vector<1x1x96xf32> to vector<1x96xf32>
    %58 = vector.broadcast %57 : vector<1x96xf32> to vector<16x96xf32>
    %59 = arith.addf %55, %58 : vector<16x96xf32>
    %60 = vector.extract_strided_slice %59 {offsets = [0, 0], sizes = [16, 32], strides = [1, 1]} : vector<16x96xf32> to vector<16x32xf32>
    %61 = vector.extract_strided_slice %59 {offsets = [0, 32], sizes = [16, 32], strides = [1, 1]} : vector<16x96xf32> to vector<16x32xf32>
    %62 = vector.extract_strided_slice %59 {offsets = [0, 64], sizes = [16, 32], strides = [1, 1]} : vector<16x96xf32> to vector<16x32xf32>
    %c0_29 = arith.constant 0 : index
    %c32_30 = arith.constant 32 : index
    %c0_31 = arith.constant 0 : index
    %63 = vector.load %arg3[%c0_29, %c32_30, %c0_31] : memref<2x272x128xf32, #tpu.memory_space<vmem>>, vector<1x32x32xf32>
    %64 = vector.shape_cast %63 : vector<1x32x32xf32> to vector<32x32xf32>
    %c0_32 = arith.constant 0 : index
    %c257 = arith.constant 257 : index
    %c0_33 = arith.constant 0 : index
    %65 = vector.load %arg3[%c0_32, %c257, %c0_33] : memref<2x272x128xf32, #tpu.memory_space<vmem>>, vector<1x1x32xf32>
    %66 = vector.shape_cast %65 : vector<1x1x32xf32> to vector<1x32xf32>
    %67 = tpu.transpose %61, [1, 0] : vector<16x32xf32> -> vector<32x16xf32>
    %68 = vector.extract_strided_slice %60 {offsets = [0, 0], sizes = [16, 8], strides = [1, 1]} : vector<16x32xf32> to vector<16x8xf32>
    %69 = vector.extract_strided_slice %67 {offsets = [0, 0], sizes = [8, 16], strides = [1, 1]} : vector<32x16xf32> to vector<8x16xf32>
    %cst_34 = arith.constant dense<0.000000e+00> : vector<16x16xf32>
    %70 = tpu.matmul %68, %69, %cst_34 {dimension_numbers = #tpu.dot_dimension_numbers<[1], [0], [0], [1], [0, 0, 1, 1], [], []>} : vector<16x8xf32>, vector<8x16xf32>, vector<16x16xf32> -> vector<16x16xf32>
    %71 = vector.extract_strided_slice %60 {offsets = [0, 8], sizes = [16, 8], strides = [1, 1]} : vector<16x32xf32> to vector<16x8xf32>
    %72 = vector.extract_strided_slice %67 {offsets = [8, 0], sizes = [8, 16], strides = [1, 1]} : vector<32x16xf32> to vector<8x16xf32>
    %cst_35 = arith.constant dense<0.000000e+00> : vector<16x16xf32>
    %73 = tpu.matmul %71, %72, %cst_35 {dimension_numbers = #tpu.dot_dimension_numbers<[1], [0], [0], [1], [0, 0, 1, 1], [], []>} : vector<16x8xf32>, vector<8x16xf32>, vector<16x16xf32> -> vector<16x16xf32>
    %74 = vector.extract_strided_slice %60 {offsets = [0, 16], sizes = [16, 8], strides = [1, 1]} : vector<16x32xf32> to vector<16x8xf32>
    %75 = vector.extract_strided_slice %67 {offsets = [16, 0], sizes = [8, 16], strides = [1, 1]} : vector<32x16xf32> to vector<8x16xf32>
    %cst_36 = arith.constant dense<0.000000e+00> : vector<16x16xf32>
    %76 = tpu.matmul %74, %75, %cst_36 {dimension_numbers = #tpu.dot_dimension_numbers<[1], [0], [0], [1], [0, 0, 1, 1], [], []>} : vector<16x8xf32>, vector<8x16xf32>, vector<16x16xf32> -> vector<16x16xf32>
    %77 = vector.extract_strided_slice %60 {offsets = [0, 24], sizes = [16, 8], strides = [1, 1]} : vector<16x32xf32> to vector<16x8xf32>
    %78 = vector.extract_strided_slice %67 {offsets = [24, 0], sizes = [8, 16], strides = [1, 1]} : vector<32x16xf32> to vector<8x16xf32>
    %cst_37 = arith.constant dense<0.000000e+00> : vector<16x16xf32>
    %79 = tpu.matmul %77, %78, %cst_37 {dimension_numbers = #tpu.dot_dimension_numbers<[1], [0], [0], [1], [0, 0, 1, 1], [], []>} : vector<16x8xf32>, vector<8x16xf32>, vector<16x16xf32> -> vector<16x16xf32>
    %80 = tpu.concatenate %70, %73, %76, %79 in 0 : vector<16x16xf32>, vector<16x16xf32>, vector<16x16xf32>, vector<16x16xf32> -> vector<64x16xf32>
    %81 = tpu.concatenate %44, %44, %44, %44 in 0 : vector<16x16xf32>, vector<16x16xf32>, vector<16x16xf32>, vector<16x16xf32> -> vector<64x16xf32>
    %82 = arith.addf %80, %81 : vector<64x16xf32>
    %cst_38 = arith.constant dense<0xFF800000> : vector<64xf32>
    %83 = vector.multi_reduction <maximumf>, %82, %cst_38 [1] : vector<64x16xf32> to vector<64xf32>
    %84 = vector.shape_cast %83 : vector<64xf32> to vector<64x1xf32>
    %85 = vector.broadcast %84 : vector<64x1xf32> to vector<64x16xf32>
    %86 = arith.subf %82, %85 : vector<64x16xf32>
    %87 = math.exp %86 : vector<64x16xf32>
    %cst_39 = arith.constant dense<0.000000e+00> : vector<64xf32>
    %88 = vector.multi_reduction <add>, %87, %cst_39 [1] : vector<64x16xf32> to vector<64xf32>
    %89 = vector.shape_cast %88 : vector<64xf32> to vector<64x1xf32>
    %90 = tpu.reciprocal %89 {approx = true} : vector<64x1xf32> -> vector<64x1xf32>
    %91 = vector.broadcast %90 : vector<64x1xf32> to vector<64x16xf32>
    %92 = arith.mulf %87, %91 : vector<64x16xf32>
    %cst_40 = arith.constant -5.000000e+29 : f32
    %93 = vector.broadcast %cst_40 : f32 to vector<64x1xf32>
    %94 = arith.cmpf ole, %84, %93 : vector<64x1xf32>
    %cst_41 = arith.constant 0.000000e+00 : f32
    %95 = vector.shape_cast %94 : vector<64x1xi1> to vector<64x1xi1>
    %96 = vector.broadcast %95 : vector<64x1xi1> to vector<64x16xi1>
    %97 = vector.broadcast %cst_41 : f32 to vector<64x16xf32>
    %98 = arith.select %96, %97, %92 : vector<64x16xi1>, vector<64x16xf32>
    %99 = vector.extract_strided_slice %98 {offsets = [0, 0], sizes = [16, 16], strides = [1, 1]} : vector<64x16xf32> to vector<16x16xf32>
    %100 = vector.extract_strided_slice %62 {offsets = [0, 0], sizes = [16, 8], strides = [1, 1]} : vector<16x32xf32> to vector<16x8xf32>
    %cst_42 = arith.constant dense<0.000000e+00> : vector<16x8xf32>
    %101 = tpu.matmul %99, %100, %cst_42 {dimension_numbers = #tpu.dot_dimension_numbers<[1], [0], [0], [1], [0, 0, 1, 1], [], []>} : vector<16x16xf32>, vector<16x8xf32>, vector<16x8xf32> -> vector<16x8xf32>
    %102 = vector.extract_strided_slice %98 {offsets = [16, 0], sizes = [16, 16], strides = [1, 1]} : vector<64x16xf32> to vector<16x16xf32>
    %103 = vector.extract_strided_slice %62 {offsets = [0, 8], sizes = [16, 8], strides = [1, 1]} : vector<16x32xf32> to vector<16x8xf32>
    %cst_43 = arith.constant dense<0.000000e+00> : vector<16x8xf32>
    %104 = tpu.matmul %102, %103, %cst_43 {dimension_numbers = #tpu.dot_dimension_numbers<[1], [0], [0], [1], [0, 0, 1, 1], [], []>} : vector<16x16xf32>, vector<16x8xf32>, vector<16x8xf32> -> vector<16x8xf32>
    %105 = vector.extract_strided_slice %98 {offsets = [32, 0], sizes = [16, 16], strides = [1, 1]} : vector<64x16xf32> to vector<16x16xf32>
    %106 = vector.extract_strided_slice %62 {offsets = [0, 16], sizes = [16, 8], strides = [1, 1]} : vector<16x32xf32> to vector<16x8xf32>
    %cst_44 = arith.constant dense<0.000000e+00> : vector<16x8xf32>
    %107 = tpu.matmul %105, %106, %cst_44 {dimension_numbers = #tpu.dot_dimension_numbers<[1], [0], [0], [1], [0, 0, 1, 1], [], []>} : vector<16x16xf32>, vector<16x8xf32>, vector<16x8xf32> -> vector<16x8xf32>
    %108 = vector.extract_strided_slice %98 {offsets = [48, 0], sizes = [16, 16], strides = [1, 1]} : vector<64x16xf32> to vector<16x16xf32>
    %109 = vector.extract_strided_slice %62 {offsets = [0, 24], sizes = [16, 8], strides = [1, 1]} : vector<16x32xf32> to vector<16x8xf32>
    %cst_45 = arith.constant dense<0.000000e+00> : vector<16x8xf32>
    %110 = tpu.matmul %108, %109, %cst_45 {dimension_numbers = #tpu.dot_dimension_numbers<[1], [0], [0], [1], [0, 0, 1, 1], [], []>} : vector<16x16xf32>, vector<16x8xf32>, vector<16x8xf32> -> vector<16x8xf32>
    %111 = tpu.concatenate %101, %104, %107, %110 in 1 : vector<16x8xf32>, vector<16x8xf32>, vector<16x8xf32>, vector<16x8xf32> -> vector<16x32xf32>
    %cst_46 = arith.constant dense<0.000000e+00> : vector<16x32xf32>
    %112 = tpu.matmul %111, %64, %cst_46 {dimension_numbers = #tpu.dot_dimension_numbers<[1], [0], [0], [1], [0, 0, 1, 1], [], []>} : vector<16x32xf32>, vector<32x32xf32>, vector<16x32xf32> -> vector<16x32xf32>
    %113 = vector.broadcast %66 : vector<1x32xf32> to vector<16x32xf32>
    %114 = arith.addf %112, %113 : vector<16x32xf32>
    %115 = arith.addf %36, %114 : vector<16x32xf32>
    %c0_47 = arith.constant 0 : index
    %c258 = arith.constant 258 : index
    %c0_48 = arith.constant 0 : index
    %116 = vector.load %arg3[%c0_47, %c258, %c0_48] : memref<2x272x128xf32, #tpu.memory_space<vmem>>, vector<1x1x32xf32>
    %117 = vector.shape_cast %116 : vector<1x1x32xf32> to vector<1x32xf32>
    %c0_49 = arith.constant 0 : index
    %c259 = arith.constant 259 : index
    %c0_50 = arith.constant 0 : index
    %118 = vector.load %arg3[%c0_49, %c259, %c0_50] : memref<2x272x128xf32, #tpu.memory_space<vmem>>, vector<1x1x32xf32>
    %119 = vector.shape_cast %118 : vector<1x1x32xf32> to vector<1x32xf32>
    %cst_51 = arith.constant dense<0.000000e+00> : vector<16xf32>
    %120 = vector.multi_reduction <add>, %115, %cst_51 [1] : vector<16x32xf32> to vector<16xf32>
    %121 = vector.shape_cast %120 : vector<16xf32> to vector<16x1xf32>
    %cst_52 = arith.constant 3.200000e+01 : f32
    %122 = vector.broadcast %cst_52 : f32 to vector<16x1xf32>
    %123 = arith.divf %121, %122 : vector<16x1xf32>
    %124 = vector.broadcast %123 : vector<16x1xf32> to vector<16x32xf32>
    %125 = arith.subf %115, %124 : vector<16x32xf32>
    %126 = arith.mulf %125, %125 : vector<16x32xf32>
    %cst_53 = arith.constant dense<0.000000e+00> : vector<16xf32>
    %127 = vector.multi_reduction <add>, %126, %cst_53 [1] : vector<16x32xf32> to vector<16xf32>
    %128 = vector.shape_cast %127 : vector<16xf32> to vector<16x1xf32>
    %cst_54 = arith.constant 3.200000e+01 : f32
    %129 = vector.broadcast %cst_54 : f32 to vector<16x1xf32>
    %130 = arith.divf %128, %129 : vector<16x1xf32>
    %131 = vector.broadcast %123 : vector<16x1xf32> to vector<16x32xf32>
    %132 = arith.subf %115, %131 : vector<16x32xf32>
    %cst_55 = arith.constant 9.99999974E-6 : f32
    %133 = vector.broadcast %cst_55 : f32 to vector<16x1xf32>
    %134 = arith.addf %130, %133 : vector<16x1xf32>
    %135 = math.rsqrt %134 : vector<16x1xf32>
    %136 = vector.broadcast %135 : vector<16x1xf32> to vector<16x32xf32>
    %137 = arith.mulf %132, %136 : vector<16x32xf32>
    %138 = vector.broadcast %117 : vector<1x32xf32> to vector<16x32xf32>
    %139 = arith.mulf %137, %138 : vector<16x32xf32>
    %140 = vector.broadcast %119 : vector<1x32xf32> to vector<16x32xf32>
    %141 = arith.addf %139, %140 : vector<16x32xf32>
    %c0_56 = arith.constant 0 : index
    %c64 = arith.constant 64 : index
    %c0_57 = arith.constant 0 : index
    %142 = vector.load %arg3[%c0_56, %c64, %c0_57] : memref<2x272x128xf32, #tpu.memory_space<vmem>>, vector<1x32x32xf32>
    %143 = vector.shape_cast %142 : vector<1x32x32xf32> to vector<32x32xf32>
    %cst_58 = arith.constant dense<0.000000e+00> : vector<16x32xf32>
    %144 = tpu.matmul %141, %143, %cst_58 {dimension_numbers = #tpu.dot_dimension_numbers<[1], [0], [0], [1], [0, 0, 1, 1], [], []>} : vector<16x32xf32>, vector<32x32xf32>, vector<16x32xf32> -> vector<16x32xf32>
    %c0_59 = arith.constant 0 : index
    %c260 = arith.constant 260 : index
    %c0_60 = arith.constant 0 : index
    %145 = vector.load %arg3[%c0_59, %c260, %c0_60] : memref<2x272x128xf32, #tpu.memory_space<vmem>>, vector<1x1x32xf32>
    %146 = vector.shape_cast %145 : vector<1x1x32xf32> to vector<1x32xf32>
    %147 = vector.broadcast %146 : vector<1x32xf32> to vector<16x32xf32>
    %148 = arith.addf %144, %147 : vector<16x32xf32>
    %c0_61 = arith.constant 0 : index
    %c96 = arith.constant 96 : index
    %c0_62 = arith.constant 0 : index
    %149 = vector.load %arg3[%c0_61, %c96, %c0_62] : memref<2x272x128xf32, #tpu.memory_space<vmem>>, vector<1x32x64xf32>
    %150 = vector.shape_cast %149 : vector<1x32x64xf32> to vector<32x64xf32>
    %cst_63 = arith.constant dense<0.000000e+00> : vector<32x64xf32>
    %151 = tpu.matmul %2, %150, %cst_63 {dimension_numbers = #tpu.dot_dimension_numbers<[1], [0], [0], [1], [0, 0, 1, 1], [], []>} : vector<32x32xf32>, vector<32x64xf32>, vector<32x64xf32> -> vector<32x64xf32>
    %c0_64 = arith.constant 0 : index
    %c261 = arith.constant 261 : index
    %c0_65 = arith.constant 0 : index
    %152 = vector.load %arg3[%c0_64, %c261, %c0_65] : memref<2x272x128xf32, #tpu.memory_space<vmem>>, vector<1x1x64xf32>
    %153 = vector.shape_cast %152 : vector<1x1x64xf32> to vector<1x64xf32>
    %154 = vector.broadcast %153 : vector<1x64xf32> to vector<32x64xf32>
    %155 = arith.addf %151, %154 : vector<32x64xf32>
    %156 = vector.extract_strided_slice %155 {offsets = [0, 0], sizes = [32, 32], strides = [1, 1]} : vector<32x64xf32> to vector<32x32xf32>
    %157 = vector.extract_strided_slice %155 {offsets = [0, 32], sizes = [32, 32], strides = [1, 1]} : vector<32x64xf32> to vector<32x32xf32>
    %c0_66 = arith.constant 0 : index
    %c128 = arith.constant 128 : index
    %c0_67 = arith.constant 0 : index
    %158 = vector.load %arg3[%c0_66, %c128, %c0_67] : memref<2x272x128xf32, #tpu.memory_space<vmem>>, vector<1x32x32xf32>
    %159 = vector.shape_cast %158 : vector<1x32x32xf32> to vector<32x32xf32>
    %c0_68 = arith.constant 0 : index
    %c262 = arith.constant 262 : index
    %c0_69 = arith.constant 0 : index
    %160 = vector.load %arg3[%c0_68, %c262, %c0_69] : memref<2x272x128xf32, #tpu.memory_space<vmem>>, vector<1x1x32xf32>
    %161 = vector.shape_cast %160 : vector<1x1x32xf32> to vector<1x32xf32>
    %162 = tpu.transpose %156, [1, 0] : vector<32x32xf32> -> vector<32x32xf32>
    %163 = vector.extract_strided_slice %148 {offsets = [0, 0], sizes = [16, 8], strides = [1, 1]} : vector<16x32xf32> to vector<16x8xf32>
    %164 = vector.extract_strided_slice %162 {offsets = [0, 0], sizes = [8, 32], strides = [1, 1]} : vector<32x32xf32> to vector<8x32xf32>
    %cst_70 = arith.constant dense<0.000000e+00> : vector<16x32xf32>
    %165 = tpu.matmul %163, %164, %cst_70 {dimension_numbers = #tpu.dot_dimension_numbers<[1], [0], [0], [1], [0, 0, 1, 1], [], []>} : vector<16x8xf32>, vector<8x32xf32>, vector<16x32xf32> -> vector<16x32xf32>
    %166 = vector.extract_strided_slice %148 {offsets = [0, 8], sizes = [16, 8], strides = [1, 1]} : vector<16x32xf32> to vector<16x8xf32>
    %167 = vector.extract_strided_slice %162 {offsets = [8, 0], sizes = [8, 32], strides = [1, 1]} : vector<32x32xf32> to vector<8x32xf32>
    %cst_71 = arith.constant dense<0.000000e+00> : vector<16x32xf32>
    %168 = tpu.matmul %166, %167, %cst_71 {dimension_numbers = #tpu.dot_dimension_numbers<[1], [0], [0], [1], [0, 0, 1, 1], [], []>} : vector<16x8xf32>, vector<8x32xf32>, vector<16x32xf32> -> vector<16x32xf32>
    %169 = vector.extract_strided_slice %148 {offsets = [0, 16], sizes = [16, 8], strides = [1, 1]} : vector<16x32xf32> to vector<16x8xf32>
    %170 = vector.extract_strided_slice %162 {offsets = [16, 0], sizes = [8, 32], strides = [1, 1]} : vector<32x32xf32> to vector<8x32xf32>
    %cst_72 = arith.constant dense<0.000000e+00> : vector<16x32xf32>
    %171 = tpu.matmul %169, %170, %cst_72 {dimension_numbers = #tpu.dot_dimension_numbers<[1], [0], [0], [1], [0, 0, 1, 1], [], []>} : vector<16x8xf32>, vector<8x32xf32>, vector<16x32xf32> -> vector<16x32xf32>
    %172 = vector.extract_strided_slice %148 {offsets = [0, 24], sizes = [16, 8], strides = [1, 1]} : vector<16x32xf32> to vector<16x8xf32>
    %173 = vector.extract_strided_slice %162 {offsets = [24, 0], sizes = [8, 32], strides = [1, 1]} : vector<32x32xf32> to vector<8x32xf32>
    %cst_73 = arith.constant dense<0.000000e+00> : vector<16x32xf32>
    %174 = tpu.matmul %172, %173, %cst_73 {dimension_numbers = #tpu.dot_dimension_numbers<[1], [0], [0], [1], [0, 0, 1, 1], [], []>} : vector<16x8xf32>, vector<8x32xf32>, vector<16x32xf32> -> vector<16x32xf32>
    %175 = tpu.concatenate %165, %168, %171, %174 in 0 : vector<16x32xf32>, vector<16x32xf32>, vector<16x32xf32>, vector<16x32xf32> -> vector<64x32xf32>
    %176 = tpu.concatenate %52, %52, %52, %52 in 0 : vector<16x32xf32>, vector<16x32xf32>, vector<16x32xf32>, vector<16x32xf32> -> vector<64x32xf32>
    %177 = arith.addf %175, %176 : vector<64x32xf32>
    %cst_74 = arith.constant dense<0xFF800000> : vector<64xf32>
    %178 = vector.multi_reduction <maximumf>, %177, %cst_74 [1] : vector<64x32xf32> to vector<64xf32>
    %179 = vector.shape_cast %178 : vector<64xf32> to vector<64x1xf32>
    %180 = vector.broadcast %179 : vector<64x1xf32> to vector<64x32xf32>
    %181 = arith.subf %177, %180 : vector<64x32xf32>
    %182 = math.exp %181 : vector<64x32xf32>
    %cst_75 = arith.constant dense<0.000000e+00> : vector<64xf32>
    %183 = vector.multi_reduction <add>, %182, %cst_75 [1] : vector<64x32xf32> to vector<64xf32>
    %184 = vector.shape_cast %183 : vector<64xf32> to vector<64x1xf32>
    %185 = tpu.reciprocal %184 {approx = true} : vector<64x1xf32> -> vector<64x1xf32>
    %186 = vector.broadcast %185 : vector<64x1xf32> to vector<64x32xf32>
    %187 = arith.mulf %182, %186 : vector<64x32xf32>
    %cst_76 = arith.constant -5.000000e+29 : f32
    %188 = vector.broadcast %cst_76 : f32 to vector<64x1xf32>
    %189 = arith.cmpf ole, %179, %188 : vector<64x1xf32>
    %cst_77 = arith.constant 0.000000e+00 : f32
    %190 = vector.shape_cast %189 : vector<64x1xi1> to vector<64x1xi1>
    %191 = vector.broadcast %190 : vector<64x1xi1> to vector<64x32xi1>
    %192 = vector.broadcast %cst_77 : f32 to vector<64x32xf32>
    %193 = arith.select %191, %192, %187 : vector<64x32xi1>, vector<64x32xf32>
    %194 = vector.extract_strided_slice %193 {offsets = [0, 0], sizes = [16, 32], strides = [1, 1]} : vector<64x32xf32> to vector<16x32xf32>
    %195 = vector.extract_strided_slice %157 {offsets = [0, 0], sizes = [32, 8], strides = [1, 1]} : vector<32x32xf32> to vector<32x8xf32>
    %cst_78 = arith.constant dense<0.000000e+00> : vector<16x8xf32>
    %196 = tpu.matmul %194, %195, %cst_78 {dimension_numbers = #tpu.dot_dimension_numbers<[1], [0], [0], [1], [0, 0, 1, 1], [], []>} : vector<16x32xf32>, vector<32x8xf32>, vector<16x8xf32> -> vector<16x8xf32>
    %197 = vector.extract_strided_slice %193 {offsets = [16, 0], sizes = [16, 32], strides = [1, 1]} : vector<64x32xf32> to vector<16x32xf32>
    %198 = vector.extract_strided_slice %157 {offsets = [0, 8], sizes = [32, 8], strides = [1, 1]} : vector<32x32xf32> to vector<32x8xf32>
    %cst_79 = arith.constant dense<0.000000e+00> : vector<16x8xf32>
    %199 = tpu.matmul %197, %198, %cst_79 {dimension_numbers = #tpu.dot_dimension_numbers<[1], [0], [0], [1], [0, 0, 1, 1], [], []>} : vector<16x32xf32>, vector<32x8xf32>, vector<16x8xf32> -> vector<16x8xf32>
    %200 = vector.extract_strided_slice %193 {offsets = [32, 0], sizes = [16, 32], strides = [1, 1]} : vector<64x32xf32> to vector<16x32xf32>
    %201 = vector.extract_strided_slice %157 {offsets = [0, 16], sizes = [32, 8], strides = [1, 1]} : vector<32x32xf32> to vector<32x8xf32>
    %cst_80 = arith.constant dense<0.000000e+00> : vector<16x8xf32>
    %202 = tpu.matmul %200, %201, %cst_80 {dimension_numbers = #tpu.dot_dimension_numbers<[1], [0], [0], [1], [0, 0, 1, 1], [], []>} : vector<16x32xf32>, vector<32x8xf32>, vector<16x8xf32> -> vector<16x8xf32>
    %203 = vector.extract_strided_slice %193 {offsets = [48, 0], sizes = [16, 32], strides = [1, 1]} : vector<64x32xf32> to vector<16x32xf32>
    %204 = vector.extract_strided_slice %157 {offsets = [0, 24], sizes = [32, 8], strides = [1, 1]} : vector<32x32xf32> to vector<32x8xf32>
    %cst_81 = arith.constant dense<0.000000e+00> : vector<16x8xf32>
    %205 = tpu.matmul %203, %204, %cst_81 {dimension_numbers = #tpu.dot_dimension_numbers<[1], [0], [0], [1], [0, 0, 1, 1], [], []>} : vector<16x32xf32>, vector<32x8xf32>, vector<16x8xf32> -> vector<16x8xf32>
    %206 = tpu.concatenate %196, %199, %202, %205 in 1 : vector<16x8xf32>, vector<16x8xf32>, vector<16x8xf32>, vector<16x8xf32> -> vector<16x32xf32>
    %cst_82 = arith.constant dense<0.000000e+00> : vector<16x32xf32>
    %207 = tpu.matmul %206, %159, %cst_82 {dimension_numbers = #tpu.dot_dimension_numbers<[1], [0], [0], [1], [0, 0, 1, 1], [], []>} : vector<16x32xf32>, vector<32x32xf32>, vector<16x32xf32> -> vector<16x32xf32>
    %208 = vector.broadcast %161 : vector<1x32xf32> to vector<16x32xf32>
    %209 = arith.addf %207, %208 : vector<16x32xf32>
    %210 = arith.addf %141, %209 : vector<16x32xf32>
    %c0_83 = arith.constant 0 : index
    %c263 = arith.constant 263 : index
    %c0_84 = arith.constant 0 : index
    %211 = vector.load %arg3[%c0_83, %c263, %c0_84] : memref<2x272x128xf32, #tpu.memory_space<vmem>>, vector<1x1x32xf32>
    %212 = vector.shape_cast %211 : vector<1x1x32xf32> to vector<1x32xf32>
    %c0_85 = arith.constant 0 : index
    %c264 = arith.constant 264 : index
    %c0_86 = arith.constant 0 : index
    %213 = vector.load %arg3[%c0_85, %c264, %c0_86] : memref<2x272x128xf32, #tpu.memory_space<vmem>>, vector<1x1x32xf32>
    %214 = vector.shape_cast %213 : vector<1x1x32xf32> to vector<1x32xf32>
    %cst_87 = arith.constant dense<0.000000e+00> : vector<16xf32>
    %215 = vector.multi_reduction <add>, %210, %cst_87 [1] : vector<16x32xf32> to vector<16xf32>
    %216 = vector.shape_cast %215 : vector<16xf32> to vector<16x1xf32>
    %cst_88 = arith.constant 3.200000e+01 : f32
    %217 = vector.broadcast %cst_88 : f32 to vector<16x1xf32>
    %218 = arith.divf %216, %217 : vector<16x1xf32>
    %219 = vector.broadcast %218 : vector<16x1xf32> to vector<16x32xf32>
    %220 = arith.subf %210, %219 : vector<16x32xf32>
    %221 = arith.mulf %220, %220 : vector<16x32xf32>
    %cst_89 = arith.constant dense<0.000000e+00> : vector<16xf32>
    %222 = vector.multi_reduction <add>, %221, %cst_89 [1] : vector<16x32xf32> to vector<16xf32>
    %223 = vector.shape_cast %222 : vector<16xf32> to vector<16x1xf32>
    %cst_90 = arith.constant 3.200000e+01 : f32
    %224 = vector.broadcast %cst_90 : f32 to vector<16x1xf32>
    %225 = arith.divf %223, %224 : vector<16x1xf32>
    %226 = vector.broadcast %218 : vector<16x1xf32> to vector<16x32xf32>
    %227 = arith.subf %210, %226 : vector<16x32xf32>
    %cst_91 = arith.constant 9.99999974E-6 : f32
    %228 = vector.broadcast %cst_91 : f32 to vector<16x1xf32>
    %229 = arith.addf %225, %228 : vector<16x1xf32>
    %230 = math.rsqrt %229 : vector<16x1xf32>
    %231 = vector.broadcast %230 : vector<16x1xf32> to vector<16x32xf32>
    %232 = arith.mulf %227, %231 : vector<16x32xf32>
    %233 = vector.broadcast %212 : vector<1x32xf32> to vector<16x32xf32>
    %234 = arith.mulf %232, %233 : vector<16x32xf32>
    %235 = vector.broadcast %214 : vector<1x32xf32> to vector<16x32xf32>
    %236 = arith.addf %234, %235 : vector<16x32xf32>
    %c0_92 = arith.constant 0 : index
    %c160 = arith.constant 160 : index
    %c0_93 = arith.constant 0 : index
    %237 = vector.load %arg3[%c0_92, %c160, %c0_93] : memref<2x272x128xf32, #tpu.memory_space<vmem>>, vector<1x32x64xf32>
    %238 = vector.shape_cast %237 : vector<1x32x64xf32> to vector<32x64xf32>
    %cst_94 = arith.constant dense<0.000000e+00> : vector<16x64xf32>
    %239 = tpu.matmul %236, %238, %cst_94 {dimension_numbers = #tpu.dot_dimension_numbers<[1], [0], [0], [1], [0, 0, 1, 1], [], []>} : vector<16x32xf32>, vector<32x64xf32>, vector<16x64xf32> -> vector<16x64xf32>
    %c0_95 = arith.constant 0 : index
    %c265 = arith.constant 265 : index
    %c0_96 = arith.constant 0 : index
    %240 = vector.load %arg3[%c0_95, %c265, %c0_96] : memref<2x272x128xf32, #tpu.memory_space<vmem>>, vector<1x1x64xf32>
    %241 = vector.shape_cast %240 : vector<1x1x64xf32> to vector<1x64xf32>
    %242 = vector.broadcast %241 : vector<1x64xf32> to vector<16x64xf32>
    %243 = arith.addf %239, %242 : vector<16x64xf32>
    %cst_97 = arith.constant 0.000000e+00 : f32
    %244 = vector.broadcast %cst_97 : f32 to vector<16x64xf32>
    %245 = arith.maximumf %243, %244 : vector<16x64xf32>
    %c0_98 = arith.constant 0 : index
    %c192 = arith.constant 192 : index
    %c0_99 = arith.constant 0 : index
    %246 = vector.load %arg3[%c0_98, %c192, %c0_99] : memref<2x272x128xf32, #tpu.memory_space<vmem>>, vector<1x64x32xf32>
    %247 = vector.shape_cast %246 : vector<1x64x32xf32> to vector<64x32xf32>
    %cst_100 = arith.constant dense<0.000000e+00> : vector<16x32xf32>
    %248 = tpu.matmul %245, %247, %cst_100 {dimension_numbers = #tpu.dot_dimension_numbers<[1], [0], [0], [1], [0, 0, 1, 1], [], []>} : vector<16x64xf32>, vector<64x32xf32>, vector<16x32xf32> -> vector<16x32xf32>
    %c0_101 = arith.constant 0 : index
    %c266 = arith.constant 266 : index
    %c0_102 = arith.constant 0 : index
    %249 = vector.load %arg3[%c0_101, %c266, %c0_102] : memref<2x272x128xf32, #tpu.memory_space<vmem>>, vector<1x1x32xf32>
    %250 = vector.shape_cast %249 : vector<1x1x32xf32> to vector<1x32xf32>
    %251 = vector.broadcast %250 : vector<1x32xf32> to vector<16x32xf32>
    %252 = arith.addf %248, %251 : vector<16x32xf32>
    %253 = arith.addf %236, %252 : vector<16x32xf32>
    %c0_103 = arith.constant 0 : index
    %c267 = arith.constant 267 : index
    %c0_104 = arith.constant 0 : index
    %254 = vector.load %arg3[%c0_103, %c267, %c0_104] : memref<2x272x128xf32, #tpu.memory_space<vmem>>, vector<1x1x32xf32>
    %255 = vector.shape_cast %254 : vector<1x1x32xf32> to vector<1x32xf32>
    %c0_105 = arith.constant 0 : index
    %c268 = arith.constant 268 : index
    %c0_106 = arith.constant 0 : index
    %256 = vector.load %arg3[%c0_105, %c268, %c0_106] : memref<2x272x128xf32, #tpu.memory_space<vmem>>, vector<1x1x32xf32>
    %257 = vector.shape_cast %256 : vector<1x1x32xf32> to vector<1x32xf32>
    %cst_107 = arith.constant dense<0.000000e+00> : vector<16xf32>
    %258 = vector.multi_reduction <add>, %253, %cst_107 [1] : vector<16x32xf32> to vector<16xf32>
    %259 = vector.shape_cast %258 : vector<16xf32> to vector<16x1xf32>
    %cst_108 = arith.constant 3.200000e+01 : f32
    %260 = vector.broadcast %cst_108 : f32 to vector<16x1xf32>
    %261 = arith.divf %259, %260 : vector<16x1xf32>
    %262 = vector.broadcast %261 : vector<16x1xf32> to vector<16x32xf32>
    %263 = arith.subf %253, %262 : vector<16x32xf32>
    %264 = arith.mulf %263, %263 : vector<16x32xf32>
    %cst_109 = arith.constant dense<0.000000e+00> : vector<16xf32>
    %265 = vector.multi_reduction <add>, %264, %cst_109 [1] : vector<16x32xf32> to vector<16xf32>
    %266 = vector.shape_cast %265 : vector<16xf32> to vector<16x1xf32>
    %cst_110 = arith.constant 3.200000e+01 : f32
    %267 = vector.broadcast %cst_110 : f32 to vector<16x1xf32>
    %268 = arith.divf %266, %267 : vector<16x1xf32>
    %269 = vector.broadcast %261 : vector<16x1xf32> to vector<16x32xf32>
    %270 = arith.subf %253, %269 : vector<16x32xf32>
    %cst_111 = arith.constant 9.99999974E-6 : f32
    %271 = vector.broadcast %cst_111 : f32 to vector<16x1xf32>
    %272 = arith.addf %268, %271 : vector<16x1xf32>
    %273 = math.rsqrt %272 : vector<16x1xf32>
    %274 = vector.broadcast %273 : vector<16x1xf32> to vector<16x32xf32>
    %275 = arith.mulf %270, %274 : vector<16x32xf32>
    %276 = vector.broadcast %255 : vector<1x32xf32> to vector<16x32xf32>
    %277 = arith.mulf %275, %276 : vector<16x32xf32>
    %278 = vector.broadcast %257 : vector<1x32xf32> to vector<16x32xf32>
    %279 = arith.addf %277, %278 : vector<16x32xf32>
    %c1 = arith.constant 1 : index
    %c0_112 = arith.constant 0 : index
    %c0_113 = arith.constant 0 : index
    %280 = vector.load %arg3[%c1, %c0_112, %c0_113] : memref<2x272x128xf32, #tpu.memory_space<vmem>>, vector<1x32x96xf32>
    %281 = vector.shape_cast %280 : vector<1x32x96xf32> to vector<32x96xf32>
    %cst_114 = arith.constant dense<0.000000e+00> : vector<16x96xf32>
    %282 = tpu.matmul %279, %281, %cst_114 {dimension_numbers = #tpu.dot_dimension_numbers<[1], [0], [0], [1], [0, 0, 1, 1], [], []>} : vector<16x32xf32>, vector<32x96xf32>, vector<16x96xf32> -> vector<16x96xf32>
    %c1_115 = arith.constant 1 : index
    %c256_116 = arith.constant 256 : index
    %c0_117 = arith.constant 0 : index
    %283 = vector.load %arg3[%c1_115, %c256_116, %c0_117] : memref<2x272x128xf32, #tpu.memory_space<vmem>>, vector<1x1x96xf32>
    %284 = vector.shape_cast %283 : vector<1x1x96xf32> to vector<1x96xf32>
    %285 = vector.broadcast %284 : vector<1x96xf32> to vector<16x96xf32>
    %286 = arith.addf %282, %285 : vector<16x96xf32>
    %287 = vector.extract_strided_slice %286 {offsets = [0, 0], sizes = [16, 32], strides = [1, 1]} : vector<16x96xf32> to vector<16x32xf32>
    %288 = vector.extract_strided_slice %286 {offsets = [0, 32], sizes = [16, 32], strides = [1, 1]} : vector<16x96xf32> to vector<16x32xf32>
    %289 = vector.extract_strided_slice %286 {offsets = [0, 64], sizes = [16, 32], strides = [1, 1]} : vector<16x96xf32> to vector<16x32xf32>
    %c1_118 = arith.constant 1 : index
    %c32_119 = arith.constant 32 : index
    %c0_120 = arith.constant 0 : index
    %290 = vector.load %arg3[%c1_118, %c32_119, %c0_120] : memref<2x272x128xf32, #tpu.memory_space<vmem>>, vector<1x32x32xf32>
    %291 = vector.shape_cast %290 : vector<1x32x32xf32> to vector<32x32xf32>
    %c1_121 = arith.constant 1 : index
    %c257_122 = arith.constant 257 : index
    %c0_123 = arith.constant 0 : index
    %292 = vector.load %arg3[%c1_121, %c257_122, %c0_123] : memref<2x272x128xf32, #tpu.memory_space<vmem>>, vector<1x1x32xf32>
    %293 = vector.shape_cast %292 : vector<1x1x32xf32> to vector<1x32xf32>
    %294 = tpu.transpose %288, [1, 0] : vector<16x32xf32> -> vector<32x16xf32>
    %295 = vector.extract_strided_slice %287 {offsets = [0, 0], sizes = [16, 8], strides = [1, 1]} : vector<16x32xf32> to vector<16x8xf32>
    %296 = vector.extract_strided_slice %294 {offsets = [0, 0], sizes = [8, 16], strides = [1, 1]} : vector<32x16xf32> to vector<8x16xf32>
    %cst_124 = arith.constant dense<0.000000e+00> : vector<16x16xf32>
    %297 = tpu.matmul %295, %296, %cst_124 {dimension_numbers = #tpu.dot_dimension_numbers<[1], [0], [0], [1], [0, 0, 1, 1], [], []>} : vector<16x8xf32>, vector<8x16xf32>, vector<16x16xf32> -> vector<16x16xf32>
    %298 = vector.extract_strided_slice %287 {offsets = [0, 8], sizes = [16, 8], strides = [1, 1]} : vector<16x32xf32> to vector<16x8xf32>
    %299 = vector.extract_strided_slice %294 {offsets = [8, 0], sizes = [8, 16], strides = [1, 1]} : vector<32x16xf32> to vector<8x16xf32>
    %cst_125 = arith.constant dense<0.000000e+00> : vector<16x16xf32>
    %300 = tpu.matmul %298, %299, %cst_125 {dimension_numbers = #tpu.dot_dimension_numbers<[1], [0], [0], [1], [0, 0, 1, 1], [], []>} : vector<16x8xf32>, vector<8x16xf32>, vector<16x16xf32> -> vector<16x16xf32>
    %301 = vector.extract_strided_slice %287 {offsets = [0, 16], sizes = [16, 8], strides = [1, 1]} : vector<16x32xf32> to vector<16x8xf32>
    %302 = vector.extract_strided_slice %294 {offsets = [16, 0], sizes = [8, 16], strides = [1, 1]} : vector<32x16xf32> to vector<8x16xf32>
    %cst_126 = arith.constant dense<0.000000e+00> : vector<16x16xf32>
    %303 = tpu.matmul %301, %302, %cst_126 {dimension_numbers = #tpu.dot_dimension_numbers<[1], [0], [0], [1], [0, 0, 1, 1], [], []>} : vector<16x8xf32>, vector<8x16xf32>, vector<16x16xf32> -> vector<16x16xf32>
    %304 = vector.extract_strided_slice %287 {offsets = [0, 24], sizes = [16, 8], strides = [1, 1]} : vector<16x32xf32> to vector<16x8xf32>
    %305 = vector.extract_strided_slice %294 {offsets = [24, 0], sizes = [8, 16], strides = [1, 1]} : vector<32x16xf32> to vector<8x16xf32>
    %cst_127 = arith.constant dense<0.000000e+00> : vector<16x16xf32>
    %306 = tpu.matmul %304, %305, %cst_127 {dimension_numbers = #tpu.dot_dimension_numbers<[1], [0], [0], [1], [0, 0, 1, 1], [], []>} : vector<16x8xf32>, vector<8x16xf32>, vector<16x16xf32> -> vector<16x16xf32>
    %307 = tpu.concatenate %297, %300, %303, %306 in 0 : vector<16x16xf32>, vector<16x16xf32>, vector<16x16xf32>, vector<16x16xf32> -> vector<64x16xf32>
    %308 = tpu.concatenate %44, %44, %44, %44 in 0 : vector<16x16xf32>, vector<16x16xf32>, vector<16x16xf32>, vector<16x16xf32> -> vector<64x16xf32>
    %309 = arith.addf %307, %308 : vector<64x16xf32>
    %cst_128 = arith.constant dense<0xFF800000> : vector<64xf32>
    %310 = vector.multi_reduction <maximumf>, %309, %cst_128 [1] : vector<64x16xf32> to vector<64xf32>
    %311 = vector.shape_cast %310 : vector<64xf32> to vector<64x1xf32>
    %312 = vector.broadcast %311 : vector<64x1xf32> to vector<64x16xf32>
    %313 = arith.subf %309, %312 : vector<64x16xf32>
    %314 = math.exp %313 : vector<64x16xf32>
    %cst_129 = arith.constant dense<0.000000e+00> : vector<64xf32>
    %315 = vector.multi_reduction <add>, %314, %cst_129 [1] : vector<64x16xf32> to vector<64xf32>
    %316 = vector.shape_cast %315 : vector<64xf32> to vector<64x1xf32>
    %317 = tpu.reciprocal %316 {approx = true} : vector<64x1xf32> -> vector<64x1xf32>
    %318 = vector.broadcast %317 : vector<64x1xf32> to vector<64x16xf32>
    %319 = arith.mulf %314, %318 : vector<64x16xf32>
    %cst_130 = arith.constant -5.000000e+29 : f32
    %320 = vector.broadcast %cst_130 : f32 to vector<64x1xf32>
    %321 = arith.cmpf ole, %311, %320 : vector<64x1xf32>
    %cst_131 = arith.constant 0.000000e+00 : f32
    %322 = vector.shape_cast %321 : vector<64x1xi1> to vector<64x1xi1>
    %323 = vector.broadcast %322 : vector<64x1xi1> to vector<64x16xi1>
    %324 = vector.broadcast %cst_131 : f32 to vector<64x16xf32>
    %325 = arith.select %323, %324, %319 : vector<64x16xi1>, vector<64x16xf32>
    %326 = vector.extract_strided_slice %325 {offsets = [0, 0], sizes = [16, 16], strides = [1, 1]} : vector<64x16xf32> to vector<16x16xf32>
    %327 = vector.extract_strided_slice %289 {offsets = [0, 0], sizes = [16, 8], strides = [1, 1]} : vector<16x32xf32> to vector<16x8xf32>
    %cst_132 = arith.constant dense<0.000000e+00> : vector<16x8xf32>
    %328 = tpu.matmul %326, %327, %cst_132 {dimension_numbers = #tpu.dot_dimension_numbers<[1], [0], [0], [1], [0, 0, 1, 1], [], []>} : vector<16x16xf32>, vector<16x8xf32>, vector<16x8xf32> -> vector<16x8xf32>
    %329 = vector.extract_strided_slice %325 {offsets = [16, 0], sizes = [16, 16], strides = [1, 1]} : vector<64x16xf32> to vector<16x16xf32>
    %330 = vector.extract_strided_slice %289 {offsets = [0, 8], sizes = [16, 8], strides = [1, 1]} : vector<16x32xf32> to vector<16x8xf32>
    %cst_133 = arith.constant dense<0.000000e+00> : vector<16x8xf32>
    %331 = tpu.matmul %329, %330, %cst_133 {dimension_numbers = #tpu.dot_dimension_numbers<[1], [0], [0], [1], [0, 0, 1, 1], [], []>} : vector<16x16xf32>, vector<16x8xf32>, vector<16x8xf32> -> vector<16x8xf32>
    %332 = vector.extract_strided_slice %325 {offsets = [32, 0], sizes = [16, 16], strides = [1, 1]} : vector<64x16xf32> to vector<16x16xf32>
    %333 = vector.extract_strided_slice %289 {offsets = [0, 16], sizes = [16, 8], strides = [1, 1]} : vector<16x32xf32> to vector<16x8xf32>
    %cst_134 = arith.constant dense<0.000000e+00> : vector<16x8xf32>
    %334 = tpu.matmul %332, %333, %cst_134 {dimension_numbers = #tpu.dot_dimension_numbers<[1], [0], [0], [1], [0, 0, 1, 1], [], []>} : vector<16x16xf32>, vector<16x8xf32>, vector<16x8xf32> -> vector<16x8xf32>
    %335 = vector.extract_strided_slice %325 {offsets = [48, 0], sizes = [16, 16], strides = [1, 1]} : vector<64x16xf32> to vector<16x16xf32>
    %336 = vector.extract_strided_slice %289 {offsets = [0, 24], sizes = [16, 8], strides = [1, 1]} : vector<16x32xf32> to vector<16x8xf32>
    %cst_135 = arith.constant dense<0.000000e+00> : vector<16x8xf32>
    %337 = tpu.matmul %335, %336, %cst_135 {dimension_numbers = #tpu.dot_dimension_numbers<[1], [0], [0], [1], [0, 0, 1, 1], [], []>} : vector<16x16xf32>, vector<16x8xf32>, vector<16x8xf32> -> vector<16x8xf32>
    %338 = tpu.concatenate %328, %331, %334, %337 in 1 : vector<16x8xf32>, vector<16x8xf32>, vector<16x8xf32>, vector<16x8xf32> -> vector<16x32xf32>
    %cst_136 = arith.constant dense<0.000000e+00> : vector<16x32xf32>
    %339 = tpu.matmul %338, %291, %cst_136 {dimension_numbers = #tpu.dot_dimension_numbers<[1], [0], [0], [1], [0, 0, 1, 1], [], []>} : vector<16x32xf32>, vector<32x32xf32>, vector<16x32xf32> -> vector<16x32xf32>
    %340 = vector.broadcast %293 : vector<1x32xf32> to vector<16x32xf32>
    %341 = arith.addf %339, %340 : vector<16x32xf32>
    %342 = arith.addf %279, %341 : vector<16x32xf32>
    %c1_137 = arith.constant 1 : index
    %c258_138 = arith.constant 258 : index
    %c0_139 = arith.constant 0 : index
    %343 = vector.load %arg3[%c1_137, %c258_138, %c0_139] : memref<2x272x128xf32, #tpu.memory_space<vmem>>, vector<1x1x32xf32>
    %344 = vector.shape_cast %343 : vector<1x1x32xf32> to vector<1x32xf32>
    %c1_140 = arith.constant 1 : index
    %c259_141 = arith.constant 259 : index
    %c0_142 = arith.constant 0 : index
    %345 = vector.load %arg3[%c1_140, %c259_141, %c0_142] : memref<2x272x128xf32, #tpu.memory_space<vmem>>, vector<1x1x32xf32>
    %346 = vector.shape_cast %345 : vector<1x1x32xf32> to vector<1x32xf32>
    %cst_143 = arith.constant dense<0.000000e+00> : vector<16xf32>
    %347 = vector.multi_reduction <add>, %342, %cst_143 [1] : vector<16x32xf32> to vector<16xf32>
    %348 = vector.shape_cast %347 : vector<16xf32> to vector<16x1xf32>
    %cst_144 = arith.constant 3.200000e+01 : f32
    %349 = vector.broadcast %cst_144 : f32 to vector<16x1xf32>
    %350 = arith.divf %348, %349 : vector<16x1xf32>
    %351 = vector.broadcast %350 : vector<16x1xf32> to vector<16x32xf32>
    %352 = arith.subf %342, %351 : vector<16x32xf32>
    %353 = arith.mulf %352, %352 : vector<16x32xf32>
    %cst_145 = arith.constant dense<0.000000e+00> : vector<16xf32>
    %354 = vector.multi_reduction <add>, %353, %cst_145 [1] : vector<16x32xf32> to vector<16xf32>
    %355 = vector.shape_cast %354 : vector<16xf32> to vector<16x1xf32>
    %cst_146 = arith.constant 3.200000e+01 : f32
    %356 = vector.broadcast %cst_146 : f32 to vector<16x1xf32>
    %357 = arith.divf %355, %356 : vector<16x1xf32>
    %358 = vector.broadcast %350 : vector<16x1xf32> to vector<16x32xf32>
    %359 = arith.subf %342, %358 : vector<16x32xf32>
    %cst_147 = arith.constant 9.99999974E-6 : f32
    %360 = vector.broadcast %cst_147 : f32 to vector<16x1xf32>
    %361 = arith.addf %357, %360 : vector<16x1xf32>
    %362 = math.rsqrt %361 : vector<16x1xf32>
    %363 = vector.broadcast %362 : vector<16x1xf32> to vector<16x32xf32>
    %364 = arith.mulf %359, %363 : vector<16x32xf32>
    %365 = vector.broadcast %344 : vector<1x32xf32> to vector<16x32xf32>
    %366 = arith.mulf %364, %365 : vector<16x32xf32>
    %367 = vector.broadcast %346 : vector<1x32xf32> to vector<16x32xf32>
    %368 = arith.addf %366, %367 : vector<16x32xf32>
    %c1_148 = arith.constant 1 : index
    %c64_149 = arith.constant 64 : index
    %c0_150 = arith.constant 0 : index
    %369 = vector.load %arg3[%c1_148, %c64_149, %c0_150] : memref<2x272x128xf32, #tpu.memory_space<vmem>>, vector<1x32x32xf32>
    %370 = vector.shape_cast %369 : vector<1x32x32xf32> to vector<32x32xf32>
    %cst_151 = arith.constant dense<0.000000e+00> : vector<16x32xf32>
    %371 = tpu.matmul %368, %370, %cst_151 {dimension_numbers = #tpu.dot_dimension_numbers<[1], [0], [0], [1], [0, 0, 1, 1], [], []>} : vector<16x32xf32>, vector<32x32xf32>, vector<16x32xf32> -> vector<16x32xf32>
    %c1_152 = arith.constant 1 : index
    %c260_153 = arith.constant 260 : index
    %c0_154 = arith.constant 0 : index
    %372 = vector.load %arg3[%c1_152, %c260_153, %c0_154] : memref<2x272x128xf32, #tpu.memory_space<vmem>>, vector<1x1x32xf32>
    %373 = vector.shape_cast %372 : vector<1x1x32xf32> to vector<1x32xf32>
    %374 = vector.broadcast %373 : vector<1x32xf32> to vector<16x32xf32>
    %375 = arith.addf %371, %374 : vector<16x32xf32>
    %c1_155 = arith.constant 1 : index
    %c96_156 = arith.constant 96 : index
    %c0_157 = arith.constant 0 : index
    %376 = vector.load %arg3[%c1_155, %c96_156, %c0_157] : memref<2x272x128xf32, #tpu.memory_space<vmem>>, vector<1x32x64xf32>
    %377 = vector.shape_cast %376 : vector<1x32x64xf32> to vector<32x64xf32>
    %cst_158 = arith.constant dense<0.000000e+00> : vector<32x64xf32>
    %378 = tpu.matmul %2, %377, %cst_158 {dimension_numbers = #tpu.dot_dimension_numbers<[1], [0], [0], [1], [0, 0, 1, 1], [], []>} : vector<32x32xf32>, vector<32x64xf32>, vector<32x64xf32> -> vector<32x64xf32>
    %c1_159 = arith.constant 1 : index
    %c261_160 = arith.constant 261 : index
    %c0_161 = arith.constant 0 : index
    %379 = vector.load %arg3[%c1_159, %c261_160, %c0_161] : memref<2x272x128xf32, #tpu.memory_space<vmem>>, vector<1x1x64xf32>
    %380 = vector.shape_cast %379 : vector<1x1x64xf32> to vector<1x64xf32>
    %381 = vector.broadcast %380 : vector<1x64xf32> to vector<32x64xf32>
    %382 = arith.addf %378, %381 : vector<32x64xf32>
    %383 = vector.extract_strided_slice %382 {offsets = [0, 0], sizes = [32, 32], strides = [1, 1]} : vector<32x64xf32> to vector<32x32xf32>
    %384 = vector.extract_strided_slice %382 {offsets = [0, 32], sizes = [32, 32], strides = [1, 1]} : vector<32x64xf32> to vector<32x32xf32>
    %c1_162 = arith.constant 1 : index
    %c128_163 = arith.constant 128 : index
    %c0_164 = arith.constant 0 : index
    %385 = vector.load %arg3[%c1_162, %c128_163, %c0_164] : memref<2x272x128xf32, #tpu.memory_space<vmem>>, vector<1x32x32xf32>
    %386 = vector.shape_cast %385 : vector<1x32x32xf32> to vector<32x32xf32>
    %c1_165 = arith.constant 1 : index
    %c262_166 = arith.constant 262 : index
    %c0_167 = arith.constant 0 : index
    %387 = vector.load %arg3[%c1_165, %c262_166, %c0_167] : memref<2x272x128xf32, #tpu.memory_space<vmem>>, vector<1x1x32xf32>
    %388 = vector.shape_cast %387 : vector<1x1x32xf32> to vector<1x32xf32>
    %389 = tpu.transpose %383, [1, 0] : vector<32x32xf32> -> vector<32x32xf32>
    %390 = vector.extract_strided_slice %375 {offsets = [0, 0], sizes = [16, 8], strides = [1, 1]} : vector<16x32xf32> to vector<16x8xf32>
    %391 = vector.extract_strided_slice %389 {offsets = [0, 0], sizes = [8, 32], strides = [1, 1]} : vector<32x32xf32> to vector<8x32xf32>
    %cst_168 = arith.constant dense<0.000000e+00> : vector<16x32xf32>
    %392 = tpu.matmul %390, %391, %cst_168 {dimension_numbers = #tpu.dot_dimension_numbers<[1], [0], [0], [1], [0, 0, 1, 1], [], []>} : vector<16x8xf32>, vector<8x32xf32>, vector<16x32xf32> -> vector<16x32xf32>
    %393 = vector.extract_strided_slice %375 {offsets = [0, 8], sizes = [16, 8], strides = [1, 1]} : vector<16x32xf32> to vector<16x8xf32>
    %394 = vector.extract_strided_slice %389 {offsets = [8, 0], sizes = [8, 32], strides = [1, 1]} : vector<32x32xf32> to vector<8x32xf32>
    %cst_169 = arith.constant dense<0.000000e+00> : vector<16x32xf32>
    %395 = tpu.matmul %393, %394, %cst_169 {dimension_numbers = #tpu.dot_dimension_numbers<[1], [0], [0], [1], [0, 0, 1, 1], [], []>} : vector<16x8xf32>, vector<8x32xf32>, vector<16x32xf32> -> vector<16x32xf32>
    %396 = vector.extract_strided_slice %375 {offsets = [0, 16], sizes = [16, 8], strides = [1, 1]} : vector<16x32xf32> to vector<16x8xf32>
    %397 = vector.extract_strided_slice %389 {offsets = [16, 0], sizes = [8, 32], strides = [1, 1]} : vector<32x32xf32> to vector<8x32xf32>
    %cst_170 = arith.constant dense<0.000000e+00> : vector<16x32xf32>
    %398 = tpu.matmul %396, %397, %cst_170 {dimension_numbers = #tpu.dot_dimension_numbers<[1], [0], [0], [1], [0, 0, 1, 1], [], []>} : vector<16x8xf32>, vector<8x32xf32>, vector<16x32xf32> -> vector<16x32xf32>
    %399 = vector.extract_strided_slice %375 {offsets = [0, 24], sizes = [16, 8], strides = [1, 1]} : vector<16x32xf32> to vector<16x8xf32>
    %400 = vector.extract_strided_slice %389 {offsets = [24, 0], sizes = [8, 32], strides = [1, 1]} : vector<32x32xf32> to vector<8x32xf32>
    %cst_171 = arith.constant dense<0.000000e+00> : vector<16x32xf32>
    %401 = tpu.matmul %399, %400, %cst_171 {dimension_numbers = #tpu.dot_dimension_numbers<[1], [0], [0], [1], [0, 0, 1, 1], [], []>} : vector<16x8xf32>, vector<8x32xf32>, vector<16x32xf32> -> vector<16x32xf32>
    %402 = tpu.concatenate %392, %395, %398, %401 in 0 : vector<16x32xf32>, vector<16x32xf32>, vector<16x32xf32>, vector<16x32xf32> -> vector<64x32xf32>
    %403 = tpu.concatenate %52, %52, %52, %52 in 0 : vector<16x32xf32>, vector<16x32xf32>, vector<16x32xf32>, vector<16x32xf32> -> vector<64x32xf32>
    %404 = arith.addf %402, %403 : vector<64x32xf32>
    %cst_172 = arith.constant dense<0xFF800000> : vector<64xf32>
    %405 = vector.multi_reduction <maximumf>, %404, %cst_172 [1] : vector<64x32xf32> to vector<64xf32>
    %406 = vector.shape_cast %405 : vector<64xf32> to vector<64x1xf32>
    %407 = vector.broadcast %406 : vector<64x1xf32> to vector<64x32xf32>
    %408 = arith.subf %404, %407 : vector<64x32xf32>
    %409 = math.exp %408 : vector<64x32xf32>
    %cst_173 = arith.constant dense<0.000000e+00> : vector<64xf32>
    %410 = vector.multi_reduction <add>, %409, %cst_173 [1] : vector<64x32xf32> to vector<64xf32>
    %411 = vector.shape_cast %410 : vector<64xf32> to vector<64x1xf32>
    %412 = tpu.reciprocal %411 {approx = true} : vector<64x1xf32> -> vector<64x1xf32>
    %413 = vector.broadcast %412 : vector<64x1xf32> to vector<64x32xf32>
    %414 = arith.mulf %409, %413 : vector<64x32xf32>
    %cst_174 = arith.constant -5.000000e+29 : f32
    %415 = vector.broadcast %cst_174 : f32 to vector<64x1xf32>
    %416 = arith.cmpf ole, %406, %415 : vector<64x1xf32>
    %cst_175 = arith.constant 0.000000e+00 : f32
    %417 = vector.shape_cast %416 : vector<64x1xi1> to vector<64x1xi1>
    %418 = vector.broadcast %417 : vector<64x1xi1> to vector<64x32xi1>
    %419 = vector.broadcast %cst_175 : f32 to vector<64x32xf32>
    %420 = arith.select %418, %419, %414 : vector<64x32xi1>, vector<64x32xf32>
    %421 = vector.extract_strided_slice %420 {offsets = [0, 0], sizes = [16, 32], strides = [1, 1]} : vector<64x32xf32> to vector<16x32xf32>
    %422 = vector.extract_strided_slice %384 {offsets = [0, 0], sizes = [32, 8], strides = [1, 1]} : vector<32x32xf32> to vector<32x8xf32>
    %cst_176 = arith.constant dense<0.000000e+00> : vector<16x8xf32>
    %423 = tpu.matmul %421, %422, %cst_176 {dimension_numbers = #tpu.dot_dimension_numbers<[1], [0], [0], [1], [0, 0, 1, 1], [], []>} : vector<16x32xf32>, vector<32x8xf32>, vector<16x8xf32> -> vector<16x8xf32>
    %424 = vector.extract_strided_slice %420 {offsets = [16, 0], sizes = [16, 32], strides = [1, 1]} : vector<64x32xf32> to vector<16x32xf32>
    %425 = vector.extract_strided_slice %384 {offsets = [0, 8], sizes = [32, 8], strides = [1, 1]} : vector<32x32xf32> to vector<32x8xf32>
    %cst_177 = arith.constant dense<0.000000e+00> : vector<16x8xf32>
    %426 = tpu.matmul %424, %425, %cst_177 {dimension_numbers = #tpu.dot_dimension_numbers<[1], [0], [0], [1], [0, 0, 1, 1], [], []>} : vector<16x32xf32>, vector<32x8xf32>, vector<16x8xf32> -> vector<16x8xf32>
    %427 = vector.extract_strided_slice %420 {offsets = [32, 0], sizes = [16, 32], strides = [1, 1]} : vector<64x32xf32> to vector<16x32xf32>
    %428 = vector.extract_strided_slice %384 {offsets = [0, 16], sizes = [32, 8], strides = [1, 1]} : vector<32x32xf32> to vector<32x8xf32>
    %cst_178 = arith.constant dense<0.000000e+00> : vector<16x8xf32>
    %429 = tpu.matmul %427, %428, %cst_178 {dimension_numbers = #tpu.dot_dimension_numbers<[1], [0], [0], [1], [0, 0, 1, 1], [], []>} : vector<16x32xf32>, vector<32x8xf32>, vector<16x8xf32> -> vector<16x8xf32>
    %430 = vector.extract_strided_slice %420 {offsets = [48, 0], sizes = [16, 32], strides = [1, 1]} : vector<64x32xf32> to vector<16x32xf32>
    %431 = vector.extract_strided_slice %384 {offsets = [0, 24], sizes = [32, 8], strides = [1, 1]} : vector<32x32xf32> to vector<32x8xf32>
    %cst_179 = arith.constant dense<0.000000e+00> : vector<16x8xf32>
    %432 = tpu.matmul %430, %431, %cst_179 {dimension_numbers = #tpu.dot_dimension_numbers<[1], [0], [0], [1], [0, 0, 1, 1], [], []>} : vector<16x32xf32>, vector<32x8xf32>, vector<16x8xf32> -> vector<16x8xf32>
    %433 = tpu.concatenate %423, %426, %429, %432 in 1 : vector<16x8xf32>, vector<16x8xf32>, vector<16x8xf32>, vector<16x8xf32> -> vector<16x32xf32>
    %cst_180 = arith.constant dense<0.000000e+00> : vector<16x32xf32>
    %434 = tpu.matmul %433, %386, %cst_180 {dimension_numbers = #tpu.dot_dimension_numbers<[1], [0], [0], [1], [0, 0, 1, 1], [], []>} : vector<16x32xf32>, vector<32x32xf32>, vector<16x32xf32> -> vector<16x32xf32>
    %435 = vector.broadcast %388 : vector<1x32xf32> to vector<16x32xf32>
    %436 = arith.addf %434, %435 : vector<16x32xf32>
    %437 = arith.addf %368, %436 : vector<16x32xf32>
    %c1_181 = arith.constant 1 : index
    %c263_182 = arith.constant 263 : index
    %c0_183 = arith.constant 0 : index
    %438 = vector.load %arg3[%c1_181, %c263_182, %c0_183] : memref<2x272x128xf32, #tpu.memory_space<vmem>>, vector<1x1x32xf32>
    %439 = vector.shape_cast %438 : vector<1x1x32xf32> to vector<1x32xf32>
    %c1_184 = arith.constant 1 : index
    %c264_185 = arith.constant 264 : index
    %c0_186 = arith.constant 0 : index
    %440 = vector.load %arg3[%c1_184, %c264_185, %c0_186] : memref<2x272x128xf32, #tpu.memory_space<vmem>>, vector<1x1x32xf32>
    %441 = vector.shape_cast %440 : vector<1x1x32xf32> to vector<1x32xf32>
    %cst_187 = arith.constant dense<0.000000e+00> : vector<16xf32>
    %442 = vector.multi_reduction <add>, %437, %cst_187 [1] : vector<16x32xf32> to vector<16xf32>
    %443 = vector.shape_cast %442 : vector<16xf32> to vector<16x1xf32>
    %cst_188 = arith.constant 3.200000e+01 : f32
    %444 = vector.broadcast %cst_188 : f32 to vector<16x1xf32>
    %445 = arith.divf %443, %444 : vector<16x1xf32>
    %446 = vector.broadcast %445 : vector<16x1xf32> to vector<16x32xf32>
    %447 = arith.subf %437, %446 : vector<16x32xf32>
    %448 = arith.mulf %447, %447 : vector<16x32xf32>
    %cst_189 = arith.constant dense<0.000000e+00> : vector<16xf32>
    %449 = vector.multi_reduction <add>, %448, %cst_189 [1] : vector<16x32xf32> to vector<16xf32>
    %450 = vector.shape_cast %449 : vector<16xf32> to vector<16x1xf32>
    %cst_190 = arith.constant 3.200000e+01 : f32
    %451 = vector.broadcast %cst_190 : f32 to vector<16x1xf32>
    %452 = arith.divf %450, %451 : vector<16x1xf32>
    %453 = vector.broadcast %445 : vector<16x1xf32> to vector<16x32xf32>
    %454 = arith.subf %437, %453 : vector<16x32xf32>
    %cst_191 = arith.constant 9.99999974E-6 : f32
    %455 = vector.broadcast %cst_191 : f32 to vector<16x1xf32>
    %456 = arith.addf %452, %455 : vector<16x1xf32>
    %457 = math.rsqrt %456 : vector<16x1xf32>
    %458 = vector.broadcast %457 : vector<16x1xf32> to vector<16x32xf32>
    %459 = arith.mulf %454, %458 : vector<16x32xf32>
    %460 = vector.broadcast %439 : vector<1x32xf32> to vector<16x32xf32>
    %461 = arith.mulf %459, %460 : vector<16x32xf32>
    %462 = vector.broadcast %441 : vector<1x32xf32> to vector<16x32xf32>
    %463 = arith.addf %461, %462 : vector<16x32xf32>
    %c1_192 = arith.constant 1 : index
    %c160_193 = arith.constant 160 : index
    %c0_194 = arith.constant 0 : index
    %464 = vector.load %arg3[%c1_192, %c160_193, %c0_194] : memref<2x272x128xf32, #tpu.memory_space<vmem>>, vector<1x32x64xf32>
    %465 = vector.shape_cast %464 : vector<1x32x64xf32> to vector<32x64xf32>
    %cst_195 = arith.constant dense<0.000000e+00> : vector<16x64xf32>
    %466 = tpu.matmul %463, %465, %cst_195 {dimension_numbers = #tpu.dot_dimension_numbers<[1], [0], [0], [1], [0, 0, 1, 1], [], []>} : vector<16x32xf32>, vector<32x64xf32>, vector<16x64xf32> -> vector<16x64xf32>
    %c1_196 = arith.constant 1 : index
    %c265_197 = arith.constant 265 : index
    %c0_198 = arith.constant 0 : index
    %467 = vector.load %arg3[%c1_196, %c265_197, %c0_198] : memref<2x272x128xf32, #tpu.memory_space<vmem>>, vector<1x1x64xf32>
    %468 = vector.shape_cast %467 : vector<1x1x64xf32> to vector<1x64xf32>
    %469 = vector.broadcast %468 : vector<1x64xf32> to vector<16x64xf32>
    %470 = arith.addf %466, %469 : vector<16x64xf32>
    %cst_199 = arith.constant 0.000000e+00 : f32
    %471 = vector.broadcast %cst_199 : f32 to vector<16x64xf32>
    %472 = arith.maximumf %470, %471 : vector<16x64xf32>
    %c1_200 = arith.constant 1 : index
    %c192_201 = arith.constant 192 : index
    %c0_202 = arith.constant 0 : index
    %473 = vector.load %arg3[%c1_200, %c192_201, %c0_202] : memref<2x272x128xf32, #tpu.memory_space<vmem>>, vector<1x64x32xf32>
    %474 = vector.shape_cast %473 : vector<1x64x32xf32> to vector<64x32xf32>
    %cst_203 = arith.constant dense<0.000000e+00> : vector<16x32xf32>
    %475 = tpu.matmul %472, %474, %cst_203 {dimension_numbers = #tpu.dot_dimension_numbers<[1], [0], [0], [1], [0, 0, 1, 1], [], []>} : vector<16x64xf32>, vector<64x32xf32>, vector<16x32xf32> -> vector<16x32xf32>
    %c1_204 = arith.constant 1 : index
    %c266_205 = arith.constant 266 : index
    %c0_206 = arith.constant 0 : index
    %476 = vector.load %arg3[%c1_204, %c266_205, %c0_206] : memref<2x272x128xf32, #tpu.memory_space<vmem>>, vector<1x1x32xf32>
    %477 = vector.shape_cast %476 : vector<1x1x32xf32> to vector<1x32xf32>
    %478 = vector.broadcast %477 : vector<1x32xf32> to vector<16x32xf32>
    %479 = arith.addf %475, %478 : vector<16x32xf32>
    %480 = arith.addf %463, %479 : vector<16x32xf32>
    %c1_207 = arith.constant 1 : index
    %c267_208 = arith.constant 267 : index
    %c0_209 = arith.constant 0 : index
    %481 = vector.load %arg3[%c1_207, %c267_208, %c0_209] : memref<2x272x128xf32, #tpu.memory_space<vmem>>, vector<1x1x32xf32>
    %482 = vector.shape_cast %481 : vector<1x1x32xf32> to vector<1x32xf32>
    %c1_210 = arith.constant 1 : index
    %c268_211 = arith.constant 268 : index
    %c0_212 = arith.constant 0 : index
    %483 = vector.load %arg3[%c1_210, %c268_211, %c0_212] : memref<2x272x128xf32, #tpu.memory_space<vmem>>, vector<1x1x32xf32>
    %484 = vector.shape_cast %483 : vector<1x1x32xf32> to vector<1x32xf32>
    %cst_213 = arith.constant dense<0.000000e+00> : vector<16xf32>
    %485 = vector.multi_reduction <add>, %480, %cst_213 [1] : vector<16x32xf32> to vector<16xf32>
    %486 = vector.shape_cast %485 : vector<16xf32> to vector<16x1xf32>
    %cst_214 = arith.constant 3.200000e+01 : f32
    %487 = vector.broadcast %cst_214 : f32 to vector<16x1xf32>
    %488 = arith.divf %486, %487 : vector<16x1xf32>
    %489 = vector.broadcast %488 : vector<16x1xf32> to vector<16x32xf32>
    %490 = arith.subf %480, %489 : vector<16x32xf32>
    %491 = arith.mulf %490, %490 : vector<16x32xf32>
    %cst_215 = arith.constant dense<0.000000e+00> : vector<16xf32>
    %492 = vector.multi_reduction <add>, %491, %cst_215 [1] : vector<16x32xf32> to vector<16xf32>
    %493 = vector.shape_cast %492 : vector<16xf32> to vector<16x1xf32>
    %cst_216 = arith.constant 3.200000e+01 : f32
    %494 = vector.broadcast %cst_216 : f32 to vector<16x1xf32>
    %495 = arith.divf %493, %494 : vector<16x1xf32>
    %496 = vector.broadcast %488 : vector<16x1xf32> to vector<16x32xf32>
    %497 = arith.subf %480, %496 : vector<16x32xf32>
    %cst_217 = arith.constant 9.99999974E-6 : f32
    %498 = vector.broadcast %cst_217 : f32 to vector<16x1xf32>
    %499 = arith.addf %495, %498 : vector<16x1xf32>
    %500 = math.rsqrt %499 : vector<16x1xf32>
    %501 = vector.broadcast %500 : vector<16x1xf32> to vector<16x32xf32>
    %502 = arith.mulf %497, %501 : vector<16x32xf32>
    %503 = vector.broadcast %482 : vector<1x32xf32> to vector<16x32xf32>
    %504 = arith.mulf %502, %503 : vector<16x32xf32>
    %505 = vector.broadcast %484 : vector<1x32xf32> to vector<16x32xf32>
    %506 = arith.addf %504, %505 : vector<16x32xf32>
    %c128_218 = arith.constant 128 : index
    %c0_219 = arith.constant 0 : index
    %507 = vector.load %arg4[%c128_218, %c0_219] : memref<216x128xf32, #tpu.memory_space<vmem>>, vector<32x128xf32>
    %cst_220 = arith.constant dense<0.000000e+00> : vector<16x128xf32>
    %508 = tpu.matmul %506, %507, %cst_220 {dimension_numbers = #tpu.dot_dimension_numbers<[1], [0], [0], [1], [0, 0, 1, 1], [], []>} : vector<16x32xf32>, vector<32x128xf32>, vector<16x128xf32> -> vector<16x128xf32>
    %c160_221 = arith.constant 160 : index
    %c0_222 = arith.constant 0 : index
    %509 = vector.load %arg4[%c160_221, %c0_222] : memref<216x128xf32, #tpu.memory_space<vmem>>, vector<1x128xf32>
    %510 = vector.broadcast %509 : vector<1x128xf32> to vector<16x128xf32>
    %511 = arith.addf %508, %510 : vector<16x128xf32>
    %c0_223 = arith.constant 0 : index
    %c0_224 = arith.constant 0 : index
    %512 = vector.load %arg5[%c0_223, %c0_224] : memref<16x128xf32, #tpu.memory_space<vmem>>, vector<16x128xf32>
    tpu.vector_store %arg5[%c0_223, %c0_224], %511 {strides = array<i32>} : memref<16x128xf32, #tpu.memory_space<vmem>>, vector<16x128xf32>,
    return
  }
}

</mosaic_0001>

<llo_original>
// kernel: decoder_forward.1
$region0: #{decoder_forward.1}
  #allocation0 [shape = 'u32[]', space=smem, size = 0x4, offset = 0x4, fixed_abs, tag = 'smem constant byte address 0x4 - core index']
  #allocation1 [shape = 'u32[144,128]{1,0:T(1,128)}', space=vmem, size = 0x12000, scoped, tag = 'internal scratch']
  %s0 = inlined_call_operand.vmem [shape: s32[16,1], index: 0, kind: input, shape index: {}]
  %s1 = inlined_call_operand.vmem [shape: s32[1,16], index: 1, kind: input, shape index: {}]
  %s2 = inlined_call_operand.vmem [shape: f32[40,32], index: 2, kind: input, shape index: {}]
  %s3 = inlined_call_operand.hbm [shape: f32[2,272,128], index: 3, kind: input, shape index: {}]
  %s4 = inlined_call_operand.hbm [shape: f32[216,128], index: 4, kind: input, shape index: {}]
  %s5 = inlined_call_operand.vmem [shape: f32[16,128], index: 5, kind: output, shape index: {}]
  %s6 = sld [smem:[#allocation0]]
  $region38: #{decoder_forward.1} parent=0
    _
  %s8 = ssub.s32 1, %s6
  %s9 = scalar_select 0, %s8, %s6
  $region1: #{decoder_forward.1} parent=0
    #allocation2 [shape = 'u8[278528]{0}', space=vmem, size = 0x44000, scoped, tag = 'input window, operand 3, single buffered']
    #allocation3 [shape = 's32[1]{0}', space=sflag, size = 0x4, scoped, tag = 'scoped memory for decoder_forward.1']
    #allocation4 [shape = 'u8[110592]{0}', space=vmem, size = 0x1b000, scoped, tag = 'input window, operand 4, single buffered']
    #allocation5 [shape = 's32[1]{0}', space=sflag, size = 0x4, scoped, tag = 'scoped memory for decoder_forward.1']
    %10 = vsyncpa [#allocation3], 0
    %11 = vsyncpa [#allocation5], 0
    // Predicated region
    $region2: #{decoder_forward.1} parent=1 // pred_check
      _
    $region3: #{decoder_forward.1} parent=1 // pred_check_branch
      %13 = sbr.rel (0) target = $region5
    $region4: #{decoder_forward.1} parent=1 // pred_region
      _
    $region5: #{decoder_forward.1} parent=1 // pred_fallthru
      _
    // Predicated region
    $region6: #{decoder_forward.1} parent=1 // pred_check
      _
    $region7: #{decoder_forward.1} parent=1 // pred_check_branch
      %15 = sbr.rel (0) target = $region9
    $region8: #{decoder_forward.1} parent=1 // pred_region
      _
    $region9: #{decoder_forward.1} parent=1 // pred_fallthru
      _
    // Predicated region
    $region10: #{decoder_forward.1} parent=1 // pred_check
      _
    $region11: #{decoder_forward.1} parent=1 // pred_check_branch
      %17 = sbr.rel (0) target = $region13
    $region12: #{decoder_forward.1} parent=1 // pred_region
      _
    $region13: #{decoder_forward.1} parent=1 // pred_fallthru
      _
    // Predicated region
    $region14: #{decoder_forward.1} parent=1 // pred_check
      _
    $region15: #{decoder_forward.1} parent=1 // pred_check_branch
      %19 = sbr.rel (0) target = $region17
    $region16: #{decoder_forward.1} parent=1 // pred_region
      %s21 = ssub.s32 8704, 8704
      %22 = vsyncadd [#allocation3], %s21
      %s23 = sshll.u32 [#allocation2], 4
      %s24 = int_to_ptr.vmem [resolvable:$true] %s23
      %29 = dma.hbm_to_vmem [thread:$0]  %s3, 8704, %s24, [#allocation3], 128, 128, 8
    $region17: #{decoder_forward.1} parent=1 // pred_fallthru
      _
    // Predicated region
    $region18: #{decoder_forward.1} parent=1 // pred_check
      _
    $region19: #{decoder_forward.1} parent=1 // pred_check_branch
      %31 = sbr.rel (0) target = $region21
    $region20: #{decoder_forward.1} parent=1 // pred_region
      %s33 = ssub.s32 3456, 3456
      %34 = vsyncadd [#allocation5], %s33
      %s35 = sshll.u32 [#allocation4], 4
      %s36 = int_to_ptr.vmem [resolvable:$true] %s35
      %41 = dma.hbm_to_vmem [thread:$0]  %s4, 3456, %s36, [#allocation5], 128, 128, 8
    $region21: #{decoder_forward.1} parent=1 // pred_fallthru
      _
    // Predicated region
    $region22: #{decoder_forward.1} parent=1 // pred_check
      _
    $region23: #{decoder_forward.1} parent=1 // pred_check_branch
      %43 = sbr.rel (0) target = $region25
    $region24: #{decoder_forward.1} parent=1 // pred_region
      %44 = dma.done [#allocation3], 8704
    $region25: #{decoder_forward.1} parent=1 // pred_fallthru
      _
    // Predicated region
    $region26: #{decoder_forward.1} parent=1 // pred_check
      _
    $region27: #{decoder_forward.1} parent=1 // pred_check_branch
      %46 = sbr.rel (0) target = $region29
    $region28: #{decoder_forward.1} parent=1 // pred_region
      %47 = dma.done [#allocation5], 3456
    $region29: #{decoder_forward.1} parent=1 // pred_fallthru
      _
    %v48 = vld [vmem:[%s0] sm:$0xff]
    %v49 = vld [vmem:[%s0 + $0x8] sm:$0xff]
    %v50 = vld [vmem:[%s1] sm:$0x1]
    %v51 = vld [vmem:[%s2] sm:$0xff]
    %v52 = vld [vmem:[%s2 + $0x8] sm:$0xff]
    %v53 = vld [vmem:[%s2 + $0x10] sm:$0xff]
    %v54 = vld [vmem:[%s2 + $0x18] sm:$0xff]
    %v55 = vld [vmem:[%s2 + $0x20] sm:$0x1]
    %v56 = vlaneseq
    %v57 = vand.u32 %v56, 127
    %58 = vset.pattern.permute.xlu0 0
    %59 = vperm.xlu0 %58, %v48
    %v60 = vpop.permute.xlu0 %59
    %61 = vset.pattern.permute.xlu0 0
    %62 = vperm.xlu0 %61, %v49
    %v63 = vpop.permute.xlu0 %62
    %vm64 = vcmp.eq.s32.totalorder %v57, %v60
    %vm65 = vcmp.eq.s32.totalorder %v57, %v63
    %v66 = vsel %vm64, 1, 0
    %v67 = vsel %vm65, 1, 0
    %v68 = vcvt.s32.f32 %v66
    %v69 = vcvt.s32.f32 %v67
    %v70 = vld [vmem:[#allocation4] sm:$0xff]
    %v71 = vld [vmem:[#allocation4 + $0x8] sm:$0xff]
    %v72 = vld [vmem:[#allocation4 + $0x10] sm:$0xff]
    %v73 = vld [vmem:[#allocation4 + $0x18] sm:$0xff]
    %v74 = vld [vmem:[#allocation4 + $0x20] sm:$0xff]
    %v75 = vld [vmem:[#allocation4 + $0x28] sm:$0xff]
    %v76 = vld [vmem:[#allocation4 + $0x30] sm:$0xff]
    %v77 = vld [vmem:[#allocation4 + $0x38] sm:$0xff]
    %v78 = vld [vmem:[#allocation4 + $0x40] sm:$0xff]
    %v79 = vld [vmem:[#allocation4 + $0x48] sm:$0xff]
    %v80 = vld [vmem:[#allocation4 + $0x50] sm:$0xff]
    %v81 = vld [vmem:[#allocation4 + $0x58] sm:$0xff]
    %v82 = vld [vmem:[#allocation4 + $0x60] sm:$0xff]
    %v83 = vld [vmem:[#allocation4 + $0x68] sm:$0xff]
    %v84 = vld [vmem:[#allocation4 + $0x70] sm:$0xff]
    %v85 = vld [vmem:[#allocation4 + $0x78] sm:$0xff]
    %86 = vmatprep.subr.mxu0 0.0
    %87 = vmatpush1.msra.mxu0 %v70
    %88 = vmatprep.subr.mxu0 0.0
    %89 = vmatpush1.msra.mxu0 %v71
    %90 = vmatprep.subr.mxu0 0.0
    %91 = vmatpush1.msra.mxu0 %v72
    %92 = vmatprep.subr.mxu0 0.0
    %93 = vmatpush1.msra.mxu0 %v73
    %94 = vmatprep.subr.mxu0 0.0
    %95 = vmatpush1.msra.mxu0 %v74
    %96 = vmatprep.subr.mxu0 0.0
    %97 = vmatpush1.msra.mxu0 %v75
    %98 = vmatprep.subr.mxu0 0.0
    %99 = vmatpush1.msra.mxu0 %v76
    %100 = vmatprep.subr.mxu0 0.0
    %101 = vmatpush1.msra.mxu0 %v77
    %102 = vmatprep.subr.mxu0 0.0
    %103 = vmatpush1.msra.mxu0 %v78
    %104 = vmatprep.subr.mxu0 0.0
    %105 = vmatpush1.msra.mxu0 %v79
    %106 = vmatprep.subr.mxu0 0.0
    %107 = vmatpush1.msra.mxu0 %v80
    %108 = vmatprep.subr.mxu0 0.0
    %109 = vmatpush1.msra.mxu0 %v81
    %110 = vmatprep.subr.mxu0 0.0
    %111 = vmatpush1.msra.mxu0 %v82
    %112 = vmatprep.subr.mxu0 0.0
    %113 = vmatpush1.msra.mxu0 %v83
    %114 = vmatprep.subr.mxu0 0.0
    %115 = vmatpush1.msra.mxu0 %v84
    %116 = vmatprep.subr.mxu0 0.0
    %117 = vmatpush1.msra.mxu0 %v85
    %118 = vmatprep.subr.mxu0 0.0
    %119 = vmatpush1.msra.mxu0 0.0
    %120 = vmatprep.subr.mxu0 0.0
    %121 = vmatpush1.msra.mxu0 0.0
    %122 = vmatprep.subr.mxu0 0.0
    %123 = vmatpush1.msra.mxu0 0.0
    %124 = vmatprep.subr.mxu0 0.0
    %125 = vmatpush1.msra.mxu0 0.0
    %126 = vmatprep.subr.mxu0 0.0
    %127 = vmatpush1.msra.mxu0 0.0
    %128 = vmatprep.subr.mxu0 0.0
    %129 = vmatpush1.msra.mxu0 0.0
    %130 = vmatprep.subr.mxu0 0.0
    %131 = vmatpush1.msra.mxu0 0.0
    %132 = vmatprep.subr.mxu0 0.0
    %133 = vmatpush1.msra.mxu0 0.0
    %134 = vmatprep.subr.mxu0 0.0
    %135 = vmatpush1.msra.mxu0 0.0
    %136 = vmatprep.subr.mxu0 0.0
    %137 = vmatpush1.msra.mxu0 0.0
    %138 = vmatprep.subr.mxu0 0.0
    %139 = vmatpush1.msra.mxu0 0.0
    %140 = vmatprep.subr.mxu0 0.0
    %141 = vmatpush1.msra.mxu0 0.0
    %142 = vmatprep.subr.mxu0 0.0
    %143 = vmatpush1.msra.mxu0 0.0
    %144 = vmatprep.subr.mxu0 0.0
    %145 = vmatpush1.msra.mxu0 0.0
    %146 = vmatprep.subr.mxu0 0.0
    %147 = vmatpush1.msra.mxu0 0.0
    %148 = vmatprep.subr.mxu0 0.0
    %149 = vmatpush1.msra.mxu0 0.0
    %150 = vmatprep.mubr.f32.mxu0 0.0
    %151 = vmatmul.mubr.f32.gmra.mrb[0].mxu0 %v68
    %v152 = vpop.f32.mrb[0].mxu0
    %v153 = vadd.f32 0.0, %v152
    %v154 = vpop.f32.mrb[0].mxu0
    %155 = vmatprep.mubr.f32.mxu0 0.0
    %156 = vmatmul.mubr.f32.gmra.mrb[0].mxu0 %v69
    %v157 = vpop.f32.mrb[0].mxu0
    %v158 = vadd.f32 0.0, %v157
    %v159 = vpop.f32.mrb[0].mxu0
    %160 = vdwg.mxu0
    %v161 = vld [vmem:[#allocation4 + $0xa1] sm:$0x1]
    %v162 = vld [vmem:[#allocation4 + $0xa2] sm:$0x1]
    %vm163 = vcmask 261120
    %v164 = vsel %vm163, %v153, 0.0
    %165 = vadd.xlane.f32.xlu0 %v164
    %v166 = vpop.xlane.xlu0 %165
    %v167 = vsel %vm163, %v158, 0.0
    %168 = vadd.xlane.f32.xlu0 %v167
    %v169 = vpop.xlane.xlu0 %168
    %v170 = vrcp.pop 32.0
    %v171 = vmul.f32 %v166, %v170
    %v172 = vmul.f32 %v169, %v170
    %v173 = vsub.f32 %v153, %v171
    %v174 = vsub.f32 %v158, %v172
    %v175 = vmul.f32 %v173, %v173
    %v176 = vmul.f32 %v174, %v174
    %v177 = vsel %vm163, %v175, 0.0
    %178 = vadd.xlane.f32.xlu0 %v177
    %v179 = vpop.xlane.xlu0 %178
    %v180 = vsel %vm163, %v176, 0.0
    %181 = vadd.xlane.f32.xlu0 %v180
    %v182 = vpop.xlane.xlu0 %181
    %v183 = vmul.f32 %v179, %v170
    %v184 = vmul.f32 %v182, %v170
    %v185 = vadd.f32 %v183, 1e-05
    %v186 = vadd.f32 %v184, 1e-05
    %v187 = vrsqrt.pop %v185
    %v188 = vrsqrt.pop %v186
    %v189 = vmul.f32 %v173, %v187
    %v190 = vmul.f32 %v174, %v188
    %v191 = vlaneseq
    %v192 = vshrl.u32 %v191, 7
    %v193 = vsub.s32 0, %v192
    %v194 = vrot.slane %v161, %v193
    %v195 = vmul.f32 %v189, %v194
    %v196 = vmul.f32 %v190, %v194
    %v197 = vlaneseq
    %v198 = vshrl.u32 %v197, 7
    %v199 = vsub.s32 0, %v198
    %v200 = vrot.slane %v162, %v199
    %v201 = vadd.f32 %v195, %v200
    %v202 = vadd.f32 %v196, %v200
    %v203 = vld [vmem:[#allocation4 + $0xa8] sm:$0xff]
    %v204 = vld [vmem:[#allocation4 + $0xb0] sm:$0xff]
    %v205 = vadd.f32 %v201, %v203
    %v206 = vadd.f32 %v202, %v204
    %v207 = vld [vmem:[#allocation4 + $0xb8] sm:$0xff]
    %v208 = vld [vmem:[#allocation4 + $0xc0] sm:$0xff]
    %vm209 = vcmp.eq.s32.totalorder %v50, 0
    %v210 = vsel %vm209, -1e+30, 0.0
    %v212 = vlaneseq
    %v213 = vshrl.u32 %v212, 7
    %v214 = vsub.s32 0, %v213
    %v215 = vrot.slane %v210, %v214
    %v217 = vadd.f32 %v207, %v215
    %v218 = vadd.f32 %v208, %v215
    %v219 = vld [vmem:[#allocation4 + $0xc8] sm:$0xff]
    %v220 = vld [vmem:[#allocation4 + $0xd0] sm:$0xff]
    %vm221 = vcmp.ne.f32.partialorder %v55, 0.0
    %v222 = vsel %vm221, -1e+30, 0.0
    %v223 = vlaneseq
    %v224 = vshrl.u32 %v223, 7
    %v225 = vsub.s32 0, %v224
    %v226 = vrot.slane %v222, %v225
    %v227 = vadd.f32 %v219, %v226
    %v228 = vadd.f32 %v220, %v226
    %v229 = vld [vmem:[#allocation2] sm:$0xff]
    %v230 = vld [vmem:[#allocation2 + $0x8] sm:$0xff]
    %v231 = vld [vmem:[#allocation2 + $0x10] sm:$0xff]
    %v232 = vld [vmem:[#allocation2 + $0x18] sm:$0xff]
    %v233 = vld [vmem:[#allocation2 + $0x100] sm:$0x1]
    %v234 = vlaneseq
    %v235 = vshrl.u32 %v234, 7
    %v236 = vsub.s32 0, %v235
    %v237 = vrot.slane %v233, %v236
    %v239 = vsel %vm163, %v205, 0
    %v242 = vsel %vm163, %v206, 0
    %244 = vmatprep.subr.mxu0 0.0
    %245 = vmatpush1.msra.mxu0 %v229
    %246 = vmatprep.subr.mxu0 0.0
    %247 = vmatpush1.msra.mxu0 %v230
    %248 = vmatprep.subr.mxu0 0.0
    %249 = vmatpush1.msra.mxu0 %v231
    %250 = vmatprep.subr.mxu0 0.0
    %251 = vmatpush1.msra.mxu0 %v232
    %252 = vmatprep.subr.mxu0 0.0
    %253 = vmatpush1.msra.mxu0 0.0
    %254 = vmatprep.subr.mxu0 0.0
    %255 = vmatpush1.msra.mxu0 0.0
    %256 = vmatprep.subr.mxu0 0.0
    %257 = vmatpush1.msra.mxu0 0.0
    %258 = vmatprep.subr.mxu0 0.0
    %259 = vmatpush1.msra.mxu0 0.0
    %260 = vmatprep.subr.mxu0 0.0
    %261 = vmatpush1.msra.mxu0 0.0
    %262 = vmatprep.subr.mxu0 0.0
    %263 = vmatpush1.msra.mxu0 0.0
    %264 = vmatprep.subr.mxu0 0.0
    %265 = vmatpush1.msra.mxu0 0.0
    %266 = vmatprep.subr.mxu0 0.0
    %267 = vmatpush1.msra.mxu0 0.0
    %268 = vmatprep.subr.mxu0 0.0
    %269 = vmatpush1.msra.mxu0 0.0
    %270 = vmatprep.subr.mxu0 0.0
    %271 = vmatpush1.msra.mxu0 0.0
    %272 = vmatprep.subr.mxu0 0.0
    %273 = vmatpush1.msra.mxu0 0.0
    %274 = vmatprep.subr.mxu0 0.0
    %275 = vmatpush1.msra.mxu0 0.0
    %276 = vmatprep.subr.mxu0 0.0
    %277 = vmatpush1.msra.mxu0 0.0
    %278 = vmatprep.subr.mxu0 0.0
    %279 = vmatpush1.msra.mxu0 0.0
    %280 = vmatprep.subr.mxu0 0.0
    %281 = vmatpush1.msra.mxu0 0.0
    %282 = vmatprep.subr.mxu0 0.0
    %283 = vmatpush1.msra.mxu0 0.0
    %284 = vmatprep.subr.mxu0 0.0
    %285 = vmatpush1.msra.mxu0 0.0
    %286 = vmatprep.subr.mxu0 0.0
    %287 = vmatpush1.msra.mxu0 0.0
    %288 = vmatprep.subr.mxu0 0.0
    %289 = vmatpush1.msra.mxu0 0.0
    %290 = vmatprep.subr.mxu0 0.0
    %291 = vmatpush1.msra.mxu0 0.0
    %292 = vmatprep.subr.mxu0 0.0
    %293 = vmatpush1.msra.mxu0 0.0
    %294 = vmatprep.subr.mxu0 0.0
    %295 = vmatpush1.msra.mxu0 0.0
    %296 = vmatprep.subr.mxu0 0.0
    %297 = vmatpush1.msra.mxu0 0.0
    %298 = vmatprep.subr.mxu0 0.0
    %299 = vmatpush1.msra.mxu0 0.0
    %300 = vmatprep.subr.mxu0 0.0
    %301 = vmatpush1.msra.mxu0 0.0
    %302 = vmatprep.subr.mxu0 0.0
    %303 = vmatpush1.msra.mxu0 0.0
    %304 = vmatprep.subr.mxu0 0.0
    %305 = vmatpush1.msra.mxu0 0.0
    %306 = vmatprep.subr.mxu0 0.0
    %307 = vmatpush1.msra.mxu0 0.0
    %308 = vmatprep.mubr.f32.mxu0 0.0
    %309 = vmatmul.mubr.f32.gmra.mrb[0].mxu0 %v239
    %v310 = vpop.f32.mrb[0].mxu0
    %v311 = vadd.f32 %v237, %v310
    %v312 = vpop.f32.mrb[0].mxu0
    %313 = vmatprep.mubr.f32.mxu0 0.0
    %314 = vmatmul.mubr.f32.gmra.mrb[0].mxu0 %v242
    %v315 = vpop.f32.mrb[0].mxu0
    %v316 = vadd.f32 %v237, %v315
    %v317 = vpop.f32.mrb[0].mxu0
    %318 = vdwg.mxu0
    %v319 = vld [vmem:[#allocation2 + $0x20] sm:$0xff]
    %v320 = vld [vmem:[#allocation2 + $0x28] sm:$0xff]
    %v321 = vld [vmem:[#allocation2 + $0x30] sm:$0xff]
    %v322 = vld [vmem:[#allocation2 + $0x38] sm:$0xff]
    %v323 = vld [vmem:[#allocation2 + $0x101] sm:$0x1]
    %326 = vrot.lane.b32.xlu0 %v311, 96
    %v327 = vpop.permute.xlu0 %326
    %328 = vrot.lane.b32.xlu0 %v316, 96
    %v329 = vpop.permute.xlu0 %328
    %vm330 = vcmask 64512
    %v331 = vsel %vm330, %v311, 0
    %v333 = vsel %vm330, %v316, 0
    %v335 = vsel %vm330, %v327, 0
    %v337 = vsel %vm330, %v329, 0
    %339 = vmatprep.subr.mxu0 0.0
    %340 = vmatpush1.xpose.msra.mxu0 %v335
    %341 = vmatprep.subr.mxu0 0.0
    %342 = vmatpush1.xpose.msra.mxu0 %v337
    %343 = vmatprep.subr.mxu0 0.0
    %344 = vmatpush1.xpose.msra.mxu0 0.0
    %345 = vmatprep.subr.mxu0 0.0
    %346 = vmatpush1.xpose.msra.mxu0 0.0
    %347 = vmatprep.subr.mxu0 0.0
    %348 = vmatpush1.xpose.msra.mxu0 0.0
    %349 = vmatprep.subr.mxu0 0.0
    %350 = vmatpush1.xpose.msra.mxu0 0.0
    %351 = vmatprep.subr.mxu0 0.0
    %352 = vmatpush1.xpose.msra.mxu0 0.0
    %353 = vmatprep.subr.mxu0 0.0
    %354 = vmatpush1.xpose.msra.mxu0 0.0
    %355 = vmatprep.subr.mxu0 0.0
    %356 = vmatpush1.xpose.msra.mxu0 0.0
    %357 = vmatprep.subr.mxu0 0.0
    %358 = vmatpush1.xpose.msra.mxu0 0.0
    %359 = vmatprep.subr.mxu0 0.0
    %360 = vmatpush1.xpose.msra.mxu0 0.0
    %361 = vmatprep.subr.mxu0 0.0
    %362 = vmatpush1.xpose.msra.mxu0 0.0
    %363 = vmatprep.subr.mxu0 0.0
    %364 = vmatpush1.xpose.msra.mxu0 0.0
    %365 = vmatprep.subr.mxu0 0.0
    %366 = vmatpush1.xpose.msra.mxu0 0.0
    %367 = vmatprep.subr.mxu0 0.0
    %368 = vmatpush1.xpose.msra.mxu0 0.0
    %369 = vmatprep.subr.mxu0 0.0
    %370 = vmatpush1.xpose.msra.mxu0 0.0
    %371 = vmatprep.subr.mxu0 0.0
    %372 = vmatpush1.xpose.msra.mxu0 0.0
    %373 = vmatprep.subr.mxu0 0.0
    %374 = vmatpush1.xpose.msra.mxu0 0.0
    %375 = vmatprep.subr.mxu0 0.0
    %376 = vmatpush1.xpose.msra.mxu0 0.0
    %377 = vmatprep.subr.mxu0 0.0
    %378 = vmatpush1.xpose.msra.mxu0 0.0
    %379 = vmatprep.subr.mxu0 0.0
    %380 = vmatpush1.xpose.msra.mxu0 0.0
    %381 = vmatprep.subr.mxu0 0.0
    %382 = vmatpush1.xpose.msra.mxu0 0.0
    %383 = vmatprep.subr.mxu0 0.0
    %384 = vmatpush1.xpose.msra.mxu0 0.0
    %385 = vmatprep.subr.mxu0 0.0
    %386 = vmatpush1.xpose.msra.mxu0 0.0
    %387 = vmatprep.subr.mxu0 0.0
    %388 = vmatpush1.xpose.msra.mxu0 0.0
    %389 = vmatprep.subr.mxu0 0.0
    %390 = vmatpush1.xpose.msra.mxu0 0.0
    %391 = vmatprep.subr.mxu0 0.0
    %392 = vmatpush1.xpose.msra.mxu0 0.0
    %393 = vmatprep.subr.mxu0 0.0
    %394 = vmatpush1.xpose.msra.mxu0 0.0
    %395 = vmatprep.subr.mxu0 0.0
    %396 = vmatpush1.xpose.msra.mxu0 0.0
    %397 = vmatprep.subr.mxu0 0.0
    %398 = vmatpush1.xpose.msra.mxu0 0.0
    %399 = vmatprep.subr.mxu0 0.0
    %400 = vmatpush1.xpose.msra.mxu0 0.0
    %401 = vmatprep.subr.mxu0 0.0
    %402 = vmatpush1.xpose.msra.mxu0 0.0
    %403 = vmatprep.mubr.f32.mxu0 0.0
    %404 = vmatmul.mubr.f32.gmra.mrb[0].mxu0 %v331
    %v405 = vpop.f32.mrb[0].mxu0
    %v406 = vadd.f32 0.0, %v405
    %v407 = vpop.f32.mrb[0].mxu0
    %408 = vmatprep.mubr.f32.mxu0 0.0
    %409 = vmatmul.mubr.f32.gmra.mrb[0].mxu0 %v333
    %v410 = vpop.f32.mrb[0].mxu0
    %v411 = vadd.f32 0.0, %v410
    %v412 = vpop.f32.mrb[0].mxu0
    %413 = vdwg.mxu0
    %414 = vrot.lane.b32.xlu0 %v311, 120
    %v415 = vpop.permute.xlu0 %414
    %416 = vrot.lane.b32.xlu0 %v316, 120
    %v417 = vpop.permute.xlu0 %416
    %418 = vrot.lane.b32.xlu0 %v311, 88
    %v419 = vpop.permute.xlu0 %418
    %420 = vrot.lane.b32.xlu0 %v316, 88
    %v421 = vpop.permute.xlu0 %420
    %v422 = vsel %vm330, %v415, 0
    %v424 = vsel %vm330, %v417, 0
    %v426 = vsel %vm330, %v419, 0
    %v428 = vsel %vm330, %v421, 0
    %430 = vmatprep.subr.mxu0 0.0
    %431 = vmatpush1.xpose.msra.mxu0 %v426
    %432 = vmatprep.subr.mxu0 0.0
    %433 = vmatpush1.xpose.msra.mxu0 %v428
    %434 = vmatprep.subr.mxu0 0.0
    %435 = vmatpush1.xpose.msra.mxu0 0.0
    %436 = vmatprep.subr.mxu0 0.0
    %437 = vmatpush1.xpose.msra.mxu0 0.0
    %438 = vmatprep.subr.mxu0 0.0
    %439 = vmatpush1.xpose.msra.mxu0 0.0
    %440 = vmatprep.subr.mxu0 0.0
    %441 = vmatpush1.xpose.msra.mxu0 0.0
    %442 = vmatprep.subr.mxu0 0.0
    %443 = vmatpush1.xpose.msra.mxu0 0.0
    %444 = vmatprep.subr.mxu0 0.0
    %445 = vmatpush1.xpose.msra.mxu0 0.0
    %446 = vmatprep.subr.mxu0 0.0
    %447 = vmatpush1.xpose.msra.mxu0 0.0
    %448 = vmatprep.subr.mxu0 0.0
    %449 = vmatpush1.xpose.msra.mxu0 0.0
    %450 = vmatprep.subr.mxu0 0.0
    %451 = vmatpush1.xpose.msra.mxu0 0.0
    %452 = vmatprep.subr.mxu0 0.0
    %453 = vmatpush1.xpose.msra.mxu0 0.0
    %454 = vmatprep.subr.mxu0 0.0
    %455 = vmatpush1.xpose.msra.mxu0 0.0
    %456 = vmatprep.subr.mxu0 0.0
    %457 = vmatpush1.xpose.msra.mxu0 0.0
    %458 = vmatprep.subr.mxu0 0.0
    %459 = vmatpush1.xpose.msra.mxu0 0.0
    %460 = vmatprep.subr.mxu0 0.0
    %461 = vmatpush1.xpose.msra.mxu0 0.0
    %462 = vmatprep.subr.mxu0 0.0
    %463 = vmatpush1.xpose.msra.mxu0 0.0
    %464 = vmatprep.subr.mxu0 0.0
    %465 = vmatpush1.xpose.msra.mxu0 0.0
    %466 = vmatprep.subr.mxu0 0.0
    %467 = vmatpush1.xpose.msra.mxu0 0.0
    %468 = vmatprep.subr.mxu0 0.0
    %469 = vmatpush1.xpose.msra.mxu0 0.0
    %470 = vmatprep.subr.mxu0 0.0
    %471 = vmatpush1.xpose.msra.mxu0 0.0
    %472 = vmatprep.subr.mxu0 0.0
    %473 = vmatpush1.xpose.msra.mxu0 0.0
    %474 = vmatprep.subr.mxu0 0.0
    %475 = vmatpush1.xpose.msra.mxu0 0.0
    %476 = vmatprep.subr.mxu0 0.0
    %477 = vmatpush1.xpose.msra.mxu0 0.0
    %478 = vmatprep.subr.mxu0 0.0
    %479 = vmatpush1.xpose.msra.mxu0 0.0
    %480 = vmatprep.subr.mxu0 0.0
    %481 = vmatpush1.xpose.msra.mxu0 0.0
    %482 = vmatprep.subr.mxu0 0.0
    %483 = vmatpush1.xpose.msra.mxu0 0.0
    %484 = vmatprep.subr.mxu0 0.0
    %485 = vmatpush1.xpose.msra.mxu0 0.0
    %486 = vmatprep.subr.mxu0 0.0
    %487 = vmatpush1.xpose.msra.mxu0 0.0
    %488 = vmatprep.subr.mxu0 0.0
    %489 = vmatpush1.xpose.msra.mxu0 0.0
    %490 = vmatprep.subr.mxu0 0.0
    %491 = vmatpush1.xpose.msra.mxu0 0.0
    %492 = vmatprep.subr.mxu0 0.0
    %493 = vmatpush1.xpose.msra.mxu0 0.0
    %494 = vmatprep.mubr.f32.mxu0 0.0
    %495 = vmatmul.mubr.f32.gmra.mrb[0].mxu0 %v422
    %v496 = vpop.f32.mrb[0].mxu0
    %v497 = vadd.f32 0.0, %v496
    %v498 = vpop.f32.mrb[0].mxu0
    %499 = vmatprep.mubr.f32.mxu0 0.0
    %500 = vmatmul.mubr.f32.gmra.mrb[0].mxu0 %v424
    %v501 = vpop.f32.mrb[0].mxu0
    %v502 = vadd.f32 0.0, %v501
    %v503 = vpop.f32.mrb[0].mxu0
    %504 = vdwg.mxu0
    %505 = vrot.lane.b32.xlu0 %v311, 112
    %v506 = vpop.permute.xlu0 %505
    %507 = vrot.lane.b32.xlu0 %v316, 112
    %v508 = vpop.permute.xlu0 %507
    %509 = vrot.lane.b32.xlu0 %v311, 80
    %v510 = vpop.permute.xlu0 %509
    %511 = vrot.lane.b32.xlu0 %v316, 80
    %v512 = vpop.permute.xlu0 %511
    %v513 = vsel %vm330, %v506, 0
    %v515 = vsel %vm330, %v508, 0
    %v517 = vsel %vm330, %v510, 0
    %v519 = vsel %vm330, %v512, 0
    %521 = vmatprep.subr.mxu0 0.0
    %522 = vmatpush1.xpose.msra.mxu0 %v517
    %523 = vmatprep.subr.mxu0 0.0
    %524 = vmatpush1.xpose.msra.mxu0 %v519
    %525 = vmatprep.subr.mxu0 0.0
    %526 = vmatpush1.xpose.msra.mxu0 0.0
    %527 = vmatprep.subr.mxu0 0.0
    %528 = vmatpush1.xpose.msra.mxu0 0.0
    %529 = vmatprep.subr.mxu0 0.0
    %530 = vmatpush1.xpose.msra.mxu0 0.0
    %531 = vmatprep.subr.mxu0 0.0
    %532 = vmatpush1.xpose.msra.mxu0 0.0
    %533 = vmatprep.subr.mxu0 0.0
    %534 = vmatpush1.xpose.msra.mxu0 0.0
    %535 = vmatprep.subr.mxu0 0.0
    %536 = vmatpush1.xpose.msra.mxu0 0.0
    %537 = vmatprep.subr.mxu0 0.0
    %538 = vmatpush1.xpose.msra.mxu0 0.0
    %539 = vmatprep.subr.mxu0 0.0
    %540 = vmatpush1.xpose.msra.mxu0 0.0
    %541 = vmatprep.subr.mxu0 0.0
    %542 = vmatpush1.xpose.msra.mxu0 0.0
    %543 = vmatprep.subr.mxu0 0.0
    %544 = vmatpush1.xpose.msra.mxu0 0.0
    %545 = vmatprep.subr.mxu0 0.0
    %546 = vmatpush1.xpose.msra.mxu0 0.0
    %547 = vmatprep.subr.mxu0 0.0
    %548 = vmatpush1.xpose.msra.mxu0 0.0
    %549 = vmatprep.subr.mxu0 0.0
    %550 = vmatpush1.xpose.msra.mxu0 0.0
    %551 = vmatprep.subr.mxu0 0.0
    %552 = vmatpush1.xpose.msra.mxu0 0.0
    %553 = vmatprep.subr.mxu0 0.0
    %554 = vmatpush1.xpose.msra.mxu0 0.0
    %555 = vmatprep.subr.mxu0 0.0
    %556 = vmatpush1.xpose.msra.mxu0 0.0
    %557 = vmatprep.subr.mxu0 0.0
    %558 = vmatpush1.xpose.msra.mxu0 0.0
    %559 = vmatprep.subr.mxu0 0.0
    %560 = vmatpush1.xpose.msra.mxu0 0.0
    %561 = vmatprep.subr.mxu0 0.0
    %562 = vmatpush1.xpose.msra.mxu0 0.0
    %563 = vmatprep.subr.mxu0 0.0
    %564 = vmatpush1.xpose.msra.mxu0 0.0
    %565 = vmatprep.subr.mxu0 0.0
    %566 = vmatpush1.xpose.msra.mxu0 0.0
    %567 = vmatprep.subr.mxu0 0.0
    %568 = vmatpush1.xpose.msra.mxu0 0.0
    %569 = vmatprep.subr.mxu0 0.0
    %570 = vmatpush1.xpose.msra.mxu0 0.0
    %571 = vmatprep.subr.mxu0 0.0
    %572 = vmatpush1.xpose.msra.mxu0 0.0
    %573 = vmatprep.subr.mxu0 0.0
    %574 = vmatpush1.xpose.msra.mxu0 0.0
    %575 = vmatprep.subr.mxu0 0.0
    %576 = vmatpush1.xpose.msra.mxu0 0.0
    %577 = vmatprep.subr.mxu0 0.0
    %578 = vmatpush1.xpose.msra.mxu0 0.0
    %579 = vmatprep.subr.mxu0 0.0
    %580 = vmatpush1.xpose.msra.mxu0 0.0
    %581 = vmatprep.subr.mxu0 0.0
    %582 = vmatpush1.xpose.msra.mxu0 0.0
    %583 = vmatprep.subr.mxu0 0.0
    %584 = vmatpush1.xpose.msra.mxu0 0.0
    %585 = vmatprep.mubr.f32.mxu0 0.0
    %586 = vmatmul.mubr.f32.gmra.mrb[0].mxu0 %v513
    %v587 = vpop.f32.mrb[0].mxu0
    %v588 = vadd.f32 0.0, %v587
    %v589 = vpop.f32.mrb[0].mxu0
    %590 = vmatprep.mubr.f32.mxu0 0.0
    %591 = vmatmul.mubr.f32.gmra.mrb[0].mxu0 %v515
    %v592 = vpop.f32.mrb[0].mxu0
    %v593 = vadd.f32 0.0, %v592
    %v594 = vpop.f32.mrb[0].mxu0
    %595 = vdwg.mxu0
    %596 = vrot.lane.b32.xlu0 %v311, 104
    %v597 = vpop.permute.xlu0 %596
    %598 = vrot.lane.b32.xlu0 %v316, 104
    %v599 = vpop.permute.xlu0 %598
    %600 = vrot.lane.b32.xlu0 %v311, 72
    %v601 = vpop.permute.xlu0 %600
    %602 = vrot.lane.b32.xlu0 %v316, 72
    %v603 = vpop.permute.xlu0 %602
    %v604 = vsel %vm330, %v597, 0
    %v606 = vsel %vm330, %v599, 0
    %v608 = vsel %vm330, %v601, 0
    %v610 = vsel %vm330, %v603, 0
    %612 = vmatprep.subr.mxu0 0.0
    %613 = vmatpush1.xpose.msra.mxu0 %v608
    %614 = vmatprep.subr.mxu0 0.0
    %615 = vmatpush1.xpose.msra.mxu0 %v610
    %616 = vmatprep.subr.mxu0 0.0
    %617 = vmatpush1.xpose.msra.mxu0 0.0
    %618 = vmatprep.subr.mxu0 0.0
    %619 = vmatpush1.xpose.msra.mxu0 0.0
    %620 = vmatprep.subr.mxu0 0.0
    %621 = vmatpush1.xpose.msra.mxu0 0.0
    %622 = vmatprep.subr.mxu0 0.0
    %623 = vmatpush1.xpose.msra.mxu0 0.0
    %624 = vmatprep.subr.mxu0 0.0
    %625 = vmatpush1.xpose.msra.mxu0 0.0
    %626 = vmatprep.subr.mxu0 0.0
    %627 = vmatpush1.xpose.msra.mxu0 0.0
    %628 = vmatprep.subr.mxu0 0.0
    %629 = vmatpush1.xpose.msra.mxu0 0.0
    %630 = vmatprep.subr.mxu0 0.0
    %631 = vmatpush1.xpose.msra.mxu0 0.0
    %632 = vmatprep.subr.mxu0 0.0
    %633 = vmatpush1.xpose.msra.mxu0 0.0
    %634 = vmatprep.subr.mxu0 0.0
    %635 = vmatpush1.xpose.msra.mxu0 0.0
    %636 = vmatprep.subr.mxu0 0.0
    %637 = vmatpush1.xpose.msra.mxu0 0.0
    %638 = vmatprep.subr.mxu0 0.0
    %639 = vmatpush1.xpose.msra.mxu0 0.0
    %640 = vmatprep.subr.mxu0 0.0
    %641 = vmatpush1.xpose.msra.mxu0 0.0
    %642 = vmatprep.subr.mxu0 0.0
    %643 = vmatpush1.xpose.msra.mxu0 0.0
    %644 = vmatprep.subr.mxu0 0.0
    %645 = vmatpush1.xpose.msra.mxu0 0.0
    %646 = vmatprep.subr.mxu0 0.0
    %647 = vmatpush1.xpose.msra.mxu0 0.0
    %648 = vmatprep.subr.mxu0 0.0
    %649 = vmatpush1.xpose.msra.mxu0 0.0
    %650 = vmatprep.subr.mxu0 0.0
    %651 = vmatpush1.xpose.msra.mxu0 0.0
    %652 = vmatprep.subr.mxu0 0.0
    %653 = vmatpush1.xpose.msra.mxu0 0.0
    %654 = vmatprep.subr.mxu0 0.0
    %655 = vmatpush1.xpose.msra.mxu0 0.0
    %656 = vmatprep.subr.mxu0 0.0
    %657 = vmatpush1.xpose.msra.mxu0 0.0
    %658 = vmatprep.subr.mxu0 0.0
    %659 = vmatpush1.xpose.msra.mxu0 0.0
    %660 = vmatprep.subr.mxu0 0.0
    %661 = vmatpush1.xpose.msra.mxu0 0.0
    %662 = vmatprep.subr.mxu0 0.0
    %663 = vmatpush1.xpose.msra.mxu0 0.0
    %664 = vmatprep.subr.mxu0 0.0
    %665 = vmatpush1.xpose.msra.mxu0 0.0
    %666 = vmatprep.subr.mxu0 0.0
    %667 = vmatpush1.xpose.msra.mxu0 0.0
    %668 = vmatprep.subr.mxu0 0.0
    %669 = vmatpush1.xpose.msra.mxu0 0.0
    %670 = vmatprep.subr.mxu0 0.0
    %671 = vmatpush1.xpose.msra.mxu0 0.0
    %672 = vmatprep.subr.mxu0 0.0
    %673 = vmatpush1.xpose.msra.mxu0 0.0
    %674 = vmatprep.subr.mxu0 0.0
    %675 = vmatpush1.xpose.msra.mxu0 0.0
    %676 = vmatprep.mubr.f32.mxu0 0.0
    %677 = vmatmul.mubr.f32.gmra.mrb[0].mxu0 %v604
    %v678 = vpop.f32.mrb[0].mxu0
    %v679 = vadd.f32 0.0, %v678
    %v680 = vpop.f32.mrb[0].mxu0
    %681 = vmatprep.mubr.f32.mxu0 0.0
    %682 = vmatmul.mubr.f32.gmra.mrb[0].mxu0 %v606
    %v683 = vpop.f32.mrb[0].mxu0
    %v684 = vadd.f32 0.0, %v683
    %v685 = vpop.f32.mrb[0].mxu0
    %686 = vdwg.mxu0
    %v687 = vadd.f32 %v406, %v217
    %v688 = vadd.f32 %v411, %v218
    %v689 = vadd.f32 %v497, %v217
    %v690 = vadd.f32 %v502, %v218
    %v691 = vadd.f32 %v588, %v217
    %v692 = vadd.f32 %v593, %v218
    %v693 = vadd.f32 %v679, %v217
    %v694 = vadd.f32 %v684, %v218
    %vm695 = vcmask 130048
    %v696 = vsel %vm695, %v687, -inf
    %697 = vmax.xlane.f32.xlu0 %v696
    %v698 = vpop.xlane.xlu0 %697
    %v699 = vsel %vm695, %v688, -inf
    %700 = vmax.xlane.f32.xlu0 %v699
    %v701 = vpop.xlane.xlu0 %700
    %v702 = vsel %vm695, %v689, -inf
    %703 = vmax.xlane.f32.xlu0 %v702
    %v704 = vpop.xlane.xlu0 %703
    %v705 = vsel %vm695, %v690, -inf
    %706 = vmax.xlane.f32.xlu0 %v705
    %v707 = vpop.xlane.xlu0 %706
    %v708 = vsel %vm695, %v691, -inf
    %709 = vmax.xlane.f32.xlu0 %v708
    %v710 = vpop.xlane.xlu0 %709
    %v711 = vsel %vm695, %v692, -inf
    %712 = vmax.xlane.f32.xlu0 %v711
    %v713 = vpop.xlane.xlu0 %712
    %v714 = vsel %vm695, %v693, -inf
    %715 = vmax.xlane.f32.xlu0 %v714
    %v716 = vpop.xlane.xlu0 %715
    %v717 = vsel %vm695, %v694, -inf
    %718 = vmax.xlane.f32.xlu0 %v717
    %v719 = vpop.xlane.xlu0 %718
    %v720 = vsub.f32 %v687, %v698
    %v721 = vsub.f32 %v688, %v701
    %v722 = vsub.f32 %v689, %v704
    %v723 = vsub.f32 %v690, %v707
    %v724 = vsub.f32 %v691, %v710
    %v725 = vsub.f32 %v692, %v713
    %v726 = vsub.f32 %v693, %v716
    %v727 = vsub.f32 %v694, %v719
    %v728 = vmul.f32 %v720, 1.442695
    %v729 = vpow.pop %v728
    %v730 = vmul.f32 %v721, 1.442695
    %v731 = vpow.pop %v730
    %v732 = vmul.f32 %v722, 1.442695
    %v733 = vpow.pop %v732
    %v734 = vmul.f32 %v723, 1.442695
    %v735 = vpow.pop %v734
    %v736 = vmul.f32 %v724, 1.442695
    %v737 = vpow.pop %v736
    %v738 = vmul.f32 %v725, 1.442695
    %v739 = vpow.pop %v738
    %v740 = vmul.f32 %v726, 1.442695
    %v741 = vpow.pop %v740
    %v742 = vmul.f32 %v727, 1.442695
    %v743 = vpow.pop %v742
    %v744 = vsel %vm695, %v729, 0.0
    %745 = vadd.xlane.f32.xlu0 %v744
    %v746 = vpop.xlane.xlu0 %745
    %v747 = vsel %vm695, %v731, 0.0
    %748 = vadd.xlane.f32.xlu0 %v747
    %v749 = vpop.xlane.xlu0 %748
    %v750 = vsel %vm695, %v733, 0.0
    %751 = vadd.xlane.f32.xlu0 %v750
    %v752 = vpop.xlane.xlu0 %751
    %v753 = vsel %vm695, %v735, 0.0
    %754 = vadd.xlane.f32.xlu0 %v753
    %v755 = vpop.xlane.xlu0 %754
    %v756 = vsel %vm695, %v737, 0.0
    %757 = vadd.xlane.f32.xlu0 %v756
    %v758 = vpop.xlane.xlu0 %757
    %v759 = vsel %vm695, %v739, 0.0
    %760 = vadd.xlane.f32.xlu0 %v759
    %v761 = vpop.xlane.xlu0 %760
    %v762 = vsel %vm695, %v741, 0.0
    %763 = vadd.xlane.f32.xlu0 %v762
    %v764 = vpop.xlane.xlu0 %763
    %v765 = vsel %vm695, %v743, 0.0
    %766 = vadd.xlane.f32.xlu0 %v765
    %v767 = vpop.xlane.xlu0 %766
    %v768 = vrcp.pop %v746
    %v769 = vrcp.pop %v749
    %v770 = vrcp.pop %v752
    %v771 = vrcp.pop %v755
    %v772 = vrcp.pop %v758
    %v773 = vrcp.pop %v761
    %v774 = vrcp.pop %v764
    %v775 = vrcp.pop %v767
    %v776 = vmul.f32 %v729, %v768
    %v777 = vmul.f32 %v731, %v769
    %v778 = vmul.f32 %v733, %v770
    %v779 = vmul.f32 %v735, %v771
    %v780 = vmul.f32 %v737, %v772
    %v781 = vmul.f32 %v739, %v773
    %v782 = vmul.f32 %v741, %v774
    %v783 = vmul.f32 %v743, %v775
    %vm784 = vcmp.le.f32.partialorder %v698, -5e+29
    %vm785 = vcmp.le.f32.partialorder %v701, -5e+29
    %vm786 = vcmp.le.f32.partialorder %v704, -5e+29
    %vm787 = vcmp.le.f32.partialorder %v707, -5e+29
    %vm788 = vcmp.le.f32.partialorder %v710, -5e+29
    %vm789 = vcmp.le.f32.partialorder %v713, -5e+29
    %vm790 = vcmp.le.f32.partialorder %v716, -5e+29
    %vm791 = vcmp.le.f32.partialorder %v719, -5e+29
    %v792 = vsel %vm784, 1, 0
    %v793 = vsel %vm785, 1, 0
    %v794 = vsel %vm786, 1, 0
    %v795 = vsel %vm787, 1, 0
    %v796 = vsel %vm788, 1, 0
    %v797 = vsel %vm789, 1, 0
    %v798 = vsel %vm790, 1, 0
    %v799 = vsel %vm791, 1, 0
    %vm800 = vcmp.eq.s32.totalorder %v792, 1
    %vm801 = vcmp.eq.s32.totalorder %v793, 1
    %vm802 = vcmp.eq.s32.totalorder %v794, 1
    %vm803 = vcmp.eq.s32.totalorder %v795, 1
    %vm804 = vcmp.eq.s32.totalorder %v796, 1
    %vm805 = vcmp.eq.s32.totalorder %v797, 1
    %vm806 = vcmp.eq.s32.totalorder %v798, 1
    %vm807 = vcmp.eq.s32.totalorder %v799, 1
    %v808 = vsel %vm800, 0.0, %v776
    %v809 = vsel %vm801, 0.0, %v777
    %v810 = vsel %vm802, 0.0, %v778
    %v811 = vsel %vm803, 0.0, %v779
    %v812 = vsel %vm804, 0.0, %v780
    %v813 = vsel %vm805, 0.0, %v781
    %v814 = vsel %vm806, 0.0, %v782
    %v815 = vsel %vm807, 0.0, %v783
    %816 = vrot.lane.b32.xlu0 %v311, 64
    %v817 = vpop.permute.xlu0 %816
    %818 = vrot.lane.b32.xlu0 %v316, 64
    %v819 = vpop.permute.xlu0 %818
    %v823 = vsel %vm695, %v808, 0
    %v826 = vsel %vm695, %v809, 0
    %828 = vmatprep.subr.mxu0 0.0
    %829 = vmatpush1.msra.mxu0 %v817
    %830 = vmatprep.subr.mxu0 0.0
    %831 = vmatpush1.msra.mxu0 %v819
    %832 = vmatprep.subr.mxu0 0.0
    %833 = vmatpush1.msra.mxu0 0.0
    %834 = vmatprep.subr.mxu0 0.0
    %835 = vmatpush1.msra.mxu0 0.0
    %836 = vmatprep.subr.mxu0 0.0
    %837 = vmatpush1.msra.mxu0 0.0
    %838 = vmatprep.subr.mxu0 0.0
    %839 = vmatpush1.msra.mxu0 0.0
    %840 = vmatprep.subr.mxu0 0.0
    %841 = vmatpush1.msra.mxu0 0.0
    %842 = vmatprep.subr.mxu0 0.0
    %843 = vmatpush1.msra.mxu0 0.0
    %844 = vmatprep.subr.mxu0 0.0
    %845 = vmatpush1.msra.mxu0 0.0
    %846 = vmatprep.subr.mxu0 0.0
    %847 = vmatpush1.msra.mxu0 0.0
    %848 = vmatprep.subr.mxu0 0.0
    %849 = vmatpush1.msra.mxu0 0.0
    %850 = vmatprep.subr.mxu0 0.0
    %851 = vmatpush1.msra.mxu0 0.0
    %852 = vmatprep.subr.mxu0 0.0
    %853 = vmatpush1.msra.mxu0 0.0
    %854 = vmatprep.subr.mxu0 0.0
    %855 = vmatpush1.msra.mxu0 0.0
    %856 = vmatprep.subr.mxu0 0.0
    %857 = vmatpush1.msra.mxu0 0.0
    %858 = vmatprep.subr.mxu0 0.0
    %859 = vmatpush1.msra.mxu0 0.0
    %860 = vmatprep.subr.mxu0 0.0
    %861 = vmatpush1.msra.mxu0 0.0
    %862 = vmatprep.subr.mxu0 0.0
    %863 = vmatpush1.msra.mxu0 0.0
    %864 = vmatprep.subr.mxu0 0.0
    %865 = vmatpush1.msra.mxu0 0.0
    %866 = vmatprep.subr.mxu0 0.0
    %867 = vmatpush1.msra.mxu0 0.0
    %868 = vmatprep.subr.mxu0 0.0
    %869 = vmatpush1.msra.mxu0 0.0
    %870 = vmatprep.subr.mxu0 0.0
    %871 = vmatpush1.msra.mxu0 0.0
    %872 = vmatprep.subr.mxu0 0.0
    %873 = vmatpush1.msra.mxu0 0.0
    %874 = vmatprep.subr.mxu0 0.0
    %875 = vmatpush1.msra.mxu0 0.0
    %876 = vmatprep.subr.mxu0 0.0
    %877 = vmatpush1.msra.mxu0 0.0
    %878 = vmatprep.subr.mxu0 0.0
    %879 = vmatpush1.msra.mxu0 0.0
    %880 = vmatprep.subr.mxu0 0.0
    %881 = vmatpush1.msra.mxu0 0.0
    %882 = vmatprep.subr.mxu0 0.0
    %883 = vmatpush1.msra.mxu0 0.0
    %884 = vmatprep.subr.mxu0 0.0
    %885 = vmatpush1.msra.mxu0 0.0
    %886 = vmatprep.subr.mxu0 0.0
    %887 = vmatpush1.msra.mxu0 0.0
    %888 = vmatprep.subr.mxu0 0.0
    %889 = vmatpush1.msra.mxu0 0.0
    %890 = vmatprep.subr.mxu0 0.0
    %891 = vmatpush1.msra.mxu0 0.0
    %892 = vmatprep.mubr.f32.mxu0 0.0
    %893 = vmatmul.mubr.f32.gmra.mrb[0].mxu0 %v823
    %v894 = vpop.f32.mrb[0].mxu0
    %v895 = vadd.f32 0.0, %v894
    %v896 = vpop.f32.mrb[0].mxu0
    %897 = vmatprep.mubr.f32.mxu0 0.0
    %898 = vmatmul.mubr.f32.gmra.mrb[0].mxu0 %v826
    %v899 = vpop.f32.mrb[0].mxu0
    %v900 = vadd.f32 0.0, %v899
    %v901 = vpop.f32.mrb[0].mxu0
    %902 = vdwg.mxu0
    %903 = vrot.lane.b32.xlu0 %v311, 56
    %v904 = vpop.permute.xlu0 %903
    %905 = vrot.lane.b32.xlu0 %v316, 56
    %v906 = vpop.permute.xlu0 %905
    %v910 = vsel %vm695, %v810, 0
    %v913 = vsel %vm695, %v811, 0
    %915 = vmatprep.subr.mxu0 0.0
    %916 = vmatpush1.msra.mxu0 %v904
    %917 = vmatprep.subr.mxu0 0.0
    %918 = vmatpush1.msra.mxu0 %v906
    %919 = vmatprep.subr.mxu0 0.0
    %920 = vmatpush1.msra.mxu0 0.0
    %921 = vmatprep.subr.mxu0 0.0
    %922 = vmatpush1.msra.mxu0 0.0
    %923 = vmatprep.subr.mxu0 0.0
    %924 = vmatpush1.msra.mxu0 0.0
    %925 = vmatprep.subr.mxu0 0.0
    %926 = vmatpush1.msra.mxu0 0.0
    %927 = vmatprep.subr.mxu0 0.0
    %928 = vmatpush1.msra.mxu0 0.0
    %929 = vmatprep.subr.mxu0 0.0
    %930 = vmatpush1.msra.mxu0 0.0
    %931 = vmatprep.subr.mxu0 0.0
    %932 = vmatpush1.msra.mxu0 0.0
    %933 = vmatprep.subr.mxu0 0.0
    %934 = vmatpush1.msra.mxu0 0.0
    %935 = vmatprep.subr.mxu0 0.0
    %936 = vmatpush1.msra.mxu0 0.0
    %937 = vmatprep.subr.mxu0 0.0
    %938 = vmatpush1.msra.mxu0 0.0
    %939 = vmatprep.subr.mxu0 0.0
    %940 = vmatpush1.msra.mxu0 0.0
    %941 = vmatprep.subr.mxu0 0.0
    %942 = vmatpush1.msra.mxu0 0.0
    %943 = vmatprep.subr.mxu0 0.0
    %944 = vmatpush1.msra.mxu0 0.0
    %945 = vmatprep.subr.mxu0 0.0
    %946 = vmatpush1.msra.mxu0 0.0
    %947 = vmatprep.subr.mxu0 0.0
    %948 = vmatpush1.msra.mxu0 0.0
    %949 = vmatprep.subr.mxu0 0.0
    %950 = vmatpush1.msra.mxu0 0.0
    %951 = vmatprep.subr.mxu0 0.0
    %952 = vmatpush1.msra.mxu0 0.0
    %953 = vmatprep.subr.mxu0 0.0
    %954 = vmatpush1.msra.mxu0 0.0
    %955 = vmatprep.subr.mxu0 0.0
    %956 = vmatpush1.msra.mxu0 0.0
    %957 = vmatprep.subr.mxu0 0.0
    %958 = vmatpush1.msra.mxu0 0.0
    %959 = vmatprep.subr.mxu0 0.0
    %960 = vmatpush1.msra.mxu0 0.0
    %961 = vmatprep.subr.mxu0 0.0
    %962 = vmatpush1.msra.mxu0 0.0
    %963 = vmatprep.subr.mxu0 0.0
    %964 = vmatpush1.msra.mxu0 0.0
    %965 = vmatprep.subr.mxu0 0.0
    %966 = vmatpush1.msra.mxu0 0.0
    %967 = vmatprep.subr.mxu0 0.0
    %968 = vmatpush1.msra.mxu0 0.0
    %969 = vmatprep.subr.mxu0 0.0
    %970 = vmatpush1.msra.mxu0 0.0
    %971 = vmatprep.subr.mxu0 0.0
    %972 = vmatpush1.msra.mxu0 0.0
    %973 = vmatprep.subr.mxu0 0.0
    %974 = vmatpush1.msra.mxu0 0.0
    %975 = vmatprep.subr.mxu0 0.0
    %976 = vmatpush1.msra.mxu0 0.0
    %977 = vmatprep.subr.mxu0 0.0
    %978 = vmatpush1.msra.mxu0 0.0
    %979 = vmatprep.mubr.f32.mxu0 0.0
    %980 = vmatmul.mubr.f32.gmra.mrb[0].mxu0 %v910
    %v981 = vpop.f32.mrb[0].mxu0
    %v982 = vadd.f32 0.0, %v981
    %v983 = vpop.f32.mrb[0].mxu0
    %984 = vmatprep.mubr.f32.mxu0 0.0
    %985 = vmatmul.mubr.f32.gmra.mrb[0].mxu0 %v913
    %v986 = vpop.f32.mrb[0].mxu0
    %v987 = vadd.f32 0.0, %v986
    %v988 = vpop.f32.mrb[0].mxu0
    %989 = vdwg.mxu0
    %990 = vrot.lane.b32.xlu0 %v311, 48
    %v991 = vpop.permute.xlu0 %990
    %992 = vrot.lane.b32.xlu0 %v316, 48
    %v993 = vpop.permute.xlu0 %992
    %v997 = vsel %vm695, %v812, 0
    %v1000 = vsel %vm695, %v813, 0
    %1002 = vmatprep.subr.mxu0 0.0
    %1003 = vmatpush1.msra.mxu0 %v991
    %1004 = vmatprep.subr.mxu0 0.0
    %1005 = vmatpush1.msra.mxu0 %v993
    %1006 = vmatprep.subr.mxu0 0.0
    %1007 = vmatpush1.msra.mxu0 0.0
    %1008 = vmatprep.subr.mxu0 0.0
    %1009 = vmatpush1.msra.mxu0 0.0
    %1010 = vmatprep.subr.mxu0 0.0
    %1011 = vmatpush1.msra.mxu0 0.0
    %1012 = vmatprep.subr.mxu0 0.0
    %1013 = vmatpush1.msra.mxu0 0.0
    %1014 = vmatprep.subr.mxu0 0.0
    %1015 = vmatpush1.msra.mxu0 0.0
    %1016 = vmatprep.subr.mxu0 0.0
    %1017 = vmatpush1.msra.mxu0 0.0
    %1018 = vmatprep.subr.mxu0 0.0
    %1019 = vmatpush1.msra.mxu0 0.0
    %1020 = vmatprep.subr.mxu0 0.0
    %1021 = vmatpush1.msra.mxu0 0.0
    %1022 = vmatprep.subr.mxu0 0.0
    %1023 = vmatpush1.msra.mxu0 0.0
    %1024 = vmatprep.subr.mxu0 0.0
    %1025 = vmatpush1.msra.mxu0 0.0
    %1026 = vmatprep.subr.mxu0 0.0
    %1027 = vmatpush1.msra.mxu0 0.0
    %1028 = vmatprep.subr.mxu0 0.0
    %1029 = vmatpush1.msra.mxu0 0.0
    %1030 = vmatprep.subr.mxu0 0.0
    %1031 = vmatpush1.msra.mxu0 0.0
    %1032 = vmatprep.subr.mxu0 0.0
    %1033 = vmatpush1.msra.mxu0 0.0
    %1034 = vmatprep.subr.mxu0 0.0
    %1035 = vmatpush1.msra.mxu0 0.0
    %1036 = vmatprep.subr.mxu0 0.0
    %1037 = vmatpush1.msra.mxu0 0.0
    %1038 = vmatprep.subr.mxu0 0.0
    %1039 = vmatpush1.msra.mxu0 0.0
    %1040 = vmatprep.subr.mxu0 0.0
    %1041 = vmatpush1.msra.mxu0 0.0
    %1042 = vmatprep.subr.mxu0 0.0
    %1043 = vmatpush1.msra.mxu0 0.0
    %1044 = vmatprep.subr.mxu0 0.0
    %1045 = vmatpush1.msra.mxu0 0.0
    %1046 = vmatprep.subr.mxu0 0.0
    %1047 = vmatpush1.msra.mxu0 0.0
    %1048 = vmatprep.subr.mxu0 0.0
    %1049 = vmatpush1.msra.mxu0 0.0
    %1050 = vmatprep.subr.mxu0 0.0
    %1051 = vmatpush1.msra.mxu0 0.0
    %1052 = vmatprep.subr.mxu0 0.0
    %1053 = vmatpush1.msra.mxu0 0.0
    %1054 = vmatprep.subr.mxu0 0.0
    %1055 = vmatpush1.msra.mxu0 0.0
    %1056 = vmatprep.subr.mxu0 0.0
    %1057 = vmatpush1.msra.mxu0 0.0
    %1058 = vmatprep.subr.mxu0 0.0
    %1059 = vmatpush1.msra.mxu0 0.0
    %1060 = vmatprep.subr.mxu0 0.0
    %1061 = vmatpush1.msra.mxu0 0.0
    %1062 = vmatprep.subr.mxu0 0.0
    %1063 = vmatpush1.msra.mxu0 0.0
    %1064 = vmatprep.subr.mxu0 0.0
    %1065 = vmatpush1.msra.mxu0 0.0
    %1066 = vmatprep.mubr.f32.mxu0 0.0
    %1067 = vmatmul.mubr.f32.gmra.mrb[0].mxu0 %v997
    %v1068 = vpop.f32.mrb[0].mxu0
    %v1069 = vadd.f32 0.0, %v1068
    %v1070 = vpop.f32.mrb[0].mxu0
    %1071 = vmatprep.mubr.f32.mxu0 0.0
    %1072 = vmatmul.mubr.f32.gmra.mrb[0].mxu0 %v1000
    %v1073 = vpop.f32.mrb[0].mxu0
    %v1074 = vadd.f32 0.0, %v1073
    %v1075 = vpop.f32.mrb[0].mxu0
    %1076 = vdwg.mxu0
    %1077 = vrot.lane.b32.xlu0 %v311, 40
    %v1078 = vpop.permute.xlu0 %1077
    %1079 = vrot.lane.b32.xlu0 %v316, 40
    %v1080 = vpop.permute.xlu0 %1079
    %v1084 = vsel %vm695, %v814, 0
    %v1087 = vsel %vm695, %v815, 0
    %1089 = vmatprep.subr.mxu0 0.0
    %1090 = vmatpush1.msra.mxu0 %v1078
    %1091 = vmatprep.subr.mxu0 0.0
    %1092 = vmatpush1.msra.mxu0 %v1080
    %1093 = vmatprep.subr.mxu0 0.0
    %1094 = vmatpush1.msra.mxu0 0.0
    %1095 = vmatprep.subr.mxu0 0.0
    %1096 = vmatpush1.msra.mxu0 0.0
    %1097 = vmatprep.subr.mxu0 0.0
    %1098 = vmatpush1.msra.mxu0 0.0
    %1099 = vmatprep.subr.mxu0 0.0
    %1100 = vmatpush1.msra.mxu0 0.0
    %1101 = vmatprep.subr.mxu0 0.0
    %1102 = vmatpush1.msra.mxu0 0.0
    %1103 = vmatprep.subr.mxu0 0.0
    %1104 = vmatpush1.msra.mxu0 0.0
    %1105 = vmatprep.subr.mxu0 0.0
    %1106 = vmatpush1.msra.mxu0 0.0
    %1107 = vmatprep.subr.mxu0 0.0
    %1108 = vmatpush1.msra.mxu0 0.0
    %1109 = vmatprep.subr.mxu0 0.0
    %1110 = vmatpush1.msra.mxu0 0.0
    %1111 = vmatprep.subr.mxu0 0.0
    %1112 = vmatpush1.msra.mxu0 0.0
    %1113 = vmatprep.subr.mxu0 0.0
    %1114 = vmatpush1.msra.mxu0 0.0
    %1115 = vmatprep.subr.mxu0 0.0
    %1116 = vmatpush1.msra.mxu0 0.0
    %1117 = vmatprep.subr.mxu0 0.0
    %1118 = vmatpush1.msra.mxu0 0.0
    %1119 = vmatprep.subr.mxu0 0.0
    %1120 = vmatpush1.msra.mxu0 0.0
    %1121 = vmatprep.subr.mxu0 0.0
    %1122 = vmatpush1.msra.mxu0 0.0
    %1123 = vmatprep.subr.mxu0 0.0
    %1124 = vmatpush1.msra.mxu0 0.0
    %1125 = vmatprep.subr.mxu0 0.0
    %1126 = vmatpush1.msra.mxu0 0.0
    %1127 = vmatprep.subr.mxu0 0.0
    %1128 = vmatpush1.msra.mxu0 0.0
    %1129 = vmatprep.subr.mxu0 0.0
    %1130 = vmatpush1.msra.mxu0 0.0
    %1131 = vmatprep.subr.mxu0 0.0
    %1132 = vmatpush1.msra.mxu0 0.0
    %1133 = vmatprep.subr.mxu0 0.0
    %1134 = vmatpush1.msra.mxu0 0.0
    %1135 = vmatprep.subr.mxu0 0.0
    %1136 = vmatpush1.msra.mxu0 0.0
    %1137 = vmatprep.subr.mxu0 0.0
    %1138 = vmatpush1.msra.mxu0 0.0
    %1139 = vmatprep.subr.mxu0 0.0
    %1140 = vmatpush1.msra.mxu0 0.0
    %1141 = vmatprep.subr.mxu0 0.0
    %1142 = vmatpush1.msra.mxu0 0.0
    %1143 = vmatprep.subr.mxu0 0.0
    %1144 = vmatpush1.msra.mxu0 0.0
    %1145 = vmatprep.subr.mxu0 0.0
    %1146 = vmatpush1.msra.mxu0 0.0
    %1147 = vmatprep.subr.mxu0 0.0
    %1148 = vmatpush1.msra.mxu0 0.0
    %1149 = vmatprep.subr.mxu0 0.0
    %1150 = vmatpush1.msra.mxu0 0.0
    %1151 = vmatprep.subr.mxu0 0.0
    %1152 = vmatpush1.msra.mxu0 0.0
    %1153 = vmatprep.mubr.f32.mxu0 0.0
    %1154 = vmatmul.mubr.f32.gmra.mrb[0].mxu0 %v1084
    %v1155 = vpop.f32.mrb[0].mxu0
    %v1156 = vadd.f32 0.0, %v1155
    %v1157 = vpop.f32.mrb[0].mxu0
    %1158 = vmatprep.mubr.f32.mxu0 0.0
    %1159 = vmatmul.mubr.f32.gmra.mrb[0].mxu0 %v1087
    %v1160 = vpop.f32.mrb[0].mxu0
    %v1161 = vadd.f32 0.0, %v1160
    %v1162 = vpop.f32.mrb[0].mxu0
    %1163 = vdwg.mxu0
    %1166 = vrot.lane.b32.xlu0 %v982, 8
    %v1167 = vpop.permute.xlu0 %1166
    %1168 = vrot.lane.b32.xlu0 %v987, 8
    %v1169 = vpop.permute.xlu0 %1168
    %1174 = vrot.lane.b32.xlu0 %v1069, 16
    %v1175 = vpop.permute.xlu0 %1174
    %1176 = vrot.lane.b32.xlu0 %v1074, 16
    %v1177 = vpop.permute.xlu0 %1176
    %1182 = vrot.lane.b32.xlu0 %v1156, 24
    %v1183 = vpop.permute.xlu0 %1182
    %1184 = vrot.lane.b32.xlu0 %v1161, 24
    %v1185 = vpop.permute.xlu0 %1184
    %v1188 = vsel %vm330, %v895, %v1167
    %v1189 = vsel %vm330, %v900, %v1169
    %v1190 = vsel %vm695, %v1188, %v1175
    %v1191 = vsel %vm695, %v1189, %v1177
    %vm1192 = vcmask 195584
    %v1193 = vsel %vm1192, %v1190, %v1183
    %v1194 = vsel %vm1192, %v1191, %v1185
    %v1195 = vlaneseq
    %v1196 = vshrl.u32 %v1195, 7
    %v1197 = vsub.s32 0, %v1196
    %v1198 = vrot.slane %v323, %v1197
    %v1200 = vsel %vm163, %v1193, 0
    %v1203 = vsel %vm163, %v1194, 0
    %1205 = vmatprep.subr.mxu0 0.0
    %1206 = vmatpush1.msra.mxu0 %v319
    %1207 = vmatprep.subr.mxu0 0.0
    %1208 = vmatpush1.msra.mxu0 %v320
    %1209 = vmatprep.subr.mxu0 0.0
    %1210 = vmatpush1.msra.mxu0 %v321
    %1211 = vmatprep.subr.mxu0 0.0
    %1212 = vmatpush1.msra.mxu0 %v322
    %1213 = vmatprep.subr.mxu0 0.0
    %1214 = vmatpush1.msra.mxu0 0.0
    %1215 = vmatprep.subr.mxu0 0.0
    %1216 = vmatpush1.msra.mxu0 0.0
    %1217 = vmatprep.subr.mxu0 0.0
    %1218 = vmatpush1.msra.mxu0 0.0
    %1219 = vmatprep.subr.mxu0 0.0
    %1220 = vmatpush1.msra.mxu0 0.0
    %1221 = vmatprep.subr.mxu0 0.0
    %1222 = vmatpush1.msra.mxu0 0.0
    %1223 = vmatprep.subr.mxu0 0.0
    %1224 = vmatpush1.msra.mxu0 0.0
    %1225 = vmatprep.subr.mxu0 0.0
    %1226 = vmatpush1.msra.mxu0 0.0
    %1227 = vmatprep.subr.mxu0 0.0
    %1228 = vmatpush1.msra.mxu0 0.0
    %1229 = vmatprep.subr.mxu0 0.0
    %1230 = vmatpush1.msra.mxu0 0.0
    %1231 = vmatprep.subr.mxu0 0.0
    %1232 = vmatpush1.msra.mxu0 0.0
    %1233 = vmatprep.subr.mxu0 0.0
    %1234 = vmatpush1.msra.mxu0 0.0
    %1235 = vmatprep.subr.mxu0 0.0
    %1236 = vmatpush1.msra.mxu0 0.0
    %1237 = vmatprep.subr.mxu0 0.0
    %1238 = vmatpush1.msra.mxu0 0.0
    %1239 = vmatprep.subr.mxu0 0.0
    %1240 = vmatpush1.msra.mxu0 0.0
    %1241 = vmatprep.subr.mxu0 0.0
    %1242 = vmatpush1.msra.mxu0 0.0
    %1243 = vmatprep.subr.mxu0 0.0
    %1244 = vmatpush1.msra.mxu0 0.0
    %1245 = vmatprep.subr.mxu0 0.0
    %1246 = vmatpush1.msra.mxu0 0.0
    %1247 = vmatprep.subr.mxu0 0.0
    %1248 = vmatpush1.msra.mxu0 0.0
    %1249 = vmatprep.subr.mxu0 0.0
    %1250 = vmatpush1.msra.mxu0 0.0
    %1251 = vmatprep.subr.mxu0 0.0
    %1252 = vmatpush1.msra.mxu0 0.0
    %1253 = vmatprep.subr.mxu0 0.0
    %1254 = vmatpush1.msra.mxu0 0.0
    %1255 = vmatprep.subr.mxu0 0.0
    %1256 = vmatpush1.msra.mxu0 0.0
    %1257 = vmatprep.subr.mxu0 0.0
    %1258 = vmatpush1.msra.mxu0 0.0
    %1259 = vmatprep.subr.mxu0 0.0
    %1260 = vmatpush1.msra.mxu0 0.0
    %1261 = vmatprep.subr.mxu0 0.0
    %1262 = vmatpush1.msra.mxu0 0.0
    %1263 = vmatprep.subr.mxu0 0.0
    %1264 = vmatpush1.msra.mxu0 0.0
    %1265 = vmatprep.subr.mxu0 0.0
    %1266 = vmatpush1.msra.mxu0 0.0
    %1267 = vmatprep.subr.mxu0 0.0
    %1268 = vmatpush1.msra.mxu0 0.0
    %1269 = vmatprep.mubr.f32.mxu0 0.0
    %1270 = vmatmul.mubr.f32.gmra.mrb[0].mxu0 %v1200
    %v1271 = vpop.f32.mrb[0].mxu0
    %v1272 = vadd.f32 %v1198, %v1271
    %v1273 = vpop.f32.mrb[0].mxu0
    %1274 = vmatprep.mubr.f32.mxu0 0.0
    %1275 = vmatmul.mubr.f32.gmra.mrb[0].mxu0 %v1203
    %v1276 = vpop.f32.mrb[0].mxu0
    %v1277 = vadd.f32 %v1198, %v1276
    %v1278 = vpop.f32.mrb[0].mxu0
    %1279 = vdwg.mxu0
    %v1280 = vadd.f32 %v205, %v1272
    %v1281 = vadd.f32 %v206, %v1277
    %v1282 = vld [vmem:[#allocation2 + $0x102] sm:$0x1]
    %v1283 = vld [vmem:[#allocation2 + $0x103] sm:$0x1]
    %v1284 = vsel %vm163, %v1280, 0.0
    %1285 = vadd.xlane.f32.xlu0 %v1284
    %v1286 = vpop.xlane.xlu0 %1285
    %v1287 = vsel %vm163, %v1281, 0.0
    %1288 = vadd.xlane.f32.xlu0 %v1287
    %v1289 = vpop.xlane.xlu0 %1288
    %v1290 = vmul.f32 %v1286, %v170
    %v1291 = vmul.f32 %v1289, %v170
    %v1292 = vsub.f32 %v1280, %v1290
    %v1293 = vsub.f32 %v1281, %v1291
    %v1294 = vmul.f32 %v1292, %v1292
    %v1295 = vmul.f32 %v1293, %v1293
    %v1296 = vsel %vm163, %v1294, 0.0
    %1297 = vadd.xlane.f32.xlu0 %v1296
    %v1298 = vpop.xlane.xlu0 %1297
    %v1299 = vsel %vm163, %v1295, 0.0
    %1300 = vadd.xlane.f32.xlu0 %v1299
    %v1301 = vpop.xlane.xlu0 %1300
    %v1302 = vmul.f32 %v1298, %v170
    %v1303 = vmul.f32 %v1301, %v170
    %v1304 = vadd.f32 %v1302, 1e-05
    %v1305 = vadd.f32 %v1303, 1e-05
    %v1306 = vrsqrt.pop %v1304
    %v1307 = vrsqrt.pop %v1305
    %v1308 = vmul.f32 %v1292, %v1306
    %v1309 = vmul.f32 %v1293, %v1307
    %v1310 = vlaneseq
    %v1311 = vshrl.u32 %v1310, 7
    %v1312 = vsub.s32 0, %v1311
    %v1313 = vrot.slane %v1282, %v1312
    %v1314 = vmul.f32 %v1308, %v1313
    %v1315 = vmul.f32 %v1309, %v1313
    %v1316 = vlaneseq
    %v1317 = vshrl.u32 %v1316, 7
    %v1318 = vsub.s32 0, %v1317
    %v1319 = vrot.slane %v1283, %v1318
    %v1320 = vadd.f32 %v1314, %v1319
    %v1321 = vadd.f32 %v1315, %v1319
    %v1322 = vld [vmem:[#allocation2 + $0x40] sm:$0xff]
    %v1323 = vld [vmem:[#allocation2 + $0x48] sm:$0xff]
    %v1324 = vld [vmem:[#allocation2 + $0x50] sm:$0xff]
    %v1325 = vld [vmem:[#allocation2 + $0x58] sm:$0xff]
    %v1326 = vld [vmem:[#allocation2 + $0x104] sm:$0x1]
    %v1327 = vlaneseq
    %v1328 = vshrl.u32 %v1327, 7
    %v1329 = vsub.s32 0, %v1328
    %v1330 = vrot.slane %v1326, %v1329
    %v1332 = vsel %vm163, %v1320, 0
    %v1335 = vsel %vm163, %v1321, 0
    %1337 = vmatprep.subr.mxu0 0.0
    %1338 = vmatpush1.msra.mxu0 %v1322
    %1339 = vmatprep.subr.mxu0 0.0
    %1340 = vmatpush1.msra.mxu0 %v1323
    %1341 = vmatprep.subr.mxu0 0.0
    %1342 = vmatpush1.msra.mxu0 %v1324
    %1343 = vmatprep.subr.mxu0 0.0
    %1344 = vmatpush1.msra.mxu0 %v1325
    %1345 = vmatprep.subr.mxu0 0.0
    %1346 = vmatpush1.msra.mxu0 0.0
    %1347 = vmatprep.subr.mxu0 0.0
    %1348 = vmatpush1.msra.mxu0 0.0
    %1349 = vmatprep.subr.mxu0 0.0
    %1350 = vmatpush1.msra.mxu0 0.0
    %1351 = vmatprep.subr.mxu0 0.0
    %1352 = vmatpush1.msra.mxu0 0.0
    %1353 = vmatprep.subr.mxu0 0.0
    %1354 = vmatpush1.msra.mxu0 0.0
    %1355 = vmatprep.subr.mxu0 0.0
    %1356 = vmatpush1.msra.mxu0 0.0
    %1357 = vmatprep.subr.mxu0 0.0
    %1358 = vmatpush1.msra.mxu0 0.0
    %1359 = vmatprep.subr.mxu0 0.0
    %1360 = vmatpush1.msra.mxu0 0.0
    %1361 = vmatprep.subr.mxu0 0.0
    %1362 = vmatpush1.msra.mxu0 0.0
    %1363 = vmatprep.subr.mxu0 0.0
    %1364 = vmatpush1.msra.mxu0 0.0
    %1365 = vmatprep.subr.mxu0 0.0
    %1366 = vmatpush1.msra.mxu0 0.0
    %1367 = vmatprep.subr.mxu0 0.0
    %1368 = vmatpush1.msra.mxu0 0.0
    %1369 = vmatprep.subr.mxu0 0.0
    %1370 = vmatpush1.msra.mxu0 0.0
    %1371 = vmatprep.subr.mxu0 0.0
    %1372 = vmatpush1.msra.mxu0 0.0
    %1373 = vmatprep.subr.mxu0 0.0
    %1374 = vmatpush1.msra.mxu0 0.0
    %1375 = vmatprep.subr.mxu0 0.0
    %1376 = vmatpush1.msra.mxu0 0.0
    %1377 = vmatprep.subr.mxu0 0.0
    %1378 = vmatpush1.msra.mxu0 0.0
    %1379 = vmatprep.subr.mxu0 0.0
    %1380 = vmatpush1.msra.mxu0 0.0
    %1381 = vmatprep.subr.mxu0 0.0
    %1382 = vmatpush1.msra.mxu0 0.0
    %1383 = vmatprep.subr.mxu0 0.0
    %1384 = vmatpush1.msra.mxu0 0.0
    %1385 = vmatprep.subr.mxu0 0.0
    %1386 = vmatpush1.msra.mxu0 0.0
    %1387 = vmatprep.subr.mxu0 0.0
    %1388 = vmatpush1.msra.mxu0 0.0
    %1389 = vmatprep.subr.mxu0 0.0
    %1390 = vmatpush1.msra.mxu0 0.0
    %1391 = vmatprep.subr.mxu0 0.0
    %1392 = vmatpush1.msra.mxu0 0.0
    %1393 = vmatprep.subr.mxu0 0.0
    %1394 = vmatpush1.msra.mxu0 0.0
    %1395 = vmatprep.subr.mxu0 0.0
    %1396 = vmatpush1.msra.mxu0 0.0
    %1397 = vmatprep.subr.mxu0 0.0
    %1398 = vmatpush1.msra.mxu0 0.0
    %1399 = vmatprep.subr.mxu0 0.0
    %1400 = vmatpush1.msra.mxu0 0.0
    %1401 = vmatprep.mubr.f32.mxu0 0.0
    %1402 = vmatmul.mubr.f32.gmra.mrb[0].mxu0 %v1332
    %v1403 = vpop.f32.mrb[0].mxu0
    %v1404 = vadd.f32 %v1330, %v1403
    %v1405 = vpop.f32.mrb[0].mxu0
    %1406 = vmatprep.mubr.f32.mxu0 0.0
    %1407 = vmatmul.mubr.f32.gmra.mrb[0].mxu0 %v1335
    %v1408 = vpop.f32.mrb[0].mxu0
    %v1409 = vadd.f32 %v1330, %v1408
    %v1410 = vpop.f32.mrb[0].mxu0
    %1411 = vdwg.mxu0
    %v1412 = vld [vmem:[#allocation2 + $0x60] sm:$0xff]
    %v1413 = vld [vmem:[#allocation2 + $0x68] sm:$0xff]
    %v1414 = vld [vmem:[#allocation2 + $0x70] sm:$0xff]
    %v1415 = vld [vmem:[#allocation2 + $0x78] sm:$0xff]
    %v1416 = vld [vmem:[#allocation2 + $0x105] sm:$0x1]
    %v1417 = vlaneseq
    %v1418 = vshrl.u32 %v1417, 7
    %v1419 = vsub.s32 0, %v1418
    %v1420 = vrot.slane %v1416, %v1419
    %v1422 = vsel %vm163, %v51, 0
    %v1425 = vsel %vm163, %v52, 0
    %v1428 = vsel %vm163, %v53, 0
    %v1431 = vsel %vm163, %v54, 0
    %1433 = vmatprep.subr.mxu0 0.0
    %1434 = vmatpush1.msra.mxu0 %v1412
    %1435 = vmatprep.subr.mxu0 0.0
    %1436 = vmatpush1.msra.mxu0 %v1413
    %1437 = vmatprep.subr.mxu0 0.0
    %1438 = vmatpush1.msra.mxu0 %v1414
    %1439 = vmatprep.subr.mxu0 0.0
    %1440 = vmatpush1.msra.mxu0 %v1415
    %1441 = vmatprep.subr.mxu0 0.0
    %1442 = vmatpush1.msra.mxu0 0.0
    %1443 = vmatprep.subr.mxu0 0.0
    %1444 = vmatpush1.msra.mxu0 0.0
    %1445 = vmatprep.subr.mxu0 0.0
    %1446 = vmatpush1.msra.mxu0 0.0
    %1447 = vmatprep.subr.mxu0 0.0
    %1448 = vmatpush1.msra.mxu0 0.0
    %1449 = vmatprep.subr.mxu0 0.0
    %1450 = vmatpush1.msra.mxu0 0.0
    %1451 = vmatprep.subr.mxu0 0.0
    %1452 = vmatpush1.msra.mxu0 0.0
    %1453 = vmatprep.subr.mxu0 0.0
    %1454 = vmatpush1.msra.mxu0 0.0
    %1455 = vmatprep.subr.mxu0 0.0
    %1456 = vmatpush1.msra.mxu0 0.0
    %1457 = vmatprep.subr.mxu0 0.0
    %1458 = vmatpush1.msra.mxu0 0.0
    %1459 = vmatprep.subr.mxu0 0.0
    %1460 = vmatpush1.msra.mxu0 0.0
    %1461 = vmatprep.subr.mxu0 0.0
    %1462 = vmatpush1.msra.mxu0 0.0
    %1463 = vmatprep.subr.mxu0 0.0
    %1464 = vmatpush1.msra.mxu0 0.0
    %1465 = vmatprep.subr.mxu0 0.0
    %1466 = vmatpush1.msra.mxu0 0.0
    %1467 = vmatprep.subr.mxu0 0.0
    %1468 = vmatpush1.msra.mxu0 0.0
    %1469 = vmatprep.subr.mxu0 0.0
    %1470 = vmatpush1.msra.mxu0 0.0
    %1471 = vmatprep.subr.mxu0 0.0
    %1472 = vmatpush1.msra.mxu0 0.0
    %1473 = vmatprep.subr.mxu0 0.0
    %1474 = vmatpush1.msra.mxu0 0.0
    %1475 = vmatprep.subr.mxu0 0.0
    %1476 = vmatpush1.msra.mxu0 0.0
    %1477 = vmatprep.subr.mxu0 0.0
    %1478 = vmatpush1.msra.mxu0 0.0
    %1479 = vmatprep.subr.mxu0 0.0
    %1480 = vmatpush1.msra.mxu0 0.0
    %1481 = vmatprep.subr.mxu0 0.0
    %1482 = vmatpush1.msra.mxu0 0.0
    %1483 = vmatprep.subr.mxu0 0.0
    %1484 = vmatpush1.msra.mxu0 0.0
    %1485 = vmatprep.subr.mxu0 0.0
    %1486 = vmatpush1.msra.mxu0 0.0
    %1487 = vmatprep.subr.mxu0 0.0
    %1488 = vmatpush1.msra.mxu0 0.0
    %1489 = vmatprep.subr.mxu0 0.0
    %1490 = vmatpush1.msra.mxu0 0.0
    %1491 = vmatprep.subr.mxu0 0.0
    %1492 = vmatpush1.msra.mxu0 0.0
    %1493 = vmatprep.subr.mxu0 0.0
    %1494 = vmatpush1.msra.mxu0 0.0
    %1495 = vmatprep.subr.mxu0 0.0
    %1496 = vmatpush1.msra.mxu0 0.0
    %1497 = vmatprep.mubr.f32.mxu0 0.0
    %1498 = vmatmul.mubr.f32.gmra.mrb[0].mxu0 %v1422
    %v1499 = vpop.f32.mrb[0].mxu0
    %v1500 = vadd.f32 %v1420, %v1499
    %v1501 = vpop.f32.mrb[0].mxu0
    %1502 = vmatprep.mubr.f32.mxu0 0.0
    %1503 = vmatmul.mubr.f32.gmra.mrb[0].mxu0 %v1425
    %v1504 = vpop.f32.mrb[0].mxu0
    %v1505 = vadd.f32 %v1420, %v1504
    %v1506 = vpop.f32.mrb[0].mxu0
    %1507 = vmatprep.mubr.f32.mxu0 0.0
    %1508 = vmatmul.mubr.f32.gmra.mrb[0].mxu0 %v1428
    %v1509 = vpop.f32.mrb[0].mxu0
    %v1510 = vadd.f32 %v1420, %v1509
    %v1511 = vpop.f32.mrb[0].mxu0
    %1512 = vmatprep.mubr.f32.mxu0 0.0
    %1513 = vmatmul.mubr.f32.gmra.mrb[0].mxu0 %v1431
    %v1514 = vpop.f32.mrb[0].mxu0
    %v1515 = vadd.f32 %v1420, %v1514
    %v1516 = vpop.f32.mrb[0].mxu0
    %1517 = vdwg.mxu0
    %v1518 = vld [vmem:[#allocation2 + $0x80] sm:$0xff]
    %v1519 = vld [vmem:[#allocation2 + $0x88] sm:$0xff]
    %v1520 = vld [vmem:[#allocation2 + $0x90] sm:$0xff]
    %v1521 = vld [vmem:[#allocation2 + $0x98] sm:$0xff]
    %v1522 = vld [vmem:[#allocation2 + $0x106] sm:$0x1]
    %v1524 = vsel %vm330, %v1404, 0
    %v1527 = vsel %vm330, %v1409, 0
    %v1530 = vsel %vm330, %v1500, 0
    %v1533 = vsel %vm330, %v1505, 0
    %v1536 = vsel %vm330, %v1510, 0
    %v1539 = vsel %vm330, %v1515, 0
    %1541 = vmatprep.subr.mxu0 0.0
    %1542 = vmatpush1.xpose.msra.mxu0 %v1530
    %1543 = vmatprep.subr.mxu0 0.0
    %1544 = vmatpush1.xpose.msra.mxu0 %v1533
    %1545 = vmatprep.subr.mxu0 0.0
    %1546 = vmatpush1.xpose.msra.mxu0 %v1536
    %1547 = vmatprep.subr.mxu0 0.0
    %1548 = vmatpush1.xpose.msra.mxu0 %v1539
    %1549 = vmatprep.subr.mxu0 0.0
    %1550 = vmatpush1.xpose.msra.mxu0 0.0
    %1551 = vmatprep.subr.mxu0 0.0
    %1552 = vmatpush1.xpose.msra.mxu0 0.0
    %1553 = vmatprep.subr.mxu0 0.0
    %1554 = vmatpush1.xpose.msra.mxu0 0.0
    %1555 = vmatprep.subr.mxu0 0.0
    %1556 = vmatpush1.xpose.msra.mxu0 0.0
    %1557 = vmatprep.subr.mxu0 0.0
    %1558 = vmatpush1.xpose.msra.mxu0 0.0
    %1559 = vmatprep.subr.mxu0 0.0
    %1560 = vmatpush1.xpose.msra.mxu0 0.0
    %1561 = vmatprep.subr.mxu0 0.0
    %1562 = vmatpush1.xpose.msra.mxu0 0.0
    %1563 = vmatprep.subr.mxu0 0.0
    %1564 = vmatpush1.xpose.msra.mxu0 0.0
    %1565 = vmatprep.subr.mxu0 0.0
    %1566 = vmatpush1.xpose.msra.mxu0 0.0
    %1567 = vmatprep.subr.mxu0 0.0
    %1568 = vmatpush1.xpose.msra.mxu0 0.0
    %1569 = vmatprep.subr.mxu0 0.0
    %1570 = vmatpush1.xpose.msra.mxu0 0.0
    %1571 = vmatprep.subr.mxu0 0.0
    %1572 = vmatpush1.xpose.msra.mxu0 0.0
    %1573 = vmatprep.subr.mxu0 0.0
    %1574 = vmatpush1.xpose.msra.mxu0 0.0
    %1575 = vmatprep.subr.mxu0 0.0
    %1576 = vmatpush1.xpose.msra.mxu0 0.0
    %1577 = vmatprep.subr.mxu0 0.0
    %1578 = vmatpush1.xpose.msra.mxu0 0.0
    %1579 = vmatprep.subr.mxu0 0.0
    %1580 = vmatpush1.xpose.msra.mxu0 0.0
    %1581 = vmatprep.subr.mxu0 0.0
    %1582 = vmatpush1.xpose.msra.mxu0 0.0
    %1583 = vmatprep.subr.mxu0 0.0
    %1584 = vmatpush1.xpose.msra.mxu0 0.0
    %1585 = vmatprep.subr.mxu0 0.0
    %1586 = vmatpush1.xpose.msra.mxu0 0.0
    %1587 = vmatprep.subr.mxu0 0.0
    %1588 = vmatpush1.xpose.msra.mxu0 0.0
    %1589 = vmatprep.subr.mxu0 0.0
    %1590 = vmatpush1.xpose.msra.mxu0 0.0
    %1591 = vmatprep.subr.mxu0 0.0
    %1592 = vmatpush1.xpose.msra.mxu0 0.0
    %1593 = vmatprep.subr.mxu0 0.0
    %1594 = vmatpush1.xpose.msra.mxu0 0.0
    %1595 = vmatprep.subr.mxu0 0.0
    %1596 = vmatpush1.xpose.msra.mxu0 0.0
    %1597 = vmatprep.subr.mxu0 0.0
    %1598 = vmatpush1.xpose.msra.mxu0 0.0
    %1599 = vmatprep.subr.mxu0 0.0
    %1600 = vmatpush1.xpose.msra.mxu0 0.0
    %1601 = vmatprep.subr.mxu0 0.0
    %1602 = vmatpush1.xpose.msra.mxu0 0.0
    %1603 = vmatprep.subr.mxu0 0.0
    %1604 = vmatpush1.xpose.msra.mxu0 0.0
    %1605 = vmatprep.mubr.f32.mxu0 0.0
    %1606 = vmatmul.mubr.f32.gmra.mrb[0].mxu0 %v1524
    %v1607 = vpop.f32.mrb[0].mxu0
    %v1608 = vadd.f32 0.0, %v1607
    %v1609 = vpop.f32.mrb[0].mxu0
    %1610 = vmatprep.mubr.f32.mxu0 0.0
    %1611 = vmatmul.mubr.f32.gmra.mrb[0].mxu0 %v1527
    %v1612 = vpop.f32.mrb[0].mxu0
    %v1613 = vadd.f32 0.0, %v1612
    %v1614 = vpop.f32.mrb[0].mxu0
    %1615 = vdwg.mxu0
    %1616 = vrot.lane.b32.xlu0 %v1404, 120
    %v1617 = vpop.permute.xlu0 %1616
    %1618 = vrot.lane.b32.xlu0 %v1409, 120
    %v1619 = vpop.permute.xlu0 %1618
    %1620 = vrot.lane.b32.xlu0 %v1500, 120
    %v1621 = vpop.permute.xlu0 %1620
    %1622 = vrot.lane.b32.xlu0 %v1505, 120
    %v1623 = vpop.permute.xlu0 %1622
    %1624 = vrot.lane.b32.xlu0 %v1510, 120
    %v1625 = vpop.permute.xlu0 %1624
    %1626 = vrot.lane.b32.xlu0 %v1515, 120
    %v1627 = vpop.permute.xlu0 %1626
    %v1628 = vsel %vm330, %v1617, 0
    %v1630 = vsel %vm330, %v1619, 0
    %v1632 = vsel %vm330, %v1621, 0
    %v1634 = vsel %vm330, %v1623, 0
    %v1636 = vsel %vm330, %v1625, 0
    %v1638 = vsel %vm330, %v1627, 0
    %1640 = vmatprep.subr.mxu0 0.0
    %1641 = vmatpush1.xpose.msra.mxu0 %v1632
    %1642 = vmatprep.subr.mxu0 0.0
    %1643 = vmatpush1.xpose.msra.mxu0 %v1634
    %1644 = vmatprep.subr.mxu0 0.0
    %1645 = vmatpush1.xpose.msra.mxu0 %v1636
    %1646 = vmatprep.subr.mxu0 0.0
    %1647 = vmatpush1.xpose.msra.mxu0 %v1638
    %1648 = vmatprep.subr.mxu0 0.0
    %1649 = vmatpush1.xpose.msra.mxu0 0.0
    %1650 = vmatprep.subr.mxu0 0.0
    %1651 = vmatpush1.xpose.msra.mxu0 0.0
    %1652 = vmatprep.subr.mxu0 0.0
    %1653 = vmatpush1.xpose.msra.mxu0 0.0
    %1654 = vmatprep.subr.mxu0 0.0
    %1655 = vmatpush1.xpose.msra.mxu0 0.0
    %1656 = vmatprep.subr.mxu0 0.0
    %1657 = vmatpush1.xpose.msra.mxu0 0.0
    %1658 = vmatprep.subr.mxu0 0.0
    %1659 = vmatpush1.xpose.msra.mxu0 0.0
    %1660 = vmatprep.subr.mxu0 0.0
    %1661 = vmatpush1.xpose.msra.mxu0 0.0
    %1662 = vmatprep.subr.mxu0 0.0
    %1663 = vmatpush1.xpose.msra.mxu0 0.0
    %1664 = vmatprep.subr.mxu0 0.0
    %1665 = vmatpush1.xpose.msra.mxu0 0.0
    %1666 = vmatprep.subr.mxu0 0.0
    %1667 = vmatpush1.xpose.msra.mxu0 0.0
    %1668 = vmatprep.subr.mxu0 0.0
    %1669 = vmatpush1.xpose.msra.mxu0 0.0
    %1670 = vmatprep.subr.mxu0 0.0
    %1671 = vmatpush1.xpose.msra.mxu0 0.0
    %1672 = vmatprep.subr.mxu0 0.0
    %1673 = vmatpush1.xpose.msra.mxu0 0.0
    %1674 = vmatprep.subr.mxu0 0.0
    %1675 = vmatpush1.xpose.msra.mxu0 0.0
    %1676 = vmatprep.subr.mxu0 0.0
    %1677 = vmatpush1.xpose.msra.mxu0 0.0
    %1678 = vmatprep.subr.mxu0 0.0
    %1679 = vmatpush1.xpose.msra.mxu0 0.0
    %1680 = vmatprep.subr.mxu0 0.0
    %1681 = vmatpush1.xpose.msra.mxu0 0.0
    %1682 = vmatprep.subr.mxu0 0.0
    %1683 = vmatpush1.xpose.msra.mxu0 0.0
    %1684 = vmatprep.subr.mxu0 0.0
    %1685 = vmatpush1.xpose.msra.mxu0 0.0
    %1686 = vmatprep.subr.mxu0 0.0
    %1687 = vmatpush1.xpose.msra.mxu0 0.0
    %1688 = vmatprep.subr.mxu0 0.0
    %1689 = vmatpush1.xpose.msra.mxu0 0.0
    %1690 = vmatprep.subr.mxu0 0.0
    %1691 = vmatpush1.xpose.msra.mxu0 0.0
    %1692 = vmatprep.subr.mxu0 0.0
    %1693 = vmatpush1.xpose.msra.mxu0 0.0
    %1694 = vmatprep.subr.mxu0 0.0
    %1695 = vmatpush1.xpose.msra.mxu0 0.0
    %1696 = vmatprep.subr.mxu0 0.0
    %1697 = vmatpush1.xpose.msra.mxu0 0.0
    %1698 = vmatprep.subr.mxu0 0.0
    %1699 = vmatpush1.xpose.msra.mxu0 0.0
    %1700 = vmatprep.subr.mxu0 0.0
    %1701 = vmatpush1.xpose.msra.mxu0 0.0
    %1702 = vmatprep.subr.mxu0 0.0
    %1703 = vmatpush1.xpose.msra.mxu0 0.0
    %1704 = vmatprep.mubr.f32.mxu0 0.0
    %1705 = vmatmul.mubr.f32.gmra.mrb[0].mxu0 %v1628
    %v1706 = vpop.f32.mrb[0].mxu0
    %v1707 = vadd.f32 0.0, %v1706
    %v1708 = vpop.f32.mrb[0].mxu0
    %1709 = vmatprep.mubr.f32.mxu0 0.0
    %1710 = vmatmul.mubr.f32.gmra.mrb[0].mxu0 %v1630
    %v1711 = vpop.f32.mrb[0].mxu0
    %v1712 = vadd.f32 0.0, %v1711
    %v1713 = vpop.f32.mrb[0].mxu0
    %1714 = vdwg.mxu0
    %1715 = vrot.lane.b32.xlu0 %v1404, 112
    %v1716 = vpop.permute.xlu0 %1715
    %1717 = vrot.lane.b32.xlu0 %v1409, 112
    %v1718 = vpop.permute.xlu0 %1717
    %1719 = vrot.lane.b32.xlu0 %v1500, 112
    %v1720 = vpop.permute.xlu0 %1719
    %1721 = vrot.lane.b32.xlu0 %v1505, 112
    %v1722 = vpop.permute.xlu0 %1721
    %1723 = vrot.lane.b32.xlu0 %v1510, 112
    %v1724 = vpop.permute.xlu0 %1723
    %1725 = vrot.lane.b32.xlu0 %v1515, 112
    %v1726 = vpop.permute.xlu0 %1725
    %v1727 = vsel %vm330, %v1716, 0
    %v1729 = vsel %vm330, %v1718, 0
    %v1731 = vsel %vm330, %v1720, 0
    %v1733 = vsel %vm330, %v1722, 0
    %v1735 = vsel %vm330, %v1724, 0
    %v1737 = vsel %vm330, %v1726, 0
    %1739 = vmatprep.subr.mxu0 0.0
    %1740 = vmatpush1.xpose.msra.mxu0 %v1731
    %1741 = vmatprep.subr.mxu0 0.0
    %1742 = vmatpush1.xpose.msra.mxu0 %v1733
    %1743 = vmatprep.subr.mxu0 0.0
    %1744 = vmatpush1.xpose.msra.mxu0 %v1735
    %1745 = vmatprep.subr.mxu0 0.0
    %1746 = vmatpush1.xpose.msra.mxu0 %v1737
    %1747 = vmatprep.subr.mxu0 0.0
    %1748 = vmatpush1.xpose.msra.mxu0 0.0
    %1749 = vmatprep.subr.mxu0 0.0
    %1750 = vmatpush1.xpose.msra.mxu0 0.0
    %1751 = vmatprep.subr.mxu0 0.0
    %1752 = vmatpush1.xpose.msra.mxu0 0.0
    %1753 = vmatprep.subr.mxu0 0.0
    %1754 = vmatpush1.xpose.msra.mxu0 0.0
    %1755 = vmatprep.subr.mxu0 0.0
    %1756 = vmatpush1.xpose.msra.mxu0 0.0
    %1757 = vmatprep.subr.mxu0 0.0
    %1758 = vmatpush1.xpose.msra.mxu0 0.0
    %1759 = vmatprep.subr.mxu0 0.0
    %1760 = vmatpush1.xpose.msra.mxu0 0.0
    %1761 = vmatprep.subr.mxu0 0.0
    %1762 = vmatpush1.xpose.msra.mxu0 0.0
    %1763 = vmatprep.subr.mxu0 0.0
    %1764 = vmatpush1.xpose.msra.mxu0 0.0
    %1765 = vmatprep.subr.mxu0 0.0
    %1766 = vmatpush1.xpose.msra.mxu0 0.0
    %1767 = vmatprep.subr.mxu0 0.0
    %1768 = vmatpush1.xpose.msra.mxu0 0.0
    %1769 = vmatprep.subr.mxu0 0.0
    %1770 = vmatpush1.xpose.msra.mxu0 0.0
    %1771 = vmatprep.subr.mxu0 0.0
    %1772 = vmatpush1.xpose.msra.mxu0 0.0
    %1773 = vmatprep.subr.mxu0 0.0
    %1774 = vmatpush1.xpose.msra.mxu0 0.0
    %1775 = vmatprep.subr.mxu0 0.0
    %1776 = vmatpush1.xpose.msra.mxu0 0.0
    %1777 = vmatprep.subr.mxu0 0.0
    %1778 = vmatpush1.xpose.msra.mxu0 0.0
    %1779 = vmatprep.subr.mxu0 0.0
    %1780 = vmatpush1.xpose.msra.mxu0 0.0
    %1781 = vmatprep.subr.mxu0 0.0
    %1782 = vmatpush1.xpose.msra.mxu0 0.0
    %1783 = vmatprep.subr.mxu0 0.0
    %1784 = vmatpush1.xpose.msra.mxu0 0.0
    %1785 = vmatprep.subr.mxu0 0.0
    %1786 = vmatpush1.xpose.msra.mxu0 0.0
    %1787 = vmatprep.subr.mxu0 0.0
    %1788 = vmatpush1.xpose.msra.mxu0 0.0
    %1789 = vmatprep.subr.mxu0 0.0
    %1790 = vmatpush1.xpose.msra.mxu0 0.0
    %1791 = vmatprep.subr.mxu0 0.0
    %1792 = vmatpush1.xpose.msra.mxu0 0.0
    %1793 = vmatprep.subr.mxu0 0.0
    %1794 = vmatpush1.xpose.msra.mxu0 0.0
    %1795 = vmatprep.subr.mxu0 0.0
    %1796 = vmatpush1.xpose.msra.mxu0 0.0
    %1797 = vmatprep.subr.mxu0 0.0
    %1798 = vmatpush1.xpose.msra.mxu0 0.0
    %1799 = vmatprep.subr.mxu0 0.0
    %1800 = vmatpush1.xpose.msra.mxu0 0.0
    %1801 = vmatprep.subr.mxu0 0.0
    %1802 = vmatpush1.xpose.msra.mxu0 0.0
    %1803 = vmatprep.mubr.f32.mxu0 0.0
    %1804 = vmatmul.mubr.f32.gmra.mrb[0].mxu0 %v1727
    %v1805 = vpop.f32.mrb[0].mxu0
    %v1806 = vadd.f32 0.0, %v1805
    %v1807 = vpop.f32.mrb[0].mxu0
    %1808 = vmatprep.mubr.f32.mxu0 0.0
    %1809 = vmatmul.mubr.f32.gmra.mrb[0].mxu0 %v1729
    %v1810 = vpop.f32.mrb[0].mxu0
    %v1811 = vadd.f32 0.0, %v1810
    %v1812 = vpop.f32.mrb[0].mxu0
    %1813 = vdwg.mxu0
    %1814 = vrot.lane.b32.xlu0 %v1404, 104
    %v1815 = vpop.permute.xlu0 %1814
    %1816 = vrot.lane.b32.xlu0 %v1409, 104
    %v1817 = vpop.permute.xlu0 %1816
    %1818 = vrot.lane.b32.xlu0 %v1500, 104
    %v1819 = vpop.permute.xlu0 %1818
    %1820 = vrot.lane.b32.xlu0 %v1505, 104
    %v1821 = vpop.permute.xlu0 %1820
    %1822 = vrot.lane.b32.xlu0 %v1510, 104
    %v1823 = vpop.permute.xlu0 %1822
    %1824 = vrot.lane.b32.xlu0 %v1515, 104
    %v1825 = vpop.permute.xlu0 %1824
    %v1826 = vsel %vm330, %v1815, 0
    %v1828 = vsel %vm330, %v1817, 0
    %v1830 = vsel %vm330, %v1819, 0
    %v1832 = vsel %vm330, %v1821, 0
    %v1834 = vsel %vm330, %v1823, 0
    %v1836 = vsel %vm330, %v1825, 0
    %1838 = vmatprep.subr.mxu0 0.0
    %1839 = vmatpush1.xpose.msra.mxu0 %v1830
    %1840 = vmatprep.subr.mxu0 0.0
    %1841 = vmatpush1.xpose.msra.mxu0 %v1832
    %1842 = vmatprep.subr.mxu0 0.0
    %1843 = vmatpush1.xpose.msra.mxu0 %v1834
    %1844 = vmatprep.subr.mxu0 0.0
    %1845 = vmatpush1.xpose.msra.mxu0 %v1836
    %1846 = vmatprep.subr.mxu0 0.0
    %1847 = vmatpush1.xpose.msra.mxu0 0.0
    %1848 = vmatprep.subr.mxu0 0.0
    %1849 = vmatpush1.xpose.msra.mxu0 0.0
    %1850 = vmatprep.subr.mxu0 0.0
    %1851 = vmatpush1.xpose.msra.mxu0 0.0
    %1852 = vmatprep.subr.mxu0 0.0
    %1853 = vmatpush1.xpose.msra.mxu0 0.0
    %1854 = vmatprep.subr.mxu0 0.0
    %1855 = vmatpush1.xpose.msra.mxu0 0.0
    %1856 = vmatprep.subr.mxu0 0.0
    %1857 = vmatpush1.xpose.msra.mxu0 0.0
    %1858 = vmatprep.subr.mxu0 0.0
    %1859 = vmatpush1.xpose.msra.mxu0 0.0
    %1860 = vmatprep.subr.mxu0 0.0
    %1861 = vmatpush1.xpose.msra.mxu0 0.0
    %1862 = vmatprep.subr.mxu0 0.0
    %1863 = vmatpush1.xpose.msra.mxu0 0.0
    %1864 = vmatprep.subr.mxu0 0.0
    %1865 = vmatpush1.xpose.msra.mxu0 0.0
    %1866 = vmatprep.subr.mxu0 0.0
    %1867 = vmatpush1.xpose.msra.mxu0 0.0
    %1868 = vmatprep.subr.mxu0 0.0
    %1869 = vmatpush1.xpose.msra.mxu0 0.0
    %1870 = vmatprep.subr.mxu0 0.0
    %1871 = vmatpush1.xpose.msra.mxu0 0.0
    %1872 = vmatprep.subr.mxu0 0.0
    %1873 = vmatpush1.xpose.msra.mxu0 0.0
    %1874 = vmatprep.subr.mxu0 0.0
    %1875 = vmatpush1.xpose.msra.mxu0 0.0
    %1876 = vmatprep.subr.mxu0 0.0
    %1877 = vmatpush1.xpose.msra.mxu0 0.0
    %1878 = vmatprep.subr.mxu0 0.0
    %1879 = vmatpush1.xpose.msra.mxu0 0.0
    %1880 = vmatprep.subr.mxu0 0.0
    %1881 = vmatpush1.xpose.msra.mxu0 0.0
    %1882 = vmatprep.subr.mxu0 0.0
    %1883 = vmatpush1.xpose.msra.mxu0 0.0
    %1884 = vmatprep.subr.mxu0 0.0
    %1885 = vmatpush1.xpose.msra.mxu0 0.0
    %1886 = vmatprep.subr.mxu0 0.0
    %1887 = vmatpush1.xpose.msra.mxu0 0.0
    %1888 = vmatprep.subr.mxu0 0.0
    %1889 = vmatpush1.xpose.msra.mxu0 0.0
    %1890 = vmatprep.subr.mxu0 0.0
    %1891 = vmatpush1.xpose.msra.mxu0 0.0
    %1892 = vmatprep.subr.mxu0 0.0
    %1893 = vmatpush1.xpose.msra.mxu0 0.0
    %1894 = vmatprep.subr.mxu0 0.0
    %1895 = vmatpush1.xpose.msra.mxu0 0.0
    %1896 = vmatprep.subr.mxu0 0.0
    %1897 = vmatpush1.xpose.msra.mxu0 0.0
    %1898 = vmatprep.subr.mxu0 0.0
    %1899 = vmatpush1.xpose.msra.mxu0 0.0
    %1900 = vmatprep.subr.mxu0 0.0
    %1901 = vmatpush1.xpose.msra.mxu0 0.0
    %1902 = vmatprep.mubr.f32.mxu0 0.0
    %1903 = vmatmul.mubr.f32.gmra.mrb[0].mxu0 %v1826
    %v1904 = vpop.f32.mrb[0].mxu0
    %v1905 = vadd.f32 0.0, %v1904
    %v1906 = vpop.f32.mrb[0].mxu0
    %1907 = vmatprep.mubr.f32.mxu0 0.0
    %1908 = vmatmul.mubr.f32.gmra.mrb[0].mxu0 %v1828
    %v1909 = vpop.f32.mrb[0].mxu0
    %v1910 = vadd.f32 0.0, %v1909
    %v1911 = vpop.f32.mrb[0].mxu0
    %1912 = vdwg.mxu0
    %v1913 = vadd.f32 %v1608, %v227
    %v1914 = vadd.f32 %v1613, %v228
    %v1915 = vadd.f32 %v1707, %v227
    %v1916 = vadd.f32 %v1712, %v228
    %v1917 = vadd.f32 %v1806, %v227
    %v1918 = vadd.f32 %v1811, %v228
    %v1919 = vadd.f32 %v1905, %v227
    %v1920 = vadd.f32 %v1910, %v228
    %v1921 = vsel %vm163, %v1913, -inf
    %1922 = vmax.xlane.f32.xlu0 %v1921
    %v1923 = vpop.xlane.xlu0 %1922
    %v1924 = vsel %vm163, %v1914, -inf
    %1925 = vmax.xlane.f32.xlu0 %v1924
    %v1926 = vpop.xlane.xlu0 %1925
    %v1927 = vsel %vm163, %v1915, -inf
    %1928 = vmax.xlane.f32.xlu0 %v1927
    %v1929 = vpop.xlane.xlu0 %1928
    %v1930 = vsel %vm163, %v1916, -inf
    %1931 = vmax.xlane.f32.xlu0 %v1930
    %v1932 = vpop.xlane.xlu0 %1931
    %v1933 = vsel %vm163, %v1917, -inf
    %1934 = vmax.xlane.f32.xlu0 %v1933
    %v1935 = vpop.xlane.xlu0 %1934
    %v1936 = vsel %vm163, %v1918, -inf
    %1937 = vmax.xlane.f32.xlu0 %v1936
    %v1938 = vpop.xlane.xlu0 %1937
    %v1939 = vsel %vm163, %v1919, -inf
    %1940 = vmax.xlane.f32.xlu0 %v1939
    %v1941 = vpop.xlane.xlu0 %1940
    %v1942 = vsel %vm163, %v1920, -inf
    %1943 = vmax.xlane.f32.xlu0 %v1942
    %v1944 = vpop.xlane.xlu0 %1943
    %v1945 = vsub.f32 %v1913, %v1923
    %v1946 = vsub.f32 %v1914, %v1926
    %v1947 = vsub.f32 %v1915, %v1929
    %v1948 = vsub.f32 %v1916, %v1932
    %v1949 = vsub.f32 %v1917, %v1935
    %v1950 = vsub.f32 %v1918, %v1938
    %v1951 = vsub.f32 %v1919, %v1941
    %v1952 = vsub.f32 %v1920, %v1944
    %v1953 = vmul.f32 %v1945, 1.442695
    %v1954 = vpow.pop %v1953
    %v1955 = vmul.f32 %v1946, 1.442695
    %v1956 = vpow.pop %v1955
    %v1957 = vmul.f32 %v1947, 1.442695
    %v1958 = vpow.pop %v1957
    %v1959 = vmul.f32 %v1948, 1.442695
    %v1960 = vpow.pop %v1959
    %v1961 = vmul.f32 %v1949, 1.442695
    %v1962 = vpow.pop %v1961
    %v1963 = vmul.f32 %v1950, 1.442695
    %v1964 = vpow.pop %v1963
    %v1965 = vmul.f32 %v1951, 1.442695
    %v1966 = vpow.pop %v1965
    %v1967 = vmul.f32 %v1952, 1.442695
    %v1968 = vpow.pop %v1967
    %v1969 = vsel %vm163, %v1954, 0.0
    %1970 = vadd.xlane.f32.xlu0 %v1969
    %v1971 = vpop.xlane.xlu0 %1970
    %v1972 = vsel %vm163, %v1956, 0.0
    %1973 = vadd.xlane.f32.xlu0 %v1972
    %v1974 = vpop.xlane.xlu0 %1973
    %v1975 = vsel %vm163, %v1958, 0.0
    %1976 = vadd.xlane.f32.xlu0 %v1975
    %v1977 = vpop.xlane.xlu0 %1976
    %v1978 = vsel %vm163, %v1960, 0.0
    %1979 = vadd.xlane.f32.xlu0 %v1978
    %v1980 = vpop.xlane.xlu0 %1979
    %v1981 = vsel %vm163, %v1962, 0.0
    %1982 = vadd.xlane.f32.xlu0 %v1981
    %v1983 = vpop.xlane.xlu0 %1982
    %v1984 = vsel %vm163, %v1964, 0.0
    %1985 = vadd.xlane.f32.xlu0 %v1984
    %v1986 = vpop.xlane.xlu0 %1985
    %v1987 = vsel %vm163, %v1966, 0.0
    %1988 = vadd.xlane.f32.xlu0 %v1987
    %v1989 = vpop.xlane.xlu0 %1988
    %v1990 = vsel %vm163, %v1968, 0.0
    %1991 = vadd.xlane.f32.xlu0 %v1990
    %v1992 = vpop.xlane.xlu0 %1991
    %v1993 = vrcp.pop %v1971
    %v1994 = vrcp.pop %v1974
    %v1995 = vrcp.pop %v1977
    %v1996 = vrcp.pop %v1980
    %v1997 = vrcp.pop %v1983
    %v1998 = vrcp.pop %v1986
    %v1999 = vrcp.pop %v1989
    %v2000 = vrcp.pop %v1992
    %v2001 = vmul.f32 %v1954, %v1993
    %v2002 = vmul.f32 %v1956, %v1994
    %v2003 = vmul.f32 %v1958, %v1995
    %v2004 = vmul.f32 %v1960, %v1996
    %v2005 = vmul.f32 %v1962, %v1997
    %v2006 = vmul.f32 %v1964, %v1998
    %v2007 = vmul.f32 %v1966, %v1999
    %v2008 = vmul.f32 %v1968, %v2000
    %vm2009 = vcmp.le.f32.partialorder %v1923, -5e+29
    %vm2010 = vcmp.le.f32.partialorder %v1926, -5e+29
    %vm2011 = vcmp.le.f32.partialorder %v1929, -5e+29
    %vm2012 = vcmp.le.f32.partialorder %v1932, -5e+29
    %vm2013 = vcmp.le.f32.partialorder %v1935, -5e+29
    %vm2014 = vcmp.le.f32.partialorder %v1938, -5e+29
    %vm2015 = vcmp.le.f32.partialorder %v1941, -5e+29
    %vm2016 = vcmp.le.f32.partialorder %v1944, -5e+29
    %v2017 = vsel %vm2009, 1, 0
    %v2018 = vsel %vm2010, 1, 0
    %v2019 = vsel %vm2011, 1, 0
    %v2020 = vsel %vm2012, 1, 0
    %v2021 = vsel %vm2013, 1, 0
    %v2022 = vsel %vm2014, 1, 0
    %v2023 = vsel %vm2015, 1, 0
    %v2024 = vsel %vm2016, 1, 0
    %vm2025 = vcmp.eq.s32.totalorder %v2017, 1
    %vm2026 = vcmp.eq.s32.totalorder %v2018, 1
    %vm2027 = vcmp.eq.s32.totalorder %v2019, 1
    %vm2028 = vcmp.eq.s32.totalorder %v2020, 1
    %vm2029 = vcmp.eq.s32.totalorder %v2021, 1
    %vm2030 = vcmp.eq.s32.totalorder %v2022, 1
    %vm2031 = vcmp.eq.s32.totalorder %v2023, 1
    %vm2032 = vcmp.eq.s32.totalorder %v2024, 1
    %v2033 = vsel %vm2025, 0.0, %v2001
    %v2034 = vsel %vm2026, 0.0, %v2002
    %v2035 = vsel %vm2027, 0.0, %v2003
    %v2036 = vsel %vm2028, 0.0, %v2004
    %v2037 = vsel %vm2029, 0.0, %v2005
    %v2038 = vsel %vm2030, 0.0, %v2006
    %v2039 = vsel %vm2031, 0.0, %v2007
    %v2040 = vsel %vm2032, 0.0, %v2008
    %2041 = vrot.lane.b32.xlu0 %v1500, 96
    %v2042 = vpop.permute.xlu0 %2041
    %2043 = vrot.lane.b32.xlu0 %v1505, 96
    %v2044 = vpop.permute.xlu0 %2043
    %2045 = vrot.lane.b32.xlu0 %v1510, 96
    %v2046 = vpop.permute.xlu0 %2045
    %2047 = vrot.lane.b32.xlu0 %v1515, 96
    %v2048 = vpop.permute.xlu0 %2047
    %v2054 = vsel %vm163, %v2033, 0
    %v2057 = vsel %vm163, %v2034, 0
    %2059 = vmatprep.subr.mxu0 0.0
    %2060 = vmatpush1.msra.mxu0 %v2042
    %2061 = vmatprep.subr.mxu0 0.0
    %2062 = vmatpush1.msra.mxu0 %v2044
    %2063 = vmatprep.subr.mxu0 0.0
    %2064 = vmatpush1.msra.mxu0 %v2046
    %2065 = vmatprep.subr.mxu0 0.0
    %2066 = vmatpush1.msra.mxu0 %v2048
    %2067 = vmatprep.subr.mxu0 0.0
    %2068 = vmatpush1.msra.mxu0 0.0
    %2069 = vmatprep.subr.mxu0 0.0
    %2070 = vmatpush1.msra.mxu0 0.0
    %2071 = vmatprep.subr.mxu0 0.0
    %2072 = vmatpush1.msra.mxu0 0.0
    %2073 = vmatprep.subr.mxu0 0.0
    %2074 = vmatpush1.msra.mxu0 0.0
    %2075 = vmatprep.subr.mxu0 0.0
    %2076 = vmatpush1.msra.mxu0 0.0
    %2077 = vmatprep.subr.mxu0 0.0
    %2078 = vmatpush1.msra.mxu0 0.0
    %2079 = vmatprep.subr.mxu0 0.0
    %2080 = vmatpush1.msra.mxu0 0.0
    %2081 = vmatprep.subr.mxu0 0.0
    %2082 = vmatpush1.msra.mxu0 0.0
    %2083 = vmatprep.subr.mxu0 0.0
    %2084 = vmatpush1.msra.mxu0 0.0
    %2085 = vmatprep.subr.mxu0 0.0
    %2086 = vmatpush1.msra.mxu0 0.0
    %2087 = vmatprep.subr.mxu0 0.0
    %2088 = vmatpush1.msra.mxu0 0.0
    %2089 = vmatprep.subr.mxu0 0.0
    %2090 = vmatpush1.msra.mxu0 0.0
    %2091 = vmatprep.subr.mxu0 0.0
    %2092 = vmatpush1.msra.mxu0 0.0
    %2093 = vmatprep.subr.mxu0 0.0
    %2094 = vmatpush1.msra.mxu0 0.0
    %2095 = vmatprep.subr.mxu0 0.0
    %2096 = vmatpush1.msra.mxu0 0.0
    %2097 = vmatprep.subr.mxu0 0.0
    %2098 = vmatpush1.msra.mxu0 0.0
    %2099 = vmatprep.subr.mxu0 0.0
    %2100 = vmatpush1.msra.mxu0 0.0
    %2101 = vmatprep.subr.mxu0 0.0
    %2102 = vmatpush1.msra.mxu0 0.0
    %2103 = vmatprep.subr.mxu0 0.0
    %2104 = vmatpush1.msra.mxu0 0.0
    %2105 = vmatprep.subr.mxu0 0.0
    %2106 = vmatpush1.msra.mxu0 0.0
    %2107 = vmatprep.subr.mxu0 0.0
    %2108 = vmatpush1.msra.mxu0 0.0
    %2109 = vmatprep.subr.mxu0 0.0
    %2110 = vmatpush1.msra.mxu0 0.0
    %2111 = vmatprep.subr.mxu0 0.0
    %2112 = vmatpush1.msra.mxu0 0.0
    %2113 = vmatprep.subr.mxu0 0.0
    %2114 = vmatpush1.msra.mxu0 0.0
    %2115 = vmatprep.subr.mxu0 0.0
    %2116 = vmatpush1.msra.mxu0 0.0
    %2117 = vmatprep.subr.mxu0 0.0
    %2118 = vmatpush1.msra.mxu0 0.0
    %2119 = vmatprep.subr.mxu0 0.0
    %2120 = vmatpush1.msra.mxu0 0.0
    %2121 = vmatprep.subr.mxu0 0.0
    %2122 = vmatpush1.msra.mxu0 0.0
    %2123 = vmatprep.mubr.f32.mxu0 0.0
    %2124 = vmatmul.mubr.f32.gmra.mrb[0].mxu0 %v2054
    %v2125 = vpop.f32.mrb[0].mxu0
    %v2126 = vadd.f32 0.0, %v2125
    %v2127 = vpop.f32.mrb[0].mxu0
    %2128 = vmatprep.mubr.f32.mxu0 0.0
    %2129 = vmatmul.mubr.f32.gmra.mrb[0].mxu0 %v2057
    %v2130 = vpop.f32.mrb[0].mxu0
    %v2131 = vadd.f32 0.0, %v2130
    %v2132 = vpop.f32.mrb[0].mxu0
    %2133 = vdwg.mxu0
    %2134 = vrot.lane.b32.xlu0 %v1500, 88
    %v2135 = vpop.permute.xlu0 %2134
    %2136 = vrot.lane.b32.xlu0 %v1505, 88
    %v2137 = vpop.permute.xlu0 %2136
    %2138 = vrot.lane.b32.xlu0 %v1510, 88
    %v2139 = vpop.permute.xlu0 %2138
    %2140 = vrot.lane.b32.xlu0 %v1515, 88
    %v2141 = vpop.permute.xlu0 %2140
    %v2147 = vsel %vm163, %v2035, 0
    %v2150 = vsel %vm163, %v2036, 0
    %2152 = vmatprep.subr.mxu0 0.0
    %2153 = vmatpush1.msra.mxu0 %v2135
    %2154 = vmatprep.subr.mxu0 0.0
    %2155 = vmatpush1.msra.mxu0 %v2137
    %2156 = vmatprep.subr.mxu0 0.0
    %2157 = vmatpush1.msra.mxu0 %v2139
    %2158 = vmatprep.subr.mxu0 0.0
    %2159 = vmatpush1.msra.mxu0 %v2141
    %2160 = vmatprep.subr.mxu0 0.0
    %2161 = vmatpush1.msra.mxu0 0.0
    %2162 = vmatprep.subr.mxu0 0.0
    %2163 = vmatpush1.msra.mxu0 0.0
    %2164 = vmatprep.subr.mxu0 0.0
    %2165 = vmatpush1.msra.mxu0 0.0
    %2166 = vmatprep.subr.mxu0 0.0
    %2167 = vmatpush1.msra.mxu0 0.0
    %2168 = vmatprep.subr.mxu0 0.0
    %2169 = vmatpush1.msra.mxu0 0.0
    %2170 = vmatprep.subr.mxu0 0.0
    %2171 = vmatpush1.msra.mxu0 0.0
    %2172 = vmatprep.subr.mxu0 0.0
    %2173 = vmatpush1.msra.mxu0 0.0
    %2174 = vmatprep.subr.mxu0 0.0
    %2175 = vmatpush1.msra.mxu0 0.0
    %2176 = vmatprep.subr.mxu0 0.0
    %2177 = vmatpush1.msra.mxu0 0.0
    %2178 = vmatprep.subr.mxu0 0.0
    %2179 = vmatpush1.msra.mxu0 0.0
    %2180 = vmatprep.subr.mxu0 0.0
    %2181 = vmatpush1.msra.mxu0 0.0
    %2182 = vmatprep.subr.mxu0 0.0
    %2183 = vmatpush1.msra.mxu0 0.0
    %2184 = vmatprep.subr.mxu0 0.0
    %2185 = vmatpush1.msra.mxu0 0.0
    %2186 = vmatprep.subr.mxu0 0.0
    %2187 = vmatpush1.msra.mxu0 0.0
    %2188 = vmatprep.subr.mxu0 0.0
    %2189 = vmatpush1.msra.mxu0 0.0
    %2190 = vmatprep.subr.mxu0 0.0
    %2191 = vmatpush1.msra.mxu0 0.0
    %2192 = vmatprep.subr.mxu0 0.0
    %2193 = vmatpush1.msra.mxu0 0.0
    %2194 = vmatprep.subr.mxu0 0.0
    %2195 = vmatpush1.msra.mxu0 0.0
    %2196 = vmatprep.subr.mxu0 0.0
    %2197 = vmatpush1.msra.mxu0 0.0
    %2198 = vmatprep.subr.mxu0 0.0
    %2199 = vmatpush1.msra.mxu0 0.0
    %2200 = vmatprep.subr.mxu0 0.0
    %2201 = vmatpush1.msra.mxu0 0.0
    %2202 = vmatprep.subr.mxu0 0.0
    %2203 = vmatpush1.msra.mxu0 0.0
    %2204 = vmatprep.subr.mxu0 0.0
    %2205 = vmatpush1.msra.mxu0 0.0
    %2206 = vmatprep.subr.mxu0 0.0
    %2207 = vmatpush1.msra.mxu0 0.0
    %2208 = vmatprep.subr.mxu0 0.0
    %2209 = vmatpush1.msra.mxu0 0.0
    %2210 = vmatprep.subr.mxu0 0.0
    %2211 = vmatpush1.msra.mxu0 0.0
    %2212 = vmatprep.subr.mxu0 0.0
    %2213 = vmatpush1.msra.mxu0 0.0
    %2214 = vmatprep.subr.mxu0 0.0
    %2215 = vmatpush1.msra.mxu0 0.0
    %2216 = vmatprep.mubr.f32.mxu0 0.0
    %2217 = vmatmul.mubr.f32.gmra.mrb[0].mxu0 %v2147
    %v2218 = vpop.f32.mrb[0].mxu0
    %v2219 = vadd.f32 0.0, %v2218
    %v2220 = vpop.f32.mrb[0].mxu0
    %2221 = vmatprep.mubr.f32.mxu0 0.0
    %2222 = vmatmul.mubr.f32.gmra.mrb[0].mxu0 %v2150
    %v2223 = vpop.f32.mrb[0].mxu0
    %v2224 = vadd.f32 0.0, %v2223
    %v2225 = vpop.f32.mrb[0].mxu0
    %2226 = vdwg.mxu0
    %2227 = vrot.lane.b32.xlu0 %v1500, 80
    %v2228 = vpop.permute.xlu0 %2227
    %2229 = vrot.lane.b32.xlu0 %v1505, 80
    %v2230 = vpop.permute.xlu0 %2229
    %2231 = vrot.lane.b32.xlu0 %v1510, 80
    %v2232 = vpop.permute.xlu0 %2231
    %2233 = vrot.lane.b32.xlu0 %v1515, 80
    %v2234 = vpop.permute.xlu0 %2233
    %v2240 = vsel %vm163, %v2037, 0
    %v2243 = vsel %vm163, %v2038, 0
    %2245 = vmatprep.subr.mxu0 0.0
    %2246 = vmatpush1.msra.mxu0 %v2228
    %2247 = vmatprep.subr.mxu0 0.0
    %2248 = vmatpush1.msra.mxu0 %v2230
    %2249 = vmatprep.subr.mxu0 0.0
    %2250 = vmatpush1.msra.mxu0 %v2232
    %2251 = vmatprep.subr.mxu0 0.0
    %2252 = vmatpush1.msra.mxu0 %v2234
    %2253 = vmatprep.subr.mxu0 0.0
    %2254 = vmatpush1.msra.mxu0 0.0
    %2255 = vmatprep.subr.mxu0 0.0
    %2256 = vmatpush1.msra.mxu0 0.0
    %2257 = vmatprep.subr.mxu0 0.0
    %2258 = vmatpush1.msra.mxu0 0.0
    %2259 = vmatprep.subr.mxu0 0.0
    %2260 = vmatpush1.msra.mxu0 0.0
    %2261 = vmatprep.subr.mxu0 0.0
    %2262 = vmatpush1.msra.mxu0 0.0
    %2263 = vmatprep.subr.mxu0 0.0
    %2264 = vmatpush1.msra.mxu0 0.0
    %2265 = vmatprep.subr.mxu0 0.0
    %2266 = vmatpush1.msra.mxu0 0.0
    %2267 = vmatprep.subr.mxu0 0.0
    %2268 = vmatpush1.msra.mxu0 0.0
    %2269 = vmatprep.subr.mxu0 0.0
    %2270 = vmatpush1.msra.mxu0 0.0
    %2271 = vmatprep.subr.mxu0 0.0
    %2272 = vmatpush1.msra.mxu0 0.0
    %2273 = vmatprep.subr.mxu0 0.0
    %2274 = vmatpush1.msra.mxu0 0.0
    %2275 = vmatprep.subr.mxu0 0.0
    %2276 = vmatpush1.msra.mxu0 0.0
    %2277 = vmatprep.subr.mxu0 0.0
    %2278 = vmatpush1.msra.mxu0 0.0
    %2279 = vmatprep.subr.mxu0 0.0
    %2280 = vmatpush1.msra.mxu0 0.0
    %2281 = vmatprep.subr.mxu0 0.0
    %2282 = vmatpush1.msra.mxu0 0.0
    %2283 = vmatprep.subr.mxu0 0.0
    %2284 = vmatpush1.msra.mxu0 0.0
    %2285 = vmatprep.subr.mxu0 0.0
    %2286 = vmatpush1.msra.mxu0 0.0
    %2287 = vmatprep.subr.mxu0 0.0
    %2288 = vmatpush1.msra.mxu0 0.0
    %2289 = vmatprep.subr.mxu0 0.0
    %2290 = vmatpush1.msra.mxu0 0.0
    %2291 = vmatprep.subr.mxu0 0.0
    %2292 = vmatpush1.msra.mxu0 0.0
    %2293 = vmatprep.subr.mxu0 0.0
    %2294 = vmatpush1.msra.mxu0 0.0
    %2295 = vmatprep.subr.mxu0 0.0
    %2296 = vmatpush1.msra.mxu0 0.0
    %2297 = vmatprep.subr.mxu0 0.0
    %2298 = vmatpush1.msra.mxu0 0.0
    %2299 = vmatprep.subr.mxu0 0.0
    %2300 = vmatpush1.msra.mxu0 0.0
    %2301 = vmatprep.subr.mxu0 0.0
    %2302 = vmatpush1.msra.mxu0 0.0
    %2303 = vmatprep.subr.mxu0 0.0
    %2304 = vmatpush1.msra.mxu0 0.0
    %2305 = vmatprep.subr.mxu0 0.0
    %2306 = vmatpush1.msra.mxu0 0.0
    %2307 = vmatprep.subr.mxu0 0.0
    %2308 = vmatpush1.msra.mxu0 0.0
    %2309 = vmatprep.mubr.f32.mxu0 0.0
    %2310 = vmatmul.mubr.f32.gmra.mrb[0].mxu0 %v2240
    %v2311 = vpop.f32.mrb[0].mxu0
    %v2312 = vadd.f32 0.0, %v2311
    %v2313 = vpop.f32.mrb[0].mxu0
    %2314 = vmatprep.mubr.f32.mxu0 0.0
    %2315 = vmatmul.mubr.f32.gmra.mrb[0].mxu0 %v2243
    %v2316 = vpop.f32.mrb[0].mxu0
    %v2317 = vadd.f32 0.0, %v2316
    %v2318 = vpop.f32.mrb[0].mxu0
    %2319 = vdwg.mxu0
    %2320 = vrot.lane.b32.xlu0 %v1500, 72
    %v2321 = vpop.permute.xlu0 %2320
    %2322 = vrot.lane.b32.xlu0 %v1505, 72
    %v2323 = vpop.permute.xlu0 %2322
    %2324 = vrot.lane.b32.xlu0 %v1510, 72
    %v2325 = vpop.permute.xlu0 %2324
    %2326 = vrot.lane.b32.xlu0 %v1515, 72
    %v2327 = vpop.permute.xlu0 %2326
    %v2333 = vsel %vm163, %v2039, 0
    %v2336 = vsel %vm163, %v2040, 0
    %2338 = vmatprep.subr.mxu0 0.0
    %2339 = vmatpush1.msra.mxu0 %v2321
    %2340 = vmatprep.subr.mxu0 0.0
    %2341 = vmatpush1.msra.mxu0 %v2323
    %2342 = vmatprep.subr.mxu0 0.0
    %2343 = vmatpush1.msra.mxu0 %v2325
    %2344 = vmatprep.subr.mxu0 0.0
    %2345 = vmatpush1.msra.mxu0 %v2327
    %2346 = vmatprep.subr.mxu0 0.0
    %2347 = vmatpush1.msra.mxu0 0.0
    %2348 = vmatprep.subr.mxu0 0.0
    %2349 = vmatpush1.msra.mxu0 0.0
    %2350 = vmatprep.subr.mxu0 0.0
    %2351 = vmatpush1.msra.mxu0 0.0
    %2352 = vmatprep.subr.mxu0 0.0
    %2353 = vmatpush1.msra.mxu0 0.0
    %2354 = vmatprep.subr.mxu0 0.0
    %2355 = vmatpush1.msra.mxu0 0.0
    %2356 = vmatprep.subr.mxu0 0.0
    %2357 = vmatpush1.msra.mxu0 0.0
    %2358 = vmatprep.subr.mxu0 0.0
    %2359 = vmatpush1.msra.mxu0 0.0
    %2360 = vmatprep.subr.mxu0 0.0
    %2361 = vmatpush1.msra.mxu0 0.0
    %2362 = vmatprep.subr.mxu0 0.0
    %2363 = vmatpush1.msra.mxu0 0.0
    %2364 = vmatprep.subr.mxu0 0.0
    %2365 = vmatpush1.msra.mxu0 0.0
    %2366 = vmatprep.subr.mxu0 0.0
    %2367 = vmatpush1.msra.mxu0 0.0
    %2368 = vmatprep.subr.mxu0 0.0
    %2369 = vmatpush1.msra.mxu0 0.0
    %2370 = vmatprep.subr.mxu0 0.0
    %2371 = vmatpush1.msra.mxu0 0.0
    %2372 = vmatprep.subr.mxu0 0.0
    %2373 = vmatpush1.msra.mxu0 0.0
    %2374 = vmatprep.subr.mxu0 0.0
    %2375 = vmatpush1.msra.mxu0 0.0
    %2376 = vmatprep.subr.mxu0 0.0
    %2377 = vmatpush1.msra.mxu0 0.0
    %2378 = vmatprep.subr.mxu0 0.0
    %2379 = vmatpush1.msra.mxu0 0.0
    %2380 = vmatprep.subr.mxu0 0.0
    %2381 = vmatpush1.msra.mxu0 0.0
    %2382 = vmatprep.subr.mxu0 0.0
    %2383 = vmatpush1.msra.mxu0 0.0
    %2384 = vmatprep.subr.mxu0 0.0
    %2385 = vmatpush1.msra.mxu0 0.0
    %2386 = vmatprep.subr.mxu0 0.0
    %2387 = vmatpush1.msra.mxu0 0.0
    %2388 = vmatprep.subr.mxu0 0.0
    %2389 = vmatpush1.msra.mxu0 0.0
    %2390 = vmatprep.subr.mxu0 0.0
    %2391 = vmatpush1.msra.mxu0 0.0
    %2392 = vmatprep.subr.mxu0 0.0
    %2393 = vmatpush1.msra.mxu0 0.0
    %2394 = vmatprep.subr.mxu0 0.0
    %2395 = vmatpush1.msra.mxu0 0.0
    %2396 = vmatprep.subr.mxu0 0.0
    %2397 = vmatpush1.msra.mxu0 0.0
    %2398 = vmatprep.subr.mxu0 0.0
    %2399 = vmatpush1.msra.mxu0 0.0
    %2400 = vmatprep.subr.mxu0 0.0
    %2401 = vmatpush1.msra.mxu0 0.0
    %2402 = vmatprep.mubr.f32.mxu0 0.0
    %2403 = vmatmul.mubr.f32.gmra.mrb[0].mxu0 %v2333
    %v2404 = vpop.f32.mrb[0].mxu0
    %v2405 = vadd.f32 0.0, %v2404
    %v2406 = vpop.f32.mrb[0].mxu0
    %2407 = vmatprep.mubr.f32.mxu0 0.0
    %2408 = vmatmul.mubr.f32.gmra.mrb[0].mxu0 %v2336
    %v2409 = vpop.f32.mrb[0].mxu0
    %v2410 = vadd.f32 0.0, %v2409
    %v2411 = vpop.f32.mrb[0].mxu0
    %2412 = vdwg.mxu0
    %2415 = vrot.lane.b32.xlu0 %v2219, 8
    %v2416 = vpop.permute.xlu0 %2415
    %2417 = vrot.lane.b32.xlu0 %v2224, 8
    %v2418 = vpop.permute.xlu0 %2417
    %2423 = vrot.lane.b32.xlu0 %v2312, 16
    %v2424 = vpop.permute.xlu0 %2423
    %2425 = vrot.lane.b32.xlu0 %v2317, 16
    %v2426 = vpop.permute.xlu0 %2425
    %2431 = vrot.lane.b32.xlu0 %v2405, 24
    %v2432 = vpop.permute.xlu0 %2431
    %2433 = vrot.lane.b32.xlu0 %v2410, 24
    %v2434 = vpop.permute.xlu0 %2433
    %v2437 = vsel %vm330, %v2126, %v2416
    %v2438 = vsel %vm330, %v2131, %v2418
    %v2439 = vsel %vm695, %v2437, %v2424
    %v2440 = vsel %vm695, %v2438, %v2426
    %v2441 = vsel %vm1192, %v2439, %v2432
    %v2442 = vsel %vm1192, %v2440, %v2434
    %v2443 = vlaneseq
    %v2444 = vshrl.u32 %v2443, 7
    %v2445 = vsub.s32 0, %v2444
    %v2446 = vrot.slane %v1522, %v2445
    %v2448 = vsel %vm163, %v2441, 0
    %v2451 = vsel %vm163, %v2442, 0
    %2453 = vmatprep.subr.mxu0 0.0
    %2454 = vmatpush1.msra.mxu0 %v1518
    %2455 = vmatprep.subr.mxu0 0.0
    %2456 = vmatpush1.msra.mxu0 %v1519
    %2457 = vmatprep.subr.mxu0 0.0
    %2458 = vmatpush1.msra.mxu0 %v1520
    %2459 = vmatprep.subr.mxu0 0.0
    %2460 = vmatpush1.msra.mxu0 %v1521
    %2461 = vmatprep.subr.mxu0 0.0
    %2462 = vmatpush1.msra.mxu0 0.0
    %2463 = vmatprep.subr.mxu0 0.0
    %2464 = vmatpush1.msra.mxu0 0.0
    %2465 = vmatprep.subr.mxu0 0.0
    %2466 = vmatpush1.msra.mxu0 0.0
    %2467 = vmatprep.subr.mxu0 0.0
    %2468 = vmatpush1.msra.mxu0 0.0
    %2469 = vmatprep.subr.mxu0 0.0
    %2470 = vmatpush1.msra.mxu0 0.0
    %2471 = vmatprep.subr.mxu0 0.0
    %2472 = vmatpush1.msra.mxu0 0.0
    %2473 = vmatprep.subr.mxu0 0.0
    %2474 = vmatpush1.msra.mxu0 0.0
    %2475 = vmatprep.subr.mxu0 0.0
    %2476 = vmatpush1.msra.mxu0 0.0
    %2477 = vmatprep.subr.mxu0 0.0
    %2478 = vmatpush1.msra.mxu0 0.0
    %2479 = vmatprep.subr.mxu0 0.0
    %2480 = vmatpush1.msra.mxu0 0.0
    %2481 = vmatprep.subr.mxu0 0.0
    %2482 = vmatpush1.msra.mxu0 0.0
    %2483 = vmatprep.subr.mxu0 0.0
    %2484 = vmatpush1.msra.mxu0 0.0
    %2485 = vmatprep.subr.mxu0 0.0
    %2486 = vmatpush1.msra.mxu0 0.0
    %2487 = vmatprep.subr.mxu0 0.0
    %2488 = vmatpush1.msra.mxu0 0.0
    %2489 = vmatprep.subr.mxu0 0.0
    %2490 = vmatpush1.msra.mxu0 0.0
    %2491 = vmatprep.subr.mxu0 0.0
    %2492 = vmatpush1.msra.mxu0 0.0
    %2493 = vmatprep.subr.mxu0 0.0
    %2494 = vmatpush1.msra.mxu0 0.0
    %2495 = vmatprep.subr.mxu0 0.0
    %2496 = vmatpush1.msra.mxu0 0.0
    %2497 = vmatprep.subr.mxu0 0.0
    %2498 = vmatpush1.msra.mxu0 0.0
    %2499 = vmatprep.subr.mxu0 0.0
    %2500 = vmatpush1.msra.mxu0 0.0
    %2501 = vmatprep.subr.mxu0 0.0
    %2502 = vmatpush1.msra.mxu0 0.0
    %2503 = vmatprep.subr.mxu0 0.0
    %2504 = vmatpush1.msra.mxu0 0.0
    %2505 = vmatprep.subr.mxu0 0.0
    %2506 = vmatpush1.msra.mxu0 0.0
    %2507 = vmatprep.subr.mxu0 0.0
    %2508 = vmatpush1.msra.mxu0 0.0
    %2509 = vmatprep.subr.mxu0 0.0
    %2510 = vmatpush1.msra.mxu0 0.0
    %2511 = vmatprep.subr.mxu0 0.0
    %2512 = vmatpush1.msra.mxu0 0.0
    %2513 = vmatprep.subr.mxu0 0.0
    %2514 = vmatpush1.msra.mxu0 0.0
    %2515 = vmatprep.subr.mxu0 0.0
    %2516 = vmatpush1.msra.mxu0 0.0
    %2517 = vmatprep.mubr.f32.mxu0 0.0
    %2518 = vmatmul.mubr.f32.gmra.mrb[0].mxu0 %v2448
    %v2519 = vpop.f32.mrb[0].mxu0
    %v2520 = vadd.f32 %v2446, %v2519
    %v2521 = vpop.f32.mrb[0].mxu0
    %2522 = vmatprep.mubr.f32.mxu0 0.0
    %2523 = vmatmul.mubr.f32.gmra.mrb[0].mxu0 %v2451
    %v2524 = vpop.f32.mrb[0].mxu0
    %v2525 = vadd.f32 %v2446, %v2524
    %v2526 = vpop.f32.mrb[0].mxu0
    %2527 = vdwg.mxu0
    %v2528 = vadd.f32 %v1320, %v2520
    %v2529 = vadd.f32 %v1321, %v2525
    %v2530 = vld [vmem:[#allocation2 + $0x107] sm:$0x1]
    %v2531 = vld [vmem:[#allocation2 + $0x108] sm:$0x1]
    %v2532 = vsel %vm163, %v2528, 0.0
    %2533 = vadd.xlane.f32.xlu0 %v2532
    %v2534 = vpop.xlane.xlu0 %2533
    %v2535 = vsel %vm163, %v2529, 0.0
    %2536 = vadd.xlane.f32.xlu0 %v2535
    %v2537 = vpop.xlane.xlu0 %2536
    %v2538 = vmul.f32 %v2534, %v170
    %v2539 = vmul.f32 %v2537, %v170
    %v2540 = vsub.f32 %v2528, %v2538
    %v2541 = vsub.f32 %v2529, %v2539
    %v2542 = vmul.f32 %v2540, %v2540
    %v2543 = vmul.f32 %v2541, %v2541
    %v2544 = vsel %vm163, %v2542, 0.0
    %2545 = vadd.xlane.f32.xlu0 %v2544
    %v2546 = vpop.xlane.xlu0 %2545
    %v2547 = vsel %vm163, %v2543, 0.0
    %2548 = vadd.xlane.f32.xlu0 %v2547
    %v2549 = vpop.xlane.xlu0 %2548
    %v2550 = vmul.f32 %v2546, %v170
    %v2551 = vmul.f32 %v2549, %v170
    %v2552 = vadd.f32 %v2550, 1e-05
    %v2553 = vadd.f32 %v2551, 1e-05
    %v2554 = vrsqrt.pop %v2552
    %v2555 = vrsqrt.pop %v2553
    %v2556 = vmul.f32 %v2540, %v2554
    %v2557 = vmul.f32 %v2541, %v2555
    %v2558 = vlaneseq
    %v2559 = vshrl.u32 %v2558, 7
    %v2560 = vsub.s32 0, %v2559
    %v2561 = vrot.slane %v2530, %v2560
    %v2562 = vmul.f32 %v2556, %v2561
    %v2563 = vmul.f32 %v2557, %v2561
    %v2564 = vlaneseq
    %v2565 = vshrl.u32 %v2564, 7
    %v2566 = vsub.s32 0, %v2565
    %v2567 = vrot.slane %v2531, %v2566
    %v2568 = vadd.f32 %v2562, %v2567
    %v2569 = vadd.f32 %v2563, %v2567
    %v2570 = vld [vmem:[#allocation2 + $0xa0] sm:$0xff]
    %v2571 = vld [vmem:[#allocation2 + $0xa8] sm:$0xff]
    %v2572 = vld [vmem:[#allocation2 + $0xb0] sm:$0xff]
    %v2573 = vld [vmem:[#allocation2 + $0xb8] sm:$0xff]
    %v2574 = vld [vmem:[#allocation2 + $0x109] sm:$0x1]
    %v2575 = vlaneseq
    %v2576 = vshrl.u32 %v2575, 7
    %v2577 = vsub.s32 0, %v2576
    %v2578 = vrot.slane %v2574, %v2577
    %v2580 = vsel %vm163, %v2568, 0
    %v2583 = vsel %vm163, %v2569, 0
    %2585 = vmatprep.subr.mxu0 0.0
    %2586 = vmatpush1.msra.mxu0 %v2570
    %2587 = vmatprep.subr.mxu0 0.0
    %2588 = vmatpush1.msra.mxu0 %v2571
    %2589 = vmatprep.subr.mxu0 0.0
    %2590 = vmatpush1.msra.mxu0 %v2572
    %2591 = vmatprep.subr.mxu0 0.0
    %2592 = vmatpush1.msra.mxu0 %v2573
    %2593 = vmatprep.subr.mxu0 0.0
    %2594 = vmatpush1.msra.mxu0 0.0
    %2595 = vmatprep.subr.mxu0 0.0
    %2596 = vmatpush1.msra.mxu0 0.0
    %2597 = vmatprep.subr.mxu0 0.0
    %2598 = vmatpush1.msra.mxu0 0.0
    %2599 = vmatprep.subr.mxu0 0.0
    %2600 = vmatpush1.msra.mxu0 0.0
    %2601 = vmatprep.subr.mxu0 0.0
    %2602 = vmatpush1.msra.mxu0 0.0
    %2603 = vmatprep.subr.mxu0 0.0
    %2604 = vmatpush1.msra.mxu0 0.0
    %2605 = vmatprep.subr.mxu0 0.0
    %2606 = vmatpush1.msra.mxu0 0.0
    %2607 = vmatprep.subr.mxu0 0.0
    %2608 = vmatpush1.msra.mxu0 0.0
    %2609 = vmatprep.subr.mxu0 0.0
    %2610 = vmatpush1.msra.mxu0 0.0
    %2611 = vmatprep.subr.mxu0 0.0
    %2612 = vmatpush1.msra.mxu0 0.0
    %2613 = vmatprep.subr.mxu0 0.0
    %2614 = vmatpush1.msra.mxu0 0.0
    %2615 = vmatprep.subr.mxu0 0.0
    %2616 = vmatpush1.msra.mxu0 0.0
    %2617 = vmatprep.subr.mxu0 0.0
    %2618 = vmatpush1.msra.mxu0 0.0
    %2619 = vmatprep.subr.mxu0 0.0
    %2620 = vmatpush1.msra.mxu0 0.0
    %2621 = vmatprep.subr.mxu0 0.0
    %2622 = vmatpush1.msra.mxu0 0.0
    %2623 = vmatprep.subr.mxu0 0.0
    %2624 = vmatpush1.msra.mxu0 0.0
    %2625 = vmatprep.subr.mxu0 0.0
    %2626 = vmatpush1.msra.mxu0 0.0
    %2627 = vmatprep.subr.mxu0 0.0
    %2628 = vmatpush1.msra.mxu0 0.0
    %2629 = vmatprep.subr.mxu0 0.0
    %2630 = vmatpush1.msra.mxu0 0.0
    %2631 = vmatprep.subr.mxu0 0.0
    %2632 = vmatpush1.msra.mxu0 0.0
    %2633 = vmatprep.subr.mxu0 0.0
    %2634 = vmatpush1.msra.mxu0 0.0
    %2635 = vmatprep.subr.mxu0 0.0
    %2636 = vmatpush1.msra.mxu0 0.0
    %2637 = vmatprep.subr.mxu0 0.0
    %2638 = vmatpush1.msra.mxu0 0.0
    %2639 = vmatprep.subr.mxu0 0.0
    %2640 = vmatpush1.msra.mxu0 0.0
    %2641 = vmatprep.subr.mxu0 0.0
    %2642 = vmatpush1.msra.mxu0 0.0
    %2643 = vmatprep.subr.mxu0 0.0
    %2644 = vmatpush1.msra.mxu0 0.0
    %2645 = vmatprep.subr.mxu0 0.0
    %2646 = vmatpush1.msra.mxu0 0.0
    %2647 = vmatprep.subr.mxu0 0.0
    %2648 = vmatpush1.msra.mxu0 0.0
    %2649 = vmatprep.mubr.f32.mxu0 0.0
    %2650 = vmatmul.mubr.f32.gmra.mrb[0].mxu0 %v2580
    %v2651 = vpop.f32.mrb[0].mxu0
    %v2652 = vadd.f32 %v2578, %v2651
    %v2653 = vpop.f32.mrb[0].mxu0
    %2654 = vmatprep.mubr.f32.mxu0 0.0
    %2655 = vmatmul.mubr.f32.gmra.mrb[0].mxu0 %v2583
    %v2656 = vpop.f32.mrb[0].mxu0
    %v2657 = vadd.f32 %v2578, %v2656
    %v2658 = vpop.f32.mrb[0].mxu0
    %2659 = vdwg.mxu0
    %v2660 = vmax.f32 %v2652, 0.0
    %v2661 = vmax.f32 %v2657, 0.0
    %v2662 = vld [vmem:[#allocation2 + $0xc0] sm:$0xff]
    %v2663 = vld [vmem:[#allocation2 + $0xc8] sm:$0xff]
    %v2664 = vld [vmem:[#allocation2 + $0xd0] sm:$0xff]
    %v2665 = vld [vmem:[#allocation2 + $0xd8] sm:$0xff]
    %v2666 = vld [vmem:[#allocation2 + $0xe0] sm:$0xff]
    %v2667 = vld [vmem:[#allocation2 + $0xe8] sm:$0xff]
    %v2668 = vld [vmem:[#allocation2 + $0xf0] sm:$0xff]
    %v2669 = vld [vmem:[#allocation2 + $0xf8] sm:$0xff]
    %v2670 = vld [vmem:[#allocation2 + $0x10a] sm:$0x1]
    %v2671 = vlaneseq
    %v2672 = vshrl.u32 %v2671, 7
    %v2673 = vsub.s32 0, %v2672
    %v2674 = vrot.slane %v2670, %v2673
    %vm2675 = vcmask 523264
    %v2677 = vsel %vm2675, %v2660, 0
    %v2680 = vsel %vm2675, %v2661, 0
    %2682 = vmatprep.subr.mxu0 0.0
    %2683 = vmatpush1.msra.mxu0 %v2662
    %2684 = vmatprep.subr.mxu0 0.0
    %2685 = vmatpush1.msra.mxu0 %v2663
    %2686 = vmatprep.subr.mxu0 0.0
    %2687 = vmatpush1.msra.mxu0 %v2664
    %2688 = vmatprep.subr.mxu0 0.0
    %2689 = vmatpush1.msra.mxu0 %v2665
    %2690 = vmatprep.subr.mxu0 0.0
    %2691 = vmatpush1.msra.mxu0 %v2666
    %2692 = vmatprep.subr.mxu0 0.0
    %2693 = vmatpush1.msra.mxu0 %v2667
    %2694 = vmatprep.subr.mxu0 0.0
    %2695 = vmatpush1.msra.mxu0 %v2668
    %2696 = vmatprep.subr.mxu0 0.0
    %2697 = vmatpush1.msra.mxu0 %v2669
    %2698 = vmatprep.subr.mxu0 0.0
    %2699 = vmatpush1.msra.mxu0 0.0
    %2700 = vmatprep.subr.mxu0 0.0
    %2701 = vmatpush1.msra.mxu0 0.0
    %2702 = vmatprep.subr.mxu0 0.0
    %2703 = vmatpush1.msra.mxu0 0.0
    %2704 = vmatprep.subr.mxu0 0.0
    %2705 = vmatpush1.msra.mxu0 0.0
    %2706 = vmatprep.subr.mxu0 0.0
    %2707 = vmatpush1.msra.mxu0 0.0
    %2708 = vmatprep.subr.mxu0 0.0
    %2709 = vmatpush1.msra.mxu0 0.0
    %2710 = vmatprep.subr.mxu0 0.0
    %2711 = vmatpush1.msra.mxu0 0.0
    %2712 = vmatprep.subr.mxu0 0.0
    %2713 = vmatpush1.msra.mxu0 0.0
    %2714 = vmatprep.subr.mxu0 0.0
    %2715 = vmatpush1.msra.mxu0 0.0
    %2716 = vmatprep.subr.mxu0 0.0
    %2717 = vmatpush1.msra.mxu0 0.0
    %2718 = vmatprep.subr.mxu0 0.0
    %2719 = vmatpush1.msra.mxu0 0.0
    %2720 = vmatprep.subr.mxu0 0.0
    %2721 = vmatpush1.msra.mxu0 0.0
    %2722 = vmatprep.subr.mxu0 0.0
    %2723 = vmatpush1.msra.mxu0 0.0
    %2724 = vmatprep.subr.mxu0 0.0
    %2725 = vmatpush1.msra.mxu0 0.0
    %2726 = vmatprep.subr.mxu0 0.0
    %2727 = vmatpush1.msra.mxu0 0.0
    %2728 = vmatprep.subr.mxu0 0.0
    %2729 = vmatpush1.msra.mxu0 0.0
    %2730 = vmatprep.subr.mxu0 0.0
    %2731 = vmatpush1.msra.mxu0 0.0
    %2732 = vmatprep.subr.mxu0 0.0
    %2733 = vmatpush1.msra.mxu0 0.0
    %2734 = vmatprep.subr.mxu0 0.0
    %2735 = vmatpush1.msra.mxu0 0.0
    %2736 = vmatprep.subr.mxu0 0.0
    %2737 = vmatpush1.msra.mxu0 0.0
    %2738 = vmatprep.subr.mxu0 0.0
    %2739 = vmatpush1.msra.mxu0 0.0
    %2740 = vmatprep.subr.mxu0 0.0
    %2741 = vmatpush1.msra.mxu0 0.0
    %2742 = vmatprep.subr.mxu0 0.0
    %2743 = vmatpush1.msra.mxu0 0.0
    %2744 = vmatprep.subr.mxu0 0.0
    %2745 = vmatpush1.msra.mxu0 0.0
    %2746 = vmatprep.mubr.f32.mxu0 0.0
    %2747 = vmatmul.mubr.f32.gmra.mrb[0].mxu0 %v2677
    %v2748 = vpop.f32.mrb[0].mxu0
    %v2749 = vadd.f32 %v2674, %v2748
    %v2750 = vpop.f32.mrb[0].mxu0
    %2751 = vmatprep.mubr.f32.mxu0 0.0
    %2752 = vmatmul.mubr.f32.gmra.mrb[0].mxu0 %v2680
    %v2753 = vpop.f32.mrb[0].mxu0
    %v2754 = vadd.f32 %v2674, %v2753
    %v2755 = vpop.f32.mrb[0].mxu0
    %2756 = vdwg.mxu0
    %v2757 = vadd.f32 %v2568, %v2749
    %v2758 = vadd.f32 %v2569, %v2754
    %v2759 = vld [vmem:[#allocation2 + $0x10b] sm:$0x1]
    %v2760 = vld [vmem:[#allocation2 + $0x10c] sm:$0x1]
    %v2761 = vsel %vm163, %v2757, 0.0
    %2762 = vadd.xlane.f32.xlu0 %v2761
    %v2763 = vpop.xlane.xlu0 %2762
    %v2764 = vsel %vm163, %v2758, 0.0
    %2765 = vadd.xlane.f32.xlu0 %v2764
    %v2766 = vpop.xlane.xlu0 %2765
    %v2767 = vmul.f32 %v2763, %v170
    %v2768 = vmul.f32 %v2766, %v170
    %v2769 = vsub.f32 %v2757, %v2767
    %v2770 = vsub.f32 %v2758, %v2768
    %v2771 = vmul.f32 %v2769, %v2769
    %v2772 = vmul.f32 %v2770, %v2770
    %v2773 = vsel %vm163, %v2771, 0.0
    %2774 = vadd.xlane.f32.xlu0 %v2773
    %v2775 = vpop.xlane.xlu0 %2774
    %v2776 = vsel %vm163, %v2772, 0.0
    %2777 = vadd.xlane.f32.xlu0 %v2776
    %v2778 = vpop.xlane.xlu0 %2777
    %v2779 = vmul.f32 %v2775, %v170
    %v2780 = vmul.f32 %v2778, %v170
    %v2781 = vadd.f32 %v2779, 1e-05
    %v2782 = vadd.f32 %v2780, 1e-05
    %v2783 = vrsqrt.pop %v2781
    %v2784 = vrsqrt.pop %v2782
    %v2785 = vmul.f32 %v2769, %v2783
    %v2786 = vmul.f32 %v2770, %v2784
    %v2787 = vlaneseq
    %v2788 = vshrl.u32 %v2787, 7
    %v2789 = vsub.s32 0, %v2788
    %v2790 = vrot.slane %v2759, %v2789
    %v2791 = vmul.f32 %v2785, %v2790
    %v2792 = vmul.f32 %v2786, %v2790
    %v2793 = vlaneseq
    %v2794 = vshrl.u32 %v2793, 7
    %v2795 = vsub.s32 0, %v2794
    %v2796 = vrot.slane %v2760, %v2795
    %v2797 = vadd.f32 %v2791, %v2796
    %v2798 = vadd.f32 %v2792, %v2796
    %s2799 = scalar_lea.vmem [#allocation2], 272
    %v2800 = vld [vmem:[%s2799] sm:$0xff]
    %v2801 = vld [vmem:[%s2799 + $0x8] sm:$0xff]
    %v2802 = vld [vmem:[%s2799 + $0x10] sm:$0xff]
    %v2803 = vld [vmem:[%s2799 + $0x18] sm:$0xff]
    %v2804 = vld [vmem:[%s2799 + $0x100] sm:$0x1]
    %v2805 = vlaneseq
    %v2806 = vshrl.u32 %v2805, 7
    %v2807 = vsub.s32 0, %v2806
    %v2808 = vrot.slane %v2804, %v2807
    %v2810 = vsel %vm163, %v2797, 0
    %v2813 = vsel %vm163, %v2798, 0
    %2815 = vmatprep.subr.mxu0 0.0
    %2816 = vmatpush1.msra.mxu0 %v2800
    %2817 = vmatprep.subr.mxu0 0.0
    %2818 = vmatpush1.msra.mxu0 %v2801
    %2819 = vmatprep.subr.mxu0 0.0
    %2820 = vmatpush1.msra.mxu0 %v2802
    %2821 = vmatprep.subr.mxu0 0.0
    %2822 = vmatpush1.msra.mxu0 %v2803
    %2823 = vmatprep.subr.mxu0 0.0
    %2824 = vmatpush1.msra.mxu0 0.0
    %2825 = vmatprep.subr.mxu0 0.0
    %2826 = vmatpush1.msra.mxu0 0.0
    %2827 = vmatprep.subr.mxu0 0.0
    %2828 = vmatpush1.msra.mxu0 0.0
    %2829 = vmatprep.subr.mxu0 0.0
    %2830 = vmatpush1.msra.mxu0 0.0
    %2831 = vmatprep.subr.mxu0 0.0
    %2832 = vmatpush1.msra.mxu0 0.0
    %2833 = vmatprep.subr.mxu0 0.0
    %2834 = vmatpush1.msra.mxu0 0.0
    %2835 = vmatprep.subr.mxu0 0.0
    %2836 = vmatpush1.msra.mxu0 0.0
    %2837 = vmatprep.subr.mxu0 0.0
    %2838 = vmatpush1.msra.mxu0 0.0
    %2839 = vmatprep.subr.mxu0 0.0
    %2840 = vmatpush1.msra.mxu0 0.0
    %2841 = vmatprep.subr.mxu0 0.0
    %2842 = vmatpush1.msra.mxu0 0.0
    %2843 = vmatprep.subr.mxu0 0.0
    %2844 = vmatpush1.msra.mxu0 0.0
    %2845 = vmatprep.subr.mxu0 0.0
    %2846 = vmatpush1.msra.mxu0 0.0
    %2847 = vmatprep.subr.mxu0 0.0
    %2848 = vmatpush1.msra.mxu0 0.0
    %2849 = vmatprep.subr.mxu0 0.0
    %2850 = vmatpush1.msra.mxu0 0.0
    %2851 = vmatprep.subr.mxu0 0.0
    %2852 = vmatpush1.msra.mxu0 0.0
    %2853 = vmatprep.subr.mxu0 0.0
    %2854 = vmatpush1.msra.mxu0 0.0
    %2855 = vmatprep.subr.mxu0 0.0
    %2856 = vmatpush1.msra.mxu0 0.0
    %2857 = vmatprep.subr.mxu0 0.0
    %2858 = vmatpush1.msra.mxu0 0.0
    %2859 = vmatprep.subr.mxu0 0.0
    %2860 = vmatpush1.msra.mxu0 0.0
    %2861 = vmatprep.subr.mxu0 0.0
    %2862 = vmatpush1.msra.mxu0 0.0
    %2863 = vmatprep.subr.mxu0 0.0
    %2864 = vmatpush1.msra.mxu0 0.0
    %2865 = vmatprep.subr.mxu0 0.0
    %2866 = vmatpush1.msra.mxu0 0.0
    %2867 = vmatprep.subr.mxu0 0.0
    %2868 = vmatpush1.msra.mxu0 0.0
    %2869 = vmatprep.subr.mxu0 0.0
    %2870 = vmatpush1.msra.mxu0 0.0
    %2871 = vmatprep.subr.mxu0 0.0
    %2872 = vmatpush1.msra.mxu0 0.0
    %2873 = vmatprep.subr.mxu0 0.0
    %2874 = vmatpush1.msra.mxu0 0.0
    %2875 = vmatprep.subr.mxu0 0.0
    %2876 = vmatpush1.msra.mxu0 0.0
    %2877 = vmatprep.subr.mxu0 0.0
    %2878 = vmatpush1.msra.mxu0 0.0
    %2879 = vmatprep.mubr.f32.mxu0 0.0
    %2880 = vmatmul.mubr.f32.gmra.mrb[0].mxu0 %v2810
    %v2881 = vpop.f32.mrb[0].mxu0
    %v2882 = vadd.f32 %v2808, %v2881
    %v2883 = vpop.f32.mrb[0].mxu0
    %2884 = vmatprep.mubr.f32.mxu0 0.0
    %2885 = vmatmul.mubr.f32.gmra.mrb[0].mxu0 %v2813
    %v2886 = vpop.f32.mrb[0].mxu0
    %v2887 = vadd.f32 %v2808, %v2886
    %v2888 = vpop.f32.mrb[0].mxu0
    %2889 = vdwg.mxu0
    %v2890 = vld [vmem:[%s2799 + $0x20] sm:$0xff]
    %v2891 = vld [vmem:[%s2799 + $0x28] sm:$0xff]
    %v2892 = vld [vmem:[%s2799 + $0x30] sm:$0xff]
    %v2893 = vld [vmem:[%s2799 + $0x38] sm:$0xff]
    %v2894 = vld [vmem:[%s2799 + $0x101] sm:$0x1]
    %2897 = vrot.lane.b32.xlu0 %v2882, 96
    %v2898 = vpop.permute.xlu0 %2897
    %2899 = vrot.lane.b32.xlu0 %v2887, 96
    %v2900 = vpop.permute.xlu0 %2899
    %v2901 = vsel %vm330, %v2882, 0
    %v2903 = vsel %vm330, %v2887, 0
    %v2905 = vsel %vm330, %v2898, 0
    %v2907 = vsel %vm330, %v2900, 0
    %2909 = vmatprep.subr.mxu0 0.0
    %2910 = vmatpush1.xpose.msra.mxu0 %v2905
    %2911 = vmatprep.subr.mxu0 0.0
    %2912 = vmatpush1.xpose.msra.mxu0 %v2907
    %2913 = vmatprep.subr.mxu0 0.0
    %2914 = vmatpush1.xpose.msra.mxu0 0.0
    %2915 = vmatprep.subr.mxu0 0.0
    %2916 = vmatpush1.xpose.msra.mxu0 0.0
    %2917 = vmatprep.subr.mxu0 0.0
    %2918 = vmatpush1.xpose.msra.mxu0 0.0
    %2919 = vmatprep.subr.mxu0 0.0
    %2920 = vmatpush1.xpose.msra.mxu0 0.0
    %2921 = vmatprep.subr.mxu0 0.0
    %2922 = vmatpush1.xpose.msra.mxu0 0.0
    %2923 = vmatprep.subr.mxu0 0.0
    %2924 = vmatpush1.xpose.msra.mxu0 0.0
    %2925 = vmatprep.subr.mxu0 0.0
    %2926 = vmatpush1.xpose.msra.mxu0 0.0
    %2927 = vmatprep.subr.mxu0 0.0
    %2928 = vmatpush1.xpose.msra.mxu0 0.0
    %2929 = vmatprep.subr.mxu0 0.0
    %2930 = vmatpush1.xpose.msra.mxu0 0.0
    %2931 = vmatprep.subr.mxu0 0.0
    %2932 = vmatpush1.xpose.msra.mxu0 0.0
    %2933 = vmatprep.subr.mxu0 0.0
    %2934 = vmatpush1.xpose.msra.mxu0 0.0
    %2935 = vmatprep.subr.mxu0 0.0
    %2936 = vmatpush1.xpose.msra.mxu0 0.0
    %2937 = vmatprep.subr.mxu0 0.0
    %2938 = vmatpush1.xpose.msra.mxu0 0.0
    %2939 = vmatprep.subr.mxu0 0.0
    %2940 = vmatpush1.xpose.msra.mxu0 0.0
    %2941 = vmatprep.subr.mxu0 0.0
    %2942 = vmatpush1.xpose.msra.mxu0 0.0
    %2943 = vmatprep.subr.mxu0 0.0
    %2944 = vmatpush1.xpose.msra.mxu0 0.0
    %2945 = vmatprep.subr.mxu0 0.0
    %2946 = vmatpush1.xpose.msra.mxu0 0.0
    %2947 = vmatprep.subr.mxu0 0.0
    %2948 = vmatpush1.xpose.msra.mxu0 0.0
    %2949 = vmatprep.subr.mxu0 0.0
    %2950 = vmatpush1.xpose.msra.mxu0 0.0
    %2951 = vmatprep.subr.mxu0 0.0
    %2952 = vmatpush1.xpose.msra.mxu0 0.0
    %2953 = vmatprep.subr.mxu0 0.0
    %2954 = vmatpush1.xpose.msra.mxu0 0.0
    %2955 = vmatprep.subr.mxu0 0.0
    %2956 = vmatpush1.xpose.msra.mxu0 0.0
    %2957 = vmatprep.subr.mxu0 0.0
    %2958 = vmatpush1.xpose.msra.mxu0 0.0
    %2959 = vmatprep.subr.mxu0 0.0
    %2960 = vmatpush1.xpose.msra.mxu0 0.0
    %2961 = vmatprep.subr.mxu0 0.0
    %2962 = vmatpush1.xpose.msra.mxu0 0.0
    %2963 = vmatprep.subr.mxu0 0.0
    %2964 = vmatpush1.xpose.msra.mxu0 0.0
    %2965 = vmatprep.subr.mxu0 0.0
    %2966 = vmatpush1.xpose.msra.mxu0 0.0
    %2967 = vmatprep.subr.mxu0 0.0
    %2968 = vmatpush1.xpose.msra.mxu0 0.0
    %2969 = vmatprep.subr.mxu0 0.0
    %2970 = vmatpush1.xpose.msra.mxu0 0.0
    %2971 = vmatprep.subr.mxu0 0.0
    %2972 = vmatpush1.xpose.msra.mxu0 0.0
    %2973 = vmatprep.mubr.f32.mxu0 0.0
    %2974 = vmatmul.mubr.f32.gmra.mrb[0].mxu0 %v2901
    %v2975 = vpop.f32.mrb[0].mxu0
    %v2976 = vadd.f32 0.0, %v2975
    %v2977 = vpop.f32.mrb[0].mxu0
    %2978 = vmatprep.mubr.f32.mxu0 0.0
    %2979 = vmatmul.mubr.f32.gmra.mrb[0].mxu0 %v2903
    %v2980 = vpop.f32.mrb[0].mxu0
    %v2981 = vadd.f32 0.0, %v2980
    %v2982 = vpop.f32.mrb[0].mxu0
    %2983 = vdwg.mxu0
    %2984 = vrot.lane.b32.xlu0 %v2882, 120
    %v2985 = vpop.permute.xlu0 %2984
    %2986 = vrot.lane.b32.xlu0 %v2887, 120
    %v2987 = vpop.permute.xlu0 %2986
    %2988 = vrot.lane.b32.xlu0 %v2882, 88
    %v2989 = vpop.permute.xlu0 %2988
    %2990 = vrot.lane.b32.xlu0 %v2887, 88
    %v2991 = vpop.permute.xlu0 %2990
    %v2992 = vsel %vm330, %v2985, 0
    %v2994 = vsel %vm330, %v2987, 0
    %v2996 = vsel %vm330, %v2989, 0
    %v2998 = vsel %vm330, %v2991, 0
    %3000 = vmatprep.subr.mxu0 0.0
    %3001 = vmatpush1.xpose.msra.mxu0 %v2996
    %3002 = vmatprep.subr.mxu0 0.0
    %3003 = vmatpush1.xpose.msra.mxu0 %v2998
    %3004 = vmatprep.subr.mxu0 0.0
    %3005 = vmatpush1.xpose.msra.mxu0 0.0
    %3006 = vmatprep.subr.mxu0 0.0
    %3007 = vmatpush1.xpose.msra.mxu0 0.0
    %3008 = vmatprep.subr.mxu0 0.0
    %3009 = vmatpush1.xpose.msra.mxu0 0.0
    %3010 = vmatprep.subr.mxu0 0.0
    %3011 = vmatpush1.xpose.msra.mxu0 0.0
    %3012 = vmatprep.subr.mxu0 0.0
    %3013 = vmatpush1.xpose.msra.mxu0 0.0
    %3014 = vmatprep.subr.mxu0 0.0
    %3015 = vmatpush1.xpose.msra.mxu0 0.0
    %3016 = vmatprep.subr.mxu0 0.0
    %3017 = vmatpush1.xpose.msra.mxu0 0.0
    %3018 = vmatprep.subr.mxu0 0.0
    %3019 = vmatpush1.xpose.msra.mxu0 0.0
    %3020 = vmatprep.subr.mxu0 0.0
    %3021 = vmatpush1.xpose.msra.mxu0 0.0
    %3022 = vmatprep.subr.mxu0 0.0
    %3023 = vmatpush1.xpose.msra.mxu0 0.0
    %3024 = vmatprep.subr.mxu0 0.0
    %3025 = vmatpush1.xpose.msra.mxu0 0.0
    %3026 = vmatprep.subr.mxu0 0.0
    %3027 = vmatpush1.xpose.msra.mxu0 0.0
    %3028 = vmatprep.subr.mxu0 0.0
    %3029 = vmatpush1.xpose.msra.mxu0 0.0
    %3030 = vmatprep.subr.mxu0 0.0
    %3031 = vmatpush1.xpose.msra.mxu0 0.0
    %3032 = vmatprep.subr.mxu0 0.0
    %3033 = vmatpush1.xpose.msra.mxu0 0.0
    %3034 = vmatprep.subr.mxu0 0.0
    %3035 = vmatpush1.xpose.msra.mxu0 0.0
    %3036 = vmatprep.subr.mxu0 0.0
    %3037 = vmatpush1.xpose.msra.mxu0 0.0
    %3038 = vmatprep.subr.mxu0 0.0
    %3039 = vmatpush1.xpose.msra.mxu0 0.0
    %3040 = vmatprep.subr.mxu0 0.0
    %3041 = vmatpush1.xpose.msra.mxu0 0.0
    %3042 = vmatprep.subr.mxu0 0.0
    %3043 = vmatpush1.xpose.msra.mxu0 0.0
    %3044 = vmatprep.subr.mxu0 0.0
    %3045 = vmatpush1.xpose.msra.mxu0 0.0
    %3046 = vmatprep.subr.mxu0 0.0
    %3047 = vmatpush1.xpose.msra.mxu0 0.0
    %3048 = vmatprep.subr.mxu0 0.0
    %3049 = vmatpush1.xpose.msra.mxu0 0.0
    %3050 = vmatprep.subr.mxu0 0.0
    %3051 = vmatpush1.xpose.msra.mxu0 0.0
    %3052 = vmatprep.subr.mxu0 0.0
    %3053 = vmatpush1.xpose.msra.mxu0 0.0
    %3054 = vmatprep.subr.mxu0 0.0
    %3055 = vmatpush1.xpose.msra.mxu0 0.0
    %3056 = vmatprep.subr.mxu0 0.0
    %3057 = vmatpush1.xpose.msra.mxu0 0.0
    %3058 = vmatprep.subr.mxu0 0.0
    %3059 = vmatpush1.xpose.msra.mxu0 0.0
    %3060 = vmatprep.subr.mxu0 0.0
    %3061 = vmatpush1.xpose.msra.mxu0 0.0
    %3062 = vmatprep.subr.mxu0 0.0
    %3063 = vmatpush1.xpose.msra.mxu0 0.0
    %3064 = vmatprep.mubr.f32.mxu0 0.0
    %3065 = vmatmul.mubr.f32.gmra.mrb[0].mxu0 %v2992
    %v3066 = vpop.f32.mrb[0].mxu0
    %v3067 = vadd.f32 0.0, %v3066
    %v3068 = vpop.f32.mrb[0].mxu0
    %3069 = vmatprep.mubr.f32.mxu0 0.0
    %3070 = vmatmul.mubr.f32.gmra.mrb[0].mxu0 %v2994
    %v3071 = vpop.f32.mrb[0].mxu0
    %v3072 = vadd.f32 0.0, %v3071
    %v3073 = vpop.f32.mrb[0].mxu0
    %3074 = vdwg.mxu0
    %3075 = vrot.lane.b32.xlu0 %v2882, 112
    %v3076 = vpop.permute.xlu0 %3075
    %3077 = vrot.lane.b32.xlu0 %v2887, 112
    %v3078 = vpop.permute.xlu0 %3077
    %3079 = vrot.lane.b32.xlu0 %v2882, 80
    %v3080 = vpop.permute.xlu0 %3079
    %3081 = vrot.lane.b32.xlu0 %v2887, 80
    %v3082 = vpop.permute.xlu0 %3081
    %v3083 = vsel %vm330, %v3076, 0
    %v3085 = vsel %vm330, %v3078, 0
    %v3087 = vsel %vm330, %v3080, 0
    %v3089 = vsel %vm330, %v3082, 0
    %3091 = vmatprep.subr.mxu0 0.0
    %3092 = vmatpush1.xpose.msra.mxu0 %v3087
    %3093 = vmatprep.subr.mxu0 0.0
    %3094 = vmatpush1.xpose.msra.mxu0 %v3089
    %3095 = vmatprep.subr.mxu0 0.0
    %3096 = vmatpush1.xpose.msra.mxu0 0.0
    %3097 = vmatprep.subr.mxu0 0.0
    %3098 = vmatpush1.xpose.msra.mxu0 0.0
    %3099 = vmatprep.subr.mxu0 0.0
    %3100 = vmatpush1.xpose.msra.mxu0 0.0
    %3101 = vmatprep.subr.mxu0 0.0
    %3102 = vmatpush1.xpose.msra.mxu0 0.0
    %3103 = vmatprep.subr.mxu0 0.0
    %3104 = vmatpush1.xpose.msra.mxu0 0.0
    %3105 = vmatprep.subr.mxu0 0.0
    %3106 = vmatpush1.xpose.msra.mxu0 0.0
    %3107 = vmatprep.subr.mxu0 0.0
    %3108 = vmatpush1.xpose.msra.mxu0 0.0
    %3109 = vmatprep.subr.mxu0 0.0
    %3110 = vmatpush1.xpose.msra.mxu0 0.0
    %3111 = vmatprep.subr.mxu0 0.0
    %3112 = vmatpush1.xpose.msra.mxu0 0.0
    %3113 = vmatprep.subr.mxu0 0.0
    %3114 = vmatpush1.xpose.msra.mxu0 0.0
    %3115 = vmatprep.subr.mxu0 0.0
    %3116 = vmatpush1.xpose.msra.mxu0 0.0
    %3117 = vmatprep.subr.mxu0 0.0
    %3118 = vmatpush1.xpose.msra.mxu0 0.0
    %3119 = vmatprep.subr.mxu0 0.0
    %3120 = vmatpush1.xpose.msra.mxu0 0.0
    %3121 = vmatprep.subr.mxu0 0.0
    %3122 = vmatpush1.xpose.msra.mxu0 0.0
    %3123 = vmatprep.subr.mxu0 0.0
    %3124 = vmatpush1.xpose.msra.mxu0 0.0
    %3125 = vmatprep.subr.mxu0 0.0
    %3126 = vmatpush1.xpose.msra.mxu0 0.0
    %3127 = vmatprep.subr.mxu0 0.0
    %3128 = vmatpush1.xpose.msra.mxu0 0.0
    %3129 = vmatprep.subr.mxu0 0.0
    %3130 = vmatpush1.xpose.msra.mxu0 0.0
    %3131 = vmatprep.subr.mxu0 0.0
    %3132 = vmatpush1.xpose.msra.mxu0 0.0
    %3133 = vmatprep.subr.mxu0 0.0
    %3134 = vmatpush1.xpose.msra.mxu0 0.0
    %3135 = vmatprep.subr.mxu0 0.0
    %3136 = vmatpush1.xpose.msra.mxu0 0.0
    %3137 = vmatprep.subr.mxu0 0.0
    %3138 = vmatpush1.xpose.msra.mxu0 0.0
    %3139 = vmatprep.subr.mxu0 0.0
    %3140 = vmatpush1.xpose.msra.mxu0 0.0
    %3141 = vmatprep.subr.mxu0 0.0
    %3142 = vmatpush1.xpose.msra.mxu0 0.0
    %3143 = vmatprep.subr.mxu0 0.0
    %3144 = vmatpush1.xpose.msra.mxu0 0.0
    %3145 = vmatprep.subr.mxu0 0.0
    %3146 = vmatpush1.xpose.msra.mxu0 0.0
    %3147 = vmatprep.subr.mxu0 0.0
    %3148 = vmatpush1.xpose.msra.mxu0 0.0
    %3149 = vmatprep.subr.mxu0 0.0
    %3150 = vmatpush1.xpose.msra.mxu0 0.0
    %3151 = vmatprep.subr.mxu0 0.0
    %3152 = vmatpush1.xpose.msra.mxu0 0.0
    %3153 = vmatprep.subr.mxu0 0.0
    %3154 = vmatpush1.xpose.msra.mxu0 0.0
    %3155 = vmatprep.mubr.f32.mxu0 0.0
    %3156 = vmatmul.mubr.f32.gmra.mrb[0].mxu0 %v3083
    %v3157 = vpop.f32.mrb[0].mxu0
    %v3158 = vadd.f32 0.0, %v3157
    %v3159 = vpop.f32.mrb[0].mxu0
    %3160 = vmatprep.mubr.f32.mxu0 0.0
    %3161 = vmatmul.mubr.f32.gmra.mrb[0].mxu0 %v3085
    %v3162 = vpop.f32.mrb[0].mxu0
    %v3163 = vadd.f32 0.0, %v3162
    %v3164 = vpop.f32.mrb[0].mxu0
    %3165 = vdwg.mxu0
    %3166 = vrot.lane.b32.xlu0 %v2882, 104
    %v3167 = vpop.permute.xlu0 %3166
    %3168 = vrot.lane.b32.xlu0 %v2887, 104
    %v3169 = vpop.permute.xlu0 %3168
    %3170 = vrot.lane.b32.xlu0 %v2882, 72
    %v3171 = vpop.permute.xlu0 %3170
    %3172 = vrot.lane.b32.xlu0 %v2887, 72
    %v3173 = vpop.permute.xlu0 %3172
    %v3174 = vsel %vm330, %v3167, 0
    %v3176 = vsel %vm330, %v3169, 0
    %v3178 = vsel %vm330, %v3171, 0
    %v3180 = vsel %vm330, %v3173, 0
    %3182 = vmatprep.subr.mxu0 0.0
    %3183 = vmatpush1.xpose.msra.mxu0 %v3178
    %3184 = vmatprep.subr.mxu0 0.0
    %3185 = vmatpush1.xpose.msra.mxu0 %v3180
    %3186 = vmatprep.subr.mxu0 0.0
    %3187 = vmatpush1.xpose.msra.mxu0 0.0
    %3188 = vmatprep.subr.mxu0 0.0
    %3189 = vmatpush1.xpose.msra.mxu0 0.0
    %3190 = vmatprep.subr.mxu0 0.0
    %3191 = vmatpush1.xpose.msra.mxu0 0.0
    %3192 = vmatprep.subr.mxu0 0.0
    %3193 = vmatpush1.xpose.msra.mxu0 0.0
    %3194 = vmatprep.subr.mxu0 0.0
    %3195 = vmatpush1.xpose.msra.mxu0 0.0
    %3196 = vmatprep.subr.mxu0 0.0
    %3197 = vmatpush1.xpose.msra.mxu0 0.0
    %3198 = vmatprep.subr.mxu0 0.0
    %3199 = vmatpush1.xpose.msra.mxu0 0.0
    %3200 = vmatprep.subr.mxu0 0.0
    %3201 = vmatpush1.xpose.msra.mxu0 0.0
    %3202 = vmatprep.subr.mxu0 0.0
    %3203 = vmatpush1.xpose.msra.mxu0 0.0
    %3204 = vmatprep.subr.mxu0 0.0
    %3205 = vmatpush1.xpose.msra.mxu0 0.0
    %3206 = vmatprep.subr.mxu0 0.0
    %3207 = vmatpush1.xpose.msra.mxu0 0.0
    %3208 = vmatprep.subr.mxu0 0.0
    %3209 = vmatpush1.xpose.msra.mxu0 0.0
    %3210 = vmatprep.subr.mxu0 0.0
    %3211 = vmatpush1.xpose.msra.mxu0 0.0
    %3212 = vmatprep.subr.mxu0 0.0
    %3213 = vmatpush1.xpose.msra.mxu0 0.0
    %3214 = vmatprep.subr.mxu0 0.0
    %3215 = vmatpush1.xpose.msra.mxu0 0.0
    %3216 = vmatprep.subr.mxu0 0.0
    %3217 = vmatpush1.xpose.msra.mxu0 0.0
    %3218 = vmatprep.subr.mxu0 0.0
    %3219 = vmatpush1.xpose.msra.mxu0 0.0
    %3220 = vmatprep.subr.mxu0 0.0
    %3221 = vmatpush1.xpose.msra.mxu0 0.0
    %3222 = vmatprep.subr.mxu0 0.0
    %3223 = vmatpush1.xpose.msra.mxu0 0.0
    %3224 = vmatprep.subr.mxu0 0.0
    %3225 = vmatpush1.xpose.msra.mxu0 0.0
    %3226 = vmatprep.subr.mxu0 0.0
    %3227 = vmatpush1.xpose.msra.mxu0 0.0
    %3228 = vmatprep.subr.mxu0 0.0
    %3229 = vmatpush1.xpose.msra.mxu0 0.0
    %3230 = vmatprep.subr.mxu0 0.0
    %3231 = vmatpush1.xpose.msra.mxu0 0.0
    %3232 = vmatprep.subr.mxu0 0.0
    %3233 = vmatpush1.xpose.msra.mxu0 0.0
    %3234 = vmatprep.subr.mxu0 0.0
    %3235 = vmatpush1.xpose.msra.mxu0 0.0
    %3236 = vmatprep.subr.mxu0 0.0
    %3237 = vmatpush1.xpose.msra.mxu0 0.0
    %3238 = vmatprep.subr.mxu0 0.0
    %3239 = vmatpush1.xpose.msra.mxu0 0.0
    %3240 = vmatprep.subr.mxu0 0.0
    %3241 = vmatpush1.xpose.msra.mxu0 0.0
    %3242 = vmatprep.subr.mxu0 0.0
    %3243 = vmatpush1.xpose.msra.mxu0 0.0
    %3244 = vmatprep.subr.mxu0 0.0
    %3245 = vmatpush1.xpose.msra.mxu0 0.0
    %3246 = vmatprep.mubr.f32.mxu0 0.0
    %3247 = vmatmul.mubr.f32.gmra.mrb[0].mxu0 %v3174
    %v3248 = vpop.f32.mrb[0].mxu0
    %v3249 = vadd.f32 0.0, %v3248
    %v3250 = vpop.f32.mrb[0].mxu0
    %3251 = vmatprep.mubr.f32.mxu0 0.0
    %3252 = vmatmul.mubr.f32.gmra.mrb[0].mxu0 %v3176
    %v3253 = vpop.f32.mrb[0].mxu0
    %v3254 = vadd.f32 0.0, %v3253
    %v3255 = vpop.f32.mrb[0].mxu0
    %3256 = vdwg.mxu0
    %v3257 = vadd.f32 %v2976, %v217
    %v3258 = vadd.f32 %v2981, %v218
    %v3259 = vadd.f32 %v3067, %v217
    %v3260 = vadd.f32 %v3072, %v218
    %v3261 = vadd.f32 %v3158, %v217
    %v3262 = vadd.f32 %v3163, %v218
    %v3263 = vadd.f32 %v3249, %v217
    %v3264 = vadd.f32 %v3254, %v218
    %v3265 = vsel %vm695, %v3257, -inf
    %3266 = vmax.xlane.f32.xlu0 %v3265
    %v3267 = vpop.xlane.xlu0 %3266
    %v3268 = vsel %vm695, %v3258, -inf
    %3269 = vmax.xlane.f32.xlu0 %v3268
    %v3270 = vpop.xlane.xlu0 %3269
    %v3271 = vsel %vm695, %v3259, -inf
    %3272 = vmax.xlane.f32.xlu0 %v3271
    %v3273 = vpop.xlane.xlu0 %3272
    %v3274 = vsel %vm695, %v3260, -inf
    %3275 = vmax.xlane.f32.xlu0 %v3274
    %v3276 = vpop.xlane.xlu0 %3275
    %v3277 = vsel %vm695, %v3261, -inf
    %3278 = vmax.xlane.f32.xlu0 %v3277
    %v3279 = vpop.xlane.xlu0 %3278
    %v3280 = vsel %vm695, %v3262, -inf
    %3281 = vmax.xlane.f32.xlu0 %v3280
    %v3282 = vpop.xlane.xlu0 %3281
    %v3283 = vsel %vm695, %v3263, -inf
    %3284 = vmax.xlane.f32.xlu0 %v3283
    %v3285 = vpop.xlane.xlu0 %3284
    %v3286 = vsel %vm695, %v3264, -inf
    %3287 = vmax.xlane.f32.xlu0 %v3286
    %v3288 = vpop.xlane.xlu0 %3287
    %v3289 = vsub.f32 %v3257, %v3267
    %v3290 = vsub.f32 %v3258, %v3270
    %v3291 = vsub.f32 %v3259, %v3273
    %v3292 = vsub.f32 %v3260, %v3276
    %v3293 = vsub.f32 %v3261, %v3279
    %v3294 = vsub.f32 %v3262, %v3282
    %v3295 = vsub.f32 %v3263, %v3285
    %v3296 = vsub.f32 %v3264, %v3288
    %v3297 = vmul.f32 %v3289, 1.442695
    %v3298 = vpow.pop %v3297
    %v3299 = vmul.f32 %v3290, 1.442695
    %v3300 = vpow.pop %v3299
    %v3301 = vmul.f32 %v3291, 1.442695
    %v3302 = vpow.pop %v3301
    %v3303 = vmul.f32 %v3292, 1.442695
    %v3304 = vpow.pop %v3303
    %v3305 = vmul.f32 %v3293, 1.442695
    %v3306 = vpow.pop %v3305
    %v3307 = vmul.f32 %v3294, 1.442695
    %v3308 = vpow.pop %v3307
    %v3309 = vmul.f32 %v3295, 1.442695
    %v3310 = vpow.pop %v3309
    %v3311 = vmul.f32 %v3296, 1.442695
    %v3312 = vpow.pop %v3311
    %v3313 = vsel %vm695, %v3298, 0.0
    %3314 = vadd.xlane.f32.xlu0 %v3313
    %v3315 = vpop.xlane.xlu0 %3314
    %v3316 = vsel %vm695, %v3300, 0.0
    %3317 = vadd.xlane.f32.xlu0 %v3316
    %v3318 = vpop.xlane.xlu0 %3317
    %v3319 = vsel %vm695, %v3302, 0.0
    %3320 = vadd.xlane.f32.xlu0 %v3319
    %v3321 = vpop.xlane.xlu0 %3320
    %v3322 = vsel %vm695, %v3304, 0.0
    %3323 = vadd.xlane.f32.xlu0 %v3322
    %v3324 = vpop.xlane.xlu0 %3323
    %v3325 = vsel %vm695, %v3306, 0.0
    %3326 = vadd.xlane.f32.xlu0 %v3325
    %v3327 = vpop.xlane.xlu0 %3326
    %v3328 = vsel %vm695, %v3308, 0.0
    %3329 = vadd.xlane.f32.xlu0 %v3328
    %v3330 = vpop.xlane.xlu0 %3329
    %v3331 = vsel %vm695, %v3310, 0.0
    %3332 = vadd.xlane.f32.xlu0 %v3331
    %v3333 = vpop.xlane.xlu0 %3332
    %v3334 = vsel %vm695, %v3312, 0.0
    %3335 = vadd.xlane.f32.xlu0 %v3334
    %v3336 = vpop.xlane.xlu0 %3335
    %v3337 = vrcp.pop %v3315
    %v3338 = vrcp.pop %v3318
    %v3339 = vrcp.pop %v3321
    %v3340 = vrcp.pop %v3324
    %v3341 = vrcp.pop %v3327
    %v3342 = vrcp.pop %v3330
    %v3343 = vrcp.pop %v3333
    %v3344 = vrcp.pop %v3336
    %v3345 = vmul.f32 %v3298, %v3337
    %v3346 = vmul.f32 %v3300, %v3338
    %v3347 = vmul.f32 %v3302, %v3339
    %v3348 = vmul.f32 %v3304, %v3340
    %v3349 = vmul.f32 %v3306, %v3341
    %v3350 = vmul.f32 %v3308, %v3342
    %v3351 = vmul.f32 %v3310, %v3343
    %v3352 = vmul.f32 %v3312, %v3344
    %vm3353 = vcmp.le.f32.partialorder %v3267, -5e+29
    %vm3354 = vcmp.le.f32.partialorder %v3270, -5e+29
    %vm3355 = vcmp.le.f32.partialorder %v3273, -5e+29
    %vm3356 = vcmp.le.f32.partialorder %v3276, -5e+29
    %vm3357 = vcmp.le.f32.partialorder %v3279, -5e+29
    %vm3358 = vcmp.le.f32.partialorder %v3282, -5e+29
    %vm3359 = vcmp.le.f32.partialorder %v3285, -5e+29
    %vm3360 = vcmp.le.f32.partialorder %v3288, -5e+29
    %v3361 = vsel %vm3353, 1, 0
    %v3362 = vsel %vm3354, 1, 0
    %v3363 = vsel %vm3355, 1, 0
    %v3364 = vsel %vm3356, 1, 0
    %v3365 = vsel %vm3357, 1, 0
    %v3366 = vsel %vm3358, 1, 0
    %v3367 = vsel %vm3359, 1, 0
    %v3368 = vsel %vm3360, 1, 0
    %vm3369 = vcmp.eq.s32.totalorder %v3361, 1
    %vm3370 = vcmp.eq.s32.totalorder %v3362, 1
    %vm3371 = vcmp.eq.s32.totalorder %v3363, 1
    %vm3372 = vcmp.eq.s32.totalorder %v3364, 1
    %vm3373 = vcmp.eq.s32.totalorder %v3365, 1
    %vm3374 = vcmp.eq.s32.totalorder %v3366, 1
    %vm3375 = vcmp.eq.s32.totalorder %v3367, 1
    %vm3376 = vcmp.eq.s32.totalorder %v3368, 1
    %v3377 = vsel %vm3369, 0.0, %v3345
    %v3378 = vsel %vm3370, 0.0, %v3346
    %v3379 = vsel %vm3371, 0.0, %v3347
    %v3380 = vsel %vm3372, 0.0, %v3348
    %v3381 = vsel %vm3373, 0.0, %v3349
    %v3382 = vsel %vm3374, 0.0, %v3350
    %v3383 = vsel %vm3375, 0.0, %v3351
    %v3384 = vsel %vm3376, 0.0, %v3352
    %3385 = vrot.lane.b32.xlu0 %v2882, 64
    %v3386 = vpop.permute.xlu0 %3385
    %3387 = vrot.lane.b32.xlu0 %v2887, 64
    %v3388 = vpop.permute.xlu0 %3387
    %v3392 = vsel %vm695, %v3377, 0
    %v3395 = vsel %vm695, %v3378, 0
    %3397 = vmatprep.subr.mxu0 0.0
    %3398 = vmatpush1.msra.mxu0 %v3386
    %3399 = vmatprep.subr.mxu0 0.0
    %3400 = vmatpush1.msra.mxu0 %v3388
    %3401 = vmatprep.subr.mxu0 0.0
    %3402 = vmatpush1.msra.mxu0 0.0
    %3403 = vmatprep.subr.mxu0 0.0
    %3404 = vmatpush1.msra.mxu0 0.0
    %3405 = vmatprep.subr.mxu0 0.0
    %3406 = vmatpush1.msra.mxu0 0.0
    %3407 = vmatprep.subr.mxu0 0.0
    %3408 = vmatpush1.msra.mxu0 0.0
    %3409 = vmatprep.subr.mxu0 0.0
    %3410 = vmatpush1.msra.mxu0 0.0
    %3411 = vmatprep.subr.mxu0 0.0
    %3412 = vmatpush1.msra.mxu0 0.0
    %3413 = vmatprep.subr.mxu0 0.0
    %3414 = vmatpush1.msra.mxu0 0.0
    %3415 = vmatprep.subr.mxu0 0.0
    %3416 = vmatpush1.msra.mxu0 0.0
    %3417 = vmatprep.subr.mxu0 0.0
    %3418 = vmatpush1.msra.mxu0 0.0
    %3419 = vmatprep.subr.mxu0 0.0
    %3420 = vmatpush1.msra.mxu0 0.0
    %3421 = vmatprep.subr.mxu0 0.0
    %3422 = vmatpush1.msra.mxu0 0.0
    %3423 = vmatprep.subr.mxu0 0.0
    %3424 = vmatpush1.msra.mxu0 0.0
    %3425 = vmatprep.subr.mxu0 0.0
    %3426 = vmatpush1.msra.mxu0 0.0
    %3427 = vmatprep.subr.mxu0 0.0
    %3428 = vmatpush1.msra.mxu0 0.0
    %3429 = vmatprep.subr.mxu0 0.0
    %3430 = vmatpush1.msra.mxu0 0.0
    %3431 = vmatprep.subr.mxu0 0.0
    %3432 = vmatpush1.msra.mxu0 0.0
    %3433 = vmatprep.subr.mxu0 0.0
    %3434 = vmatpush1.msra.mxu0 0.0
    %3435 = vmatprep.subr.mxu0 0.0
    %3436 = vmatpush1.msra.mxu0 0.0
    %3437 = vmatprep.subr.mxu0 0.0
    %3438 = vmatpush1.msra.mxu0 0.0
    %3439 = vmatprep.subr.mxu0 0.0
    %3440 = vmatpush1.msra.mxu0 0.0
    %3441 = vmatprep.subr.mxu0 0.0
    %3442 = vmatpush1.msra.mxu0 0.0
    %3443 = vmatprep.subr.mxu0 0.0
    %3444 = vmatpush1.msra.mxu0 0.0
    %3445 = vmatprep.subr.mxu0 0.0
    %3446 = vmatpush1.msra.mxu0 0.0
    %3447 = vmatprep.subr.mxu0 0.0
    %3448 = vmatpush1.msra.mxu0 0.0
    %3449 = vmatprep.subr.mxu0 0.0
    %3450 = vmatpush1.msra.mxu0 0.0
    %3451 = vmatprep.subr.mxu0 0.0
    %3452 = vmatpush1.msra.mxu0 0.0
    %3453 = vmatprep.subr.mxu0 0.0
    %3454 = vmatpush1.msra.mxu0 0.0
    %3455 = vmatprep.subr.mxu0 0.0
    %3456 = vmatpush1.msra.mxu0 0.0
    %3457 = vmatprep.subr.mxu0 0.0
    %3458 = vmatpush1.msra.mxu0 0.0
    %3459 = vmatprep.subr.mxu0 0.0
    %3460 = vmatpush1.msra.mxu0 0.0
    %3461 = vmatprep.mubr.f32.mxu0 0.0
    %3462 = vmatmul.mubr.f32.gmra.mrb[0].mxu0 %v3392
    %v3463 = vpop.f32.mrb[0].mxu0
    %v3464 = vadd.f32 0.0, %v3463
    %v3465 = vpop.f32.mrb[0].mxu0
    %3466 = vmatprep.mubr.f32.mxu0 0.0
    %3467 = vmatmul.mubr.f32.gmra.mrb[0].mxu0 %v3395
    %v3468 = vpop.f32.mrb[0].mxu0
    %v3469 = vadd.f32 0.0, %v3468
    %v3470 = vpop.f32.mrb[0].mxu0
    %3471 = vdwg.mxu0
    %3472 = vrot.lane.b32.xlu0 %v2882, 56
    %v3473 = vpop.permute.xlu0 %3472
    %3474 = vrot.lane.b32.xlu0 %v2887, 56
    %v3475 = vpop.permute.xlu0 %3474
    %v3479 = vsel %vm695, %v3379, 0
    %v3482 = vsel %vm695, %v3380, 0
    %3484 = vmatprep.subr.mxu0 0.0
    %3485 = vmatpush1.msra.mxu0 %v3473
    %3486 = vmatprep.subr.mxu0 0.0
    %3487 = vmatpush1.msra.mxu0 %v3475
    %3488 = vmatprep.subr.mxu0 0.0
    %3489 = vmatpush1.msra.mxu0 0.0
    %3490 = vmatprep.subr.mxu0 0.0
    %3491 = vmatpush1.msra.mxu0 0.0
    %3492 = vmatprep.subr.mxu0 0.0
    %3493 = vmatpush1.msra.mxu0 0.0
    %3494 = vmatprep.subr.mxu0 0.0
    %3495 = vmatpush1.msra.mxu0 0.0
    %3496 = vmatprep.subr.mxu0 0.0
    %3497 = vmatpush1.msra.mxu0 0.0
    %3498 = vmatprep.subr.mxu0 0.0
    %3499 = vmatpush1.msra.mxu0 0.0
    %3500 = vmatprep.subr.mxu0 0.0
    %3501 = vmatpush1.msra.mxu0 0.0
    %3502 = vmatprep.subr.mxu0 0.0
    %3503 = vmatpush1.msra.mxu0 0.0
    %3504 = vmatprep.subr.mxu0 0.0
    %3505 = vmatpush1.msra.mxu0 0.0
    %3506 = vmatprep.subr.mxu0 0.0
    %3507 = vmatpush1.msra.mxu0 0.0
    %3508 = vmatprep.subr.mxu0 0.0
    %3509 = vmatpush1.msra.mxu0 0.0
    %3510 = vmatprep.subr.mxu0 0.0
    %3511 = vmatpush1.msra.mxu0 0.0
    %3512 = vmatprep.subr.mxu0 0.0
    %3513 = vmatpush1.msra.mxu0 0.0
    %3514 = vmatprep.subr.mxu0 0.0
    %3515 = vmatpush1.msra.mxu0 0.0
    %3516 = vmatprep.subr.mxu0 0.0
    %3517 = vmatpush1.msra.mxu0 0.0
    %3518 = vmatprep.subr.mxu0 0.0
    %3519 = vmatpush1.msra.mxu0 0.0
    %3520 = vmatprep.subr.mxu0 0.0
    %3521 = vmatpush1.msra.mxu0 0.0
    %3522 = vmatprep.subr.mxu0 0.0
    %3523 = vmatpush1.msra.mxu0 0.0
    %3524 = vmatprep.subr.mxu0 0.0
    %3525 = vmatpush1.msra.mxu0 0.0
    %3526 = vmatprep.subr.mxu0 0.0
    %3527 = vmatpush1.msra.mxu0 0.0
    %3528 = vmatprep.subr.mxu0 0.0
    %3529 = vmatpush1.msra.mxu0 0.0
    %3530 = vmatprep.subr.mxu0 0.0
    %3531 = vmatpush1.msra.mxu0 0.0
    %3532 = vmatprep.subr.mxu0 0.0
    %3533 = vmatpush1.msra.mxu0 0.0
    %3534 = vmatprep.subr.mxu0 0.0
    %3535 = vmatpush1.msra.mxu0 0.0
    %3536 = vmatprep.subr.mxu0 0.0
    %3537 = vmatpush1.msra.mxu0 0.0
    %3538 = vmatprep.subr.mxu0 0.0
    %3539 = vmatpush1.msra.mxu0 0.0
    %3540 = vmatprep.subr.mxu0 0.0
    %3541 = vmatpush1.msra.mxu0 0.0
    %3542 = vmatprep.subr.mxu0 0.0
    %3543 = vmatpush1.msra.mxu0 0.0
    %3544 = vmatprep.subr.mxu0 0.0
    %3545 = vmatpush1.msra.mxu0 0.0
    %3546 = vmatprep.subr.mxu0 0.0
    %3547 = vmatpush1.msra.mxu0 0.0
    %3548 = vmatprep.mubr.f32.mxu0 0.0
    %3549 = vmatmul.mubr.f32.gmra.mrb[0].mxu0 %v3479
    %v3550 = vpop.f32.mrb[0].mxu0
    %v3551 = vadd.f32 0.0, %v3550
    %v3552 = vpop.f32.mrb[0].mxu0
    %3553 = vmatprep.mubr.f32.mxu0 0.0
    %3554 = vmatmul.mubr.f32.gmra.mrb[0].mxu0 %v3482
    %v3555 = vpop.f32.mrb[0].mxu0
    %v3556 = vadd.f32 0.0, %v3555
    %v3557 = vpop.f32.mrb[0].mxu0
    %3558 = vdwg.mxu0
    %3559 = vrot.lane.b32.xlu0 %v2882, 48
    %v3560 = vpop.permute.xlu0 %3559
    %3561 = vrot.lane.b32.xlu0 %v2887, 48
    %v3562 = vpop.permute.xlu0 %3561
    %v3566 = vsel %vm695, %v3381, 0
    %v3569 = vsel %vm695, %v3382, 0
    %3571 = vmatprep.subr.mxu0 0.0
    %3572 = vmatpush1.msra.mxu0 %v3560
    %3573 = vmatprep.subr.mxu0 0.0
    %3574 = vmatpush1.msra.mxu0 %v3562
    %3575 = vmatprep.subr.mxu0 0.0
    %3576 = vmatpush1.msra.mxu0 0.0
    %3577 = vmatprep.subr.mxu0 0.0
    %3578 = vmatpush1.msra.mxu0 0.0
    %3579 = vmatprep.subr.mxu0 0.0
    %3580 = vmatpush1.msra.mxu0 0.0
    %3581 = vmatprep.subr.mxu0 0.0
    %3582 = vmatpush1.msra.mxu0 0.0
    %3583 = vmatprep.subr.mxu0 0.0
    %3584 = vmatpush1.msra.mxu0 0.0
    %3585 = vmatprep.subr.mxu0 0.0
    %3586 = vmatpush1.msra.mxu0 0.0
    %3587 = vmatprep.subr.mxu0 0.0
    %3588 = vmatpush1.msra.mxu0 0.0
    %3589 = vmatprep.subr.mxu0 0.0
    %3590 = vmatpush1.msra.mxu0 0.0
    %3591 = vmatprep.subr.mxu0 0.0
    %3592 = vmatpush1.msra.mxu0 0.0
    %3593 = vmatprep.subr.mxu0 0.0
    %3594 = vmatpush1.msra.mxu0 0.0
    %3595 = vmatprep.subr.mxu0 0.0
    %3596 = vmatpush1.msra.mxu0 0.0
    %3597 = vmatprep.subr.mxu0 0.0
    %3598 = vmatpush1.msra.mxu0 0.0
    %3599 = vmatprep.subr.mxu0 0.0
    %3600 = vmatpush1.msra.mxu0 0.0
    %3601 = vmatprep.subr.mxu0 0.0
    %3602 = vmatpush1.msra.mxu0 0.0
    %3603 = vmatprep.subr.mxu0 0.0
    %3604 = vmatpush1.msra.mxu0 0.0
    %3605 = vmatprep.subr.mxu0 0.0
    %3606 = vmatpush1.msra.mxu0 0.0
    %3607 = vmatprep.subr.mxu0 0.0
    %3608 = vmatpush1.msra.mxu0 0.0
    %3609 = vmatprep.subr.mxu0 0.0
    %3610 = vmatpush1.msra.mxu0 0.0
    %3611 = vmatprep.subr.mxu0 0.0
    %3612 = vmatpush1.msra.mxu0 0.0
    %3613 = vmatprep.subr.mxu0 0.0
    %3614 = vmatpush1.msra.mxu0 0.0
    %3615 = vmatprep.subr.mxu0 0.0
    %3616 = vmatpush1.msra.mxu0 0.0
    %3617 = vmatprep.subr.mxu0 0.0
    %3618 = vmatpush1.msra.mxu0 0.0
    %3619 = vmatprep.subr.mxu0 0.0
    %3620 = vmatpush1.msra.mxu0 0.0
    %3621 = vmatprep.subr.mxu0 0.0
    %3622 = vmatpush1.msra.mxu0 0.0
    %3623 = vmatprep.subr.mxu0 0.0
    %3624 = vmatpush1.msra.mxu0 0.0
    %3625 = vmatprep.subr.mxu0 0.0
    %3626 = vmatpush1.msra.mxu0 0.0
    %3627 = vmatprep.subr.mxu0 0.0
    %3628 = vmatpush1.msra.mxu0 0.0
    %3629 = vmatprep.subr.mxu0 0.0
    %3630 = vmatpush1.msra.mxu0 0.0
    %3631 = vmatprep.subr.mxu0 0.0
    %3632 = vmatpush1.msra.mxu0 0.0
    %3633 = vmatprep.subr.mxu0 0.0
    %3634 = vmatpush1.msra.mxu0 0.0
    %3635 = vmatprep.mubr.f32.mxu0 0.0
    %3636 = vmatmul.mubr.f32.gmra.mrb[0].mxu0 %v3566
    %v3637 = vpop.f32.mrb[0].mxu0
    %v3638 = vadd.f32 0.0, %v3637
    %v3639 = vpop.f32.mrb[0].mxu0
    %3640 = vmatprep.mubr.f32.mxu0 0.0
    %3641 = vmatmul.mubr.f32.gmra.mrb[0].mxu0 %v3569
    %v3642 = vpop.f32.mrb[0].mxu0
    %v3643 = vadd.f32 0.0, %v3642
    %v3644 = vpop.f32.mrb[0].mxu0
    %3645 = vdwg.mxu0
    %3646 = vrot.lane.b32.xlu0 %v2882, 40
    %v3647 = vpop.permute.xlu0 %3646
    %3648 = vrot.lane.b32.xlu0 %v2887, 40
    %v3649 = vpop.permute.xlu0 %3648
    %v3653 = vsel %vm695, %v3383, 0
    %v3656 = vsel %vm695, %v3384, 0
    %3658 = vmatprep.subr.mxu0 0.0
    %3659 = vmatpush1.msra.mxu0 %v3647
    %3660 = vmatprep.subr.mxu0 0.0
    %3661 = vmatpush1.msra.mxu0 %v3649
    %3662 = vmatprep.subr.mxu0 0.0
    %3663 = vmatpush1.msra.mxu0 0.0
    %3664 = vmatprep.subr.mxu0 0.0
    %3665 = vmatpush1.msra.mxu0 0.0
    %3666 = vmatprep.subr.mxu0 0.0
    %3667 = vmatpush1.msra.mxu0 0.0
    %3668 = vmatprep.subr.mxu0 0.0
    %3669 = vmatpush1.msra.mxu0 0.0
    %3670 = vmatprep.subr.mxu0 0.0
    %3671 = vmatpush1.msra.mxu0 0.0
    %3672 = vmatprep.subr.mxu0 0.0
    %3673 = vmatpush1.msra.mxu0 0.0
    %3674 = vmatprep.subr.mxu0 0.0
    %3675 = vmatpush1.msra.mxu0 0.0
    %3676 = vmatprep.subr.mxu0 0.0
    %3677 = vmatpush1.msra.mxu0 0.0
    %3678 = vmatprep.subr.mxu0 0.0
    %3679 = vmatpush1.msra.mxu0 0.0
    %3680 = vmatprep.subr.mxu0 0.0
    %3681 = vmatpush1.msra.mxu0 0.0
    %3682 = vmatprep.subr.mxu0 0.0
    %3683 = vmatpush1.msra.mxu0 0.0
    %3684 = vmatprep.subr.mxu0 0.0
    %3685 = vmatpush1.msra.mxu0 0.0
    %3686 = vmatprep.subr.mxu0 0.0
    %3687 = vmatpush1.msra.mxu0 0.0
    %3688 = vmatprep.subr.mxu0 0.0
    %3689 = vmatpush1.msra.mxu0 0.0
    %3690 = vmatprep.subr.mxu0 0.0
    %3691 = vmatpush1.msra.mxu0 0.0
    %3692 = vmatprep.subr.mxu0 0.0
    %3693 = vmatpush1.msra.mxu0 0.0
    %3694 = vmatprep.subr.mxu0 0.0
    %3695 = vmatpush1.msra.mxu0 0.0
    %3696 = vmatprep.subr.mxu0 0.0
    %3697 = vmatpush1.msra.mxu0 0.0
    %3698 = vmatprep.subr.mxu0 0.0
    %3699 = vmatpush1.msra.mxu0 0.0
    %3700 = vmatprep.subr.mxu0 0.0
    %3701 = vmatpush1.msra.mxu0 0.0
    %3702 = vmatprep.subr.mxu0 0.0
    %3703 = vmatpush1.msra.mxu0 0.0
    %3704 = vmatprep.subr.mxu0 0.0
    %3705 = vmatpush1.msra.mxu0 0.0
    %3706 = vmatprep.subr.mxu0 0.0
    %3707 = vmatpush1.msra.mxu0 0.0
    %3708 = vmatprep.subr.mxu0 0.0
    %3709 = vmatpush1.msra.mxu0 0.0
    %3710 = vmatprep.subr.mxu0 0.0
    %3711 = vmatpush1.msra.mxu0 0.0
    %3712 = vmatprep.subr.mxu0 0.0
    %3713 = vmatpush1.msra.mxu0 0.0
    %3714 = vmatprep.subr.mxu0 0.0
    %3715 = vmatpush1.msra.mxu0 0.0
    %3716 = vmatprep.subr.mxu0 0.0
    %3717 = vmatpush1.msra.mxu0 0.0
    %3718 = vmatprep.subr.mxu0 0.0
    %3719 = vmatpush1.msra.mxu0 0.0
    %3720 = vmatprep.subr.mxu0 0.0
    %3721 = vmatpush1.msra.mxu0 0.0
    %3722 = vmatprep.mubr.f32.mxu0 0.0
    %3723 = vmatmul.mubr.f32.gmra.mrb[0].mxu0 %v3653
    %v3724 = vpop.f32.mrb[0].mxu0
    %v3725 = vadd.f32 0.0, %v3724
    %v3726 = vpop.f32.mrb[0].mxu0
    %3727 = vmatprep.mubr.f32.mxu0 0.0
    %3728 = vmatmul.mubr.f32.gmra.mrb[0].mxu0 %v3656
    %v3729 = vpop.f32.mrb[0].mxu0
    %v3730 = vadd.f32 0.0, %v3729
    %v3731 = vpop.f32.mrb[0].mxu0
    %3732 = vdwg.mxu0
    %3735 = vrot.lane.b32.xlu0 %v3551, 8
    %v3736 = vpop.permute.xlu0 %3735
    %3737 = vrot.lane.b32.xlu0 %v3556, 8
    %v3738 = vpop.permute.xlu0 %3737
    %3743 = vrot.lane.b32.xlu0 %v3638, 16
    %v3744 = vpop.permute.xlu0 %3743
    %3745 = vrot.lane.b32.xlu0 %v3643, 16
    %v3746 = vpop.permute.xlu0 %3745
    %3751 = vrot.lane.b32.xlu0 %v3725, 24
    %v3752 = vpop.permute.xlu0 %3751
    %3753 = vrot.lane.b32.xlu0 %v3730, 24
    %v3754 = vpop.permute.xlu0 %3753
    %v3757 = vsel %vm330, %v3464, %v3736
    %v3758 = vsel %vm330, %v3469, %v3738
    %v3759 = vsel %vm695, %v3757, %v3744
    %v3760 = vsel %vm695, %v3758, %v3746
    %v3761 = vsel %vm1192, %v3759, %v3752
    %v3762 = vsel %vm1192, %v3760, %v3754
    %v3763 = vlaneseq
    %v3764 = vshrl.u32 %v3763, 7
    %v3765 = vsub.s32 0, %v3764
    %v3766 = vrot.slane %v2894, %v3765
    %v3768 = vsel %vm163, %v3761, 0
    %v3771 = vsel %vm163, %v3762, 0
    %3773 = vmatprep.subr.mxu0 0.0
    %3774 = vmatpush1.msra.mxu0 %v2890
    %3775 = vmatprep.subr.mxu0 0.0
    %3776 = vmatpush1.msra.mxu0 %v2891
    %3777 = vmatprep.subr.mxu0 0.0
    %3778 = vmatpush1.msra.mxu0 %v2892
    %3779 = vmatprep.subr.mxu0 0.0
    %3780 = vmatpush1.msra.mxu0 %v2893
    %3781 = vmatprep.subr.mxu0 0.0
    %3782 = vmatpush1.msra.mxu0 0.0
    %3783 = vmatprep.subr.mxu0 0.0
    %3784 = vmatpush1.msra.mxu0 0.0
    %3785 = vmatprep.subr.mxu0 0.0
    %3786 = vmatpush1.msra.mxu0 0.0
    %3787 = vmatprep.subr.mxu0 0.0
    %3788 = vmatpush1.msra.mxu0 0.0
    %3789 = vmatprep.subr.mxu0 0.0
    %3790 = vmatpush1.msra.mxu0 0.0
    %3791 = vmatprep.subr.mxu0 0.0
    %3792 = vmatpush1.msra.mxu0 0.0
    %3793 = vmatprep.subr.mxu0 0.0
    %3794 = vmatpush1.msra.mxu0 0.0
    %3795 = vmatprep.subr.mxu0 0.0
    %3796 = vmatpush1.msra.mxu0 0.0
    %3797 = vmatprep.subr.mxu0 0.0
    %3798 = vmatpush1.msra.mxu0 0.0
    %3799 = vmatprep.subr.mxu0 0.0
    %3800 = vmatpush1.msra.mxu0 0.0
    %3801 = vmatprep.subr.mxu0 0.0
    %3802 = vmatpush1.msra.mxu0 0.0
    %3803 = vmatprep.subr.mxu0 0.0
    %3804 = vmatpush1.msra.mxu0 0.0
    %3805 = vmatprep.subr.mxu0 0.0
    %3806 = vmatpush1.msra.mxu0 0.0
    %3807 = vmatprep.subr.mxu0 0.0
    %3808 = vmatpush1.msra.mxu0 0.0
    %3809 = vmatprep.subr.mxu0 0.0
    %3810 = vmatpush1.msra.mxu0 0.0
    %3811 = vmatprep.subr.mxu0 0.0
    %3812 = vmatpush1.msra.mxu0 0.0
    %3813 = vmatprep.subr.mxu0 0.0
    %3814 = vmatpush1.msra.mxu0 0.0
    %3815 = vmatprep.subr.mxu0 0.0
    %3816 = vmatpush1.msra.mxu0 0.0
    %3817 = vmatprep.subr.mxu0 0.0
    %3818 = vmatpush1.msra.mxu0 0.0
    %3819 = vmatprep.subr.mxu0 0.0
    %3820 = vmatpush1.msra.mxu0 0.0
    %3821 = vmatprep.subr.mxu0 0.0
    %3822 = vmatpush1.msra.mxu0 0.0
    %3823 = vmatprep.subr.mxu0 0.0
    %3824 = vmatpush1.msra.mxu0 0.0
    %3825 = vmatprep.subr.mxu0 0.0
    %3826 = vmatpush1.msra.mxu0 0.0
    %3827 = vmatprep.subr.mxu0 0.0
    %3828 = vmatpush1.msra.mxu0 0.0
    %3829 = vmatprep.subr.mxu0 0.0
    %3830 = vmatpush1.msra.mxu0 0.0
    %3831 = vmatprep.subr.mxu0 0.0
    %3832 = vmatpush1.msra.mxu0 0.0
    %3833 = vmatprep.subr.mxu0 0.0
    %3834 = vmatpush1.msra.mxu0 0.0
    %3835 = vmatprep.subr.mxu0 0.0
    %3836 = vmatpush1.msra.mxu0 0.0
    %3837 = vmatprep.mubr.f32.mxu0 0.0
    %3838 = vmatmul.mubr.f32.gmra.mrb[0].mxu0 %v3768
    %v3839 = vpop.f32.mrb[0].mxu0
    %v3840 = vadd.f32 %v3766, %v3839
    %v3841 = vpop.f32.mrb[0].mxu0
    %3842 = vmatprep.mubr.f32.mxu0 0.0
    %3843 = vmatmul.mubr.f32.gmra.mrb[0].mxu0 %v3771
    %v3844 = vpop.f32.mrb[0].mxu0
    %v3845 = vadd.f32 %v3766, %v3844
    %v3846 = vpop.f32.mrb[0].mxu0
    %3847 = vdwg.mxu0
    %v3848 = vadd.f32 %v2797, %v3840
    %v3849 = vadd.f32 %v2798, %v3845
    %v3850 = vld [vmem:[%s2799 + $0x102] sm:$0x1]
    %v3851 = vld [vmem:[%s2799 + $0x103] sm:$0x1]
    %v3852 = vsel %vm163, %v3848, 0.0
    %3853 = vadd.xlane.f32.xlu0 %v3852
    %v3854 = vpop.xlane.xlu0 %3853
    %v3855 = vsel %vm163, %v3849, 0.0
    %3856 = vadd.xlane.f32.xlu0 %v3855
    %v3857 = vpop.xlane.xlu0 %3856
    %v3858 = vmul.f32 %v3854, %v170
    %v3859 = vmul.f32 %v3857, %v170
    %v3860 = vsub.f32 %v3848, %v3858
    %v3861 = vsub.f32 %v3849, %v3859
    %v3862 = vmul.f32 %v3860, %v3860
    %v3863 = vmul.f32 %v3861, %v3861
    %v3864 = vsel %vm163, %v3862, 0.0
    %3865 = vadd.xlane.f32.xlu0 %v3864
    %v3866 = vpop.xlane.xlu0 %3865
    %v3867 = vsel %vm163, %v3863, 0.0
    %3868 = vadd.xlane.f32.xlu0 %v3867
    %v3869 = vpop.xlane.xlu0 %3868
    %v3870 = vmul.f32 %v3866, %v170
    %v3871 = vmul.f32 %v3869, %v170
    %v3872 = vadd.f32 %v3870, 1e-05
    %v3873 = vadd.f32 %v3871, 1e-05
    %v3874 = vrsqrt.pop %v3872
    %v3875 = vrsqrt.pop %v3873
    %v3876 = vmul.f32 %v3860, %v3874
    %v3877 = vmul.f32 %v3861, %v3875
    %v3878 = vlaneseq
    %v3879 = vshrl.u32 %v3878, 7
    %v3880 = vsub.s32 0, %v3879
    %v3881 = vrot.slane %v3850, %v3880
    %v3882 = vmul.f32 %v3876, %v3881
    %v3883 = vmul.f32 %v3877, %v3881
    %v3884 = vlaneseq
    %v3885 = vshrl.u32 %v3884, 7
    %v3886 = vsub.s32 0, %v3885
    %v3887 = vrot.slane %v3851, %v3886
    %v3888 = vadd.f32 %v3882, %v3887
    %v3889 = vadd.f32 %v3883, %v3887
    %v3890 = vld [vmem:[%s2799 + $0x40] sm:$0xff]
    %v3891 = vld [vmem:[%s2799 + $0x48] sm:$0xff]
    %v3892 = vld [vmem:[%s2799 + $0x50] sm:$0xff]
    %v3893 = vld [vmem:[%s2799 + $0x58] sm:$0xff]
    %v3894 = vld [vmem:[%s2799 + $0x104] sm:$0x1]
    %v3895 = vlaneseq
    %v3896 = vshrl.u32 %v3895, 7
    %v3897 = vsub.s32 0, %v3896
    %v3898 = vrot.slane %v3894, %v3897
    %v3900 = vsel %vm163, %v3888, 0
    %v3903 = vsel %vm163, %v3889, 0
    %3905 = vmatprep.subr.mxu0 0.0
    %3906 = vmatpush1.msra.mxu0 %v3890
    %3907 = vmatprep.subr.mxu0 0.0
    %3908 = vmatpush1.msra.mxu0 %v3891
    %3909 = vmatprep.subr.mxu0 0.0
    %3910 = vmatpush1.msra.mxu0 %v3892
    %3911 = vmatprep.subr.mxu0 0.0
    %3912 = vmatpush1.msra.mxu0 %v3893
    %3913 = vmatprep.subr.mxu0 0.0
    %3914 = vmatpush1.msra.mxu0 0.0
    %3915 = vmatprep.subr.mxu0 0.0
    %3916 = vmatpush1.msra.mxu0 0.0
    %3917 = vmatprep.subr.mxu0 0.0
    %3918 = vmatpush1.msra.mxu0 0.0
    %3919 = vmatprep.subr.mxu0 0.0
    %3920 = vmatpush1.msra.mxu0 0.0
    %3921 = vmatprep.subr.mxu0 0.0
    %3922 = vmatpush1.msra.mxu0 0.0
    %3923 = vmatprep.subr.mxu0 0.0
    %3924 = vmatpush1.msra.mxu0 0.0
    %3925 = vmatprep.subr.mxu0 0.0
    %3926 = vmatpush1.msra.mxu0 0.0
    %3927 = vmatprep.subr.mxu0 0.0
    %3928 = vmatpush1.msra.mxu0 0.0
    %3929 = vmatprep.subr.mxu0 0.0
    %3930 = vmatpush1.msra.mxu0 0.0
    %3931 = vmatprep.subr.mxu0 0.0
    %3932 = vmatpush1.msra.mxu0 0.0
    %3933 = vmatprep.subr.mxu0 0.0
    %3934 = vmatpush1.msra.mxu0 0.0
    %3935 = vmatprep.subr.mxu0 0.0
    %3936 = vmatpush1.msra.mxu0 0.0
    %3937 = vmatprep.subr.mxu0 0.0
    %3938 = vmatpush1.msra.mxu0 0.0
    %3939 = vmatprep.subr.mxu0 0.0
    %3940 = vmatpush1.msra.mxu0 0.0
    %3941 = vmatprep.subr.mxu0 0.0
    %3942 = vmatpush1.msra.mxu0 0.0
    %3943 = vmatprep.subr.mxu0 0.0
    %3944 = vmatpush1.msra.mxu0 0.0
    %3945 = vmatprep.subr.mxu0 0.0
    %3946 = vmatpush1.msra.mxu0 0.0
    %3947 = vmatprep.subr.mxu0 0.0
    %3948 = vmatpush1.msra.mxu0 0.0
    %3949 = vmatprep.subr.mxu0 0.0
    %3950 = vmatpush1.msra.mxu0 0.0
    %3951 = vmatprep.subr.mxu0 0.0
    %3952 = vmatpush1.msra.mxu0 0.0
    %3953 = vmatprep.subr.mxu0 0.0
    %3954 = vmatpush1.msra.mxu0 0.0
    %3955 = vmatprep.subr.mxu0 0.0
    %3956 = vmatpush1.msra.mxu0 0.0
    %3957 = vmatprep.subr.mxu0 0.0
    %3958 = vmatpush1.msra.mxu0 0.0
    %3959 = vmatprep.subr.mxu0 0.0
    %3960 = vmatpush1.msra.mxu0 0.0
    %3961 = vmatprep.subr.mxu0 0.0
    %3962 = vmatpush1.msra.mxu0 0.0
    %3963 = vmatprep.subr.mxu0 0.0
    %3964 = vmatpush1.msra.mxu0 0.0
    %3965 = vmatprep.subr.mxu0 0.0
    %3966 = vmatpush1.msra.mxu0 0.0
    %3967 = vmatprep.subr.mxu0 0.0
    %3968 = vmatpush1.msra.mxu0 0.0
    %3969 = vmatprep.mubr.f32.mxu0 0.0
    %3970 = vmatmul.mubr.f32.gmra.mrb[0].mxu0 %v3900
    %v3971 = vpop.f32.mrb[0].mxu0
    %v3972 = vadd.f32 %v3898, %v3971
    %v3973 = vpop.f32.mrb[0].mxu0
    %3974 = vmatprep.mubr.f32.mxu0 0.0
    %3975 = vmatmul.mubr.f32.gmra.mrb[0].mxu0 %v3903
    %v3976 = vpop.f32.mrb[0].mxu0
    %v3977 = vadd.f32 %v3898, %v3976
    %v3978 = vpop.f32.mrb[0].mxu0
    %3979 = vdwg.mxu0
    %v3980 = vld [vmem:[%s2799 + $0x60] sm:$0xff]
    %v3981 = vld [vmem:[%s2799 + $0x68] sm:$0xff]
    %v3982 = vld [vmem:[%s2799 + $0x70] sm:$0xff]
    %v3983 = vld [vmem:[%s2799 + $0x78] sm:$0xff]
    %v3984 = vld [vmem:[%s2799 + $0x105] sm:$0x1]
    %v3985 = vlaneseq
    %v3986 = vshrl.u32 %v3985, 7
    %v3987 = vsub.s32 0, %v3986
    %v3988 = vrot.slane %v3984, %v3987
    %3989 = vmatprep.subr.mxu0 0.0
    %3990 = vmatpush1.msra.mxu0 %v3980
    %3991 = vmatprep.subr.mxu0 0.0
    %3992 = vmatpush1.msra.mxu0 %v3981
    %3993 = vmatprep.subr.mxu0 0.0
    %3994 = vmatpush1.msra.mxu0 %v3982
    %3995 = vmatprep.subr.mxu0 0.0
    %3996 = vmatpush1.msra.mxu0 %v3983
    %3997 = vmatprep.subr.mxu0 0.0
    %3998 = vmatpush1.msra.mxu0 0.0
    %3999 = vmatprep.subr.mxu0 0.0
    %4000 = vmatpush1.msra.mxu0 0.0
    %4001 = vmatprep.subr.mxu0 0.0
    %4002 = vmatpush1.msra.mxu0 0.0
    %4003 = vmatprep.subr.mxu0 0.0
    %4004 = vmatpush1.msra.mxu0 0.0
    %4005 = vmatprep.subr.mxu0 0.0
    %4006 = vmatpush1.msra.mxu0 0.0
    %4007 = vmatprep.subr.mxu0 0.0
    %4008 = vmatpush1.msra.mxu0 0.0
    %4009 = vmatprep.subr.mxu0 0.0
    %4010 = vmatpush1.msra.mxu0 0.0
    %4011 = vmatprep.subr.mxu0 0.0
    %4012 = vmatpush1.msra.mxu0 0.0
    %4013 = vmatprep.subr.mxu0 0.0
    %4014 = vmatpush1.msra.mxu0 0.0
    %4015 = vmatprep.subr.mxu0 0.0
    %4016 = vmatpush1.msra.mxu0 0.0
    %4017 = vmatprep.subr.mxu0 0.0
    %4018 = vmatpush1.msra.mxu0 0.0
    %4019 = vmatprep.subr.mxu0 0.0
    %4020 = vmatpush1.msra.mxu0 0.0
    %4021 = vmatprep.subr.mxu0 0.0
    %4022 = vmatpush1.msra.mxu0 0.0
    %4023 = vmatprep.subr.mxu0 0.0
    %4024 = vmatpush1.msra.mxu0 0.0
    %4025 = vmatprep.subr.mxu0 0.0
    %4026 = vmatpush1.msra.mxu0 0.0
    %4027 = vmatprep.subr.mxu0 0.0
    %4028 = vmatpush1.msra.mxu0 0.0
    %4029 = vmatprep.subr.mxu0 0.0
    %4030 = vmatpush1.msra.mxu0 0.0
    %4031 = vmatprep.subr.mxu0 0.0
    %4032 = vmatpush1.msra.mxu0 0.0
    %4033 = vmatprep.subr.mxu0 0.0
    %4034 = vmatpush1.msra.mxu0 0.0
    %4035 = vmatprep.subr.mxu0 0.0
    %4036 = vmatpush1.msra.mxu0 0.0
    %4037 = vmatprep.subr.mxu0 0.0
    %4038 = vmatpush1.msra.mxu0 0.0
    %4039 = vmatprep.subr.mxu0 0.0
    %4040 = vmatpush1.msra.mxu0 0.0
    %4041 = vmatprep.subr.mxu0 0.0
    %4042 = vmatpush1.msra.mxu0 0.0
    %4043 = vmatprep.subr.mxu0 0.0
    %4044 = vmatpush1.msra.mxu0 0.0
    %4045 = vmatprep.subr.mxu0 0.0
    %4046 = vmatpush1.msra.mxu0 0.0
    %4047 = vmatprep.subr.mxu0 0.0
    %4048 = vmatpush1.msra.mxu0 0.0
    %4049 = vmatprep.subr.mxu0 0.0
    %4050 = vmatpush1.msra.mxu0 0.0
    %4051 = vmatprep.subr.mxu0 0.0
    %4052 = vmatpush1.msra.mxu0 0.0
    %4053 = vmatprep.mubr.f32.mxu0 0.0
    %4054 = vmatmul.mubr.f32.gmra.mrb[0].mxu0 %v1422
    %v4055 = vpop.f32.mrb[0].mxu0
    %v4056 = vadd.f32 %v3988, %v4055
    %v4057 = vpop.f32.mrb[0].mxu0
    %4058 = vmatprep.mubr.f32.mxu0 0.0
    %4059 = vmatmul.mubr.f32.gmra.mrb[0].mxu0 %v1425
    %v4060 = vpop.f32.mrb[0].mxu0
    %v4061 = vadd.f32 %v3988, %v4060
    %v4062 = vpop.f32.mrb[0].mxu0
    %4063 = vmatprep.mubr.f32.mxu0 0.0
    %4064 = vmatmul.mubr.f32.gmra.mrb[0].mxu0 %v1428
    %v4065 = vpop.f32.mrb[0].mxu0
    %v4066 = vadd.f32 %v3988, %v4065
    %v4067 = vpop.f32.mrb[0].mxu0
    %4068 = vmatprep.mubr.f32.mxu0 0.0
    %4069 = vmatmul.mubr.f32.gmra.mrb[0].mxu0 %v1431
    %v4070 = vpop.f32.mrb[0].mxu0
    %v4071 = vadd.f32 %v3988, %v4070
    %v4072 = vpop.f32.mrb[0].mxu0
    %4073 = vdwg.mxu0
    %v4074 = vld [vmem:[%s2799 + $0x80] sm:$0xff]
    %v4075 = vld [vmem:[%s2799 + $0x88] sm:$0xff]
    %v4076 = vld [vmem:[%s2799 + $0x90] sm:$0xff]
    %v4077 = vld [vmem:[%s2799 + $0x98] sm:$0xff]
    %v4078 = vld [vmem:[%s2799 + $0x106] sm:$0x1]
    %v4080 = vsel %vm330, %v3972, 0
    %v4083 = vsel %vm330, %v3977, 0
    %v4086 = vsel %vm330, %v4056, 0
    %v4089 = vsel %vm330, %v4061, 0
    %v4092 = vsel %vm330, %v4066, 0
    %v4095 = vsel %vm330, %v4071, 0
    %4097 = vmatprep.subr.mxu0 0.0
    %4098 = vmatpush1.xpose.msra.mxu0 %v4086
    %4099 = vmatprep.subr.mxu0 0.0
    %4100 = vmatpush1.xpose.msra.mxu0 %v4089
    %4101 = vmatprep.subr.mxu0 0.0
    %4102 = vmatpush1.xpose.msra.mxu0 %v4092
    %4103 = vmatprep.subr.mxu0 0.0
    %4104 = vmatpush1.xpose.msra.mxu0 %v4095
    %4105 = vmatprep.subr.mxu0 0.0
    %4106 = vmatpush1.xpose.msra.mxu0 0.0
    %4107 = vmatprep.subr.mxu0 0.0
    %4108 = vmatpush1.xpose.msra.mxu0 0.0
    %4109 = vmatprep.subr.mxu0 0.0
    %4110 = vmatpush1.xpose.msra.mxu0 0.0
    %4111 = vmatprep.subr.mxu0 0.0
    %4112 = vmatpush1.xpose.msra.mxu0 0.0
    %4113 = vmatprep.subr.mxu0 0.0
    %4114 = vmatpush1.xpose.msra.mxu0 0.0
    %4115 = vmatprep.subr.mxu0 0.0
    %4116 = vmatpush1.xpose.msra.mxu0 0.0
    %4117 = vmatprep.subr.mxu0 0.0
    %4118 = vmatpush1.xpose.msra.mxu0 0.0
    %4119 = vmatprep.subr.mxu0 0.0
    %4120 = vmatpush1.xpose.msra.mxu0 0.0
    %4121 = vmatprep.subr.mxu0 0.0
    %4122 = vmatpush1.xpose.msra.mxu0 0.0
    %4123 = vmatprep.subr.mxu0 0.0
    %4124 = vmatpush1.xpose.msra.mxu0 0.0
    %4125 = vmatprep.subr.mxu0 0.0
    %4126 = vmatpush1.xpose.msra.mxu0 0.0
    %4127 = vmatprep.subr.mxu0 0.0
    %4128 = vmatpush1.xpose.msra.mxu0 0.0
    %4129 = vmatprep.subr.mxu0 0.0
    %4130 = vmatpush1.xpose.msra.mxu0 0.0
    %4131 = vmatprep.subr.mxu0 0.0
    %4132 = vmatpush1.xpose.msra.mxu0 0.0
    %4133 = vmatprep.subr.mxu0 0.0
    %4134 = vmatpush1.xpose.msra.mxu0 0.0
    %4135 = vmatprep.subr.mxu0 0.0
    %4136 = vmatpush1.xpose.msra.mxu0 0.0
    %4137 = vmatprep.subr.mxu0 0.0
    %4138 = vmatpush1.xpose.msra.mxu0 0.0
    %4139 = vmatprep.subr.mxu0 0.0
    %4140 = vmatpush1.xpose.msra.mxu0 0.0
    %4141 = vmatprep.subr.mxu0 0.0
    %4142 = vmatpush1.xpose.msra.mxu0 0.0
    %4143 = vmatprep.subr.mxu0 0.0
    %4144 = vmatpush1.xpose.msra.mxu0 0.0
    %4145 = vmatprep.subr.mxu0 0.0
    %4146 = vmatpush1.xpose.msra.mxu0 0.0
    %4147 = vmatprep.subr.mxu0 0.0
    %4148 = vmatpush1.xpose.msra.mxu0 0.0
    %4149 = vmatprep.subr.mxu0 0.0
    %4150 = vmatpush1.xpose.msra.mxu0 0.0
    %4151 = vmatprep.subr.mxu0 0.0
    %4152 = vmatpush1.xpose.msra.mxu0 0.0
    %4153 = vmatprep.subr.mxu0 0.0
    %4154 = vmatpush1.xpose.msra.mxu0 0.0
    %4155 = vmatprep.subr.mxu0 0.0
    %4156 = vmatpush1.xpose.msra.mxu0 0.0
    %4157 = vmatprep.subr.mxu0 0.0
    %4158 = vmatpush1.xpose.msra.mxu0 0.0
    %4159 = vmatprep.subr.mxu0 0.0
    %4160 = vmatpush1.xpose.msra.mxu0 0.0
    %4161 = vmatprep.mubr.f32.mxu0 0.0
    %4162 = vmatmul.mubr.f32.gmra.mrb[0].mxu0 %v4080
    %v4163 = vpop.f32.mrb[0].mxu0
    %v4164 = vadd.f32 0.0, %v4163
    %v4165 = vpop.f32.mrb[0].mxu0
    %4166 = vmatprep.mubr.f32.mxu0 0.0
    %4167 = vmatmul.mubr.f32.gmra.mrb[0].mxu0 %v4083
    %v4168 = vpop.f32.mrb[0].mxu0
    %v4169 = vadd.f32 0.0, %v4168
    %v4170 = vpop.f32.mrb[0].mxu0
    %4171 = vdwg.mxu0
    %4172 = vrot.lane.b32.xlu0 %v3972, 120
    %v4173 = vpop.permute.xlu0 %4172
    %4174 = vrot.lane.b32.xlu0 %v3977, 120
    %v4175 = vpop.permute.xlu0 %4174
    %4176 = vrot.lane.b32.xlu0 %v4056, 120
    %v4177 = vpop.permute.xlu0 %4176
    %4178 = vrot.lane.b32.xlu0 %v4061, 120
    %v4179 = vpop.permute.xlu0 %4178
    %4180 = vrot.lane.b32.xlu0 %v4066, 120
    %v4181 = vpop.permute.xlu0 %4180
    %4182 = vrot.lane.b32.xlu0 %v4071, 120
    %v4183 = vpop.permute.xlu0 %4182
    %v4184 = vsel %vm330, %v4173, 0
    %v4186 = vsel %vm330, %v4175, 0
    %v4188 = vsel %vm330, %v4177, 0
    %v4190 = vsel %vm330, %v4179, 0
    %v4192 = vsel %vm330, %v4181, 0
    %v4194 = vsel %vm330, %v4183, 0
    %4196 = vmatprep.subr.mxu0 0.0
    %4197 = vmatpush1.xpose.msra.mxu0 %v4188
    %4198 = vmatprep.subr.mxu0 0.0
    %4199 = vmatpush1.xpose.msra.mxu0 %v4190
    %4200 = vmatprep.subr.mxu0 0.0
    %4201 = vmatpush1.xpose.msra.mxu0 %v4192
    %4202 = vmatprep.subr.mxu0 0.0
    %4203 = vmatpush1.xpose.msra.mxu0 %v4194
    %4204 = vmatprep.subr.mxu0 0.0
    %4205 = vmatpush1.xpose.msra.mxu0 0.0
    %4206 = vmatprep.subr.mxu0 0.0
    %4207 = vmatpush1.xpose.msra.mxu0 0.0
    %4208 = vmatprep.subr.mxu0 0.0
    %4209 = vmatpush1.xpose.msra.mxu0 0.0
    %4210 = vmatprep.subr.mxu0 0.0
    %4211 = vmatpush1.xpose.msra.mxu0 0.0
    %4212 = vmatprep.subr.mxu0 0.0
    %4213 = vmatpush1.xpose.msra.mxu0 0.0
    %4214 = vmatprep.subr.mxu0 0.0
    %4215 = vmatpush1.xpose.msra.mxu0 0.0
    %4216 = vmatprep.subr.mxu0 0.0
    %4217 = vmatpush1.xpose.msra.mxu0 0.0
    %4218 = vmatprep.subr.mxu0 0.0
    %4219 = vmatpush1.xpose.msra.mxu0 0.0
    %4220 = vmatprep.subr.mxu0 0.0
    %4221 = vmatpush1.xpose.msra.mxu0 0.0
    %4222 = vmatprep.subr.mxu0 0.0
    %4223 = vmatpush1.xpose.msra.mxu0 0.0
    %4224 = vmatprep.subr.mxu0 0.0
    %4225 = vmatpush1.xpose.msra.mxu0 0.0
    %4226 = vmatprep.subr.mxu0 0.0
    %4227 = vmatpush1.xpose.msra.mxu0 0.0
    %4228 = vmatprep.subr.mxu0 0.0
    %4229 = vmatpush1.xpose.msra.mxu0 0.0
    %4230 = vmatprep.subr.mxu0 0.0
    %4231 = vmatpush1.xpose.msra.mxu0 0.0
    %4232 = vmatprep.subr.mxu0 0.0
    %4233 = vmatpush1.xpose.msra.mxu0 0.0
    %4234 = vmatprep.subr.mxu0 0.0
    %4235 = vmatpush1.xpose.msra.mxu0 0.0
    %4236 = vmatprep.subr.mxu0 0.0
    %4237 = vmatpush1.xpose.msra.mxu0 0.0
    %4238 = vmatprep.subr.mxu0 0.0
    %4239 = vmatpush1.xpose.msra.mxu0 0.0
    %4240 = vmatprep.subr.mxu0 0.0
    %4241 = vmatpush1.xpose.msra.mxu0 0.0
    %4242 = vmatprep.subr.mxu0 0.0
    %4243 = vmatpush1.xpose.msra.mxu0 0.0
    %4244 = vmatprep.subr.mxu0 0.0
    %4245 = vmatpush1.xpose.msra.mxu0 0.0
    %4246 = vmatprep.subr.mxu0 0.0
    %4247 = vmatpush1.xpose.msra.mxu0 0.0
    %4248 = vmatprep.subr.mxu0 0.0
    %4249 = vmatpush1.xpose.msra.mxu0 0.0
    %4250 = vmatprep.subr.mxu0 0.0
    %4251 = vmatpush1.xpose.msra.mxu0 0.0
    %4252 = vmatprep.subr.mxu0 0.0
    %4253 = vmatpush1.xpose.msra.mxu0 0.0
    %4254 = vmatprep.subr.mxu0 0.0
    %4255 = vmatpush1.xpose.msra.mxu0 0.0
    %4256 = vmatprep.subr.mxu0 0.0
    %4257 = vmatpush1.xpose.msra.mxu0 0.0
    %4258 = vmatprep.subr.mxu0 0.0
    %4259 = vmatpush1.xpose.msra.mxu0 0.0
    %4260 = vmatprep.mubr.f32.mxu0 0.0
    %4261 = vmatmul.mubr.f32.gmra.mrb[0].mxu0 %v4184
    %v4262 = vpop.f32.mrb[0].mxu0
    %v4263 = vadd.f32 0.0, %v4262
    %v4264 = vpop.f32.mrb[0].mxu0
    %4265 = vmatprep.mubr.f32.mxu0 0.0
    %4266 = vmatmul.mubr.f32.gmra.mrb[0].mxu0 %v4186
    %v4267 = vpop.f32.mrb[0].mxu0
    %v4268 = vadd.f32 0.0, %v4267
    %v4269 = vpop.f32.mrb[0].mxu0
    %4270 = vdwg.mxu0
    %4271 = vrot.lane.b32.xlu0 %v3972, 112
    %v4272 = vpop.permute.xlu0 %4271
    %4273 = vrot.lane.b32.xlu0 %v3977, 112
    %v4274 = vpop.permute.xlu0 %4273
    %4275 = vrot.lane.b32.xlu0 %v4056, 112
    %v4276 = vpop.permute.xlu0 %4275
    %4277 = vrot.lane.b32.xlu0 %v4061, 112
    %v4278 = vpop.permute.xlu0 %4277
    %4279 = vrot.lane.b32.xlu0 %v4066, 112
    %v4280 = vpop.permute.xlu0 %4279
    %4281 = vrot.lane.b32.xlu0 %v4071, 112
    %v4282 = vpop.permute.xlu0 %4281
    %v4283 = vsel %vm330, %v4272, 0
    %v4285 = vsel %vm330, %v4274, 0
    %v4287 = vsel %vm330, %v4276, 0
    %v4289 = vsel %vm330, %v4278, 0
    %v4291 = vsel %vm330, %v4280, 0
    %v4293 = vsel %vm330, %v4282, 0
    %4295 = vmatprep.subr.mxu0 0.0
    %4296 = vmatpush1.xpose.msra.mxu0 %v4287
    %4297 = vmatprep.subr.mxu0 0.0
    %4298 = vmatpush1.xpose.msra.mxu0 %v4289
    %4299 = vmatprep.subr.mxu0 0.0
    %4300 = vmatpush1.xpose.msra.mxu0 %v4291
    %4301 = vmatprep.subr.mxu0 0.0
    %4302 = vmatpush1.xpose.msra.mxu0 %v4293
    %4303 = vmatprep.subr.mxu0 0.0
    %4304 = vmatpush1.xpose.msra.mxu0 0.0
    %4305 = vmatprep.subr.mxu0 0.0
    %4306 = vmatpush1.xpose.msra.mxu0 0.0
    %4307 = vmatprep.subr.mxu0 0.0
    %4308 = vmatpush1.xpose.msra.mxu0 0.0
    %4309 = vmatprep.subr.mxu0 0.0
    %4310 = vmatpush1.xpose.msra.mxu0 0.0
    %4311 = vmatprep.subr.mxu0 0.0
    %4312 = vmatpush1.xpose.msra.mxu0 0.0
    %4313 = vmatprep.subr.mxu0 0.0
    %4314 = vmatpush1.xpose.msra.mxu0 0.0
    %4315 = vmatprep.subr.mxu0 0.0
    %4316 = vmatpush1.xpose.msra.mxu0 0.0
    %4317 = vmatprep.subr.mxu0 0.0
    %4318 = vmatpush1.xpose.msra.mxu0 0.0
    %4319 = vmatprep.subr.mxu0 0.0
    %4320 = vmatpush1.xpose.msra.mxu0 0.0
    %4321 = vmatprep.subr.mxu0 0.0
    %4322 = vmatpush1.xpose.msra.mxu0 0.0
    %4323 = vmatprep.subr.mxu0 0.0
    %4324 = vmatpush1.xpose.msra.mxu0 0.0
    %4325 = vmatprep.subr.mxu0 0.0
    %4326 = vmatpush1.xpose.msra.mxu0 0.0
    %4327 = vmatprep.subr.mxu0 0.0
    %4328 = vmatpush1.xpose.msra.mxu0 0.0
    %4329 = vmatprep.subr.mxu0 0.0
    %4330 = vmatpush1.xpose.msra.mxu0 0.0
    %4331 = vmatprep.subr.mxu0 0.0
    %4332 = vmatpush1.xpose.msra.mxu0 0.0
    %4333 = vmatprep.subr.mxu0 0.0
    %4334 = vmatpush1.xpose.msra.mxu0 0.0
    %4335 = vmatprep.subr.mxu0 0.0
    %4336 = vmatpush1.xpose.msra.mxu0 0.0
    %4337 = vmatprep.subr.mxu0 0.0
    %4338 = vmatpush1.xpose.msra.mxu0 0.0
    %4339 = vmatprep.subr.mxu0 0.0
    %4340 = vmatpush1.xpose.msra.mxu0 0.0
    %4341 = vmatprep.subr.mxu0 0.0
    %4342 = vmatpush1.xpose.msra.mxu0 0.0
    %4343 = vmatprep.subr.mxu0 0.0
    %4344 = vmatpush1.xpose.msra.mxu0 0.0
    %4345 = vmatprep.subr.mxu0 0.0
    %4346 = vmatpush1.xpose.msra.mxu0 0.0
    %4347 = vmatprep.subr.mxu0 0.0
    %4348 = vmatpush1.xpose.msra.mxu0 0.0
    %4349 = vmatprep.subr.mxu0 0.0
    %4350 = vmatpush1.xpose.msra.mxu0 0.0
    %4351 = vmatprep.subr.mxu0 0.0
    %4352 = vmatpush1.xpose.msra.mxu0 0.0
    %4353 = vmatprep.subr.mxu0 0.0
    %4354 = vmatpush1.xpose.msra.mxu0 0.0
    %4355 = vmatprep.subr.mxu0 0.0
    %4356 = vmatpush1.xpose.msra.mxu0 0.0
    %4357 = vmatprep.subr.mxu0 0.0
    %4358 = vmatpush1.xpose.msra.mxu0 0.0
    %4359 = vmatprep.mubr.f32.mxu0 0.0
    %4360 = vmatmul.mubr.f32.gmra.mrb[0].mxu0 %v4283
    %v4361 = vpop.f32.mrb[0].mxu0
    %v4362 = vadd.f32 0.0, %v4361
    %v4363 = vpop.f32.mrb[0].mxu0
    %4364 = vmatprep.mubr.f32.mxu0 0.0
    %4365 = vmatmul.mubr.f32.gmra.mrb[0].mxu0 %v4285
    %v4366 = vpop.f32.mrb[0].mxu0
    %v4367 = vadd.f32 0.0, %v4366
    %v4368 = vpop.f32.mrb[0].mxu0
    %4369 = vdwg.mxu0
    %4370 = vrot.lane.b32.xlu0 %v3972, 104
    %v4371 = vpop.permute.xlu0 %4370
    %4372 = vrot.lane.b32.xlu0 %v3977, 104
    %v4373 = vpop.permute.xlu0 %4372
    %4374 = vrot.lane.b32.xlu0 %v4056, 104
    %v4375 = vpop.permute.xlu0 %4374
    %4376 = vrot.lane.b32.xlu0 %v4061, 104
    %v4377 = vpop.permute.xlu0 %4376
    %4378 = vrot.lane.b32.xlu0 %v4066, 104
    %v4379 = vpop.permute.xlu0 %4378
    %4380 = vrot.lane.b32.xlu0 %v4071, 104
    %v4381 = vpop.permute.xlu0 %4380
    %v4382 = vsel %vm330, %v4371, 0
    %v4384 = vsel %vm330, %v4373, 0
    %v4386 = vsel %vm330, %v4375, 0
    %v4388 = vsel %vm330, %v4377, 0
    %v4390 = vsel %vm330, %v4379, 0
    %v4392 = vsel %vm330, %v4381, 0
    %4394 = vmatprep.subr.mxu0 0.0
    %4395 = vmatpush1.xpose.msra.mxu0 %v4386
    %4396 = vmatprep.subr.mxu0 0.0
    %4397 = vmatpush1.xpose.msra.mxu0 %v4388
    %4398 = vmatprep.subr.mxu0 0.0
    %4399 = vmatpush1.xpose.msra.mxu0 %v4390
    %4400 = vmatprep.subr.mxu0 0.0
    %4401 = vmatpush1.xpose.msra.mxu0 %v4392
    %4402 = vmatprep.subr.mxu0 0.0
    %4403 = vmatpush1.xpose.msra.mxu0 0.0
    %4404 = vmatprep.subr.mxu0 0.0
    %4405 = vmatpush1.xpose.msra.mxu0 0.0
    %4406 = vmatprep.subr.mxu0 0.0
    %4407 = vmatpush1.xpose.msra.mxu0 0.0
    %4408 = vmatprep.subr.mxu0 0.0
    %4409 = vmatpush1.xpose.msra.mxu0 0.0
    %4410 = vmatprep.subr.mxu0 0.0
    %4411 = vmatpush1.xpose.msra.mxu0 0.0
    %4412 = vmatprep.subr.mxu0 0.0
    %4413 = vmatpush1.xpose.msra.mxu0 0.0
    %4414 = vmatprep.subr.mxu0 0.0
    %4415 = vmatpush1.xpose.msra.mxu0 0.0
    %4416 = vmatprep.subr.mxu0 0.0
    %4417 = vmatpush1.xpose.msra.mxu0 0.0
    %4418 = vmatprep.subr.mxu0 0.0
    %4419 = vmatpush1.xpose.msra.mxu0 0.0
    %4420 = vmatprep.subr.mxu0 0.0
    %4421 = vmatpush1.xpose.msra.mxu0 0.0
    %4422 = vmatprep.subr.mxu0 0.0
    %4423 = vmatpush1.xpose.msra.mxu0 0.0
    %4424 = vmatprep.subr.mxu0 0.0
    %4425 = vmatpush1.xpose.msra.mxu0 0.0
    %4426 = vmatprep.subr.mxu0 0.0
    %4427 = vmatpush1.xpose.msra.mxu0 0.0
    %4428 = vmatprep.subr.mxu0 0.0
    %4429 = vmatpush1.xpose.msra.mxu0 0.0
    %4430 = vmatprep.subr.mxu0 0.0
    %4431 = vmatpush1.xpose.msra.mxu0 0.0
    %4432 = vmatprep.subr.mxu0 0.0
    %4433 = vmatpush1.xpose.msra.mxu0 0.0
    %4434 = vmatprep.subr.mxu0 0.0
    %4435 = vmatpush1.xpose.msra.mxu0 0.0
    %4436 = vmatprep.subr.mxu0 0.0
    %4437 = vmatpush1.xpose.msra.mxu0 0.0
    %4438 = vmatprep.subr.mxu0 0.0
    %4439 = vmatpush1.xpose.msra.mxu0 0.0
    %4440 = vmatprep.subr.mxu0 0.0
    %4441 = vmatpush1.xpose.msra.mxu0 0.0
    %4442 = vmatprep.subr.mxu0 0.0
    %4443 = vmatpush1.xpose.msra.mxu0 0.0
    %4444 = vmatprep.subr.mxu0 0.0
    %4445 = vmatpush1.xpose.msra.mxu0 0.0
    %4446 = vmatprep.subr.mxu0 0.0
    %4447 = vmatpush1.xpose.msra.mxu0 0.0
    %4448 = vmatprep.subr.mxu0 0.0
    %4449 = vmatpush1.xpose.msra.mxu0 0.0
    %4450 = vmatprep.subr.mxu0 0.0
    %4451 = vmatpush1.xpose.msra.mxu0 0.0
    %4452 = vmatprep.subr.mxu0 0.0
    %4453 = vmatpush1.xpose.msra.mxu0 0.0
    %4454 = vmatprep.subr.mxu0 0.0
    %4455 = vmatpush1.xpose.msra.mxu0 0.0
    %4456 = vmatprep.subr.mxu0 0.0
    %4457 = vmatpush1.xpose.msra.mxu0 0.0
    %4458 = vmatprep.mubr.f32.mxu0 0.0
    %4459 = vmatmul.mubr.f32.gmra.mrb[0].mxu0 %v4382
    %v4460 = vpop.f32.mrb[0].mxu0
    %v4461 = vadd.f32 0.0, %v4460
    %v4462 = vpop.f32.mrb[0].mxu0
    %4463 = vmatprep.mubr.f32.mxu0 0.0
    %4464 = vmatmul.mubr.f32.gmra.mrb[0].mxu0 %v4384
    %v4465 = vpop.f32.mrb[0].mxu0
    %v4466 = vadd.f32 0.0, %v4465
    %v4467 = vpop.f32.mrb[0].mxu0
    %4468 = vdwg.mxu0
    %v4469 = vadd.f32 %v4164, %v227
    %v4470 = vadd.f32 %v4169, %v228
    %v4471 = vadd.f32 %v4263, %v227
    %v4472 = vadd.f32 %v4268, %v228
    %v4473 = vadd.f32 %v4362, %v227
    %v4474 = vadd.f32 %v4367, %v228
    %v4475 = vadd.f32 %v4461, %v227
    %v4476 = vadd.f32 %v4466, %v228
    %v4477 = vsel %vm163, %v4469, -inf
    %4478 = vmax.xlane.f32.xlu0 %v4477
    %v4479 = vpop.xlane.xlu0 %4478
    %v4480 = vsel %vm163, %v4470, -inf
    %4481 = vmax.xlane.f32.xlu0 %v4480
    %v4482 = vpop.xlane.xlu0 %4481
    %v4483 = vsel %vm163, %v4471, -inf
    %4484 = vmax.xlane.f32.xlu0 %v4483
    %v4485 = vpop.xlane.xlu0 %4484
    %v4486 = vsel %vm163, %v4472, -inf
    %4487 = vmax.xlane.f32.xlu0 %v4486
    %v4488 = vpop.xlane.xlu0 %4487
    %v4489 = vsel %vm163, %v4473, -inf
    %4490 = vmax.xlane.f32.xlu0 %v4489
    %v4491 = vpop.xlane.xlu0 %4490
    %v4492 = vsel %vm163, %v4474, -inf
    %4493 = vmax.xlane.f32.xlu0 %v4492
    %v4494 = vpop.xlane.xlu0 %4493
    %v4495 = vsel %vm163, %v4475, -inf
    %4496 = vmax.xlane.f32.xlu0 %v4495
    %v4497 = vpop.xlane.xlu0 %4496
    %v4498 = vsel %vm163, %v4476, -inf
    %4499 = vmax.xlane.f32.xlu0 %v4498
    %v4500 = vpop.xlane.xlu0 %4499
    %v4501 = vsub.f32 %v4469, %v4479
    %v4502 = vsub.f32 %v4470, %v4482
    %v4503 = vsub.f32 %v4471, %v4485
    %v4504 = vsub.f32 %v4472, %v4488
    %v4505 = vsub.f32 %v4473, %v4491
    %v4506 = vsub.f32 %v4474, %v4494
    %v4507 = vsub.f32 %v4475, %v4497
    %v4508 = vsub.f32 %v4476, %v4500
    %v4509 = vmul.f32 %v4501, 1.442695
    %v4510 = vpow.pop %v4509
    %v4511 = vmul.f32 %v4502, 1.442695
    %v4512 = vpow.pop %v4511
    %v4513 = vmul.f32 %v4503, 1.442695
    %v4514 = vpow.pop %v4513
    %v4515 = vmul.f32 %v4504, 1.442695
    %v4516 = vpow.pop %v4515
    %v4517 = vmul.f32 %v4505, 1.442695
    %v4518 = vpow.pop %v4517
    %v4519 = vmul.f32 %v4506, 1.442695
    %v4520 = vpow.pop %v4519
    %v4521 = vmul.f32 %v4507, 1.442695
    %v4522 = vpow.pop %v4521
    %v4523 = vmul.f32 %v4508, 1.442695
    %v4524 = vpow.pop %v4523
    %v4525 = vsel %vm163, %v4510, 0.0
    %4526 = vadd.xlane.f32.xlu0 %v4525
    %v4527 = vpop.xlane.xlu0 %4526
    %v4528 = vsel %vm163, %v4512, 0.0
    %4529 = vadd.xlane.f32.xlu0 %v4528
    %v4530 = vpop.xlane.xlu0 %4529
    %v4531 = vsel %vm163, %v4514, 0.0
    %4532 = vadd.xlane.f32.xlu0 %v4531
    %v4533 = vpop.xlane.xlu0 %4532
    %v4534 = vsel %vm163, %v4516, 0.0
    %4535 = vadd.xlane.f32.xlu0 %v4534
    %v4536 = vpop.xlane.xlu0 %4535
    %v4537 = vsel %vm163, %v4518, 0.0
    %4538 = vadd.xlane.f32.xlu0 %v4537
    %v4539 = vpop.xlane.xlu0 %4538
    %v4540 = vsel %vm163, %v4520, 0.0
    %4541 = vadd.xlane.f32.xlu0 %v4540
    %v4542 = vpop.xlane.xlu0 %4541
    %v4543 = vsel %vm163, %v4522, 0.0
    %4544 = vadd.xlane.f32.xlu0 %v4543
    %v4545 = vpop.xlane.xlu0 %4544
    %v4546 = vsel %vm163, %v4524, 0.0
    %4547 = vadd.xlane.f32.xlu0 %v4546
    %v4548 = vpop.xlane.xlu0 %4547
    %v4549 = vrcp.pop %v4527
    %v4550 = vrcp.pop %v4530
    %v4551 = vrcp.pop %v4533
    %v4552 = vrcp.pop %v4536
    %v4553 = vrcp.pop %v4539
    %v4554 = vrcp.pop %v4542
    %v4555 = vrcp.pop %v4545
    %v4556 = vrcp.pop %v4548
    %v4557 = vmul.f32 %v4510, %v4549
    %v4558 = vmul.f32 %v4512, %v4550
    %v4559 = vmul.f32 %v4514, %v4551
    %v4560 = vmul.f32 %v4516, %v4552
    %v4561 = vmul.f32 %v4518, %v4553
    %v4562 = vmul.f32 %v4520, %v4554
    %v4563 = vmul.f32 %v4522, %v4555
    %v4564 = vmul.f32 %v4524, %v4556
    %vm4565 = vcmp.le.f32.partialorder %v4479, -5e+29
    %vm4566 = vcmp.le.f32.partialorder %v4482, -5e+29
    %vm4567 = vcmp.le.f32.partialorder %v4485, -5e+29
    %vm4568 = vcmp.le.f32.partialorder %v4488, -5e+29
    %vm4569 = vcmp.le.f32.partialorder %v4491, -5e+29
    %vm4570 = vcmp.le.f32.partialorder %v4494, -5e+29
    %vm4571 = vcmp.le.f32.partialorder %v4497, -5e+29
    %vm4572 = vcmp.le.f32.partialorder %v4500, -5e+29
    %v4573 = vsel %vm4565, 1, 0
    %v4574 = vsel %vm4566, 1, 0
    %v4575 = vsel %vm4567, 1, 0
    %v4576 = vsel %vm4568, 1, 0
    %v4577 = vsel %vm4569, 1, 0
    %v4578 = vsel %vm4570, 1, 0
    %v4579 = vsel %vm4571, 1, 0
    %v4580 = vsel %vm4572, 1, 0
    %vm4581 = vcmp.eq.s32.totalorder %v4573, 1
    %vm4582 = vcmp.eq.s32.totalorder %v4574, 1
    %vm4583 = vcmp.eq.s32.totalorder %v4575, 1
    %vm4584 = vcmp.eq.s32.totalorder %v4576, 1
    %vm4585 = vcmp.eq.s32.totalorder %v4577, 1
    %vm4586 = vcmp.eq.s32.totalorder %v4578, 1
    %vm4587 = vcmp.eq.s32.totalorder %v4579, 1
    %vm4588 = vcmp.eq.s32.totalorder %v4580, 1
    %v4589 = vsel %vm4581, 0.0, %v4557
    %v4590 = vsel %vm4582, 0.0, %v4558
    %v4591 = vsel %vm4583, 0.0, %v4559
    %v4592 = vsel %vm4584, 0.0, %v4560
    %v4593 = vsel %vm4585, 0.0, %v4561
    %v4594 = vsel %vm4586, 0.0, %v4562
    %v4595 = vsel %vm4587, 0.0, %v4563
    %v4596 = vsel %vm4588, 0.0, %v4564
    %4597 = vrot.lane.b32.xlu0 %v4056, 96
    %v4598 = vpop.permute.xlu0 %4597
    %4599 = vrot.lane.b32.xlu0 %v4061, 96
    %v4600 = vpop.permute.xlu0 %4599
    %4601 = vrot.lane.b32.xlu0 %v4066, 96
    %v4602 = vpop.permute.xlu0 %4601
    %4603 = vrot.lane.b32.xlu0 %v4071, 96
    %v4604 = vpop.permute.xlu0 %4603
    %v4610 = vsel %vm163, %v4589, 0
    %v4613 = vsel %vm163, %v4590, 0
    %4615 = vmatprep.subr.mxu0 0.0
    %4616 = vmatpush1.msra.mxu0 %v4598
    %4617 = vmatprep.subr.mxu0 0.0
    %4618 = vmatpush1.msra.mxu0 %v4600
    %4619 = vmatprep.subr.mxu0 0.0
    %4620 = vmatpush1.msra.mxu0 %v4602
    %4621 = vmatprep.subr.mxu0 0.0
    %4622 = vmatpush1.msra.mxu0 %v4604
    %4623 = vmatprep.subr.mxu0 0.0
    %4624 = vmatpush1.msra.mxu0 0.0
    %4625 = vmatprep.subr.mxu0 0.0
    %4626 = vmatpush1.msra.mxu0 0.0
    %4627 = vmatprep.subr.mxu0 0.0
    %4628 = vmatpush1.msra.mxu0 0.0
    %4629 = vmatprep.subr.mxu0 0.0
    %4630 = vmatpush1.msra.mxu0 0.0
    %4631 = vmatprep.subr.mxu0 0.0
    %4632 = vmatpush1.msra.mxu0 0.0
    %4633 = vmatprep.subr.mxu0 0.0
    %4634 = vmatpush1.msra.mxu0 0.0
    %4635 = vmatprep.subr.mxu0 0.0
    %4636 = vmatpush1.msra.mxu0 0.0
    %4637 = vmatprep.subr.mxu0 0.0
    %4638 = vmatpush1.msra.mxu0 0.0
    %4639 = vmatprep.subr.mxu0 0.0
    %4640 = vmatpush1.msra.mxu0 0.0
    %4641 = vmatprep.subr.mxu0 0.0
    %4642 = vmatpush1.msra.mxu0 0.0
    %4643 = vmatprep.subr.mxu0 0.0
    %4644 = vmatpush1.msra.mxu0 0.0
    %4645 = vmatprep.subr.mxu0 0.0
    %4646 = vmatpush1.msra.mxu0 0.0
    %4647 = vmatprep.subr.mxu0 0.0
    %4648 = vmatpush1.msra.mxu0 0.0
    %4649 = vmatprep.subr.mxu0 0.0
    %4650 = vmatpush1.msra.mxu0 0.0
    %4651 = vmatprep.subr.mxu0 0.0
    %4652 = vmatpush1.msra.mxu0 0.0
    %4653 = vmatprep.subr.mxu0 0.0
    %4654 = vmatpush1.msra.mxu0 0.0
    %4655 = vmatprep.subr.mxu0 0.0
    %4656 = vmatpush1.msra.mxu0 0.0
    %4657 = vmatprep.subr.mxu0 0.0
    %4658 = vmatpush1.msra.mxu0 0.0
    %4659 = vmatprep.subr.mxu0 0.0
    %4660 = vmatpush1.msra.mxu0 0.0
    %4661 = vmatprep.subr.mxu0 0.0
    %4662 = vmatpush1.msra.mxu0 0.0
    %4663 = vmatprep.subr.mxu0 0.0
    %4664 = vmatpush1.msra.mxu0 0.0
    %4665 = vmatprep.subr.mxu0 0.0
    %4666 = vmatpush1.msra.mxu0 0.0
    %4667 = vmatprep.subr.mxu0 0.0
    %4668 = vmatpush1.msra.mxu0 0.0
    %4669 = vmatprep.subr.mxu0 0.0
    %4670 = vmatpush1.msra.mxu0 0.0
    %4671 = vmatprep.subr.mxu0 0.0
    %4672 = vmatpush1.msra.mxu0 0.0
    %4673 = vmatprep.subr.mxu0 0.0
    %4674 = vmatpush1.msra.mxu0 0.0
    %4675 = vmatprep.subr.mxu0 0.0
    %4676 = vmatpush1.msra.mxu0 0.0
    %4677 = vmatprep.subr.mxu0 0.0
    %4678 = vmatpush1.msra.mxu0 0.0
    %4679 = vmatprep.mubr.f32.mxu0 0.0
    %4680 = vmatmul.mubr.f32.gmra.mrb[0].mxu0 %v4610
    %v4681 = vpop.f32.mrb[0].mxu0
    %v4682 = vadd.f32 0.0, %v4681
    %v4683 = vpop.f32.mrb[0].mxu0
    %4684 = vmatprep.mubr.f32.mxu0 0.0
    %4685 = vmatmul.mubr.f32.gmra.mrb[0].mxu0 %v4613
    %v4686 = vpop.f32.mrb[0].mxu0
    %v4687 = vadd.f32 0.0, %v4686
    %v4688 = vpop.f32.mrb[0].mxu0
    %4689 = vdwg.mxu0
    %4690 = vrot.lane.b32.xlu0 %v4056, 88
    %v4691 = vpop.permute.xlu0 %4690
    %4692 = vrot.lane.b32.xlu0 %v4061, 88
    %v4693 = vpop.permute.xlu0 %4692
    %4694 = vrot.lane.b32.xlu0 %v4066, 88
    %v4695 = vpop.permute.xlu0 %4694
    %4696 = vrot.lane.b32.xlu0 %v4071, 88
    %v4697 = vpop.permute.xlu0 %4696
    %v4703 = vsel %vm163, %v4591, 0
    %v4706 = vsel %vm163, %v4592, 0
    %4708 = vmatprep.subr.mxu0 0.0
    %4709 = vmatpush1.msra.mxu0 %v4691
    %4710 = vmatprep.subr.mxu0 0.0
    %4711 = vmatpush1.msra.mxu0 %v4693
    %4712 = vmatprep.subr.mxu0 0.0
    %4713 = vmatpush1.msra.mxu0 %v4695
    %4714 = vmatprep.subr.mxu0 0.0
    %4715 = vmatpush1.msra.mxu0 %v4697
    %4716 = vmatprep.subr.mxu0 0.0
    %4717 = vmatpush1.msra.mxu0 0.0
    %4718 = vmatprep.subr.mxu0 0.0
    %4719 = vmatpush1.msra.mxu0 0.0
    %4720 = vmatprep.subr.mxu0 0.0
    %4721 = vmatpush1.msra.mxu0 0.0
    %4722 = vmatprep.subr.mxu0 0.0
    %4723 = vmatpush1.msra.mxu0 0.0
    %4724 = vmatprep.subr.mxu0 0.0
    %4725 = vmatpush1.msra.mxu0 0.0
    %4726 = vmatprep.subr.mxu0 0.0
    %4727 = vmatpush1.msra.mxu0 0.0
    %4728 = vmatprep.subr.mxu0 0.0
    %4729 = vmatpush1.msra.mxu0 0.0
    %4730 = vmatprep.subr.mxu0 0.0
    %4731 = vmatpush1.msra.mxu0 0.0
    %4732 = vmatprep.subr.mxu0 0.0
    %4733 = vmatpush1.msra.mxu0 0.0
    %4734 = vmatprep.subr.mxu0 0.0
    %4735 = vmatpush1.msra.mxu0 0.0
    %4736 = vmatprep.subr.mxu0 0.0
    %4737 = vmatpush1.msra.mxu0 0.0
    %4738 = vmatprep.subr.mxu0 0.0
    %4739 = vmatpush1.msra.mxu0 0.0
    %4740 = vmatprep.subr.mxu0 0.0
    %4741 = vmatpush1.msra.mxu0 0.0
    %4742 = vmatprep.subr.mxu0 0.0
    %4743 = vmatpush1.msra.mxu0 0.0
    %4744 = vmatprep.subr.mxu0 0.0
    %4745 = vmatpush1.msra.mxu0 0.0
    %4746 = vmatprep.subr.mxu0 0.0
    %4747 = vmatpush1.msra.mxu0 0.0
    %4748 = vmatprep.subr.mxu0 0.0
    %4749 = vmatpush1.msra.mxu0 0.0
    %4750 = vmatprep.subr.mxu0 0.0
    %4751 = vmatpush1.msra.mxu0 0.0
    %4752 = vmatprep.subr.mxu0 0.0
    %4753 = vmatpush1.msra.mxu0 0.0
    %4754 = vmatprep.subr.mxu0 0.0
    %4755 = vmatpush1.msra.mxu0 0.0
    %4756 = vmatprep.subr.mxu0 0.0
    %4757 = vmatpush1.msra.mxu0 0.0
    %4758 = vmatprep.subr.mxu0 0.0
    %4759 = vmatpush1.msra.mxu0 0.0
    %4760 = vmatprep.subr.mxu0 0.0
    %4761 = vmatpush1.msra.mxu0 0.0
    %4762 = vmatprep.subr.mxu0 0.0
    %4763 = vmatpush1.msra.mxu0 0.0
    %4764 = vmatprep.subr.mxu0 0.0
    %4765 = vmatpush1.msra.mxu0 0.0
    %4766 = vmatprep.subr.mxu0 0.0
    %4767 = vmatpush1.msra.mxu0 0.0
    %4768 = vmatprep.subr.mxu0 0.0
    %4769 = vmatpush1.msra.mxu0 0.0
    %4770 = vmatprep.subr.mxu0 0.0
    %4771 = vmatpush1.msra.mxu0 0.0
    %4772 = vmatprep.mubr.f32.mxu0 0.0
    %4773 = vmatmul.mubr.f32.gmra.mrb[0].mxu0 %v4703
    %v4774 = vpop.f32.mrb[0].mxu0
    %v4775 = vadd.f32 0.0, %v4774
    %v4776 = vpop.f32.mrb[0].mxu0
    %4777 = vmatprep.mubr.f32.mxu0 0.0
    %4778 = vmatmul.mubr.f32.gmra.mrb[0].mxu0 %v4706
    %v4779 = vpop.f32.mrb[0].mxu0
    %v4780 = vadd.f32 0.0, %v4779
    %v4781 = vpop.f32.mrb[0].mxu0
    %4782 = vdwg.mxu0
    %4783 = vrot.lane.b32.xlu0 %v4056, 80
    %v4784 = vpop.permute.xlu0 %4783
    %4785 = vrot.lane.b32.xlu0 %v4061, 80
    %v4786 = vpop.permute.xlu0 %4785
    %4787 = vrot.lane.b32.xlu0 %v4066, 80
    %v4788 = vpop.permute.xlu0 %4787
    %4789 = vrot.lane.b32.xlu0 %v4071, 80
    %v4790 = vpop.permute.xlu0 %4789
    %v4796 = vsel %vm163, %v4593, 0
    %v4799 = vsel %vm163, %v4594, 0
    %4801 = vmatprep.subr.mxu0 0.0
    %4802 = vmatpush1.msra.mxu0 %v4784
    %4803 = vmatprep.subr.mxu0 0.0
    %4804 = vmatpush1.msra.mxu0 %v4786
    %4805 = vmatprep.subr.mxu0 0.0
    %4806 = vmatpush1.msra.mxu0 %v4788
    %4807 = vmatprep.subr.mxu0 0.0
    %4808 = vmatpush1.msra.mxu0 %v4790
    %4809 = vmatprep.subr.mxu0 0.0
    %4810 = vmatpush1.msra.mxu0 0.0
    %4811 = vmatprep.subr.mxu0 0.0
    %4812 = vmatpush1.msra.mxu0 0.0
    %4813 = vmatprep.subr.mxu0 0.0
    %4814 = vmatpush1.msra.mxu0 0.0
    %4815 = vmatprep.subr.mxu0 0.0
    %4816 = vmatpush1.msra.mxu0 0.0
    %4817 = vmatprep.subr.mxu0 0.0
    %4818 = vmatpush1.msra.mxu0 0.0
    %4819 = vmatprep.subr.mxu0 0.0
    %4820 = vmatpush1.msra.mxu0 0.0
    %4821 = vmatprep.subr.mxu0 0.0
    %4822 = vmatpush1.msra.mxu0 0.0
    %4823 = vmatprep.subr.mxu0 0.0
    %4824 = vmatpush1.msra.mxu0 0.0
    %4825 = vmatprep.subr.mxu0 0.0
    %4826 = vmatpush1.msra.mxu0 0.0
    %4827 = vmatprep.subr.mxu0 0.0
    %4828 = vmatpush1.msra.mxu0 0.0
    %4829 = vmatprep.subr.mxu0 0.0
    %4830 = vmatpush1.msra.mxu0 0.0
    %4831 = vmatprep.subr.mxu0 0.0
    %4832 = vmatpush1.msra.mxu0 0.0
    %4833 = vmatprep.subr.mxu0 0.0
    %4834 = vmatpush1.msra.mxu0 0.0
    %4835 = vmatprep.subr.mxu0 0.0
    %4836 = vmatpush1.msra.mxu0 0.0
    %4837 = vmatprep.subr.mxu0 0.0
    %4838 = vmatpush1.msra.mxu0 0.0
    %4839 = vmatprep.subr.mxu0 0.0
    %4840 = vmatpush1.msra.mxu0 0.0
    %4841 = vmatprep.subr.mxu0 0.0
    %4842 = vmatpush1.msra.mxu0 0.0
    %4843 = vmatprep.subr.mxu0 0.0
    %4844 = vmatpush1.msra.mxu0 0.0
    %4845 = vmatprep.subr.mxu0 0.0
    %4846 = vmatpush1.msra.mxu0 0.0
    %4847 = vmatprep.subr.mxu0 0.0
    %4848 = vmatpush1.msra.mxu0 0.0
    %4849 = vmatprep.subr.mxu0 0.0
    %4850 = vmatpush1.msra.mxu0 0.0
    %4851 = vmatprep.subr.mxu0 0.0
    %4852 = vmatpush1.msra.mxu0 0.0
    %4853 = vmatprep.subr.mxu0 0.0
    %4854 = vmatpush1.msra.mxu0 0.0
    %4855 = vmatprep.subr.mxu0 0.0
    %4856 = vmatpush1.msra.mxu0 0.0
    %4857 = vmatprep.subr.mxu0 0.0
    %4858 = vmatpush1.msra.mxu0 0.0
    %4859 = vmatprep.subr.mxu0 0.0
    %4860 = vmatpush1.msra.mxu0 0.0
    %4861 = vmatprep.subr.mxu0 0.0
    %4862 = vmatpush1.msra.mxu0 0.0
    %4863 = vmatprep.subr.mxu0 0.0
    %4864 = vmatpush1.msra.mxu0 0.0
    %4865 = vmatprep.mubr.f32.mxu0 0.0
    %4866 = vmatmul.mubr.f32.gmra.mrb[0].mxu0 %v4796
    %v4867 = vpop.f32.mrb[0].mxu0
    %v4868 = vadd.f32 0.0, %v4867
    %v4869 = vpop.f32.mrb[0].mxu0
    %4870 = vmatprep.mubr.f32.mxu0 0.0
    %4871 = vmatmul.mubr.f32.gmra.mrb[0].mxu0 %v4799
    %v4872 = vpop.f32.mrb[0].mxu0
    %v4873 = vadd.f32 0.0, %v4872
    %v4874 = vpop.f32.mrb[0].mxu0
    %4875 = vdwg.mxu0
    %4876 = vrot.lane.b32.xlu0 %v4056, 72
    %v4877 = vpop.permute.xlu0 %4876
    %4878 = vrot.lane.b32.xlu0 %v4061, 72
    %v4879 = vpop.permute.xlu0 %4878
    %4880 = vrot.lane.b32.xlu0 %v4066, 72
    %v4881 = vpop.permute.xlu0 %4880
    %4882 = vrot.lane.b32.xlu0 %v4071, 72
    %v4883 = vpop.permute.xlu0 %4882
    %v4889 = vsel %vm163, %v4595, 0
    %v4892 = vsel %vm163, %v4596, 0
    %4894 = vmatprep.subr.mxu0 0.0
    %4895 = vmatpush1.msra.mxu0 %v4877
    %4896 = vmatprep.subr.mxu0 0.0
    %4897 = vmatpush1.msra.mxu0 %v4879
    %4898 = vmatprep.subr.mxu0 0.0
    %4899 = vmatpush1.msra.mxu0 %v4881
    %4900 = vmatprep.subr.mxu0 0.0
    %4901 = vmatpush1.msra.mxu0 %v4883
    %4902 = vmatprep.subr.mxu0 0.0
    %4903 = vmatpush1.msra.mxu0 0.0
    %4904 = vmatprep.subr.mxu0 0.0
    %4905 = vmatpush1.msra.mxu0 0.0
    %4906 = vmatprep.subr.mxu0 0.0
    %4907 = vmatpush1.msra.mxu0 0.0
    %4908 = vmatprep.subr.mxu0 0.0
    %4909 = vmatpush1.msra.mxu0 0.0
    %4910 = vmatprep.subr.mxu0 0.0
    %4911 = vmatpush1.msra.mxu0 0.0
    %4912 = vmatprep.subr.mxu0 0.0
    %4913 = vmatpush1.msra.mxu0 0.0
    %4914 = vmatprep.subr.mxu0 0.0
    %4915 = vmatpush1.msra.mxu0 0.0
    %4916 = vmatprep.subr.mxu0 0.0
    %4917 = vmatpush1.msra.mxu0 0.0
    %4918 = vmatprep.subr.mxu0 0.0
    %4919 = vmatpush1.msra.mxu0 0.0
    %4920 = vmatprep.subr.mxu0 0.0
    %4921 = vmatpush1.msra.mxu0 0.0
    %4922 = vmatprep.subr.mxu0 0.0
    %4923 = vmatpush1.msra.mxu0 0.0
    %4924 = vmatprep.subr.mxu0 0.0
    %4925 = vmatpush1.msra.mxu0 0.0
    %4926 = vmatprep.subr.mxu0 0.0
    %4927 = vmatpush1.msra.mxu0 0.0
    %4928 = vmatprep.subr.mxu0 0.0
    %4929 = vmatpush1.msra.mxu0 0.0
    %4930 = vmatprep.subr.mxu0 0.0
    %4931 = vmatpush1.msra.mxu0 0.0
    %4932 = vmatprep.subr.mxu0 0.0
    %4933 = vmatpush1.msra.mxu0 0.0
    %4934 = vmatprep.subr.mxu0 0.0
    %4935 = vmatpush1.msra.mxu0 0.0
    %4936 = vmatprep.subr.mxu0 0.0
    %4937 = vmatpush1.msra.mxu0 0.0
    %4938 = vmatprep.subr.mxu0 0.0
    %4939 = vmatpush1.msra.mxu0 0.0
    %4940 = vmatprep.subr.mxu0 0.0
    %4941 = vmatpush1.msra.mxu0 0.0
    %4942 = vmatprep.subr.mxu0 0.0
    %4943 = vmatpush1.msra.mxu0 0.0
    %4944 = vmatprep.subr.mxu0 0.0
    %4945 = vmatpush1.msra.mxu0 0.0
    %4946 = vmatprep.subr.mxu0 0.0
    %4947 = vmatpush1.msra.mxu0 0.0
    %4948 = vmatprep.subr.mxu0 0.0
    %4949 = vmatpush1.msra.mxu0 0.0
    %4950 = vmatprep.subr.mxu0 0.0
    %4951 = vmatpush1.msra.mxu0 0.0
    %4952 = vmatprep.subr.mxu0 0.0
    %4953 = vmatpush1.msra.mxu0 0.0
    %4954 = vmatprep.subr.mxu0 0.0
    %4955 = vmatpush1.msra.mxu0 0.0
    %4956 = vmatprep.subr.mxu0 0.0
    %4957 = vmatpush1.msra.mxu0 0.0
    %4958 = vmatprep.mubr.f32.mxu0 0.0
    %4959 = vmatmul.mubr.f32.gmra.mrb[0].mxu0 %v4889
    %v4960 = vpop.f32.mrb[0].mxu0
    %v4961 = vadd.f32 0.0, %v4960
    %v4962 = vpop.f32.mrb[0].mxu0
    %4963 = vmatprep.mubr.f32.mxu0 0.0
    %4964 = vmatmul.mubr.f32.gmra.mrb[0].mxu0 %v4892
    %v4965 = vpop.f32.mrb[0].mxu0
    %v4966 = vadd.f32 0.0, %v4965
    %v4967 = vpop.f32.mrb[0].mxu0
    %4968 = vdwg.mxu0
    %4971 = vrot.lane.b32.xlu0 %v4775, 8
    %v4972 = vpop.permute.xlu0 %4971
    %4973 = vrot.lane.b32.xlu0 %v4780, 8
    %v4974 = vpop.permute.xlu0 %4973
    %4979 = vrot.lane.b32.xlu0 %v4868, 16
    %v4980 = vpop.permute.xlu0 %4979
    %4981 = vrot.lane.b32.xlu0 %v4873, 16
    %v4982 = vpop.permute.xlu0 %4981
    %4987 = vrot.lane.b32.xlu0 %v4961, 24
    %v4988 = vpop.permute.xlu0 %4987
    %4989 = vrot.lane.b32.xlu0 %v4966, 24
    %v4990 = vpop.permute.xlu0 %4989
    %v4993 = vsel %vm330, %v4682, %v4972
    %v4994 = vsel %vm330, %v4687, %v4974
    %v4995 = vsel %vm695, %v4993, %v4980
    %v4996 = vsel %vm695, %v4994, %v4982
    %v4997 = vsel %vm1192, %v4995, %v4988
    %v4998 = vsel %vm1192, %v4996, %v4990
    %v4999 = vlaneseq
    %v5000 = vshrl.u32 %v4999, 7
    %v5001 = vsub.s32 0, %v5000
    %v5002 = vrot.slane %v4078, %v5001
    %v5004 = vsel %vm163, %v4997, 0
    %v5007 = vsel %vm163, %v4998, 0
    %5009 = vmatprep.subr.mxu0 0.0
    %5010 = vmatpush1.msra.mxu0 %v4074
    %5011 = vmatprep.subr.mxu0 0.0
    %5012 = vmatpush1.msra.mxu0 %v4075
    %5013 = vmatprep.subr.mxu0 0.0
    %5014 = vmatpush1.msra.mxu0 %v4076
    %5015 = vmatprep.subr.mxu0 0.0
    %5016 = vmatpush1.msra.mxu0 %v4077
    %5017 = vmatprep.subr.mxu0 0.0
    %5018 = vmatpush1.msra.mxu0 0.0
    %5019 = vmatprep.subr.mxu0 0.0
    %5020 = vmatpush1.msra.mxu0 0.0
    %5021 = vmatprep.subr.mxu0 0.0
    %5022 = vmatpush1.msra.mxu0 0.0
    %5023 = vmatprep.subr.mxu0 0.0
    %5024 = vmatpush1.msra.mxu0 0.0
    %5025 = vmatprep.subr.mxu0 0.0
    %5026 = vmatpush1.msra.mxu0 0.0
    %5027 = vmatprep.subr.mxu0 0.0
    %5028 = vmatpush1.msra.mxu0 0.0
    %5029 = vmatprep.subr.mxu0 0.0
    %5030 = vmatpush1.msra.mxu0 0.0
    %5031 = vmatprep.subr.mxu0 0.0
    %5032 = vmatpush1.msra.mxu0 0.0
    %5033 = vmatprep.subr.mxu0 0.0
    %5034 = vmatpush1.msra.mxu0 0.0
    %5035 = vmatprep.subr.mxu0 0.0
    %5036 = vmatpush1.msra.mxu0 0.0
    %5037 = vmatprep.subr.mxu0 0.0
    %5038 = vmatpush1.msra.mxu0 0.0
    %5039 = vmatprep.subr.mxu0 0.0
    %5040 = vmatpush1.msra.mxu0 0.0
    %5041 = vmatprep.subr.mxu0 0.0
    %5042 = vmatpush1.msra.mxu0 0.0
    %5043 = vmatprep.subr.mxu0 0.0
    %5044 = vmatpush1.msra.mxu0 0.0
    %5045 = vmatprep.subr.mxu0 0.0
    %5046 = vmatpush1.msra.mxu0 0.0
    %5047 = vmatprep.subr.mxu0 0.0
    %5048 = vmatpush1.msra.mxu0 0.0
    %5049 = vmatprep.subr.mxu0 0.0
    %5050 = vmatpush1.msra.mxu0 0.0
    %5051 = vmatprep.subr.mxu0 0.0
    %5052 = vmatpush1.msra.mxu0 0.0
    %5053 = vmatprep.subr.mxu0 0.0
    %5054 = vmatpush1.msra.mxu0 0.0
    %5055 = vmatprep.subr.mxu0 0.0
    %5056 = vmatpush1.msra.mxu0 0.0
    %5057 = vmatprep.subr.mxu0 0.0
    %5058 = vmatpush1.msra.mxu0 0.0
    %5059 = vmatprep.subr.mxu0 0.0
    %5060 = vmatpush1.msra.mxu0 0.0
    %5061 = vmatprep.subr.mxu0 0.0
    %5062 = vmatpush1.msra.mxu0 0.0
    %5063 = vmatprep.subr.mxu0 0.0
    %5064 = vmatpush1.msra.mxu0 0.0
    %5065 = vmatprep.subr.mxu0 0.0
    %5066 = vmatpush1.msra.mxu0 0.0
    %5067 = vmatprep.subr.mxu0 0.0
    %5068 = vmatpush1.msra.mxu0 0.0
    %5069 = vmatprep.subr.mxu0 0.0
    %5070 = vmatpush1.msra.mxu0 0.0
    %5071 = vmatprep.subr.mxu0 0.0
    %5072 = vmatpush1.msra.mxu0 0.0
    %5073 = vmatprep.mubr.f32.mxu0 0.0
    %5074 = vmatmul.mubr.f32.gmra.mrb[0].mxu0 %v5004
    %v5075 = vpop.f32.mrb[0].mxu0
    %v5076 = vadd.f32 %v5002, %v5075
    %v5077 = vpop.f32.mrb[0].mxu0
    %5078 = vmatprep.mubr.f32.mxu0 0.0
    %5079 = vmatmul.mubr.f32.gmra.mrb[0].mxu0 %v5007
    %v5080 = vpop.f32.mrb[0].mxu0
    %v5081 = vadd.f32 %v5002, %v5080
    %v5082 = vpop.f32.mrb[0].mxu0
    %5083 = vdwg.mxu0
    %v5084 = vadd.f32 %v3888, %v5076
    %v5085 = vadd.f32 %v3889, %v5081
    %v5086 = vld [vmem:[%s2799 + $0x107] sm:$0x1]
    %v5087 = vld [vmem:[%s2799 + $0x108] sm:$0x1]
    %v5088 = vsel %vm163, %v5084, 0.0
    %5089 = vadd.xlane.f32.xlu0 %v5088
    %v5090 = vpop.xlane.xlu0 %5089
    %v5091 = vsel %vm163, %v5085, 0.0
    %5092 = vadd.xlane.f32.xlu0 %v5091
    %v5093 = vpop.xlane.xlu0 %5092
    %v5094 = vmul.f32 %v5090, %v170
    %v5095 = vmul.f32 %v5093, %v170
    %v5096 = vsub.f32 %v5084, %v5094
    %v5097 = vsub.f32 %v5085, %v5095
    %v5098 = vmul.f32 %v5096, %v5096
    %v5099 = vmul.f32 %v5097, %v5097
    %v5100 = vsel %vm163, %v5098, 0.0
    %5101 = vadd.xlane.f32.xlu0 %v5100
    %v5102 = vpop.xlane.xlu0 %5101
    %v5103 = vsel %vm163, %v5099, 0.0
    %5104 = vadd.xlane.f32.xlu0 %v5103
    %v5105 = vpop.xlane.xlu0 %5104
    %v5106 = vmul.f32 %v5102, %v170
    %v5107 = vmul.f32 %v5105, %v170
    %v5108 = vadd.f32 %v5106, 1e-05
    %v5109 = vadd.f32 %v5107, 1e-05
    %v5110 = vrsqrt.pop %v5108
    %v5111 = vrsqrt.pop %v5109
    %v5112 = vmul.f32 %v5096, %v5110
    %v5113 = vmul.f32 %v5097, %v5111
    %v5114 = vlaneseq
    %v5115 = vshrl.u32 %v5114, 7
    %v5116 = vsub.s32 0, %v5115
    %v5117 = vrot.slane %v5086, %v5116
    %v5118 = vmul.f32 %v5112, %v5117
    %v5119 = vmul.f32 %v5113, %v5117
    %v5120 = vlaneseq
    %v5121 = vshrl.u32 %v5120, 7
    %v5122 = vsub.s32 0, %v5121
    %v5123 = vrot.slane %v5087, %v5122
    %v5124 = vadd.f32 %v5118, %v5123
    %v5125 = vadd.f32 %v5119, %v5123
    %v5126 = vld [vmem:[%s2799 + $0xa0] sm:$0xff]
    %v5127 = vld [vmem:[%s2799 + $0xa8] sm:$0xff]
    %v5128 = vld [vmem:[%s2799 + $0xb0] sm:$0xff]
    %v5129 = vld [vmem:[%s2799 + $0xb8] sm:$0xff]
    %v5130 = vld [vmem:[%s2799 + $0x109] sm:$0x1]
    %v5131 = vlaneseq
    %v5132 = vshrl.u32 %v5131, 7
    %v5133 = vsub.s32 0, %v5132
    %v5134 = vrot.slane %v5130, %v5133
    %v5136 = vsel %vm163, %v5124, 0
    %v5139 = vsel %vm163, %v5125, 0
    %5141 = vmatprep.subr.mxu0 0.0
    %5142 = vmatpush1.msra.mxu0 %v5126
    %5143 = vmatprep.subr.mxu0 0.0
    %5144 = vmatpush1.msra.mxu0 %v5127
    %5145 = vmatprep.subr.mxu0 0.0
    %5146 = vmatpush1.msra.mxu0 %v5128
    %5147 = vmatprep.subr.mxu0 0.0
    %5148 = vmatpush1.msra.mxu0 %v5129
    %5149 = vmatprep.subr.mxu0 0.0
    %5150 = vmatpush1.msra.mxu0 0.0
    %5151 = vmatprep.subr.mxu0 0.0
    %5152 = vmatpush1.msra.mxu0 0.0
    %5153 = vmatprep.subr.mxu0 0.0
    %5154 = vmatpush1.msra.mxu0 0.0
    %5155 = vmatprep.subr.mxu0 0.0
    %5156 = vmatpush1.msra.mxu0 0.0
    %5157 = vmatprep.subr.mxu0 0.0
    %5158 = vmatpush1.msra.mxu0 0.0
    %5159 = vmatprep.subr.mxu0 0.0
    %5160 = vmatpush1.msra.mxu0 0.0
    %5161 = vmatprep.subr.mxu0 0.0
    %5162 = vmatpush1.msra.mxu0 0.0
    %5163 = vmatprep.subr.mxu0 0.0
    %5164 = vmatpush1.msra.mxu0 0.0
    %5165 = vmatprep.subr.mxu0 0.0
    %5166 = vmatpush1.msra.mxu0 0.0
    %5167 = vmatprep.subr.mxu0 0.0
    %5168 = vmatpush1.msra.mxu0 0.0
    %5169 = vmatprep.subr.mxu0 0.0
    %5170 = vmatpush1.msra.mxu0 0.0
    %5171 = vmatprep.subr.mxu0 0.0
    %5172 = vmatpush1.msra.mxu0 0.0
    %5173 = vmatprep.subr.mxu0 0.0
    %5174 = vmatpush1.msra.mxu0 0.0
    %5175 = vmatprep.subr.mxu0 0.0
    %5176 = vmatpush1.msra.mxu0 0.0
    %5177 = vmatprep.subr.mxu0 0.0
    %5178 = vmatpush1.msra.mxu0 0.0
    %5179 = vmatprep.subr.mxu0 0.0
    %5180 = vmatpush1.msra.mxu0 0.0
    %5181 = vmatprep.subr.mxu0 0.0
    %5182 = vmatpush1.msra.mxu0 0.0
    %5183 = vmatprep.subr.mxu0 0.0
    %5184 = vmatpush1.msra.mxu0 0.0
    %5185 = vmatprep.subr.mxu0 0.0
    %5186 = vmatpush1.msra.mxu0 0.0
    %5187 = vmatprep.subr.mxu0 0.0
    %5188 = vmatpush1.msra.mxu0 0.0
    %5189 = vmatprep.subr.mxu0 0.0
    %5190 = vmatpush1.msra.mxu0 0.0
    %5191 = vmatprep.subr.mxu0 0.0
    %5192 = vmatpush1.msra.mxu0 0.0
    %5193 = vmatprep.subr.mxu0 0.0
    %5194 = vmatpush1.msra.mxu0 0.0
    %5195 = vmatprep.subr.mxu0 0.0
    %5196 = vmatpush1.msra.mxu0 0.0
    %5197 = vmatprep.subr.mxu0 0.0
    %5198 = vmatpush1.msra.mxu0 0.0
    %5199 = vmatprep.subr.mxu0 0.0
    %5200 = vmatpush1.msra.mxu0 0.0
    %5201 = vmatprep.subr.mxu0 0.0
    %5202 = vmatpush1.msra.mxu0 0.0
    %5203 = vmatprep.subr.mxu0 0.0
    %5204 = vmatpush1.msra.mxu0 0.0
    %5205 = vmatprep.mubr.f32.mxu0 0.0
    %5206 = vmatmul.mubr.f32.gmra.mrb[0].mxu0 %v5136
    %v5207 = vpop.f32.mrb[0].mxu0
    %v5208 = vadd.f32 %v5134, %v5207
    %v5209 = vpop.f32.mrb[0].mxu0
    %5210 = vmatprep.mubr.f32.mxu0 0.0
    %5211 = vmatmul.mubr.f32.gmra.mrb[0].mxu0 %v5139
    %v5212 = vpop.f32.mrb[0].mxu0
    %v5213 = vadd.f32 %v5134, %v5212
    %v5214 = vpop.f32.mrb[0].mxu0
    %5215 = vdwg.mxu0
    %v5216 = vmax.f32 %v5208, 0.0
    %v5217 = vmax.f32 %v5213, 0.0
    %v5218 = vld [vmem:[%s2799 + $0xc0] sm:$0xff]
    %v5219 = vld [vmem:[%s2799 + $0xc8] sm:$0xff]
    %v5220 = vld [vmem:[%s2799 + $0xd0] sm:$0xff]
    %v5221 = vld [vmem:[%s2799 + $0xd8] sm:$0xff]
    %v5222 = vld [vmem:[%s2799 + $0xe0] sm:$0xff]
    %v5223 = vld [vmem:[%s2799 + $0xe8] sm:$0xff]
    %v5224 = vld [vmem:[%s2799 + $0xf0] sm:$0xff]
    %v5225 = vld [vmem:[%s2799 + $0xf8] sm:$0xff]
    %v5226 = vld [vmem:[%s2799 + $0x10a] sm:$0x1]
    %v5227 = vlaneseq
    %v5228 = vshrl.u32 %v5227, 7
    %v5229 = vsub.s32 0, %v5228
    %v5230 = vrot.slane %v5226, %v5229
    %v5232 = vsel %vm2675, %v5216, 0
    %v5235 = vsel %vm2675, %v5217, 0
    %5237 = vmatprep.subr.mxu0 0.0
    %5238 = vmatpush1.msra.mxu0 %v5218
    %5239 = vmatprep.subr.mxu0 0.0
    %5240 = vmatpush1.msra.mxu0 %v5219
    %5241 = vmatprep.subr.mxu0 0.0
    %5242 = vmatpush1.msra.mxu0 %v5220
    %5243 = vmatprep.subr.mxu0 0.0
    %5244 = vmatpush1.msra.mxu0 %v5221
    %5245 = vmatprep.subr.mxu0 0.0
    %5246 = vmatpush1.msra.mxu0 %v5222
    %5247 = vmatprep.subr.mxu0 0.0
    %5248 = vmatpush1.msra.mxu0 %v5223
    %5249 = vmatprep.subr.mxu0 0.0
    %5250 = vmatpush1.msra.mxu0 %v5224
    %5251 = vmatprep.subr.mxu0 0.0
    %5252 = vmatpush1.msra.mxu0 %v5225
    %5253 = vmatprep.subr.mxu0 0.0
    %5254 = vmatpush1.msra.mxu0 0.0
    %5255 = vmatprep.subr.mxu0 0.0
    %5256 = vmatpush1.msra.mxu0 0.0
    %5257 = vmatprep.subr.mxu0 0.0
    %5258 = vmatpush1.msra.mxu0 0.0
    %5259 = vmatprep.subr.mxu0 0.0
    %5260 = vmatpush1.msra.mxu0 0.0
    %5261 = vmatprep.subr.mxu0 0.0
    %5262 = vmatpush1.msra.mxu0 0.0
    %5263 = vmatprep.subr.mxu0 0.0
    %5264 = vmatpush1.msra.mxu0 0.0
    %5265 = vmatprep.subr.mxu0 0.0
    %5266 = vmatpush1.msra.mxu0 0.0
    %5267 = vmatprep.subr.mxu0 0.0
    %5268 = vmatpush1.msra.mxu0 0.0
    %5269 = vmatprep.subr.mxu0 0.0
    %5270 = vmatpush1.msra.mxu0 0.0
    %5271 = vmatprep.subr.mxu0 0.0
    %5272 = vmatpush1.msra.mxu0 0.0
    %5273 = vmatprep.subr.mxu0 0.0
    %5274 = vmatpush1.msra.mxu0 0.0
    %5275 = vmatprep.subr.mxu0 0.0
    %5276 = vmatpush1.msra.mxu0 0.0
    %5277 = vmatprep.subr.mxu0 0.0
    %5278 = vmatpush1.msra.mxu0 0.0
    %5279 = vmatprep.subr.mxu0 0.0
    %5280 = vmatpush1.msra.mxu0 0.0
    %5281 = vmatprep.subr.mxu0 0.0
    %5282 = vmatpush1.msra.mxu0 0.0
    %5283 = vmatprep.subr.mxu0 0.0
    %5284 = vmatpush1.msra.mxu0 0.0
    %5285 = vmatprep.subr.mxu0 0.0
    %5286 = vmatpush1.msra.mxu0 0.0
    %5287 = vmatprep.subr.mxu0 0.0
    %5288 = vmatpush1.msra.mxu0 0.0
    %5289 = vmatprep.subr.mxu0 0.0
    %5290 = vmatpush1.msra.mxu0 0.0
    %5291 = vmatprep.subr.mxu0 0.0
    %5292 = vmatpush1.msra.mxu0 0.0
    %5293 = vmatprep.subr.mxu0 0.0
    %5294 = vmatpush1.msra.mxu0 0.0
    %5295 = vmatprep.subr.mxu0 0.0
    %5296 = vmatpush1.msra.mxu0 0.0
    %5297 = vmatprep.subr.mxu0 0.0
    %5298 = vmatpush1.msra.mxu0 0.0
    %5299 = vmatprep.subr.mxu0 0.0
    %5300 = vmatpush1.msra.mxu0 0.0
    %5301 = vmatprep.mubr.f32.mxu0 0.0
    %5302 = vmatmul.mubr.f32.gmra.mrb[0].mxu0 %v5232
    %v5303 = vpop.f32.mrb[0].mxu0
    %v5304 = vadd.f32 %v5230, %v5303
    %v5305 = vpop.f32.mrb[0].mxu0
    %5306 = vmatprep.mubr.f32.mxu0 0.0
    %5307 = vmatmul.mubr.f32.gmra.mrb[0].mxu0 %v5235
    %v5308 = vpop.f32.mrb[0].mxu0
    %v5309 = vadd.f32 %v5230, %v5308
    %v5310 = vpop.f32.mrb[0].mxu0
    %5311 = vdwg.mxu0
    %v5312 = vadd.f32 %v5124, %v5304
    %v5313 = vadd.f32 %v5125, %v5309
    %v5314 = vld [vmem:[%s2799 + $0x10b] sm:$0x1]
    %v5315 = vld [vmem:[%s2799 + $0x10c] sm:$0x1]
    %v5316 = vsel %vm163, %v5312, 0.0
    %5317 = vadd.xlane.f32.xlu0 %v5316
    %v5318 = vpop.xlane.xlu0 %5317
    %v5319 = vsel %vm163, %v5313, 0.0
    %5320 = vadd.xlane.f32.xlu0 %v5319
    %v5321 = vpop.xlane.xlu0 %5320
    %v5322 = vmul.f32 %v5318, %v170
    %v5323 = vmul.f32 %v5321, %v170
    %v5324 = vsub.f32 %v5312, %v5322
    %v5325 = vsub.f32 %v5313, %v5323
    %v5326 = vmul.f32 %v5324, %v5324
    %v5327 = vmul.f32 %v5325, %v5325
    %v5328 = vsel %vm163, %v5326, 0.0
    %5329 = vadd.xlane.f32.xlu0 %v5328
    %v5330 = vpop.xlane.xlu0 %5329
    %v5331 = vsel %vm163, %v5327, 0.0
    %5332 = vadd.xlane.f32.xlu0 %v5331
    %v5333 = vpop.xlane.xlu0 %5332
    %v5334 = vmul.f32 %v5330, %v170
    %v5335 = vmul.f32 %v5333, %v170
    %v5336 = vadd.f32 %v5334, 1e-05
    %v5337 = vadd.f32 %v5335, 1e-05
    %v5338 = vrsqrt.pop %v5336
    %v5339 = vrsqrt.pop %v5337
    %v5340 = vmul.f32 %v5324, %v5338
    %v5341 = vmul.f32 %v5325, %v5339
    %v5342 = vlaneseq
    %v5343 = vshrl.u32 %v5342, 7
    %v5344 = vsub.s32 0, %v5343
    %v5345 = vrot.slane %v5314, %v5344
    %v5346 = vmul.f32 %v5340, %v5345
    %v5347 = vmul.f32 %v5341, %v5345
    %v5348 = vlaneseq
    %v5349 = vshrl.u32 %v5348, 7
    %v5350 = vsub.s32 0, %v5349
    %v5351 = vrot.slane %v5315, %v5350
    %v5352 = vadd.f32 %v5346, %v5351
    %v5353 = vadd.f32 %v5347, %v5351
    %v5354 = vld [vmem:[#allocation4 + $0x80] sm:$0xff]
    %v5355 = vld [vmem:[#allocation4 + $0x88] sm:$0xff]
    %v5356 = vld [vmem:[#allocation4 + $0x90] sm:$0xff]
    %v5357 = vld [vmem:[#allocation4 + $0x98] sm:$0xff]
    %v5358 = vld [vmem:[#allocation4 + $0xa0] sm:$0x1]
    %v5359 = vlaneseq
    %v5360 = vshrl.u32 %v5359, 7
    %v5361 = vsub.s32 0, %v5360
    %v5362 = vrot.slane %v5358, %v5361
    %v5364 = vsel %vm163, %v5352, 0
    %v5367 = vsel %vm163, %v5353, 0
    %5369 = vmatprep.subr.mxu0 0.0
    %5370 = vmatpush1.msra.mxu0 %v5354
    %5371 = vmatprep.subr.mxu0 0.0
    %5372 = vmatpush1.msra.mxu0 %v5355
    %5373 = vmatprep.subr.mxu0 0.0
    %5374 = vmatpush1.msra.mxu0 %v5356
    %5375 = vmatprep.subr.mxu0 0.0
    %5376 = vmatpush1.msra.mxu0 %v5357
    %5377 = vmatprep.subr.mxu0 0.0
    %5378 = vmatpush1.msra.mxu0 0.0
    %5379 = vmatprep.subr.mxu0 0.0
    %5380 = vmatpush1.msra.mxu0 0.0
    %5381 = vmatprep.subr.mxu0 0.0
    %5382 = vmatpush1.msra.mxu0 0.0
    %5383 = vmatprep.subr.mxu0 0.0
    %5384 = vmatpush1.msra.mxu0 0.0
    %5385 = vmatprep.subr.mxu0 0.0
    %5386 = vmatpush1.msra.mxu0 0.0
    %5387 = vmatprep.subr.mxu0 0.0
    %5388 = vmatpush1.msra.mxu0 0.0
    %5389 = vmatprep.subr.mxu0 0.0
    %5390 = vmatpush1.msra.mxu0 0.0
    %5391 = vmatprep.subr.mxu0 0.0
    %5392 = vmatpush1.msra.mxu0 0.0
    %5393 = vmatprep.subr.mxu0 0.0
    %5394 = vmatpush1.msra.mxu0 0.0
    %5395 = vmatprep.subr.mxu0 0.0
    %5396 = vmatpush1.msra.mxu0 0.0
    %5397 = vmatprep.subr.mxu0 0.0
    %5398 = vmatpush1.msra.mxu0 0.0
    %5399 = vmatprep.subr.mxu0 0.0
    %5400 = vmatpush1.msra.mxu0 0.0
    %5401 = vmatprep.subr.mxu0 0.0
    %5402 = vmatpush1.msra.mxu0 0.0
    %5403 = vmatprep.subr.mxu0 0.0
    %5404 = vmatpush1.msra.mxu0 0.0
    %5405 = vmatprep.subr.mxu0 0.0
    %5406 = vmatpush1.msra.mxu0 0.0
    %5407 = vmatprep.subr.mxu0 0.0
    %5408 = vmatpush1.msra.mxu0 0.0
    %5409 = vmatprep.subr.mxu0 0.0
    %5410 = vmatpush1.msra.mxu0 0.0
    %5411 = vmatprep.subr.mxu0 0.0
    %5412 = vmatpush1.msra.mxu0 0.0
    %5413 = vmatprep.subr.mxu0 0.0
    %5414 = vmatpush1.msra.mxu0 0.0
    %5415 = vmatprep.subr.mxu0 0.0
    %5416 = vmatpush1.msra.mxu0 0.0
    %5417 = vmatprep.subr.mxu0 0.0
    %5418 = vmatpush1.msra.mxu0 0.0
    %5419 = vmatprep.subr.mxu0 0.0
    %5420 = vmatpush1.msra.mxu0 0.0
    %5421 = vmatprep.subr.mxu0 0.0
    %5422 = vmatpush1.msra.mxu0 0.0
    %5423 = vmatprep.subr.mxu0 0.0
    %5424 = vmatpush1.msra.mxu0 0.0
    %5425 = vmatprep.subr.mxu0 0.0
    %5426 = vmatpush1.msra.mxu0 0.0
    %5427 = vmatprep.subr.mxu0 0.0
    %5428 = vmatpush1.msra.mxu0 0.0
    %5429 = vmatprep.subr.mxu0 0.0
    %5430 = vmatpush1.msra.mxu0 0.0
    %5431 = vmatprep.subr.mxu0 0.0
    %5432 = vmatpush1.msra.mxu0 0.0
    %5433 = vmatprep.mubr.f32.mxu0 0.0
    %5434 = vmatmul.mubr.f32.gmra.mrb[0].mxu0 %v5364
    %v5435 = vpop.f32.mrb[0].mxu0
    %v5436 = vadd.f32 %v5362, %v5435
    %v5437 = vpop.f32.mrb[0].mxu0
    %5438 = vmatprep.mubr.f32.mxu0 0.0
    %5439 = vmatmul.mubr.f32.gmra.mrb[0].mxu0 %v5367
    %v5440 = vpop.f32.mrb[0].mxu0
    %v5441 = vadd.f32 %v5362, %v5440
    %v5442 = vpop.f32.mrb[0].mxu0
    %5443 = vdwg.mxu0
    %5444 = vst [vmem:[%s5] sm:$0xff] %v5436
    %5445 = vst [vmem:[%s5 + $0x8] sm:$0xff] %v5441
    // Predicated region
    $region30: #{decoder_forward.1} parent=1 // pred_check
      _
    $region31: #{decoder_forward.1} parent=1 // pred_check_branch
      %5447 = sbr.rel (0) target = $region33
    $region32: #{decoder_forward.1} parent=1 // pred_region
      _
    $region33: #{decoder_forward.1} parent=1 // pred_fallthru
      _
    // Predicated region
    $region34: #{decoder_forward.1} parent=1 // pred_check
      _
    $region35: #{decoder_forward.1} parent=1 // pred_check_branch
      %5449 = sbr.rel (0) target = $region37
    $region36: #{decoder_forward.1} parent=1 // pred_region
      _
    $region37: #{decoder_forward.1} parent=1 // pred_fallthru
      _
    %5450 = vsyncpa [#allocation3], 1
    %5451 = vsyncpa [#allocation5], 1

</llo_original>
